<compile_context>
chip_gen: v7x
topology: tpu7x:2x2x1
jax: 0.10.0
libtpu: 0.0.40
codegen_flags: <defaults>
</compile_context>

<pallas_src>
import jax
import jax.numpy as jnp
from jax.experimental import pallas as pl
from jax.experimental.pallas import tpu as pltpu

CPAD = 128  # channel padding = one full lane tile


# ----------------------------------------------------------------------------
# In-kernel helpers
# ----------------------------------------------------------------------------
def _conv3x3_taps(slab, w_ref, H, W, C):
    """slab: (H+2, W+2, C) value (spatially padded). Returns f32 (H*W, C)."""
    acc = jnp.zeros((H * W, C), jnp.float32)
    for t in range(9):
        dy, dx = divmod(t, 3)
        xt = slab[dy:dy + H, dx:dx + W, :].reshape(H * W, C)
        acc = acc + jnp.dot(xt, w_ref[t], preferred_element_type=jnp.float32)
    return acc


# ----------------------------------------------------------------------------
# Kernels
# ----------------------------------------------------------------------------
def _conv_relu_kernel(x_ref, w_ref, b_ref, o_ref):
    """Single folded ConvBn3x3 + ReLU. x_ref: (1, H+2, W+2, C) bf16."""
    _, H, W, C = o_ref.shape
    xv = x_ref[0]
    acc = _conv3x3_taps(xv, w_ref, H, W, C)
    y = jnp.maximum(acc + b_ref[...], 0.0)
    o_ref[...] = y.reshape(1, H, W, C).astype(o_ref.dtype)


def _block_kernel_s1(x_ref, w1_ref, b1_ref, w2_ref, b2_ref, o_ref, mid_ref):
    """Stride-1 BasicBlock with identity shortcut, fully fused.

    x_ref: (1, H+2, W+2, C) bf16 (spatially + channel padded)
    mid_ref: VMEM scratch (H+2, W+2, C) bf16 for the padded intermediate.
    """
    _, H, W, C = o_ref.shape
    xv = x_ref[0]

    # conv1 + BN + ReLU  -> padded intermediate kept in VMEM
    a1 = jnp.maximum(_conv3x3_taps(xv, w1_ref, H, W, C) + b1_ref[...], 0.0)
    mid_ref[...] = jnp.zeros_like(mid_ref)
    mid_ref[1:H + 1, 1:W + 1, :] = a1.reshape(H, W, C).astype(mid_ref.dtype)

    # conv2 + BN + identity residual + ReLU
    midv = mid_ref[...]
    acc2 = _conv3x3_taps(midv, w2_ref, H, W, C)
    res = xv[1:H + 1, 1:W + 1, :].reshape(H * W, C).astype(jnp.float32)
    y = jnp.maximum(acc2 + b2_ref[...] + res, 0.0)
    o_ref[...] = y.reshape(1, H, W, C).astype(o_ref.dtype)


def _block_kernel_s2(x00_ref, x01_ref, x10_ref, x11_ref,
                     w1_ref, b1_ref, w2_ref, b2_ref, ws_ref, bs_ref,
                     o_ref, mid_ref):
    """Stride-2 BasicBlock with 1x1 stride-2 projection shortcut, fully fused.

    x{py}{px}_ref are the 4 polyphase slabs of the spatially padded input:
        x_phase[py, px][a, b] == x_pad[2a + py, 2b + px]
    so every 3x3 stride-2 tap is a contiguous window of one phase slab.
    """
    _, Ho, Wo, C = o_ref.shape
    phases = ((x00_ref[0], x01_ref[0]), (x10_ref[0], x11_ref[0]))

    # conv1 (stride 2) + BN + ReLU
    acc = jnp.zeros((Ho * Wo, C), jnp.float32)
    for t in range(9):
        dy, dx = divmod(t, 3)
        ph = phases[dy % 2][dx % 2]
        oy, ox = dy // 2, dx // 2
        xt = ph[oy:oy + Ho, ox:ox + Wo, :].reshape(Ho * Wo, C)
        acc = acc + jnp.dot(xt, w1_ref[t], preferred_element_type=jnp.float32)
    a1 = jnp.maximum(acc + b1_ref[...], 0.0)
    mid_ref[...] = jnp.zeros_like(mid_ref)
    mid_ref[1:Ho + 1, 1:Wo + 1, :] = a1.reshape(Ho, Wo, C).astype(mid_ref.dtype)

    # conv2 (stride 1) + BN
    acc2 = _conv3x3_taps(mid_ref[...], w2_ref, Ho, Wo, C)

    # projection shortcut: 1x1 stride-2 ConvBn from phase (1,1)
    xc = phases[1][1][0:Ho, 0:Wo, :].reshape(Ho * Wo, C)
    sc = jnp.dot(xc, ws_ref[0], preferred_element_type=jnp.float32) + bs_ref[...]

    y = jnp.maximum(acc2 + b2_ref[...] + sc, 0.0)
    o_ref[...] = y.reshape(1, Ho, Wo, C).astype(o_ref.dtype)


def _pool_linear_kernel(x_ref, w_ref, b_ref, o_ref):
    """Global average pool over (H, W) then Linear, lane-dense (padded classes)."""
    _, Hf, Wf, C = x_ref.shape
    xv = x_ref[0].astype(jnp.float32).reshape(Hf * Wf, C)
    pooled = jnp.sum(xv, axis=0, keepdims=True) * (1.0 / (Hf * Wf))
    logits = jnp.dot(pooled.astype(jnp.bfloat16), w_ref[...],
                     preferred_element_type=jnp.float32) + b_ref[...]
    o_ref[...] = logits.reshape(1, 1, C).astype(o_ref.dtype)


# ----------------------------------------------------------------------------
# pallas_call wrappers (grid over batch, "parallel" for megacore)
# ----------------------------------------------------------------------------
_PARALLEL = pltpu.CompilerParams(dimension_semantics=("parallel",))


def conv3x3_relu(x, p):
    N, H, W, _ = x.shape
    xp = jnp.pad(x, ((0, 0), (1, 1), (1, 1), (0, 0)))
    return pl.pallas_call(
        _conv_relu_kernel,
        out_shape=jax.ShapeDtypeStruct((N, H, W, CPAD), jnp.bfloat16),
        grid=(N,),
        in_specs=[
            pl.BlockSpec((1, H + 2, W + 2, CPAD), lambda n: (n, 0, 0, 0)),
            pl.BlockSpec((9, CPAD, CPAD), lambda n: (0, 0, 0)),
            pl.BlockSpec((1, CPAD), lambda n: (0, 0)),
        ],
        out_specs=pl.BlockSpec((1, H, W, CPAD), lambda n: (n, 0, 0, 0)),
        compiler_params=_PARALLEL,
    )(xp, p["w"], p["b"])


def basic_block_s1(x, blk):
    N, H, W, _ = x.shape
    xp = jnp.pad(x, ((0, 0), (1, 1), (1, 1), (0, 0)))
    return pl.pallas_call(
        _block_kernel_s1,
        out_shape=jax.ShapeDtypeStruct((N, H, W, CPAD), jnp.bfloat16),
        grid=(N,),
        in_specs=[
            pl.BlockSpec((1, H + 2, W + 2, CPAD), lambda n: (n, 0, 0, 0)),
            pl.BlockSpec((9, CPAD, CPAD), lambda n: (0, 0, 0)),
            pl.BlockSpec((1, CPAD), lambda n: (0, 0)),
            pl.BlockSpec((9, CPAD, CPAD), lambda n: (0, 0, 0)),
            pl.BlockSpec((1, CPAD), lambda n: (0, 0)),
        ],
        out_specs=pl.BlockSpec((1, H, W, CPAD), lambda n: (n, 0, 0, 0)),
        scratch_shapes=[pltpu.VMEM((H + 2, W + 2, CPAD), jnp.bfloat16)],
        compiler_params=_PARALLEL,
    )(xp, blk["conv1"]["w"], blk["conv1"]["b"],
      blk["conv2"]["w"], blk["conv2"]["b"])


def basic_block_s2(x, blk):
    N, H, W, _ = x.shape
    Ho, Wo = H // 2, W // 2
    xp = jnp.pad(x, ((0, 0), (1, 1), (1, 1), (0, 0)))
    # Polyphase split (cheap XLA slicing, total traffic == 1x activation).
    x00 = xp[:, 0::2, 0::2, :]
    x01 = xp[:, 0::2, 1::2, :]
    x10 = xp[:, 1::2, 0::2, :]
    x11 = xp[:, 1::2, 1::2, :]
    Hp2, Wp2 = x00.shape[1], x00.shape[2]
    phase_spec = pl.BlockSpec((1, Hp2, Wp2, CPAD), lambda n: (n, 0, 0, 0))
    w3_spec = pl.BlockSpec((9, CPAD, CPAD), lambda n: (0, 0, 0))
    w1_spec = pl.BlockSpec((1, CPAD, CPAD), lambda n: (0, 0, 0))
    b_spec = pl.BlockSpec((1, CPAD), lambda n: (0, 0))
    return pl.pallas_call(
        _block_kernel_s2,
        out_shape=jax.ShapeDtypeStruct((N, Ho, Wo, CPAD), jnp.bfloat16),
        grid=(N,),
        in_specs=[phase_spec, phase_spec, phase_spec, phase_spec,
                  w3_spec, b_spec, w3_spec, b_spec, w1_spec, b_spec],
        out_specs=pl.BlockSpec((1, Ho, Wo, CPAD), lambda n: (n, 0, 0, 0)),
        scratch_shapes=[pltpu.VMEM((Ho + 2, Wo + 2, CPAD), jnp.bfloat16)],
        compiler_params=_PARALLEL,
    )(x00, x01, x10, x11,
      blk["conv1"]["w"], blk["conv1"]["b"],
      blk["conv2"]["w"], blk["conv2"]["b"],
      blk["shortcut"]["w"], blk["shortcut"]["b"])


def pool_and_linear(x, lin):
    N, Hf, Wf, _ = x.shape
    out = pl.pallas_call(
        _pool_linear_kernel,
        out_shape=jax.ShapeDtypeStruct((N, 1, CPAD), jnp.float32),
        grid=(N,),
        in_specs=[
            pl.BlockSpec((1, Hf, Wf, CPAD), lambda n: (n, 0, 0, 0)),
            pl.BlockSpec((CPAD, CPAD), lambda n: (0, 0)),
            pl.BlockSpec((1, CPAD), lambda n: (0, 0)),
        ],
        out_specs=pl.BlockSpec((1, 1, CPAD), lambda n: (n, 0, 0)),
        compiler_params=_PARALLEL,
    )(x, lin["w"], lin["b"])
    return out.reshape(N, CPAD)


# ----------------------------------------------------------------------------
# Parameters: ConvBn folding + padding to lane-dense bf16 layout
# ----------------------------------------------------------------------------
def init_convbn_params(key, cin, cout, k):
    k1, k2, k3, k4, k5 = jax.random.split(key, 5)
    fan_in = k * k * cin
    w = jax.random.normal(k1, (cout, cin, k, k), jnp.float32) / jnp.sqrt(
        jnp.float32(fan_in))
    gamma = 1.0 + 0.1 * jax.random.normal(k2, (cout,), jnp.float32)
    beta = 0.1 * jax.random.normal(k3, (cout,), jnp.float32)
    mean = 0.1 * jax.random.normal(k4, (cout,), jnp.float32)
    var = 1.0 + 0.1 * jnp.abs(jax.random.normal(k5, (cout,), jnp.float32))
    eps = 1e-5
    scale = gamma / jnp.sqrt(var + eps)
    # Fold BN into conv; weight layout (tap, Cin, Cout), tap = 3*dy + dx.
    w_fold = jnp.transpose(w, (2, 3, 1, 0)).reshape(k * k, cin, cout)
    w_fold = w_fold * scale[None, None, :]
    b_fold = beta - mean * scale
    # Pad to lane-dense 128x128 (zero rows/cols keep padded channels exactly 0).
    w_pad = jnp.zeros((k * k, CPAD, CPAD), jnp.float32).at[:, :cin, :cout].set(w_fold)
    b_pad = jnp.zeros((1, CPAD), jnp.float32).at[0, :cout].set(b_fold)
    return {"w": w_pad.astype(jnp.bfloat16), "b": b_pad}


def init_resnet_params(key, n, num_classes):
    keys = iter(jax.random.split(key, 64))
    params = {"init": init_convbn_params(next(keys), 3, 16, 3)}
    stage_cfg = [(16, 16, 1), (16, 32, 2), (32, 64, 2)]
    stages = []
    for in_c, c, stride in stage_cfg:
        blocks = []
        prev_c, s = in_c, stride
        for _ in range(n):
            blk = {
                "conv1": init_convbn_params(next(keys), prev_c, c, 3),
                "conv2": init_convbn_params(next(keys), c, c, 3),
            }
            if s != 1 or prev_c != c:
                blk["shortcut"] = init_convbn_params(next(keys), prev_c, c, 1)
            blocks.append(blk)
            prev_c, s = c, 1
        stages.append({"stride": stride, "blocks": blocks})
    params["stages"] = stages
    kw, kb = jax.random.split(next(keys))
    # PyTorch Linear(64, num_classes): y = x @ W.T + b ; store padded W.T.
    w = jax.random.normal(kw, (64, num_classes), jnp.float32) / 8.0
    b = 0.1 * jax.random.normal(kb, (num_classes,), jnp.float32)
    w_pad = jnp.zeros((CPAD, CPAD), jnp.float32).at[:64, :num_classes].set(w)
    b_pad = jnp.zeros((1, CPAD), jnp.float32).at[0, :num_classes].set(b)
    params["linear"] = {"w": w_pad.astype(jnp.bfloat16), "b": b_pad}
    return params


# ----------------------------------------------------------------------------
# Forward pass
# ----------------------------------------------------------------------------
def resnet_forward(x_nchw, params, num_classes):
    x = jnp.transpose(x_nchw, (0, 2, 3, 1))  # NCHW -> NHWC
    N, H, W, C = x.shape
    # Keep spatial dims multiples of 8 through both stride-2 stages so in-kernel
    # (H, W, C) -> (H*W, C) flattenings stay layout-preserving.
    assert H % 32 == 0 and W % 32 == 0, "spatial dims must be multiples of 32"
    x = jnp.pad(x, ((0, 0), (0, 0), (0, 0), (0, CPAD - C))).astype(jnp.bfloat16)

    x = conv3x3_relu(x, params["init"])          # init ConvBn + ApproxRelu
    for stage in params["stages"]:
        for i, blk in enumerate(stage["blocks"]):
            stride = stage["stride"] if i == 0 else 1
            if stride == 2:
                x = basic_block_s2(x, blk)       # fused block, projection shortcut
            else:
                assert "shortcut" not in blk
                x = basic_block_s1(x, blk)       # fused block, identity shortcut

    logits_pad = pool_and_linear(x, params["linear"])
    return logits_pad[:, :num_classes]


# ----------------------------------------------------------------------------
if __name__ == "__main__":
    key = jax.random.PRNGKey(0)
    k_in, k_par = jax.random.split(key)

    n_blocks_per_stage = 1
    num_classes = 10
    # CIFAR-like input: batch=2, 3 channels, 32x32 spatial
    x = jax.random.normal(k_in, (2, 3, 32, 32), jnp.float32)

    params = init_resnet_params(k_par, n_blocks_per_stage, num_classes)

    out = resnet_forward(x, params, num_classes)
    out = jax.block_until_ready(out)
    assert out.shape == (2, num_classes), out.shape
    assert bool(jnp.all(jnp.isfinite(out)))
    print("KERNEL_OK")
</pallas_src>

<mosaic_0001>
module attributes {stable_mosaic.version = 11 : i64} {
  func.func @_conv_relu_kernel(%arg0: i32, %arg1: memref<1x34x34x128xbf16, #tpu.memory_space<vmem>>, %arg2: memref<9x128x128xbf16, #tpu.memory_space<vmem>>, %arg3: memref<1x128xf32, #tpu.memory_space<vmem>>, %arg4: memref<1x32x32x128xbf16, #tpu.memory_space<vmem>>) attributes {dimension_semantics = [#tpu.dimension_semantics<parallel>], iteration_bounds = array<i64: 2>, scalar_prefetch = 0 : i64, scratch_operands = 0 : i64, tpu.core_type = #tpu.core_type<tc>, window_params = [{transform_indices = @transform_0, window_bounds = array<i64: 1, 34, 34, 128>}, {pipeline_mode = #tpu.pipeline_mode<synchronous>, transform_indices = @transform_1, window_bounds = array<i64: 9, 128, 128>}, {pipeline_mode = #tpu.pipeline_mode<synchronous>, transform_indices = @transform_2, window_bounds = array<i64: 1, 128>}, {transform_indices = @transform_3, window_bounds = array<i64: 1, 32, 32, 128>}]} {
    %c0 = arith.constant 0 : index
    %c0_0 = arith.constant 0 : index
    %c0_1 = arith.constant 0 : index
    %c0_2 = arith.constant 0 : index
    %0 = vector.load %arg1[%c0, %c0_0, %c0_1, %c0_2] : memref<1x34x34x128xbf16, #tpu.memory_space<vmem>>, vector<1x34x34x128xbf16>
    %1 = vector.shape_cast %0 : vector<1x34x34x128xbf16> to vector<34x34x128xbf16>
    %cst = arith.constant 0.000000e+00 : f32
    %2 = vector.broadcast %cst : f32 to vector<1024x128xf32>
    %3 = vector.extract_strided_slice %1 {offsets = [0, 0, 0], sizes = [32, 32, 128], strides = [1, 1, 1]} : vector<34x34x128xbf16> to vector<32x32x128xbf16>
    %4 = vector.shape_cast %3 : vector<32x32x128xbf16> to vector<1024x128xbf16>
    %c0_3 = arith.constant 0 : index
    %c0_4 = arith.constant 0 : index
    %c0_5 = arith.constant 0 : index
    %5 = vector.load %arg2[%c0_3, %c0_4, %c0_5] : memref<9x128x128xbf16, #tpu.memory_space<vmem>>, vector<1x128x128xbf16>
    %6 = vector.shape_cast %5 : vector<1x128x128xbf16> to vector<128x128xbf16>
    %cst_6 = arith.constant dense<0.000000e+00> : vector<1024x128xf32>
    %7 = tpu.matmul %4, %6, %cst_6 {dimension_numbers = #tpu.dot_dimension_numbers<[1], [0], [0], [1], [0, 0, 1, 1], [], []>} : vector<1024x128xbf16>, vector<128x128xbf16>, vector<1024x128xf32> -> vector<1024x128xf32>
    %8 = arith.addf %2, %7 : vector<1024x128xf32>
    %9 = vector.extract_strided_slice %1 {offsets = [0, 1, 0], sizes = [32, 32, 128], strides = [1, 1, 1]} : vector<34x34x128xbf16> to vector<32x32x128xbf16>
    %10 = vector.shape_cast %9 : vector<32x32x128xbf16> to vector<1024x128xbf16>
    %c1 = arith.constant 1 : index
    %c0_7 = arith.constant 0 : index
    %c0_8 = arith.constant 0 : index
    %11 = vector.load %arg2[%c1, %c0_7, %c0_8] : memref<9x128x128xbf16, #tpu.memory_space<vmem>>, vector<1x128x128xbf16>
    %12 = vector.shape_cast %11 : vector<1x128x128xbf16> to vector<128x128xbf16>
    %cst_9 = arith.constant dense<0.000000e+00> : vector<1024x128xf32>
    %13 = tpu.matmul %10, %12, %cst_9 {dimension_numbers = #tpu.dot_dimension_numbers<[1], [0], [0], [1], [0, 0, 1, 1], [], []>} : vector<1024x128xbf16>, vector<128x128xbf16>, vector<1024x128xf32> -> vector<1024x128xf32>
    %14 = arith.addf %8, %13 : vector<1024x128xf32>
    %15 = vector.extract_strided_slice %1 {offsets = [0, 2, 0], sizes = [32, 32, 128], strides = [1, 1, 1]} : vector<34x34x128xbf16> to vector<32x32x128xbf16>
    %16 = vector.shape_cast %15 : vector<32x32x128xbf16> to vector<1024x128xbf16>
    %c2 = arith.constant 2 : index
    %c0_10 = arith.constant 0 : index
    %c0_11 = arith.constant 0 : index
    %17 = vector.load %arg2[%c2, %c0_10, %c0_11] : memref<9x128x128xbf16, #tpu.memory_space<vmem>>, vector<1x128x128xbf16>
    %18 = vector.shape_cast %17 : vector<1x128x128xbf16> to vector<128x128xbf16>
    %cst_12 = arith.constant dense<0.000000e+00> : vector<1024x128xf32>
    %19 = tpu.matmul %16, %18, %cst_12 {dimension_numbers = #tpu.dot_dimension_numbers<[1], [0], [0], [1], [0, 0, 1, 1], [], []>} : vector<1024x128xbf16>, vector<128x128xbf16>, vector<1024x128xf32> -> vector<1024x128xf32>
    %20 = arith.addf %14, %19 : vector<1024x128xf32>
    %21 = vector.extract_strided_slice %1 {offsets = [1, 0, 0], sizes = [32, 32, 128], strides = [1, 1, 1]} : vector<34x34x128xbf16> to vector<32x32x128xbf16>
    %22 = vector.shape_cast %21 : vector<32x32x128xbf16> to vector<1024x128xbf16>
    %c3 = arith.constant 3 : index
    %c0_13 = arith.constant 0 : index
    %c0_14 = arith.constant 0 : index
    %23 = vector.load %arg2[%c3, %c0_13, %c0_14] : memref<9x128x128xbf16, #tpu.memory_space<vmem>>, vector<1x128x128xbf16>
    %24 = vector.shape_cast %23 : vector<1x128x128xbf16> to vector<128x128xbf16>
    %cst_15 = arith.constant dense<0.000000e+00> : vector<1024x128xf32>
    %25 = tpu.matmul %22, %24, %cst_15 {dimension_numbers = #tpu.dot_dimension_numbers<[1], [0], [0], [1], [0, 0, 1, 1], [], []>} : vector<1024x128xbf16>, vector<128x128xbf16>, vector<1024x128xf32> -> vector<1024x128xf32>
    %26 = arith.addf %20, %25 : vector<1024x128xf32>
    %27 = vector.extract_strided_slice %1 {offsets = [1, 1, 0], sizes = [32, 32, 128], strides = [1, 1, 1]} : vector<34x34x128xbf16> to vector<32x32x128xbf16>
    %28 = vector.shape_cast %27 : vector<32x32x128xbf16> to vector<1024x128xbf16>
    %c4 = arith.constant 4 : index
    %c0_16 = arith.constant 0 : index
    %c0_17 = arith.constant 0 : index
    %29 = vector.load %arg2[%c4, %c0_16, %c0_17] : memref<9x128x128xbf16, #tpu.memory_space<vmem>>, vector<1x128x128xbf16>
    %30 = vector.shape_cast %29 : vector<1x128x128xbf16> to vector<128x128xbf16>
    %cst_18 = arith.constant dense<0.000000e+00> : vector<1024x128xf32>
    %31 = tpu.matmul %28, %30, %cst_18 {dimension_numbers = #tpu.dot_dimension_numbers<[1], [0], [0], [1], [0, 0, 1, 1], [], []>} : vector<1024x128xbf16>, vector<128x128xbf16>, vector<1024x128xf32> -> vector<1024x128xf32>
    %32 = arith.addf %26, %31 : vector<1024x128xf32>
    %33 = vector.extract_strided_slice %1 {offsets = [1, 2, 0], sizes = [32, 32, 128], strides = [1, 1, 1]} : vector<34x34x128xbf16> to vector<32x32x128xbf16>
    %34 = vector.shape_cast %33 : vector<32x32x128xbf16> to vector<1024x128xbf16>
    %c5 = arith.constant 5 : index
    %c0_19 = arith.constant 0 : index
    %c0_20 = arith.constant 0 : index
    %35 = vector.load %arg2[%c5, %c0_19, %c0_20] : memref<9x128x128xbf16, #tpu.memory_space<vmem>>, vector<1x128x128xbf16>
    %36 = vector.shape_cast %35 : vector<1x128x128xbf16> to vector<128x128xbf16>
    %cst_21 = arith.constant dense<0.000000e+00> : vector<1024x128xf32>
    %37 = tpu.matmul %34, %36, %cst_21 {dimension_numbers = #tpu.dot_dimension_numbers<[1], [0], [0], [1], [0, 0, 1, 1], [], []>} : vector<1024x128xbf16>, vector<128x128xbf16>, vector<1024x128xf32> -> vector<1024x128xf32>
    %38 = arith.addf %32, %37 : vector<1024x128xf32>
    %39 = vector.extract_strided_slice %1 {offsets = [2, 0, 0], sizes = [32, 32, 128], strides = [1, 1, 1]} : vector<34x34x128xbf16> to vector<32x32x128xbf16>
    %40 = vector.shape_cast %39 : vector<32x32x128xbf16> to vector<1024x128xbf16>
    %c6 = arith.constant 6 : index
    %c0_22 = arith.constant 0 : index
    %c0_23 = arith.constant 0 : index
    %41 = vector.load %arg2[%c6, %c0_22, %c0_23] : memref<9x128x128xbf16, #tpu.memory_space<vmem>>, vector<1x128x128xbf16>
    %42 = vector.shape_cast %41 : vector<1x128x128xbf16> to vector<128x128xbf16>
    %cst_24 = arith.constant dense<0.000000e+00> : vector<1024x128xf32>
    %43 = tpu.matmul %40, %42, %cst_24 {dimension_numbers = #tpu.dot_dimension_numbers<[1], [0], [0], [1], [0, 0, 1, 1], [], []>} : vector<1024x128xbf16>, vector<128x128xbf16>, vector<1024x128xf32> -> vector<1024x128xf32>
    %44 = arith.addf %38, %43 : vector<1024x128xf32>
    %45 = vector.extract_strided_slice %1 {offsets = [2, 1, 0], sizes = [32, 32, 128], strides = [1, 1, 1]} : vector<34x34x128xbf16> to vector<32x32x128xbf16>
    %46 = vector.shape_cast %45 : vector<32x32x128xbf16> to vector<1024x128xbf16>
    %c7 = arith.constant 7 : index
    %c0_25 = arith.constant 0 : index
    %c0_26 = arith.constant 0 : index
    %47 = vector.load %arg2[%c7, %c0_25, %c0_26] : memref<9x128x128xbf16, #tpu.memory_space<vmem>>, vector<1x128x128xbf16>
    %48 = vector.shape_cast %47 : vector<1x128x128xbf16> to vector<128x128xbf16>
    %cst_27 = arith.constant dense<0.000000e+00> : vector<1024x128xf32>
    %49 = tpu.matmul %46, %48, %cst_27 {dimension_numbers = #tpu.dot_dimension_numbers<[1], [0], [0], [1], [0, 0, 1, 1], [], []>} : vector<1024x128xbf16>, vector<128x128xbf16>, vector<1024x128xf32> -> vector<1024x128xf32>
    %50 = arith.addf %44, %49 : vector<1024x128xf32>
    %51 = vector.extract_strided_slice %1 {offsets = [2, 2, 0], sizes = [32, 32, 128], strides = [1, 1, 1]} : vector<34x34x128xbf16> to vector<32x32x128xbf16>
    %52 = vector.shape_cast %51 : vector<32x32x128xbf16> to vector<1024x128xbf16>
    %c8 = arith.constant 8 : index
    %c0_28 = arith.constant 0 : index
    %c0_29 = arith.constant 0 : index
    %53 = vector.load %arg2[%c8, %c0_28, %c0_29] : memref<9x128x128xbf16, #tpu.memory_space<vmem>>, vector<1x128x128xbf16>
    %54 = vector.shape_cast %53 : vector<1x128x128xbf16> to vector<128x128xbf16>
    %cst_30 = arith.constant dense<0.000000e+00> : vector<1024x128xf32>
    %55 = tpu.matmul %52, %54, %cst_30 {dimension_numbers = #tpu.dot_dimension_numbers<[1], [0], [0], [1], [0, 0, 1, 1], [], []>} : vector<1024x128xbf16>, vector<128x128xbf16>, vector<1024x128xf32> -> vector<1024x128xf32>
    %56 = arith.addf %50, %55 : vector<1024x128xf32>
    %c0_31 = arith.constant 0 : index
    %c0_32 = arith.constant 0 : index
    %57 = vector.load %arg3[%c0_31, %c0_32] : memref<1x128xf32, #tpu.memory_space<vmem>>, vector<1x128xf32>
    %58 = vector.broadcast %57 : vector<1x128xf32> to vector<1024x128xf32>
    %59 = arith.addf %56, %58 : vector<1024x128xf32>
    %cst_33 = arith.constant 0.000000e+00 : f32
    %60 = vector.broadcast %cst_33 : f32 to vector<1024x128xf32>
    %61 = arith.maximumf %59, %60 : vector<1024x128xf32>
    %62 = vector.shape_cast %61 : vector<1024x128xf32> to vector<1x32x32x128xf32>
    %63 = arith.truncf %62 : vector<1x32x32x128xf32> to vector<1x32x32x128xbf16>
    %c0_34 = arith.constant 0 : index
    %c0_35 = arith.constant 0 : index
    %c0_36 = arith.constant 0 : index
    %c0_37 = arith.constant 0 : index
    %64 = vector.load %arg4[%c0_34, %c0_35, %c0_36, %c0_37] : memref<1x32x32x128xbf16, #tpu.memory_space<vmem>>, vector<1x32x32x128xbf16>
    tpu.vector_store %arg4[%c0_34, %c0_35, %c0_36, %c0_37], %63 {strides = array<i32>} : memref<1x32x32x128xbf16, #tpu.memory_space<vmem>>, vector<1x32x32x128xbf16>,
    return
  }
  func.func @transform_0(%arg0: i32) -> (i32, i32, i32, i32) {
    %c0_i32 = arith.constant 0 : i32
    %c0_i32_0 = arith.constant 0 : i32
    %c0_i32_1 = arith.constant 0 : i32
    %c0_i32_2 = arith.constant 0 : i32
    return %arg0, %c0_i32, %c0_i32_0, %c0_i32_1 : i32, i32, i32, i32
  }
  func.func @transform_1(%arg0: i32) -> (i32, i32, i32) {
    %c0_i32 = arith.constant 0 : i32
    %c0_i32_0 = arith.constant 0 : i32
    %c0_i32_1 = arith.constant 0 : i32
    %c0_i32_2 = arith.constant 0 : i32
    return %c0_i32, %c0_i32_0, %c0_i32_1 : i32, i32, i32
  }
  func.func @transform_2(%arg0: i32) -> (i32, i32) {
    %c0_i32 = arith.constant 0 : i32
    %c0_i32_0 = arith.constant 0 : i32
    %c0_i32_1 = arith.constant 0 : i32
    return %c0_i32, %c0_i32_0 : i32, i32
  }
  func.func @transform_3(%arg0: i32) -> (i32, i32, i32, i32) {
    %c0_i32 = arith.constant 0 : i32
    %c0_i32_0 = arith.constant 0 : i32
    %c0_i32_1 = arith.constant 0 : i32
    %c0_i32_2 = arith.constant 0 : i32
    return %arg0, %c0_i32, %c0_i32_0, %c0_i32_1 : i32, i32, i32, i32
  }
}

</mosaic_0001>

<llo_original>
// kernel: tpu_custom_call.1
$region0: #{tpu_custom_call.1}
  #allocation0 [shape = 'u32[]', space=smem, size = 0x4, offset = 0x4, fixed_abs, tag = 'smem constant byte address 0x4 - core index']
  #allocation1 [shape = 'u32[144,128]{1,0:T(1,128)}', space=vmem, size = 0x12000, scoped, tag = 'internal scratch']
  %s0 = inlined_call_operand.vmem [shape: bf16[2,34,34,128], index: 0, kind: input, shape index: {}]
  %s1 = inlined_call_operand.vmem [shape: bf16[9,128,128], index: 1, kind: input, shape index: {}]
  %s2 = inlined_call_operand.vmem [shape: f32[1,128], index: 2, kind: input, shape index: {}]
  %s3 = inlined_call_operand.hbm [shape: bf16[2,32,32,128], index: 3, kind: output, shape index: {}]
  %s4 = sld [smem:[#allocation0]]
  $region45: #{tpu_custom_call.1} parent=0
    _
  %s6 = ssub.s32 1, %s4
  %s7 = scalar_select 0, %s6, %s4
  $region1: #{tpu_custom_call.1} parent=0
    #allocation2 [shape = 'u8[524288]{0}', space=vmem, size = 0x80000, scoped, tag = 'output window, operand 0']
    #allocation3 [shape = 's32[2]{0}', space=sflag, size = 0x8, scoped, tag = 'scoped memory for tpu_custom_call.1']
    %8 = vsyncpa [#allocation3], 0
    %s9 = scalar_lea.sflag [#allocation3], 1
    %10 = vsyncpa %s9, 0
    loop: start=0, step=1, limit=4
    $region2: #{tpu_custom_call.1} parent=1 // loop_pre_header
      _
    $region3: #{tpu_custom_call.1} parent=1 // loop_header
      %s12 = sphi 0, %s16
      %p13 = scmp.ge.s32.totalorder %s12, 4
      %s22 = sphi 0, %s24
      %s25 = sphi 0, %s22
      %s26 = sphi 0, %s25
      %s42 = sphi 0, %s26
      %s46 = sphi 0, %s46
      %s48 = sphi 0, %s46
      %s49 = sphi 0, %s48
      %s63 = sphi 0, %s49
      %s67 = sphi 0, %s67
      %s69 = sphi 0, %s67
      %s70 = sphi 0, %s69
      %s84 = sphi 0, %s70
      %s90 = sphi 0, %s92
      %s93 = sphi 0, %s90
      %s94 = sphi 0, %s93
      %s110 = sphi 0, %s94
    $region4: #{tpu_custom_call.1} parent=1 // loop_header_branch
      %15 = sbr.rel (%p13) target = $region8
    $region5: #{tpu_custom_call.1} parent=1 // loop_body
      %s17 = ssub.s32 %s12, 1
      %s18 = ssub.s32 %s12, 2
      %s19 = sadd.s32 %s12, 1
      %s20 = ssub.s32 %s12, %s19
      %p21 = scmp.eq.s32.totalorder %s20, 0
      %s23 = sadd.s32 %s22, 1
      %s24 = scalar_select %p21, %s22, %s23
      %p27 = pneg %p21
      %p28 = scmp.eq.s32.totalorder %s12, 1
      %p29 = por %p27, %p28
      %p30 = scmp.ne.s32.totalorder %s22, %s25
      %p31 = scmp.eq.s32.totalorder %s12, 0
      %p32 = por %p30, %p31
      %p33 = scmp.ne.s32.totalorder %s22, %s25
      %p34 = scmp.eq.s32.totalorder %s17, 1
      %p35 = por %p33, %p34
      %p36 = scmp.ne.s32.totalorder %s25, %s26
      %p37 = scmp.eq.s32.totalorder %s17, 0
      %p38 = por %p36, %p37
      %p39 = scmp.ne.s32.totalorder %s25, %s26
      %p40 = scmp.eq.s32.totalorder %s18, 1
      %p41 = por %p39, %p40
      %p43 = scmp.ne.s32.totalorder %s26, %s42
      %p44 = scmp.eq.s32.totalorder %s18, 0
      %p45 = por %p43, %p44
      %s47 = sadd.s32 %s46, 1
      %p50 = scmp.eq.s32.totalorder %s12, 1
      %p51 = scmp.ne.s32.totalorder %s46, %s48
      %p52 = scmp.eq.s32.totalorder %s12, 0
      %p53 = por %p51, %p52
      %p54 = scmp.ne.s32.totalorder %s46, %s48
      %p55 = scmp.eq.s32.totalorder %s17, 1
      %p56 = por %p54, %p55
      %p57 = scmp.ne.s32.totalorder %s48, %s49
      %p58 = scmp.eq.s32.totalorder %s17, 0
      %p59 = por %p57, %p58
      %p60 = scmp.ne.s32.totalorder %s48, %s49
      %p61 = scmp.eq.s32.totalorder %s18, 1
      %p62 = por %p60, %p61
      %p64 = scmp.ne.s32.totalorder %s49, %s63
      %p65 = scmp.eq.s32.totalorder %s18, 0
      %p66 = por %p64, %p65
      %s68 = sadd.s32 %s67, 1
      %p71 = scmp.eq.s32.totalorder %s12, 1
      %p72 = scmp.ne.s32.totalorder %s67, %s69
      %p73 = scmp.eq.s32.totalorder %s12, 0
      %p74 = por %p72, %p73
      %p75 = scmp.ne.s32.totalorder %s67, %s69
      %p76 = scmp.eq.s32.totalorder %s17, 1
      %p77 = por %p75, %p76
      %p78 = scmp.ne.s32.totalorder %s69, %s70
      %p79 = scmp.eq.s32.totalorder %s17, 0
      %p80 = por %p78, %p79
      %p81 = scmp.ne.s32.totalorder %s69, %s70
      %p82 = scmp.eq.s32.totalorder %s18, 1
      %p83 = por %p81, %p82
      %p85 = scmp.ne.s32.totalorder %s70, %s84
      %p86 = scmp.eq.s32.totalorder %s18, 0
      %p87 = por %p85, %p86
      %s88 = ssub.s32 %s12, %s19
      %p89 = scmp.eq.s32.totalorder %s88, 0
      %s91 = sadd.s32 %s90, 1
      %s92 = scalar_select %p89, %s90, %s91
      %p95 = pneg %p89
      %p96 = scmp.eq.s32.totalorder %s12, 1
      %p97 = por %p95, %p96
      %p98 = scmp.ne.s32.totalorder %s90, %s93
      %p99 = scmp.eq.s32.totalorder %s12, 0
      %p100 = por %p98, %p99
      %p101 = scmp.ne.s32.totalorder %s90, %s93
      %p102 = scmp.eq.s32.totalorder %s17, 1
      %p103 = por %p101, %p102
      %p104 = scmp.ne.s32.totalorder %s93, %s94
      %p105 = scmp.eq.s32.totalorder %s17, 0
      %p106 = por %p104, %p105
      %p107 = scmp.ne.s32.totalorder %s93, %s94
      %p108 = scmp.eq.s32.totalorder %s18, 1
      %p109 = por %p107, %p108
      %p111 = scmp.ne.s32.totalorder %s94, %s110
      %p112 = scmp.eq.s32.totalorder %s18, 0
      %p113 = por %p111, %p112
      %p114 = scmp.le.s32.totalorder 1, %s12
      %p115 = scmp.lt.s32.totalorder %s12, 3
      %p116 = pnand %p114, %p115
      %p117 = pneg %p116
      // Predicated region
      $region9: #{tpu_custom_call.1} parent=5 // pred_check
        _
      $region10: #{tpu_custom_call.1} parent=5 // pred_check_branch
        %119 = sbr.rel (%p116) target = $region12
      $region11: #{tpu_custom_call.1} parent=5 // pred_region
        %s120 = ssub.s32 %s12, 1
        // Predicated region
        $region13: #{tpu_custom_call.1} parent=11 // pred_check
          %p121 = pneg %p59
        $region14: #{tpu_custom_call.1} parent=11 // pred_check_branch
          %123 = sbr.rel (%p121) target = $region16
        $region15: #{tpu_custom_call.1} parent=11 // pred_region
          _
        $region16: #{tpu_custom_call.1} parent=11 // pred_fallthru
          _
        // Predicated region
        $region17: #{tpu_custom_call.1} parent=11 // pred_check
          %p124 = pneg %p80
        $region18: #{tpu_custom_call.1} parent=11 // pred_check_branch
          %126 = sbr.rel (%p124) target = $region20
        $region19: #{tpu_custom_call.1} parent=11 // pred_region
          _
        $region20: #{tpu_custom_call.1} parent=11 // pred_fallthru
          _
      $region12: #{tpu_custom_call.1} parent=5 // pred_fallthru
        _
      %p127 = scmp.lt.s32.totalorder %s12, 2
      // Predicated region
      $region21: #{tpu_custom_call.1} parent=5 // pred_check
        %p128 = pneg %p127
      $region22: #{tpu_custom_call.1} parent=5 // pred_check_branch
        %130 = sbr.rel (%p128) target = $region24
      $region23: #{tpu_custom_call.1} parent=5 // pred_region
        // Predicated region
        $region25: #{tpu_custom_call.1} parent=23 // pred_check
          %p131 = pneg %p32
        $region26: #{tpu_custom_call.1} parent=23 // pred_check_branch
          %133 = sbr.rel (%p131) target = $region28
        $region27: #{tpu_custom_call.1} parent=23 // pred_region
          %p134 = scmp.lt.s32.totalorder %s12, 1
          %s135 = scalar_select %p134, %s12, 1
          %s136 = smul.addr %s135, 170
          %s137 = smul.addr %s136, 4
          %s138 = scalar_lea.vmem %s0, %s137
        $region28: #{tpu_custom_call.1} parent=23 // pred_fallthru
          _
      $region24: #{tpu_custom_call.1} parent=5 // pred_fallthru
        _
      %p139 = scmp.le.s32.totalorder 1, %s12
      %p140 = scmp.lt.s32.totalorder %s12, 3
      %p141 = pnand %p139, %p140
      %p142 = pneg %p141
      // Predicated region
      $region29: #{tpu_custom_call.1} parent=5 // pred_check
        _
      $region30: #{tpu_custom_call.1} parent=5 // pred_check_branch
        %144 = sbr.rel (%p141) target = $region32
      $region31: #{tpu_custom_call.1} parent=5 // pred_region
        %s145 = ssub.s32 %s12, 1
        %p146 = scmp.lt.s32.totalorder %s17, 1
        %s147 = scalar_select %p146, %s17, 1
        %s148 = smul.addr %s147, 170
        %s149 = smul.addr %s148, 4
        %s150 = scalar_lea.vmem %s0, %s149
        %p151 = pneg %p38
        %p152 = pneg %p35
        %p153 = pneg %p59
        %p154 = pneg %p56
        %p155 = pneg %p80
        %p156 = pneg %p77
        %p157 = pneg %p106
        %p158 = pneg %p103
        %s159 = sand.u32 %s93, 1
        %s160 = scalar_lea.sflag [#allocation3], %s159
        %s161 = sand.u32 %s93, 1
        %s162 = smul.addr %s161, 512
        %s163 = scalar_lea.vmem [#allocation2], %s162
        %p164 = scmp.lt.s32.totalorder %s17, 1
        %s165 = scalar_select %p164, %s17, 1
        %s166 = smul.addr %s165, 170
        %s167 = smul.addr %s166, 4
        %s168 = scalar_lea.vmem %s0, %s167
        %v170 = vld [vmem:[%s168] sm:$0xf]
        %v171 = vld [vmem:[%s168 + $0x4] sm:$0xf]
        %v172 = vld [vmem:[%s168 + $0x8] sm:$0xf]
        %v173 = vld [vmem:[%s168 + $0xc] sm:$0xf]
        %v174 = vld [vmem:[%s168 + $0x10] sm:$0x1]
        %v175 = vld [vmem:[%s168 + $0x14] sm:$0xf]
        %v176 = vld [vmem:[%s168 + $0x18] sm:$0xf]
        %v177 = vld [vmem:[%s168 + $0x1c] sm:$0xf]
        %v178 = vld [vmem:[%s168 + $0x20] sm:$0xf]
        %v179 = vld [vmem:[%s168 + $0x24] sm:$0x1]
        %v180 = vld [vmem:[%s168 + $0x28] sm:$0xf]
        %v181 = vld [vmem:[%s168 + $0x2c] sm:$0xf]
        %v182 = vld [vmem:[%s168 + $0x30] sm:$0xf]
        %v183 = vld [vmem:[%s168 + $0x34] sm:$0xf]
        %v184 = vld [vmem:[%s168 + $0x38] sm:$0x1]
        %v185 = vld [vmem:[%s168 + $0x3c] sm:$0xf]
        %v186 = vld [vmem:[%s168 + $0x40] sm:$0xf]
        %v187 = vld [vmem:[%s168 + $0x44] sm:$0xf]
        %v188 = vld [vmem:[%s168 + $0x48] sm:$0xf]
        %v189 = vld [vmem:[%s168 + $0x4c] sm:$0x1]
        %v190 = vld [vmem:[%s168 + $0x50] sm:$0xf]
        %v191 = vld [vmem:[%s168 + $0x54] sm:$0xf]
        %v192 = vld [vmem:[%s168 + $0x58] sm:$0xf]
        %v193 = vld [vmem:[%s168 + $0x5c] sm:$0xf]
        %v194 = vld [vmem:[%s168 + $0x60] sm:$0x1]
        %v195 = vld [vmem:[%s168 + $0x64] sm:$0xf]
        %v196 = vld [vmem:[%s168 + $0x68] sm:$0xf]
        %v197 = vld [vmem:[%s168 + $0x6c] sm:$0xf]
        %v198 = vld [vmem:[%s168 + $0x70] sm:$0xf]
        %v199 = vld [vmem:[%s168 + $0x74] sm:$0x1]
        %v200 = vld [vmem:[%s168 + $0x78] sm:$0xf]
        %v201 = vld [vmem:[%s168 + $0x7c] sm:$0xf]
        %v202 = vld [vmem:[%s168 + $0x80] sm:$0xf]
        %v203 = vld [vmem:[%s168 + $0x84] sm:$0xf]
        %v204 = vld [vmem:[%s168 + $0x88] sm:$0x1]
        %v205 = vld [vmem:[%s168 + $0x8c] sm:$0xf]
        %v206 = vld [vmem:[%s168 + $0x90] sm:$0xf]
        %v207 = vld [vmem:[%s168 + $0x94] sm:$0xf]
        %v208 = vld [vmem:[%s168 + $0x98] sm:$0xf]
        %v209 = vld [vmem:[%s168 + $0x9c] sm:$0x1]
        %v210 = vld [vmem:[%s168 + $0xa0] sm:$0xf]
        %v211 = vld [vmem:[%s168 + $0xa4] sm:$0xf]
        %v212 = vld [vmem:[%s168 + $0xa8] sm:$0xf]
        %v213 = vld [vmem:[%s168 + $0xac] sm:$0xf]
        %v214 = vld [vmem:[%s168 + $0xb0] sm:$0x1]
        %v215 = vld [vmem:[%s168 + $0xb4] sm:$0xf]
        %v216 = vld [vmem:[%s168 + $0xb8] sm:$0xf]
        %v217 = vld [vmem:[%s168 + $0xbc] sm:$0xf]
        %v218 = vld [vmem:[%s168 + $0xc0] sm:$0xf]
        %v219 = vld [vmem:[%s168 + $0xc4] sm:$0x1]
        %v220 = vld [vmem:[%s168 + $0xc8] sm:$0xf]
        %v221 = vld [vmem:[%s168 + $0xcc] sm:$0xf]
        %v222 = vld [vmem:[%s168 + $0xd0] sm:$0xf]
        %v223 = vld [vmem:[%s168 + $0xd4] sm:$0xf]
        %v224 = vld [vmem:[%s168 + $0xd8] sm:$0x1]
        %v225 = vld [vmem:[%s168 + $0xdc] sm:$0xf]
        %v226 = vld [vmem:[%s168 + $0xe0] sm:$0xf]
        %v227 = vld [vmem:[%s168 + $0xe4] sm:$0xf]
        %v228 = vld [vmem:[%s168 + $0xe8] sm:$0xf]
        %v229 = vld [vmem:[%s168 + $0xec] sm:$0x1]
        %v230 = vld [vmem:[%s168 + $0xf0] sm:$0xf]
        %v231 = vld [vmem:[%s168 + $0xf4] sm:$0xf]
        %v232 = vld [vmem:[%s168 + $0xf8] sm:$0xf]
        %v233 = vld [vmem:[%s168 + $0xfc] sm:$0xf]
        %v234 = vld [vmem:[%s168 + $0x100] sm:$0x1]
        %v235 = vld [vmem:[%s168 + $0x104] sm:$0xf]
        %v236 = vld [vmem:[%s168 + $0x108] sm:$0xf]
        %v237 = vld [vmem:[%s168 + $0x10c] sm:$0xf]
        %v238 = vld [vmem:[%s168 + $0x110] sm:$0xf]
        %v239 = vld [vmem:[%s168 + $0x114] sm:$0x1]
        %v240 = vld [vmem:[%s168 + $0x118] sm:$0xf]
        %v241 = vld [vmem:[%s168 + $0x11c] sm:$0xf]
        %v242 = vld [vmem:[%s168 + $0x120] sm:$0xf]
        %v243 = vld [vmem:[%s168 + $0x124] sm:$0xf]
        %v244 = vld [vmem:[%s168 + $0x128] sm:$0x1]
        %v245 = vld [vmem:[%s168 + $0x12c] sm:$0xf]
        %v246 = vld [vmem:[%s168 + $0x130] sm:$0xf]
        %v247 = vld [vmem:[%s168 + $0x134] sm:$0xf]
        %v248 = vld [vmem:[%s168 + $0x138] sm:$0xf]
        %v249 = vld [vmem:[%s168 + $0x13c] sm:$0x1]
        %v250 = vld [vmem:[%s168 + $0x140] sm:$0xf]
        %v251 = vld [vmem:[%s168 + $0x144] sm:$0xf]
        %v252 = vld [vmem:[%s168 + $0x148] sm:$0xf]
        %v253 = vld [vmem:[%s168 + $0x14c] sm:$0xf]
        %v254 = vld [vmem:[%s168 + $0x150] sm:$0x1]
        %v255 = vld [vmem:[%s168 + $0x154] sm:$0xf]
        %v256 = vld [vmem:[%s168 + $0x158] sm:$0xf]
        %v257 = vld [vmem:[%s168 + $0x15c] sm:$0xf]
        %v258 = vld [vmem:[%s168 + $0x160] sm:$0xf]
        %v259 = vld [vmem:[%s168 + $0x164] sm:$0x1]
        %v260 = vld [vmem:[%s168 + $0x168] sm:$0xf]
        %v261 = vld [vmem:[%s168 + $0x16c] sm:$0xf]
        %v262 = vld [vmem:[%s168 + $0x170] sm:$0xf]
        %v263 = vld [vmem:[%s168 + $0x174] sm:$0xf]
        %v264 = vld [vmem:[%s168 + $0x178] sm:$0x1]
        %v265 = vld [vmem:[%s168 + $0x17c] sm:$0xf]
        %v266 = vld [vmem:[%s168 + $0x180] sm:$0xf]
        %v267 = vld [vmem:[%s168 + $0x184] sm:$0xf]
        %v268 = vld [vmem:[%s168 + $0x188] sm:$0xf]
        %v269 = vld [vmem:[%s168 + $0x18c] sm:$0x1]
        %v270 = vld [vmem:[%s168 + $0x190] sm:$0xf]
        %v271 = vld [vmem:[%s168 + $0x194] sm:$0xf]
        %v272 = vld [vmem:[%s168 + $0x198] sm:$0xf]
        %v273 = vld [vmem:[%s168 + $0x19c] sm:$0xf]
        %v274 = vld [vmem:[%s168 + $0x1a0] sm:$0x1]
        %v275 = vld [vmem:[%s168 + $0x1a4] sm:$0xf]
        %v276 = vld [vmem:[%s168 + $0x1a8] sm:$0xf]
        %v277 = vld [vmem:[%s168 + $0x1ac] sm:$0xf]
        %v278 = vld [vmem:[%s168 + $0x1b0] sm:$0xf]
        %v279 = vld [vmem:[%s168 + $0x1b4] sm:$0x1]
        %v280 = vld [vmem:[%s168 + $0x1b8] sm:$0xf]
        %v281 = vld [vmem:[%s168 + $0x1bc] sm:$0xf]
        %v282 = vld [vmem:[%s168 + $0x1c0] sm:$0xf]
        %v283 = vld [vmem:[%s168 + $0x1c4] sm:$0xf]
        %v284 = vld [vmem:[%s168 + $0x1c8] sm:$0x1]
        %v285 = vld [vmem:[%s168 + $0x1cc] sm:$0xf]
        %v286 = vld [vmem:[%s168 + $0x1d0] sm:$0xf]
        %v287 = vld [vmem:[%s168 + $0x1d4] sm:$0xf]
        %v288 = vld [vmem:[%s168 + $0x1d8] sm:$0xf]
        %v289 = vld [vmem:[%s168 + $0x1dc] sm:$0x1]
        %v290 = vld [vmem:[%s168 + $0x1e0] sm:$0xf]
        %v291 = vld [vmem:[%s168 + $0x1e4] sm:$0xf]
        %v292 = vld [vmem:[%s168 + $0x1e8] sm:$0xf]
        %v293 = vld [vmem:[%s168 + $0x1ec] sm:$0xf]
        %v294 = vld [vmem:[%s168 + $0x1f0] sm:$0x1]
        %v295 = vld [vmem:[%s168 + $0x1f4] sm:$0xf]
        %v296 = vld [vmem:[%s168 + $0x1f8] sm:$0xf]
        %v297 = vld [vmem:[%s168 + $0x1fc] sm:$0xf]
        %v298 = vld [vmem:[%s168 + $0x200] sm:$0xf]
        %v299 = vld [vmem:[%s168 + $0x204] sm:$0x1]
        %v300 = vld [vmem:[%s168 + $0x208] sm:$0xf]
        %v301 = vld [vmem:[%s168 + $0x20c] sm:$0xf]
        %v302 = vld [vmem:[%s168 + $0x210] sm:$0xf]
        %v303 = vld [vmem:[%s168 + $0x214] sm:$0xf]
        %v304 = vld [vmem:[%s168 + $0x218] sm:$0x1]
        %v305 = vld [vmem:[%s168 + $0x21c] sm:$0xf]
        %v306 = vld [vmem:[%s168 + $0x220] sm:$0xf]
        %v307 = vld [vmem:[%s168 + $0x224] sm:$0xf]
        %v308 = vld [vmem:[%s168 + $0x228] sm:$0xf]
        %v309 = vld [vmem:[%s168 + $0x22c] sm:$0x1]
        %v310 = vld [vmem:[%s168 + $0x230] sm:$0xf]
        %v311 = vld [vmem:[%s168 + $0x234] sm:$0xf]
        %v312 = vld [vmem:[%s168 + $0x238] sm:$0xf]
        %v313 = vld [vmem:[%s168 + $0x23c] sm:$0xf]
        %v314 = vld [vmem:[%s168 + $0x240] sm:$0x1]
        %v315 = vld [vmem:[%s168 + $0x244] sm:$0xf]
        %v316 = vld [vmem:[%s168 + $0x248] sm:$0xf]
        %v317 = vld [vmem:[%s168 + $0x24c] sm:$0xf]
        %v318 = vld [vmem:[%s168 + $0x250] sm:$0xf]
        %v319 = vld [vmem:[%s168 + $0x254] sm:$0x1]
        %v320 = vld [vmem:[%s168 + $0x258] sm:$0xf]
        %v321 = vld [vmem:[%s168 + $0x25c] sm:$0xf]
        %v322 = vld [vmem:[%s168 + $0x260] sm:$0xf]
        %v323 = vld [vmem:[%s168 + $0x264] sm:$0xf]
        %v324 = vld [vmem:[%s168 + $0x268] sm:$0x1]
        %v325 = vld [vmem:[%s168 + $0x26c] sm:$0xf]
        %v326 = vld [vmem:[%s168 + $0x270] sm:$0xf]
        %v327 = vld [vmem:[%s168 + $0x274] sm:$0xf]
        %v328 = vld [vmem:[%s168 + $0x278] sm:$0xf]
        %v329 = vld [vmem:[%s168 + $0x27c] sm:$0x1]
        %v330 = vld [vmem:[%s168 + $0x280] sm:$0xf]
        %v331 = vld [vmem:[%s168 + $0x284] sm:$0xf]
        %v332 = vld [vmem:[%s168 + $0x288] sm:$0xf]
        %v333 = vld [vmem:[%s168 + $0x28c] sm:$0xf]
        %v334 = vld [vmem:[%s168 + $0x290] sm:$0x1]
        %v335 = vld [vmem:[%s168 + $0x294] sm:$0xf]
        %v336 = vld [vmem:[%s168 + $0x298] sm:$0xf]
        %v337 = vld [vmem:[%s168 + $0x29c] sm:$0xf]
        %v338 = vld [vmem:[%s168 + $0x2a0] sm:$0xf]
        %v339 = vld [vmem:[%s168 + $0x2a4] sm:$0x1]
        %v340 = vld [vmem:[%s1] sm:$0xf]
        %v341 = vld [vmem:[%s1 + $0x4] sm:$0xf]
        %v342 = vld [vmem:[%s1 + $0x8] sm:$0xf]
        %v343 = vld [vmem:[%s1 + $0xc] sm:$0xf]
        %v344 = vld [vmem:[%s1 + $0x10] sm:$0xf]
        %v345 = vld [vmem:[%s1 + $0x14] sm:$0xf]
        %v346 = vld [vmem:[%s1 + $0x18] sm:$0xf]
        %v347 = vld [vmem:[%s1 + $0x1c] sm:$0xf]
        %v348 = vld [vmem:[%s1 + $0x20] sm:$0xf]
        %v349 = vld [vmem:[%s1 + $0x24] sm:$0xf]
        %v350 = vld [vmem:[%s1 + $0x28] sm:$0xf]
        %v351 = vld [vmem:[%s1 + $0x2c] sm:$0xf]
        %v352 = vld [vmem:[%s1 + $0x30] sm:$0xf]
        %v353 = vld [vmem:[%s1 + $0x34] sm:$0xf]
        %v354 = vld [vmem:[%s1 + $0x38] sm:$0xf]
        %v355 = vld [vmem:[%s1 + $0x3c] sm:$0xf]
        %vm356 = vsmask.f32 3328
        %vm357 = vsmask.f32 7440
        %vm358 = vmor %vm356, %vm357
        %v360 = vshrl.u32 %v170, 16
        %v362 = vrot.slane %v360, 4
        %v363 = vshll.u32 %v170, 16
        %v365 = vrot.slane %v363, 5
        %v366 = vor.u32 %v362, %v365
        %v367 = vrot.slane %v366, 4
        %v369 = vshll.u32 %v171, 16
        %v371 = vrot.slane %v369, 5
        %v372 = vsel %vm358, %v367, %v371
        %v373 = vshrl.u32 %v171, 16
        %v375 = vrot.slane %v373, 4
        %v376 = vor.u32 %v375, %v371
        %v377 = vrot.slane %v376, 4
        %v379 = vshll.u32 %v172, 16
        %v381 = vrot.slane %v379, 5
        %v382 = vsel %vm358, %v377, %v381
        %v383 = vshrl.u32 %v172, 16
        %v385 = vrot.slane %v383, 4
        %v386 = vor.u32 %v385, %v381
        %v387 = vrot.slane %v386, 4
        %v389 = vshll.u32 %v173, 16
        %v391 = vrot.slane %v389, 5
        %v392 = vsel %vm358, %v387, %v391
        %v393 = vshrl.u32 %v173, 16
        %v395 = vrot.slane %v393, 4
        %v396 = vor.u32 %v395, %v391
        %v397 = vrot.slane %v396, 4
        %v399 = vshll.u32 %v174, 16
        %v401 = vrot.slane %v399, 5
        %v402 = vsel %vm358, %v397, %v401
        %v404 = vshrl.u32 %v175, 16
        %v406 = vrot.slane %v404, 4
        %v407 = vshll.u32 %v175, 16
        %v409 = vrot.slane %v407, 5
        %v410 = vor.u32 %v406, %v409
        %v411 = vrot.slane %v410, 4
        %v413 = vshll.u32 %v176, 16
        %v415 = vrot.slane %v413, 5
        %v416 = vsel %vm358, %v411, %v415
        %v417 = vshrl.u32 %v176, 16
        %v419 = vrot.slane %v417, 4
        %v420 = vor.u32 %v419, %v415
        %v421 = vrot.slane %v420, 4
        %v423 = vshll.u32 %v177, 16
        %v425 = vrot.slane %v423, 5
        %v426 = vsel %vm358, %v421, %v425
        %v427 = vshrl.u32 %v177, 16
        %v429 = vrot.slane %v427, 4
        %v430 = vor.u32 %v429, %v425
        %v431 = vrot.slane %v430, 4
        %v433 = vshll.u32 %v178, 16
        %v435 = vrot.slane %v433, 5
        %v436 = vsel %vm358, %v431, %v435
        %v437 = vshrl.u32 %v178, 16
        %v439 = vrot.slane %v437, 4
        %v440 = vor.u32 %v439, %v435
        %v441 = vrot.slane %v440, 4
        %v443 = vshll.u32 %v179, 16
        %v445 = vrot.slane %v443, 5
        %v446 = vsel %vm358, %v441, %v445
        %v448 = vshrl.u32 %v180, 16
        %v450 = vrot.slane %v448, 4
        %v451 = vshll.u32 %v180, 16
        %v453 = vrot.slane %v451, 5
        %v454 = vor.u32 %v450, %v453
        %v455 = vrot.slane %v454, 4
        %v457 = vshll.u32 %v181, 16
        %v459 = vrot.slane %v457, 5
        %v460 = vsel %vm358, %v455, %v459
        %v461 = vshrl.u32 %v181, 16
        %v463 = vrot.slane %v461, 4
        %v464 = vor.u32 %v463, %v459
        %v465 = vrot.slane %v464, 4
        %v467 = vshll.u32 %v182, 16
        %v469 = vrot.slane %v467, 5
        %v470 = vsel %vm358, %v465, %v469
        %v471 = vshrl.u32 %v182, 16
        %v473 = vrot.slane %v471, 4
        %v474 = vor.u32 %v473, %v469
        %v475 = vrot.slane %v474, 4
        %v477 = vshll.u32 %v183, 16
        %v479 = vrot.slane %v477, 5
        %v480 = vsel %vm358, %v475, %v479
        %v481 = vshrl.u32 %v183, 16
        %v483 = vrot.slane %v481, 4
        %v484 = vor.u32 %v483, %v479
        %v485 = vrot.slane %v484, 4
        %v487 = vshll.u32 %v184, 16
        %v489 = vrot.slane %v487, 5
        %v490 = vsel %vm358, %v485, %v489
        %v492 = vshrl.u32 %v185, 16
        %v494 = vrot.slane %v492, 4
        %v495 = vshll.u32 %v185, 16
        %v497 = vrot.slane %v495, 5
        %v498 = vor.u32 %v494, %v497
        %v499 = vrot.slane %v498, 4
        %v501 = vshll.u32 %v186, 16
        %v503 = vrot.slane %v501, 5
        %v504 = vsel %vm358, %v499, %v503
        %v505 = vshrl.u32 %v186, 16
        %v507 = vrot.slane %v505, 4
        %v508 = vor.u32 %v507, %v503
        %v509 = vrot.slane %v508, 4
        %v511 = vshll.u32 %v187, 16
        %v513 = vrot.slane %v511, 5
        %v514 = vsel %vm358, %v509, %v513
        %v515 = vshrl.u32 %v187, 16
        %v517 = vrot.slane %v515, 4
        %v518 = vor.u32 %v517, %v513
        %v519 = vrot.slane %v518, 4
        %v521 = vshll.u32 %v188, 16
        %v523 = vrot.slane %v521, 5
        %v524 = vsel %vm358, %v519, %v523
        %v525 = vshrl.u32 %v188, 16
        %v527 = vrot.slane %v525, 4
        %v528 = vor.u32 %v527, %v523
        %v529 = vrot.slane %v528, 4
        %v531 = vshll.u32 %v189, 16
        %v533 = vrot.slane %v531, 5
        %v534 = vsel %vm358, %v529, %v533
        %v536 = vshrl.u32 %v190, 16
        %v538 = vrot.slane %v536, 4
        %v539 = vshll.u32 %v190, 16
        %v541 = vrot.slane %v539, 5
        %v542 = vor.u32 %v538, %v541
        %v543 = vrot.slane %v542, 4
        %v545 = vshll.u32 %v191, 16
        %v547 = vrot.slane %v545, 5
        %v548 = vsel %vm358, %v543, %v547
        %v549 = vshrl.u32 %v191, 16
        %v551 = vrot.slane %v549, 4
        %v552 = vor.u32 %v551, %v547
        %v553 = vrot.slane %v552, 4
        %v555 = vshll.u32 %v192, 16
        %v557 = vrot.slane %v555, 5
        %v558 = vsel %vm358, %v553, %v557
        %v559 = vshrl.u32 %v192, 16
        %v561 = vrot.slane %v559, 4
        %v562 = vor.u32 %v561, %v557
        %v563 = vrot.slane %v562, 4
        %v565 = vshll.u32 %v193, 16
        %v567 = vrot.slane %v565, 5
        %v568 = vsel %vm358, %v563, %v567
        %v569 = vshrl.u32 %v193, 16
        %v571 = vrot.slane %v569, 4
        %v572 = vor.u32 %v571, %v567
        %v573 = vrot.slane %v572, 4
        %v575 = vshll.u32 %v194, 16
        %v577 = vrot.slane %v575, 5
        %v578 = vsel %vm358, %v573, %v577
        %v580 = vshrl.u32 %v195, 16
        %v582 = vrot.slane %v580, 4
        %v583 = vshll.u32 %v195, 16
        %v585 = vrot.slane %v583, 5
        %v586 = vor.u32 %v582, %v585
        %v587 = vrot.slane %v586, 4
        %v589 = vshll.u32 %v196, 16
        %v591 = vrot.slane %v589, 5
        %v592 = vsel %vm358, %v587, %v591
        %v593 = vshrl.u32 %v196, 16
        %v595 = vrot.slane %v593, 4
        %v596 = vor.u32 %v595, %v591
        %v597 = vrot.slane %v596, 4
        %v599 = vshll.u32 %v197, 16
        %v601 = vrot.slane %v599, 5
        %v602 = vsel %vm358, %v597, %v601
        %v603 = vshrl.u32 %v197, 16
        %v605 = vrot.slane %v603, 4
        %v606 = vor.u32 %v605, %v601
        %v607 = vrot.slane %v606, 4
        %v609 = vshll.u32 %v198, 16
        %v611 = vrot.slane %v609, 5
        %v612 = vsel %vm358, %v607, %v611
        %v613 = vshrl.u32 %v198, 16
        %v615 = vrot.slane %v613, 4
        %v616 = vor.u32 %v615, %v611
        %v617 = vrot.slane %v616, 4
        %v619 = vshll.u32 %v199, 16
        %v621 = vrot.slane %v619, 5
        %v622 = vsel %vm358, %v617, %v621
        %v624 = vshrl.u32 %v200, 16
        %v626 = vrot.slane %v624, 4
        %v627 = vshll.u32 %v200, 16
        %v629 = vrot.slane %v627, 5
        %v630 = vor.u32 %v626, %v629
        %v631 = vrot.slane %v630, 4
        %v633 = vshll.u32 %v201, 16
        %v635 = vrot.slane %v633, 5
        %v636 = vsel %vm358, %v631, %v635
        %v637 = vshrl.u32 %v201, 16
        %v639 = vrot.slane %v637, 4
        %v640 = vor.u32 %v639, %v635
        %v641 = vrot.slane %v640, 4
        %v643 = vshll.u32 %v202, 16
        %v645 = vrot.slane %v643, 5
        %v646 = vsel %vm358, %v641, %v645
        %v647 = vshrl.u32 %v202, 16
        %v649 = vrot.slane %v647, 4
        %v650 = vor.u32 %v649, %v645
        %v651 = vrot.slane %v650, 4
        %v653 = vshll.u32 %v203, 16
        %v655 = vrot.slane %v653, 5
        %v656 = vsel %vm358, %v651, %v655
        %v657 = vshrl.u32 %v203, 16
        %v659 = vrot.slane %v657, 4
        %v660 = vor.u32 %v659, %v655
        %v661 = vrot.slane %v660, 4
        %v663 = vshll.u32 %v204, 16
        %v665 = vrot.slane %v663, 5
        %v666 = vsel %vm358, %v661, %v665
        %v668 = vshrl.u32 %v205, 16
        %v670 = vrot.slane %v668, 4
        %v671 = vshll.u32 %v205, 16
        %v673 = vrot.slane %v671, 5
        %v674 = vor.u32 %v670, %v673
        %v675 = vrot.slane %v674, 4
        %v677 = vshll.u32 %v206, 16
        %v679 = vrot.slane %v677, 5
        %v680 = vsel %vm358, %v675, %v679
        %v681 = vshrl.u32 %v206, 16
        %v683 = vrot.slane %v681, 4
        %v684 = vor.u32 %v683, %v679
        %v685 = vrot.slane %v684, 4
        %v687 = vshll.u32 %v207, 16
        %v689 = vrot.slane %v687, 5
        %v690 = vsel %vm358, %v685, %v689
        %v691 = vshrl.u32 %v207, 16
        %v693 = vrot.slane %v691, 4
        %v694 = vor.u32 %v693, %v689
        %v695 = vrot.slane %v694, 4
        %v697 = vshll.u32 %v208, 16
        %v699 = vrot.slane %v697, 5
        %v700 = vsel %vm358, %v695, %v699
        %v701 = vshrl.u32 %v208, 16
        %v703 = vrot.slane %v701, 4
        %v704 = vor.u32 %v703, %v699
        %v705 = vrot.slane %v704, 4
        %v707 = vshll.u32 %v209, 16
        %v709 = vrot.slane %v707, 5
        %v710 = vsel %vm358, %v705, %v709
        %v712 = vshrl.u32 %v210, 16
        %v714 = vrot.slane %v712, 4
        %v715 = vshll.u32 %v210, 16
        %v717 = vrot.slane %v715, 5
        %v718 = vor.u32 %v714, %v717
        %v719 = vrot.slane %v718, 4
        %v721 = vshll.u32 %v211, 16
        %v723 = vrot.slane %v721, 5
        %v724 = vsel %vm358, %v719, %v723
        %v725 = vshrl.u32 %v211, 16
        %v727 = vrot.slane %v725, 4
        %v728 = vor.u32 %v727, %v723
        %v729 = vrot.slane %v728, 4
        %v731 = vshll.u32 %v212, 16
        %v733 = vrot.slane %v731, 5
        %v734 = vsel %vm358, %v729, %v733
        %v735 = vshrl.u32 %v212, 16
        %v737 = vrot.slane %v735, 4
        %v738 = vor.u32 %v737, %v733
        %v739 = vrot.slane %v738, 4
        %v741 = vshll.u32 %v213, 16
        %v743 = vrot.slane %v741, 5
        %v744 = vsel %vm358, %v739, %v743
        %v745 = vshrl.u32 %v213, 16
        %v747 = vrot.slane %v745, 4
        %v748 = vor.u32 %v747, %v743
        %v749 = vrot.slane %v748, 4
        %v751 = vshll.u32 %v214, 16
        %v753 = vrot.slane %v751, 5
        %v754 = vsel %vm358, %v749, %v753
        %v756 = vshrl.u32 %v215, 16
        %v758 = vrot.slane %v756, 4
        %v759 = vshll.u32 %v215, 16
        %v761 = vrot.slane %v759, 5
        %v762 = vor.u32 %v758, %v761
        %v763 = vrot.slane %v762, 4
        %v765 = vshll.u32 %v216, 16
        %v767 = vrot.slane %v765, 5
        %v768 = vsel %vm358, %v763, %v767
        %v769 = vshrl.u32 %v216, 16
        %v771 = vrot.slane %v769, 4
        %v772 = vor.u32 %v771, %v767
        %v773 = vrot.slane %v772, 4
        %v775 = vshll.u32 %v217, 16
        %v777 = vrot.slane %v775, 5
        %v778 = vsel %vm358, %v773, %v777
        %v779 = vshrl.u32 %v217, 16
        %v781 = vrot.slane %v779, 4
        %v782 = vor.u32 %v781, %v777
        %v783 = vrot.slane %v782, 4
        %v785 = vshll.u32 %v218, 16
        %v787 = vrot.slane %v785, 5
        %v788 = vsel %vm358, %v783, %v787
        %v789 = vshrl.u32 %v218, 16
        %v791 = vrot.slane %v789, 4
        %v792 = vor.u32 %v791, %v787
        %v793 = vrot.slane %v792, 4
        %v795 = vshll.u32 %v219, 16
        %v797 = vrot.slane %v795, 5
        %v798 = vsel %vm358, %v793, %v797
        %v800 = vshrl.u32 %v220, 16
        %v802 = vrot.slane %v800, 4
        %v803 = vshll.u32 %v220, 16
        %v805 = vrot.slane %v803, 5
        %v806 = vor.u32 %v802, %v805
        %v807 = vrot.slane %v806, 4
        %v809 = vshll.u32 %v221, 16
        %v811 = vrot.slane %v809, 5
        %v812 = vsel %vm358, %v807, %v811
        %v813 = vshrl.u32 %v221, 16
        %v815 = vrot.slane %v813, 4
        %v816 = vor.u32 %v815, %v811
        %v817 = vrot.slane %v816, 4
        %v819 = vshll.u32 %v222, 16
        %v821 = vrot.slane %v819, 5
        %v822 = vsel %vm358, %v817, %v821
        %v823 = vshrl.u32 %v222, 16
        %v825 = vrot.slane %v823, 4
        %v826 = vor.u32 %v825, %v821
        %v827 = vrot.slane %v826, 4
        %v829 = vshll.u32 %v223, 16
        %v831 = vrot.slane %v829, 5
        %v832 = vsel %vm358, %v827, %v831
        %v833 = vshrl.u32 %v223, 16
        %v835 = vrot.slane %v833, 4
        %v836 = vor.u32 %v835, %v831
        %v837 = vrot.slane %v836, 4
        %v839 = vshll.u32 %v224, 16
        %v841 = vrot.slane %v839, 5
        %v842 = vsel %vm358, %v837, %v841
        %v844 = vshrl.u32 %v225, 16
        %v846 = vrot.slane %v844, 4
        %v847 = vshll.u32 %v225, 16
        %v849 = vrot.slane %v847, 5
        %v850 = vor.u32 %v846, %v849
        %v851 = vrot.slane %v850, 4
        %v853 = vshll.u32 %v226, 16
        %v855 = vrot.slane %v853, 5
        %v856 = vsel %vm358, %v851, %v855
        %v857 = vshrl.u32 %v226, 16
        %v859 = vrot.slane %v857, 4
        %v860 = vor.u32 %v859, %v855
        %v861 = vrot.slane %v860, 4
        %v863 = vshll.u32 %v227, 16
        %v865 = vrot.slane %v863, 5
        %v866 = vsel %vm358, %v861, %v865
        %v867 = vshrl.u32 %v227, 16
        %v869 = vrot.slane %v867, 4
        %v870 = vor.u32 %v869, %v865
        %v871 = vrot.slane %v870, 4
        %v873 = vshll.u32 %v228, 16
        %v875 = vrot.slane %v873, 5
        %v876 = vsel %vm358, %v871, %v875
        %v877 = vshrl.u32 %v228, 16
        %v879 = vrot.slane %v877, 4
        %v880 = vor.u32 %v879, %v875
        %v881 = vrot.slane %v880, 4
        %v883 = vshll.u32 %v229, 16
        %v885 = vrot.slane %v883, 5
        %v886 = vsel %vm358, %v881, %v885
        %v888 = vshrl.u32 %v230, 16
        %v890 = vrot.slane %v888, 4
        %v891 = vshll.u32 %v230, 16
        %v893 = vrot.slane %v891, 5
        %v894 = vor.u32 %v890, %v893
        %v895 = vrot.slane %v894, 4
        %v897 = vshll.u32 %v231, 16
        %v899 = vrot.slane %v897, 5
        %v900 = vsel %vm358, %v895, %v899
        %v901 = vshrl.u32 %v231, 16
        %v903 = vrot.slane %v901, 4
        %v904 = vor.u32 %v903, %v899
        %v905 = vrot.slane %v904, 4
        %v907 = vshll.u32 %v232, 16
        %v909 = vrot.slane %v907, 5
        %v910 = vsel %vm358, %v905, %v909
        %v911 = vshrl.u32 %v232, 16
        %v913 = vrot.slane %v911, 4
        %v914 = vor.u32 %v913, %v909
        %v915 = vrot.slane %v914, 4
        %v917 = vshll.u32 %v233, 16
        %v919 = vrot.slane %v917, 5
        %v920 = vsel %vm358, %v915, %v919
        %v921 = vshrl.u32 %v233, 16
        %v923 = vrot.slane %v921, 4
        %v924 = vor.u32 %v923, %v919
        %v925 = vrot.slane %v924, 4
        %v927 = vshll.u32 %v234, 16
        %v929 = vrot.slane %v927, 5
        %v930 = vsel %vm358, %v925, %v929
        %v932 = vshrl.u32 %v235, 16
        %v934 = vrot.slane %v932, 4
        %v935 = vshll.u32 %v235, 16
        %v937 = vrot.slane %v935, 5
        %v938 = vor.u32 %v934, %v937
        %v939 = vrot.slane %v938, 4
        %v941 = vshll.u32 %v236, 16
        %v943 = vrot.slane %v941, 5
        %v944 = vsel %vm358, %v939, %v943
        %v945 = vshrl.u32 %v236, 16
        %v947 = vrot.slane %v945, 4
        %v948 = vor.u32 %v947, %v943
        %v949 = vrot.slane %v948, 4
        %v951 = vshll.u32 %v237, 16
        %v953 = vrot.slane %v951, 5
        %v954 = vsel %vm358, %v949, %v953
        %v955 = vshrl.u32 %v237, 16
        %v957 = vrot.slane %v955, 4
        %v958 = vor.u32 %v957, %v953
        %v959 = vrot.slane %v958, 4
        %v961 = vshll.u32 %v238, 16
        %v963 = vrot.slane %v961, 5
        %v964 = vsel %vm358, %v959, %v963
        %v965 = vshrl.u32 %v238, 16
        %v967 = vrot.slane %v965, 4
        %v968 = vor.u32 %v967, %v963
        %v969 = vrot.slane %v968, 4
        %v971 = vshll.u32 %v239, 16
        %v973 = vrot.slane %v971, 5
        %v974 = vsel %vm358, %v969, %v973
        %v976 = vshrl.u32 %v240, 16
        %v978 = vrot.slane %v976, 4
        %v979 = vshll.u32 %v240, 16
        %v981 = vrot.slane %v979, 5
        %v982 = vor.u32 %v978, %v981
        %v983 = vrot.slane %v982, 4
        %v985 = vshll.u32 %v241, 16
        %v987 = vrot.slane %v985, 5
        %v988 = vsel %vm358, %v983, %v987
        %v989 = vshrl.u32 %v241, 16
        %v991 = vrot.slane %v989, 4
        %v992 = vor.u32 %v991, %v987
        %v993 = vrot.slane %v992, 4
        %v995 = vshll.u32 %v242, 16
        %v997 = vrot.slane %v995, 5
        %v998 = vsel %vm358, %v993, %v997
        %v999 = vshrl.u32 %v242, 16
        %v1001 = vrot.slane %v999, 4
        %v1002 = vor.u32 %v1001, %v997
        %v1003 = vrot.slane %v1002, 4
        %v1005 = vshll.u32 %v243, 16
        %v1007 = vrot.slane %v1005, 5
        %v1008 = vsel %vm358, %v1003, %v1007
        %v1009 = vshrl.u32 %v243, 16
        %v1011 = vrot.slane %v1009, 4
        %v1012 = vor.u32 %v1011, %v1007
        %v1013 = vrot.slane %v1012, 4
        %v1015 = vshll.u32 %v244, 16
        %v1017 = vrot.slane %v1015, 5
        %v1018 = vsel %vm358, %v1013, %v1017
        %v1020 = vshrl.u32 %v245, 16
        %v1022 = vrot.slane %v1020, 4
        %v1023 = vshll.u32 %v245, 16
        %v1025 = vrot.slane %v1023, 5
        %v1026 = vor.u32 %v1022, %v1025
        %v1027 = vrot.slane %v1026, 4
        %v1029 = vshll.u32 %v246, 16
        %v1031 = vrot.slane %v1029, 5
        %v1032 = vsel %vm358, %v1027, %v1031
        %v1033 = vshrl.u32 %v246, 16
        %v1035 = vrot.slane %v1033, 4
        %v1036 = vor.u32 %v1035, %v1031
        %v1037 = vrot.slane %v1036, 4
        %v1039 = vshll.u32 %v247, 16
        %v1041 = vrot.slane %v1039, 5
        %v1042 = vsel %vm358, %v1037, %v1041
        %v1043 = vshrl.u32 %v247, 16
        %v1045 = vrot.slane %v1043, 4
        %v1046 = vor.u32 %v1045, %v1041
        %v1047 = vrot.slane %v1046, 4
        %v1049 = vshll.u32 %v248, 16
        %v1051 = vrot.slane %v1049, 5
        %v1052 = vsel %vm358, %v1047, %v1051
        %v1053 = vshrl.u32 %v248, 16
        %v1055 = vrot.slane %v1053, 4
        %v1056 = vor.u32 %v1055, %v1051
        %v1057 = vrot.slane %v1056, 4
        %v1059 = vshll.u32 %v249, 16
        %v1061 = vrot.slane %v1059, 5
        %v1062 = vsel %vm358, %v1057, %v1061
        %v1064 = vshrl.u32 %v250, 16
        %v1066 = vrot.slane %v1064, 4
        %v1067 = vshll.u32 %v250, 16
        %v1069 = vrot.slane %v1067, 5
        %v1070 = vor.u32 %v1066, %v1069
        %v1071 = vrot.slane %v1070, 4
        %v1073 = vshll.u32 %v251, 16
        %v1075 = vrot.slane %v1073, 5
        %v1076 = vsel %vm358, %v1071, %v1075
        %v1077 = vshrl.u32 %v251, 16
        %v1079 = vrot.slane %v1077, 4
        %v1080 = vor.u32 %v1079, %v1075
        %v1081 = vrot.slane %v1080, 4
        %v1083 = vshll.u32 %v252, 16
        %v1085 = vrot.slane %v1083, 5
        %v1086 = vsel %vm358, %v1081, %v1085
        %v1087 = vshrl.u32 %v252, 16
        %v1089 = vrot.slane %v1087, 4
        %v1090 = vor.u32 %v1089, %v1085
        %v1091 = vrot.slane %v1090, 4
        %v1093 = vshll.u32 %v253, 16
        %v1095 = vrot.slane %v1093, 5
        %v1096 = vsel %vm358, %v1091, %v1095
        %v1097 = vshrl.u32 %v253, 16
        %v1099 = vrot.slane %v1097, 4
        %v1100 = vor.u32 %v1099, %v1095
        %v1101 = vrot.slane %v1100, 4
        %v1103 = vshll.u32 %v254, 16
        %v1105 = vrot.slane %v1103, 5
        %v1106 = vsel %vm358, %v1101, %v1105
        %v1108 = vshrl.u32 %v255, 16
        %v1110 = vrot.slane %v1108, 4
        %v1111 = vshll.u32 %v255, 16
        %v1113 = vrot.slane %v1111, 5
        %v1114 = vor.u32 %v1110, %v1113
        %v1115 = vrot.slane %v1114, 4
        %v1117 = vshll.u32 %v256, 16
        %v1119 = vrot.slane %v1117, 5
        %v1120 = vsel %vm358, %v1115, %v1119
        %v1121 = vshrl.u32 %v256, 16
        %v1123 = vrot.slane %v1121, 4
        %v1124 = vor.u32 %v1123, %v1119
        %v1125 = vrot.slane %v1124, 4
        %v1127 = vshll.u32 %v257, 16
        %v1129 = vrot.slane %v1127, 5
        %v1130 = vsel %vm358, %v1125, %v1129
        %v1131 = vshrl.u32 %v257, 16
        %v1133 = vrot.slane %v1131, 4
        %v1134 = vor.u32 %v1133, %v1129
        %v1135 = vrot.slane %v1134, 4
        %v1137 = vshll.u32 %v258, 16
        %v1139 = vrot.slane %v1137, 5
        %v1140 = vsel %vm358, %v1135, %v1139
        %v1141 = vshrl.u32 %v258, 16
        %v1143 = vrot.slane %v1141, 4
        %v1144 = vor.u32 %v1143, %v1139
        %v1145 = vrot.slane %v1144, 4
        %v1147 = vshll.u32 %v259, 16
        %v1149 = vrot.slane %v1147, 5
        %v1150 = vsel %vm358, %v1145, %v1149
        %v1152 = vshrl.u32 %v260, 16
        %v1154 = vrot.slane %v1152, 4
        %v1155 = vshll.u32 %v260, 16
        %v1157 = vrot.slane %v1155, 5
        %v1158 = vor.u32 %v1154, %v1157
        %v1159 = vrot.slane %v1158, 4
        %v1161 = vshll.u32 %v261, 16
        %v1163 = vrot.slane %v1161, 5
        %v1164 = vsel %vm358, %v1159, %v1163
        %v1165 = vshrl.u32 %v261, 16
        %v1167 = vrot.slane %v1165, 4
        %v1168 = vor.u32 %v1167, %v1163
        %v1169 = vrot.slane %v1168, 4
        %v1171 = vshll.u32 %v262, 16
        %v1173 = vrot.slane %v1171, 5
        %v1174 = vsel %vm358, %v1169, %v1173
        %v1175 = vshrl.u32 %v262, 16
        %v1177 = vrot.slane %v1175, 4
        %v1178 = vor.u32 %v1177, %v1173
        %v1179 = vrot.slane %v1178, 4
        %v1181 = vshll.u32 %v263, 16
        %v1183 = vrot.slane %v1181, 5
        %v1184 = vsel %vm358, %v1179, %v1183
        %v1185 = vshrl.u32 %v263, 16
        %v1187 = vrot.slane %v1185, 4
        %v1188 = vor.u32 %v1187, %v1183
        %v1189 = vrot.slane %v1188, 4
        %v1191 = vshll.u32 %v264, 16
        %v1193 = vrot.slane %v1191, 5
        %v1194 = vsel %vm358, %v1189, %v1193
        %v1196 = vshrl.u32 %v265, 16
        %v1198 = vrot.slane %v1196, 4
        %v1199 = vshll.u32 %v265, 16
        %v1201 = vrot.slane %v1199, 5
        %v1202 = vor.u32 %v1198, %v1201
        %v1203 = vrot.slane %v1202, 4
        %v1205 = vshll.u32 %v266, 16
        %v1207 = vrot.slane %v1205, 5
        %v1208 = vsel %vm358, %v1203, %v1207
        %v1209 = vshrl.u32 %v266, 16
        %v1211 = vrot.slane %v1209, 4
        %v1212 = vor.u32 %v1211, %v1207
        %v1213 = vrot.slane %v1212, 4
        %v1215 = vshll.u32 %v267, 16
        %v1217 = vrot.slane %v1215, 5
        %v1218 = vsel %vm358, %v1213, %v1217
        %v1219 = vshrl.u32 %v267, 16
        %v1221 = vrot.slane %v1219, 4
        %v1222 = vor.u32 %v1221, %v1217
        %v1223 = vrot.slane %v1222, 4
        %v1225 = vshll.u32 %v268, 16
        %v1227 = vrot.slane %v1225, 5
        %v1228 = vsel %vm358, %v1223, %v1227
        %v1229 = vshrl.u32 %v268, 16
        %v1231 = vrot.slane %v1229, 4
        %v1232 = vor.u32 %v1231, %v1227
        %v1233 = vrot.slane %v1232, 4
        %v1235 = vshll.u32 %v269, 16
        %v1237 = vrot.slane %v1235, 5
        %v1238 = vsel %vm358, %v1233, %v1237
        %v1240 = vshrl.u32 %v270, 16
        %v1242 = vrot.slane %v1240, 4
        %v1243 = vshll.u32 %v270, 16
        %v1245 = vrot.slane %v1243, 5
        %v1246 = vor.u32 %v1242, %v1245
        %v1247 = vrot.slane %v1246, 4
        %v1249 = vshll.u32 %v271, 16
        %v1251 = vrot.slane %v1249, 5
        %v1252 = vsel %vm358, %v1247, %v1251
        %v1253 = vshrl.u32 %v271, 16
        %v1255 = vrot.slane %v1253, 4
        %v1256 = vor.u32 %v1255, %v1251
        %v1257 = vrot.slane %v1256, 4
        %v1259 = vshll.u32 %v272, 16
        %v1261 = vrot.slane %v1259, 5
        %v1262 = vsel %vm358, %v1257, %v1261
        %v1263 = vshrl.u32 %v272, 16
        %v1265 = vrot.slane %v1263, 4
        %v1266 = vor.u32 %v1265, %v1261
        %v1267 = vrot.slane %v1266, 4
        %v1269 = vshll.u32 %v273, 16
        %v1271 = vrot.slane %v1269, 5
        %v1272 = vsel %vm358, %v1267, %v1271
        %v1273 = vshrl.u32 %v273, 16
        %v1275 = vrot.slane %v1273, 4
        %v1276 = vor.u32 %v1275, %v1271
        %v1277 = vrot.slane %v1276, 4
        %v1279 = vshll.u32 %v274, 16
        %v1281 = vrot.slane %v1279, 5
        %v1282 = vsel %vm358, %v1277, %v1281
        %v1284 = vshrl.u32 %v275, 16
        %v1286 = vrot.slane %v1284, 4
        %v1287 = vshll.u32 %v275, 16
        %v1289 = vrot.slane %v1287, 5
        %v1290 = vor.u32 %v1286, %v1289
        %v1291 = vrot.slane %v1290, 4
        %v1293 = vshll.u32 %v276, 16
        %v1295 = vrot.slane %v1293, 5
        %v1296 = vsel %vm358, %v1291, %v1295
        %v1297 = vshrl.u32 %v276, 16
        %v1299 = vrot.slane %v1297, 4
        %v1300 = vor.u32 %v1299, %v1295
        %v1301 = vrot.slane %v1300, 4
        %v1303 = vshll.u32 %v277, 16
        %v1305 = vrot.slane %v1303, 5
        %v1306 = vsel %vm358, %v1301, %v1305
        %v1307 = vshrl.u32 %v277, 16
        %v1309 = vrot.slane %v1307, 4
        %v1310 = vor.u32 %v1309, %v1305
        %v1311 = vrot.slane %v1310, 4
        %v1313 = vshll.u32 %v278, 16
        %v1315 = vrot.slane %v1313, 5
        %v1316 = vsel %vm358, %v1311, %v1315
        %v1317 = vshrl.u32 %v278, 16
        %v1319 = vrot.slane %v1317, 4
        %v1320 = vor.u32 %v1319, %v1315
        %v1321 = vrot.slane %v1320, 4
        %v1323 = vshll.u32 %v279, 16
        %v1325 = vrot.slane %v1323, 5
        %v1326 = vsel %vm358, %v1321, %v1325
        %v1328 = vshrl.u32 %v280, 16
        %v1330 = vrot.slane %v1328, 4
        %v1331 = vshll.u32 %v280, 16
        %v1333 = vrot.slane %v1331, 5
        %v1334 = vor.u32 %v1330, %v1333
        %v1335 = vrot.slane %v1334, 4
        %v1337 = vshll.u32 %v281, 16
        %v1339 = vrot.slane %v1337, 5
        %v1340 = vsel %vm358, %v1335, %v1339
        %v1341 = vshrl.u32 %v281, 16
        %v1343 = vrot.slane %v1341, 4
        %v1344 = vor.u32 %v1343, %v1339
        %v1345 = vrot.slane %v1344, 4
        %v1347 = vshll.u32 %v282, 16
        %v1349 = vrot.slane %v1347, 5
        %v1350 = vsel %vm358, %v1345, %v1349
        %v1351 = vshrl.u32 %v282, 16
        %v1353 = vrot.slane %v1351, 4
        %v1354 = vor.u32 %v1353, %v1349
        %v1355 = vrot.slane %v1354, 4
        %v1357 = vshll.u32 %v283, 16
        %v1359 = vrot.slane %v1357, 5
        %v1360 = vsel %vm358, %v1355, %v1359
        %v1361 = vshrl.u32 %v283, 16
        %v1363 = vrot.slane %v1361, 4
        %v1364 = vor.u32 %v1363, %v1359
        %v1365 = vrot.slane %v1364, 4
        %v1367 = vshll.u32 %v284, 16
        %v1369 = vrot.slane %v1367, 5
        %v1370 = vsel %vm358, %v1365, %v1369
        %v1372 = vshrl.u32 %v285, 16
        %v1374 = vrot.slane %v1372, 4
        %v1375 = vshll.u32 %v285, 16
        %v1377 = vrot.slane %v1375, 5
        %v1378 = vor.u32 %v1374, %v1377
        %v1379 = vrot.slane %v1378, 4
        %v1381 = vshll.u32 %v286, 16
        %v1383 = vrot.slane %v1381, 5
        %v1384 = vsel %vm358, %v1379, %v1383
        %v1385 = vshrl.u32 %v286, 16
        %v1387 = vrot.slane %v1385, 4
        %v1388 = vor.u32 %v1387, %v1383
        %v1389 = vrot.slane %v1388, 4
        %v1391 = vshll.u32 %v287, 16
        %v1393 = vrot.slane %v1391, 5
        %v1394 = vsel %vm358, %v1389, %v1393
        %v1395 = vshrl.u32 %v287, 16
        %v1397 = vrot.slane %v1395, 4
        %v1398 = vor.u32 %v1397, %v1393
        %v1399 = vrot.slane %v1398, 4
        %v1401 = vshll.u32 %v288, 16
        %v1403 = vrot.slane %v1401, 5
        %v1404 = vsel %vm358, %v1399, %v1403
        %v1405 = vshrl.u32 %v288, 16
        %v1407 = vrot.slane %v1405, 4
        %v1408 = vor.u32 %v1407, %v1403
        %v1409 = vrot.slane %v1408, 4
        %v1411 = vshll.u32 %v289, 16
        %v1413 = vrot.slane %v1411, 5
        %v1414 = vsel %vm358, %v1409, %v1413
        %v1416 = vshrl.u32 %v290, 16
        %v1418 = vrot.slane %v1416, 4
        %v1419 = vshll.u32 %v290, 16
        %v1421 = vrot.slane %v1419, 5
        %v1422 = vor.u32 %v1418, %v1421
        %v1423 = vrot.slane %v1422, 4
        %v1425 = vshll.u32 %v291, 16
        %v1427 = vrot.slane %v1425, 5
        %v1428 = vsel %vm358, %v1423, %v1427
        %v1429 = vshrl.u32 %v291, 16
        %v1431 = vrot.slane %v1429, 4
        %v1432 = vor.u32 %v1431, %v1427
        %v1433 = vrot.slane %v1432, 4
        %v1435 = vshll.u32 %v292, 16
        %v1437 = vrot.slane %v1435, 5
        %v1438 = vsel %vm358, %v1433, %v1437
        %v1439 = vshrl.u32 %v292, 16
        %v1441 = vrot.slane %v1439, 4
        %v1442 = vor.u32 %v1441, %v1437
        %v1443 = vrot.slane %v1442, 4
        %v1445 = vshll.u32 %v293, 16
        %v1447 = vrot.slane %v1445, 5
        %v1448 = vsel %vm358, %v1443, %v1447
        %v1449 = vshrl.u32 %v293, 16
        %v1451 = vrot.slane %v1449, 4
        %v1452 = vor.u32 %v1451, %v1447
        %v1453 = vrot.slane %v1452, 4
        %v1455 = vshll.u32 %v294, 16
        %v1457 = vrot.slane %v1455, 5
        %v1458 = vsel %vm358, %v1453, %v1457
        %v1460 = vshrl.u32 %v295, 16
        %v1462 = vrot.slane %v1460, 4
        %v1463 = vshll.u32 %v295, 16
        %v1465 = vrot.slane %v1463, 5
        %v1466 = vor.u32 %v1462, %v1465
        %v1467 = vrot.slane %v1466, 4
        %v1469 = vshll.u32 %v296, 16
        %v1471 = vrot.slane %v1469, 5
        %v1472 = vsel %vm358, %v1467, %v1471
        %v1473 = vshrl.u32 %v296, 16
        %v1475 = vrot.slane %v1473, 4
        %v1476 = vor.u32 %v1475, %v1471
        %v1477 = vrot.slane %v1476, 4
        %v1479 = vshll.u32 %v297, 16
        %v1481 = vrot.slane %v1479, 5
        %v1482 = vsel %vm358, %v1477, %v1481
        %v1483 = vshrl.u32 %v297, 16
        %v1485 = vrot.slane %v1483, 4
        %v1486 = vor.u32 %v1485, %v1481
        %v1487 = vrot.slane %v1486, 4
        %v1489 = vshll.u32 %v298, 16
        %v1491 = vrot.slane %v1489, 5
        %v1492 = vsel %vm358, %v1487, %v1491
        %v1493 = vshrl.u32 %v298, 16
        %v1495 = vrot.slane %v1493, 4
        %v1496 = vor.u32 %v1495, %v1491
        %v1497 = vrot.slane %v1496, 4
        %v1499 = vshll.u32 %v299, 16
        %v1501 = vrot.slane %v1499, 5
        %v1502 = vsel %vm358, %v1497, %v1501
        %v1504 = vshrl.u32 %v300, 16
        %v1506 = vrot.slane %v1504, 4
        %v1507 = vshll.u32 %v300, 16
        %v1509 = vrot.slane %v1507, 5
        %v1510 = vor.u32 %v1506, %v1509
        %v1511 = vrot.slane %v1510, 4
        %v1513 = vshll.u32 %v301, 16
        %v1515 = vrot.slane %v1513, 5
        %v1516 = vsel %vm358, %v1511, %v1515
        %v1517 = vshrl.u32 %v301, 16
        %v1519 = vrot.slane %v1517, 4
        %v1520 = vor.u32 %v1519, %v1515
        %v1521 = vrot.slane %v1520, 4
        %v1523 = vshll.u32 %v302, 16
        %v1525 = vrot.slane %v1523, 5
        %v1526 = vsel %vm358, %v1521, %v1525
        %v1527 = vshrl.u32 %v302, 16
        %v1529 = vrot.slane %v1527, 4
        %v1530 = vor.u32 %v1529, %v1525
        %v1531 = vrot.slane %v1530, 4
        %v1533 = vshll.u32 %v303, 16
        %v1535 = vrot.slane %v1533, 5
        %v1536 = vsel %vm358, %v1531, %v1535
        %v1537 = vshrl.u32 %v303, 16
        %v1539 = vrot.slane %v1537, 4
        %v1540 = vor.u32 %v1539, %v1535
        %v1541 = vrot.slane %v1540, 4
        %v1543 = vshll.u32 %v304, 16
        %v1545 = vrot.slane %v1543, 5
        %v1546 = vsel %vm358, %v1541, %v1545
        %v1548 = vshrl.u32 %v305, 16
        %v1550 = vrot.slane %v1548, 4
        %v1551 = vshll.u32 %v305, 16
        %v1553 = vrot.slane %v1551, 5
        %v1554 = vor.u32 %v1550, %v1553
        %v1555 = vrot.slane %v1554, 4
        %v1557 = vshll.u32 %v306, 16
        %v1559 = vrot.slane %v1557, 5
        %v1560 = vsel %vm358, %v1555, %v1559
        %v1561 = vshrl.u32 %v306, 16
        %v1563 = vrot.slane %v1561, 4
        %v1564 = vor.u32 %v1563, %v1559
        %v1565 = vrot.slane %v1564, 4
        %v1567 = vshll.u32 %v307, 16
        %v1569 = vrot.slane %v1567, 5
        %v1570 = vsel %vm358, %v1565, %v1569
        %v1571 = vshrl.u32 %v307, 16
        %v1573 = vrot.slane %v1571, 4
        %v1574 = vor.u32 %v1573, %v1569
        %v1575 = vrot.slane %v1574, 4
        %v1577 = vshll.u32 %v308, 16
        %v1579 = vrot.slane %v1577, 5
        %v1580 = vsel %vm358, %v1575, %v1579
        %v1581 = vshrl.u32 %v308, 16
        %v1583 = vrot.slane %v1581, 4
        %v1584 = vor.u32 %v1583, %v1579
        %v1585 = vrot.slane %v1584, 4
        %v1587 = vshll.u32 %v309, 16
        %v1589 = vrot.slane %v1587, 5
        %v1590 = vsel %vm358, %v1585, %v1589
        %v1592 = vshrl.u32 %v310, 16
        %v1594 = vrot.slane %v1592, 4
        %v1595 = vshll.u32 %v310, 16
        %v1597 = vrot.slane %v1595, 5
        %v1598 = vor.u32 %v1594, %v1597
        %v1599 = vrot.slane %v1598, 4
        %v1601 = vshll.u32 %v311, 16
        %v1603 = vrot.slane %v1601, 5
        %v1604 = vsel %vm358, %v1599, %v1603
        %v1605 = vshrl.u32 %v311, 16
        %v1607 = vrot.slane %v1605, 4
        %v1608 = vor.u32 %v1607, %v1603
        %v1609 = vrot.slane %v1608, 4
        %v1611 = vshll.u32 %v312, 16
        %v1613 = vrot.slane %v1611, 5
        %v1614 = vsel %vm358, %v1609, %v1613
        %v1615 = vshrl.u32 %v312, 16
        %v1617 = vrot.slane %v1615, 4
        %v1618 = vor.u32 %v1617, %v1613
        %v1619 = vrot.slane %v1618, 4
        %v1621 = vshll.u32 %v313, 16
        %v1623 = vrot.slane %v1621, 5
        %v1624 = vsel %vm358, %v1619, %v1623
        %v1625 = vshrl.u32 %v313, 16
        %v1627 = vrot.slane %v1625, 4
        %v1628 = vor.u32 %v1627, %v1623
        %v1629 = vrot.slane %v1628, 4
        %v1631 = vshll.u32 %v314, 16
        %v1633 = vrot.slane %v1631, 5
        %v1634 = vsel %vm358, %v1629, %v1633
        %v1636 = vshrl.u32 %v315, 16
        %v1638 = vrot.slane %v1636, 4
        %v1639 = vshll.u32 %v315, 16
        %v1641 = vrot.slane %v1639, 5
        %v1642 = vor.u32 %v1638, %v1641
        %v1643 = vrot.slane %v1642, 4
        %v1645 = vshll.u32 %v316, 16
        %v1647 = vrot.slane %v1645, 5
        %v1648 = vsel %vm358, %v1643, %v1647
        %v1649 = vshrl.u32 %v316, 16
        %v1651 = vrot.slane %v1649, 4
        %v1652 = vor.u32 %v1651, %v1647
        %v1653 = vrot.slane %v1652, 4
        %v1655 = vshll.u32 %v317, 16
        %v1657 = vrot.slane %v1655, 5
        %v1658 = vsel %vm358, %v1653, %v1657
        %v1659 = vshrl.u32 %v317, 16
        %v1661 = vrot.slane %v1659, 4
        %v1662 = vor.u32 %v1661, %v1657
        %v1663 = vrot.slane %v1662, 4
        %v1665 = vshll.u32 %v318, 16
        %v1667 = vrot.slane %v1665, 5
        %v1668 = vsel %vm358, %v1663, %v1667
        %v1669 = vshrl.u32 %v318, 16
        %v1671 = vrot.slane %v1669, 4
        %v1672 = vor.u32 %v1671, %v1667
        %v1673 = vrot.slane %v1672, 4
        %v1675 = vshll.u32 %v319, 16
        %v1677 = vrot.slane %v1675, 5
        %v1678 = vsel %vm358, %v1673, %v1677
        %v1680 = vshrl.u32 %v320, 16
        %v1682 = vrot.slane %v1680, 4
        %v1683 = vshll.u32 %v320, 16
        %v1685 = vrot.slane %v1683, 5
        %v1686 = vor.u32 %v1682, %v1685
        %v1687 = vrot.slane %v1686, 4
        %v1689 = vshll.u32 %v321, 16
        %v1691 = vrot.slane %v1689, 5
        %v1692 = vsel %vm358, %v1687, %v1691
        %v1693 = vshrl.u32 %v321, 16
        %v1695 = vrot.slane %v1693, 4
        %v1696 = vor.u32 %v1695, %v1691
        %v1697 = vrot.slane %v1696, 4
        %v1699 = vshll.u32 %v322, 16
        %v1701 = vrot.slane %v1699, 5
        %v1702 = vsel %vm358, %v1697, %v1701
        %v1703 = vshrl.u32 %v322, 16
        %v1705 = vrot.slane %v1703, 4
        %v1706 = vor.u32 %v1705, %v1701
        %v1707 = vrot.slane %v1706, 4
        %v1709 = vshll.u32 %v323, 16
        %v1711 = vrot.slane %v1709, 5
        %v1712 = vsel %vm358, %v1707, %v1711
        %v1713 = vshrl.u32 %v323, 16
        %v1715 = vrot.slane %v1713, 4
        %v1716 = vor.u32 %v1715, %v1711
        %v1717 = vrot.slane %v1716, 4
        %v1719 = vshll.u32 %v324, 16
        %v1721 = vrot.slane %v1719, 5
        %v1722 = vsel %vm358, %v1717, %v1721
        %v1724 = vshrl.u32 %v325, 16
        %v1726 = vrot.slane %v1724, 4
        %v1727 = vshll.u32 %v325, 16
        %v1729 = vrot.slane %v1727, 5
        %v1730 = vor.u32 %v1726, %v1729
        %v1731 = vrot.slane %v1730, 4
        %v1733 = vshll.u32 %v326, 16
        %v1735 = vrot.slane %v1733, 5
        %v1736 = vsel %vm358, %v1731, %v1735
        %v1737 = vshrl.u32 %v326, 16
        %v1739 = vrot.slane %v1737, 4
        %v1740 = vor.u32 %v1739, %v1735
        %v1741 = vrot.slane %v1740, 4
        %v1743 = vshll.u32 %v327, 16
        %v1745 = vrot.slane %v1743, 5
        %v1746 = vsel %vm358, %v1741, %v1745
        %v1747 = vshrl.u32 %v327, 16
        %v1749 = vrot.slane %v1747, 4
        %v1750 = vor.u32 %v1749, %v1745
        %v1751 = vrot.slane %v1750, 4
        %v1753 = vshll.u32 %v328, 16
        %v1755 = vrot.slane %v1753, 5
        %v1756 = vsel %vm358, %v1751, %v1755
        %v1757 = vshrl.u32 %v328, 16
        %v1759 = vrot.slane %v1757, 4
        %v1760 = vor.u32 %v1759, %v1755
        %v1761 = vrot.slane %v1760, 4
        %v1763 = vshll.u32 %v329, 16
        %v1765 = vrot.slane %v1763, 5
        %v1766 = vsel %vm358, %v1761, %v1765
        %s1767 = scalar_lea.vmem %s1, 64
        %v1768 = vld [vmem:[%s1767] sm:$0xf]
        %v1769 = vld [vmem:[%s1767 + $0x4] sm:$0xf]
        %v1770 = vld [vmem:[%s1767 + $0x8] sm:$0xf]
        %v1771 = vld [vmem:[%s1767 + $0xc] sm:$0xf]
        %v1772 = vld [vmem:[%s1767 + $0x10] sm:$0xf]
        %v1773 = vld [vmem:[%s1767 + $0x14] sm:$0xf]
        %v1774 = vld [vmem:[%s1767 + $0x18] sm:$0xf]
        %v1775 = vld [vmem:[%s1767 + $0x1c] sm:$0xf]
        %v1776 = vld [vmem:[%s1767 + $0x20] sm:$0xf]
        %v1777 = vld [vmem:[%s1767 + $0x24] sm:$0xf]
        %v1778 = vld [vmem:[%s1767 + $0x28] sm:$0xf]
        %v1779 = vld [vmem:[%s1767 + $0x2c] sm:$0xf]
        %v1780 = vld [vmem:[%s1767 + $0x30] sm:$0xf]
        %v1781 = vld [vmem:[%s1767 + $0x34] sm:$0xf]
        %v1782 = vld [vmem:[%s1767 + $0x38] sm:$0xf]
        %v1783 = vld [vmem:[%s1767 + $0x3c] sm:$0xf]
        %v1784 = vunpack.c.l.b16 %v372
        %v1785 = vunpack.c.l.b16 %v382
        %v1786 = vunpack.c.l.b16 %v392
        %v1787 = vunpack.c.l.b16 %v402
        %v1788 = vunpack.c.l.b16 %v416
        %v1789 = vunpack.c.l.b16 %v426
        %v1790 = vunpack.c.l.b16 %v436
        %v1791 = vunpack.c.l.b16 %v446
        %v1792 = vunpack.c.l.b16 %v460
        %v1793 = vunpack.c.l.b16 %v470
        %v1794 = vunpack.c.l.b16 %v480
        %v1795 = vunpack.c.l.b16 %v490
        %v1796 = vunpack.c.l.b16 %v504
        %v1797 = vunpack.c.l.b16 %v514
        %v1798 = vunpack.c.l.b16 %v524
        %v1799 = vunpack.c.l.b16 %v534
        %v1800 = vunpack.c.l.b16 %v548
        %v1801 = vunpack.c.l.b16 %v558
        %v1802 = vunpack.c.l.b16 %v568
        %v1803 = vunpack.c.l.b16 %v578
        %v1804 = vunpack.c.l.b16 %v592
        %v1805 = vunpack.c.l.b16 %v602
        %v1806 = vunpack.c.l.b16 %v612
        %v1807 = vunpack.c.l.b16 %v622
        %v1808 = vunpack.c.l.b16 %v636
        %v1809 = vunpack.c.l.b16 %v646
        %v1810 = vunpack.c.l.b16 %v656
        %v1811 = vunpack.c.l.b16 %v666
        %v1812 = vunpack.c.l.b16 %v680
        %v1813 = vunpack.c.l.b16 %v690
        %v1814 = vunpack.c.l.b16 %v700
        %v1815 = vunpack.c.l.b16 %v710
        %v1816 = vunpack.c.l.b16 %v724
        %v1817 = vunpack.c.l.b16 %v734
        %v1818 = vunpack.c.l.b16 %v744
        %v1819 = vunpack.c.l.b16 %v754
        %v1820 = vunpack.c.l.b16 %v768
        %v1821 = vunpack.c.l.b16 %v778
        %v1822 = vunpack.c.l.b16 %v788
        %v1823 = vunpack.c.l.b16 %v798
        %v1824 = vunpack.c.l.b16 %v812
        %v1825 = vunpack.c.l.b16 %v822
        %v1826 = vunpack.c.l.b16 %v832
        %v1827 = vunpack.c.l.b16 %v842
        %v1828 = vunpack.c.l.b16 %v856
        %v1829 = vunpack.c.l.b16 %v866
        %v1830 = vunpack.c.l.b16 %v876
        %v1831 = vunpack.c.l.b16 %v886
        %v1832 = vunpack.c.l.b16 %v900
        %v1833 = vunpack.c.l.b16 %v910
        %v1834 = vunpack.c.l.b16 %v920
        %v1835 = vunpack.c.l.b16 %v930
        %v1836 = vunpack.c.l.b16 %v944
        %v1837 = vunpack.c.l.b16 %v954
        %v1838 = vunpack.c.l.b16 %v964
        %v1839 = vunpack.c.l.b16 %v974
        %v1840 = vunpack.c.l.b16 %v988
        %v1841 = vunpack.c.l.b16 %v998
        %v1842 = vunpack.c.l.b16 %v1008
        %v1843 = vunpack.c.l.b16 %v1018
        %v1844 = vunpack.c.l.b16 %v1032
        %v1845 = vunpack.c.l.b16 %v1042
        %v1846 = vunpack.c.l.b16 %v1052
        %v1847 = vunpack.c.l.b16 %v1062
        %v1848 = vunpack.c.l.b16 %v1076
        %v1849 = vunpack.c.l.b16 %v1086
        %v1850 = vunpack.c.l.b16 %v1096
        %v1851 = vunpack.c.l.b16 %v1106
        %v1852 = vunpack.c.l.b16 %v1120
        %v1853 = vunpack.c.l.b16 %v1130
        %v1854 = vunpack.c.l.b16 %v1140
        %v1855 = vunpack.c.l.b16 %v1150
        %v1856 = vunpack.c.l.b16 %v1164
        %v1857 = vunpack.c.l.b16 %v1174
        %v1858 = vunpack.c.l.b16 %v1184
        %v1859 = vunpack.c.l.b16 %v1194
        %v1860 = vunpack.c.l.b16 %v1208
        %v1861 = vunpack.c.l.b16 %v1218
        %v1862 = vunpack.c.l.b16 %v1228
        %v1863 = vunpack.c.l.b16 %v1238
        %v1864 = vunpack.c.l.b16 %v1252
        %v1865 = vunpack.c.l.b16 %v1262
        %v1866 = vunpack.c.l.b16 %v1272
        %v1867 = vunpack.c.l.b16 %v1282
        %v1868 = vunpack.c.l.b16 %v1296
        %v1869 = vunpack.c.l.b16 %v1306
        %v1870 = vunpack.c.l.b16 %v1316
        %v1871 = vunpack.c.l.b16 %v1326
        %v1872 = vunpack.c.l.b16 %v1340
        %v1873 = vunpack.c.l.b16 %v1350
        %v1874 = vunpack.c.l.b16 %v1360
        %v1875 = vunpack.c.l.b16 %v1370
        %v1876 = vunpack.c.l.b16 %v1384
        %v1877 = vunpack.c.l.b16 %v1394
        %v1878 = vunpack.c.l.b16 %v1404
        %v1879 = vunpack.c.l.b16 %v1414
        %v1880 = vunpack.c.l.b16 %v1428
        %v1881 = vunpack.c.l.b16 %v1438
        %v1882 = vunpack.c.l.b16 %v1448
        %v1883 = vunpack.c.l.b16 %v1458
        %v1884 = vunpack.c.l.b16 %v1472
        %v1885 = vunpack.c.l.b16 %v1482
        %v1886 = vunpack.c.l.b16 %v1492
        %v1887 = vunpack.c.l.b16 %v1502
        %v1888 = vunpack.c.l.b16 %v1516
        %v1889 = vunpack.c.l.b16 %v1526
        %v1890 = vunpack.c.l.b16 %v1536
        %v1891 = vunpack.c.l.b16 %v1546
        %v1892 = vunpack.c.l.b16 %v1560
        %v1893 = vunpack.c.l.b16 %v1570
        %v1894 = vunpack.c.l.b16 %v1580
        %v1895 = vunpack.c.l.b16 %v1590
        %v1896 = vunpack.c.l.b16 %v1604
        %v1897 = vunpack.c.l.b16 %v1614
        %v1898 = vunpack.c.l.b16 %v1624
        %v1899 = vunpack.c.l.b16 %v1634
        %v1900 = vunpack.c.l.b16 %v1648
        %v1901 = vunpack.c.l.b16 %v1658
        %v1902 = vunpack.c.l.b16 %v1668
        %v1903 = vunpack.c.l.b16 %v1678
        %v1904 = vunpack.c.l.b16 %v1692
        %v1905 = vunpack.c.l.b16 %v1702
        %v1906 = vunpack.c.l.b16 %v1712
        %v1907 = vunpack.c.l.b16 %v1722
        %v1908 = vunpack.c.l.b16 %v1736
        %v1909 = vunpack.c.l.b16 %v1746
        %v1910 = vunpack.c.l.b16 %v1756
        %v1911 = vunpack.c.l.b16 %v1766
        %v1912 = vpack.c.b16 %v1785, %v1784
        %v1913 = vpack.c.b16 %v1787, %v1786
        %v1914 = vpack.c.b16 %v1789, %v1788
        %v1915 = vpack.c.b16 %v1791, %v1790
        %v1916 = vpack.c.b16 %v1793, %v1792
        %v1917 = vpack.c.b16 %v1795, %v1794
        %v1918 = vpack.c.b16 %v1797, %v1796
        %v1919 = vpack.c.b16 %v1799, %v1798
        %v1920 = vpack.c.b16 %v1801, %v1800
        %v1921 = vpack.c.b16 %v1803, %v1802
        %v1922 = vpack.c.b16 %v1805, %v1804
        %v1923 = vpack.c.b16 %v1807, %v1806
        %v1924 = vpack.c.b16 %v1809, %v1808
        %v1925 = vpack.c.b16 %v1811, %v1810
        %v1926 = vpack.c.b16 %v1813, %v1812
        %v1927 = vpack.c.b16 %v1815, %v1814
        %v1928 = vpack.c.b16 %v1817, %v1816
        %v1929 = vpack.c.b16 %v1819, %v1818
        %v1930 = vpack.c.b16 %v1821, %v1820
        %v1931 = vpack.c.b16 %v1823, %v1822
        %v1932 = vpack.c.b16 %v1825, %v1824
        %v1933 = vpack.c.b16 %v1827, %v1826
        %v1934 = vpack.c.b16 %v1829, %v1828
        %v1935 = vpack.c.b16 %v1831, %v1830
        %v1936 = vpack.c.b16 %v1833, %v1832
        %v1937 = vpack.c.b16 %v1835, %v1834
        %v1938 = vpack.c.b16 %v1837, %v1836
        %v1939 = vpack.c.b16 %v1839, %v1838
        %v1940 = vpack.c.b16 %v1841, %v1840
        %v1941 = vpack.c.b16 %v1843, %v1842
        %v1942 = vpack.c.b16 %v1845, %v1844
        %v1943 = vpack.c.b16 %v1847, %v1846
        %v1944 = vpack.c.b16 %v1849, %v1848
        %v1945 = vpack.c.b16 %v1851, %v1850
        %v1946 = vpack.c.b16 %v1853, %v1852
        %v1947 = vpack.c.b16 %v1855, %v1854
        %v1948 = vpack.c.b16 %v1857, %v1856
        %v1949 = vpack.c.b16 %v1859, %v1858
        %v1950 = vpack.c.b16 %v1861, %v1860
        %v1951 = vpack.c.b16 %v1863, %v1862
        %v1952 = vpack.c.b16 %v1865, %v1864
        %v1953 = vpack.c.b16 %v1867, %v1866
        %v1954 = vpack.c.b16 %v1869, %v1868
        %v1955 = vpack.c.b16 %v1871, %v1870
        %v1956 = vpack.c.b16 %v1873, %v1872
        %v1957 = vpack.c.b16 %v1875, %v1874
        %v1958 = vpack.c.b16 %v1877, %v1876
        %v1959 = vpack.c.b16 %v1879, %v1878
        %v1960 = vpack.c.b16 %v1881, %v1880
        %v1961 = vpack.c.b16 %v1883, %v1882
        %v1962 = vpack.c.b16 %v1885, %v1884
        %v1963 = vpack.c.b16 %v1887, %v1886
        %v1964 = vpack.c.b16 %v1889, %v1888
        %v1965 = vpack.c.b16 %v1891, %v1890
        %v1966 = vpack.c.b16 %v1893, %v1892
        %v1967 = vpack.c.b16 %v1895, %v1894
        %v1968 = vpack.c.b16 %v1897, %v1896
        %v1969 = vpack.c.b16 %v1899, %v1898
        %v1970 = vpack.c.b16 %v1901, %v1900
        %v1971 = vpack.c.b16 %v1903, %v1902
        %v1972 = vpack.c.b16 %v1905, %v1904
        %v1973 = vpack.c.b16 %v1907, %v1906
        %v1974 = vpack.c.b16 %v1909, %v1908
        %v1975 = vpack.c.b16 %v1911, %v1910
        %v2056 = vunpack.c.l.b16 %v1768
        %v2057 = vunpack.c.l.b16 %v1769
        %v2058 = vunpack.c.l.b16 %v1770
        %v2059 = vunpack.c.l.b16 %v1771
        %v2060 = vunpack.c.l.b16 %v1772
        %v2061 = vunpack.c.l.b16 %v1773
        %v2062 = vunpack.c.l.b16 %v1774
        %v2063 = vunpack.c.l.b16 %v1775
        %v2064 = vunpack.c.l.b16 %v1776
        %v2065 = vunpack.c.l.b16 %v1777
        %v2066 = vunpack.c.l.b16 %v1778
        %v2067 = vunpack.c.l.b16 %v1779
        %v2068 = vunpack.c.l.b16 %v1780
        %v2069 = vunpack.c.l.b16 %v1781
        %v2070 = vunpack.c.l.b16 %v1782
        %v2071 = vunpack.c.l.b16 %v1783
        %v2072 = vpack.c.b16 %v2057, %v2056
        %v2073 = vpack.c.b16 %v2059, %v2058
        %v2074 = vpack.c.b16 %v2061, %v2060
        %v2075 = vpack.c.b16 %v2063, %v2062
        %v2076 = vpack.c.b16 %v2065, %v2064
        %v2077 = vpack.c.b16 %v2067, %v2066
        %v2078 = vpack.c.b16 %v2069, %v2068
        %v2079 = vpack.c.b16 %v2071, %v2070
        %2088 = vmatprep.subr.bf16.mxu0 0
        %2089 = vmatpush1.bf16.msra.mxu0 %v2072
        %2090 = vmatprep.subr.bf16.mxu0 0
        %2091 = vmatpush1.bf16.msra.mxu0 %v2073
        %2092 = vmatprep.subr.bf16.mxu0 0
        %2093 = vmatpush1.bf16.msra.mxu0 %v2074
        %2094 = vmatprep.subr.bf16.mxu0 0
        %2095 = vmatpush1.bf16.msra.mxu0 %v2075
        %2096 = vmatprep.subr.bf16.mxu0 0
        %2097 = vmatpush1.bf16.msra.mxu0 %v2076
        %2098 = vmatprep.subr.bf16.mxu0 0
        %2099 = vmatpush1.bf16.msra.mxu0 %v2077
        %2100 = vmatprep.subr.bf16.mxu0 0
        %2101 = vmatpush1.bf16.msra.mxu0 %v2078
        %2102 = vmatprep.subr.bf16.mxu0 0
        %2103 = vmatpush1.bf16.msra.mxu0 %v2079
        %2104 = vmatprep.subr.bf16.mxu0 0
        %2105 = vmatpush1.bf16.msra.mxu0 0
        %2106 = vmatprep.subr.bf16.mxu0 0
        %2107 = vmatpush1.bf16.msra.mxu0 0
        %2108 = vmatprep.subr.bf16.mxu0 0
        %2109 = vmatpush1.bf16.msra.mxu0 0
        %2110 = vmatprep.subr.bf16.mxu0 0
        %2111 = vmatpush1.bf16.msra.mxu0 0
        %2112 = vmatprep.subr.bf16.mxu0 0
        %2113 = vmatpush1.bf16.msra.mxu0 0
        %2114 = vmatprep.subr.bf16.mxu0 0
        %2115 = vmatpush1.bf16.msra.mxu0 0
        %2116 = vmatprep.subr.bf16.mxu0 0
        %2117 = vmatpush1.bf16.msra.mxu0 0
        %2118 = vmatprep.subr.bf16.mxu0 0
        %2119 = vmatpush1.bf16.msra.mxu0 0
        %2120 = vmatprep.mubr.bf16.mxu0 0
        %2121 = vmatmul.mubr.bf16.gmra.mrb[0].mxu0 %v1912
        %v2122 = vpop.f32.mrb[0].mxu0
        %v2123 = vadd.f32 0.0, %v2122
        %v2124 = vpop.f32.mrb[0].mxu0
        %v2125 = vpop.f32.mrb[0].mxu0
        %v2126 = vadd.f32 0.0, %v2125
        %v2127 = vpop.f32.mrb[0].mxu0
        %2128 = vmatprep.mubr.bf16.mxu0 0
        %2129 = vmatmul.mubr.bf16.gmra.mrb[0].mxu0 %v1913
        %v2130 = vpop.f32.mrb[0].mxu0
        %v2131 = vadd.f32 0.0, %v2130
        %v2132 = vpop.f32.mrb[0].mxu0
        %v2133 = vpop.f32.mrb[0].mxu0
        %v2134 = vadd.f32 0.0, %v2133
        %v2135 = vpop.f32.mrb[0].mxu0
        %2136 = vmatprep.mubr.bf16.mxu0 0
        %2137 = vmatmul.mubr.bf16.gmra.mrb[0].mxu0 %v1914
        %v2138 = vpop.f32.mrb[0].mxu0
        %v2139 = vadd.f32 0.0, %v2138
        %v2140 = vpop.f32.mrb[0].mxu0
        %v2141 = vpop.f32.mrb[0].mxu0
        %v2142 = vadd.f32 0.0, %v2141
        %v2143 = vpop.f32.mrb[0].mxu0
        %2144 = vmatprep.mubr.bf16.mxu0 0
        %2145 = vmatmul.mubr.bf16.gmra.mrb[0].mxu0 %v1915
        %v2146 = vpop.f32.mrb[0].mxu0
        %v2147 = vadd.f32 0.0, %v2146
        %v2148 = vpop.f32.mrb[0].mxu0
        %v2149 = vpop.f32.mrb[0].mxu0
        %v2150 = vadd.f32 0.0, %v2149
        %v2151 = vpop.f32.mrb[0].mxu0
        %2152 = vmatprep.mubr.bf16.mxu0 0
        %2153 = vmatmul.mubr.bf16.gmra.mrb[0].mxu0 %v1916
        %v2154 = vpop.f32.mrb[0].mxu0
        %v2155 = vadd.f32 0.0, %v2154
        %v2156 = vpop.f32.mrb[0].mxu0
        %v2157 = vpop.f32.mrb[0].mxu0
        %v2158 = vadd.f32 0.0, %v2157
        %v2159 = vpop.f32.mrb[0].mxu0
        %2160 = vmatprep.mubr.bf16.mxu0 0
        %2161 = vmatmul.mubr.bf16.gmra.mrb[0].mxu0 %v1917
        %v2162 = vpop.f32.mrb[0].mxu0
        %v2163 = vadd.f32 0.0, %v2162
        %v2164 = vpop.f32.mrb[0].mxu0
        %v2165 = vpop.f32.mrb[0].mxu0
        %v2166 = vadd.f32 0.0, %v2165
        %v2167 = vpop.f32.mrb[0].mxu0
        %2168 = vmatprep.mubr.bf16.mxu0 0
        %2169 = vmatmul.mubr.bf16.gmra.mrb[0].mxu0 %v1918
        %v2170 = vpop.f32.mrb[0].mxu0
        %v2171 = vadd.f32 0.0, %v2170
        %v2172 = vpop.f32.mrb[0].mxu0
        %v2173 = vpop.f32.mrb[0].mxu0
        %v2174 = vadd.f32 0.0, %v2173
        %v2175 = vpop.f32.mrb[0].mxu0
        %2176 = vmatprep.mubr.bf16.mxu0 0
        %2177 = vmatmul.mubr.bf16.gmra.mrb[0].mxu0 %v1919
        %v2178 = vpop.f32.mrb[0].mxu0
        %v2179 = vadd.f32 0.0, %v2178
        %v2180 = vpop.f32.mrb[0].mxu0
        %v2181 = vpop.f32.mrb[0].mxu0
        %v2182 = vadd.f32 0.0, %v2181
        %v2183 = vpop.f32.mrb[0].mxu0
        %2184 = vmatprep.mubr.bf16.mxu0 0
        %2185 = vmatmul.mubr.bf16.gmra.mrb[0].mxu0 %v1920
        %v2186 = vpop.f32.mrb[0].mxu0
        %v2187 = vadd.f32 0.0, %v2186
        %v2188 = vpop.f32.mrb[0].mxu0
        %v2189 = vpop.f32.mrb[0].mxu0
        %v2190 = vadd.f32 0.0, %v2189
        %v2191 = vpop.f32.mrb[0].mxu0
        %2192 = vmatprep.mubr.bf16.mxu0 0
        %2193 = vmatmul.mubr.bf16.gmra.mrb[0].mxu0 %v1921
        %v2194 = vpop.f32.mrb[0].mxu0
        %v2195 = vadd.f32 0.0, %v2194
        %v2196 = vpop.f32.mrb[0].mxu0
        %v2197 = vpop.f32.mrb[0].mxu0
        %v2198 = vadd.f32 0.0, %v2197
        %v2199 = vpop.f32.mrb[0].mxu0
        %2200 = vmatprep.mubr.bf16.mxu0 0
        %2201 = vmatmul.mubr.bf16.gmra.mrb[0].mxu0 %v1922
        %v2202 = vpop.f32.mrb[0].mxu0
        %v2203 = vadd.f32 0.0, %v2202
        %v2204 = vpop.f32.mrb[0].mxu0
        %v2205 = vpop.f32.mrb[0].mxu0
        %v2206 = vadd.f32 0.0, %v2205
        %v2207 = vpop.f32.mrb[0].mxu0
        %2208 = vmatprep.mubr.bf16.mxu0 0
        %2209 = vmatmul.mubr.bf16.gmra.mrb[0].mxu0 %v1923
        %v2210 = vpop.f32.mrb[0].mxu0
        %v2211 = vadd.f32 0.0, %v2210
        %v2212 = vpop.f32.mrb[0].mxu0
        %v2213 = vpop.f32.mrb[0].mxu0
        %v2214 = vadd.f32 0.0, %v2213
        %v2215 = vpop.f32.mrb[0].mxu0
        %2216 = vmatprep.mubr.bf16.mxu0 0
        %2217 = vmatmul.mubr.bf16.gmra.mrb[0].mxu0 %v1924
        %v2218 = vpop.f32.mrb[0].mxu0
        %v2219 = vadd.f32 0.0, %v2218
        %v2220 = vpop.f32.mrb[0].mxu0
        %v2221 = vpop.f32.mrb[0].mxu0
        %v2222 = vadd.f32 0.0, %v2221
        %v2223 = vpop.f32.mrb[0].mxu0
        %2224 = vmatprep.mubr.bf16.mxu0 0
        %2225 = vmatmul.mubr.bf16.gmra.mrb[0].mxu0 %v1925
        %v2226 = vpop.f32.mrb[0].mxu0
        %v2227 = vadd.f32 0.0, %v2226
        %v2228 = vpop.f32.mrb[0].mxu0
        %v2229 = vpop.f32.mrb[0].mxu0
        %v2230 = vadd.f32 0.0, %v2229
        %v2231 = vpop.f32.mrb[0].mxu0
        %2232 = vmatprep.mubr.bf16.mxu0 0
        %2233 = vmatmul.mubr.bf16.gmra.mrb[0].mxu0 %v1926
        %v2234 = vpop.f32.mrb[0].mxu0
        %v2235 = vadd.f32 0.0, %v2234
        %v2236 = vpop.f32.mrb[0].mxu0
        %v2237 = vpop.f32.mrb[0].mxu0
        %v2238 = vadd.f32 0.0, %v2237
        %v2239 = vpop.f32.mrb[0].mxu0
        %2240 = vmatprep.mubr.bf16.mxu0 0
        %2241 = vmatmul.mubr.bf16.gmra.mrb[0].mxu0 %v1927
        %v2242 = vpop.f32.mrb[0].mxu0
        %v2243 = vadd.f32 0.0, %v2242
        %v2244 = vpop.f32.mrb[0].mxu0
        %v2245 = vpop.f32.mrb[0].mxu0
        %v2246 = vadd.f32 0.0, %v2245
        %v2247 = vpop.f32.mrb[0].mxu0
        %2248 = vmatprep.mubr.bf16.mxu0 0
        %2249 = vmatmul.mubr.bf16.gmra.mrb[0].mxu0 %v1928
        %v2250 = vpop.f32.mrb[0].mxu0
        %v2251 = vadd.f32 0.0, %v2250
        %v2252 = vpop.f32.mrb[0].mxu0
        %v2253 = vpop.f32.mrb[0].mxu0
        %v2254 = vadd.f32 0.0, %v2253
        %v2255 = vpop.f32.mrb[0].mxu0
        %2256 = vmatprep.mubr.bf16.mxu0 0
        %2257 = vmatmul.mubr.bf16.gmra.mrb[0].mxu0 %v1929
        %v2258 = vpop.f32.mrb[0].mxu0
        %v2259 = vadd.f32 0.0, %v2258
        %v2260 = vpop.f32.mrb[0].mxu0
        %v2261 = vpop.f32.mrb[0].mxu0
        %v2262 = vadd.f32 0.0, %v2261
        %v2263 = vpop.f32.mrb[0].mxu0
        %2264 = vmatprep.mubr.bf16.mxu0 0
        %2265 = vmatmul.mubr.bf16.gmra.mrb[0].mxu0 %v1930
        %v2266 = vpop.f32.mrb[0].mxu0
        %v2267 = vadd.f32 0.0, %v2266
        %v2268 = vpop.f32.mrb[0].mxu0
        %v2269 = vpop.f32.mrb[0].mxu0
        %v2270 = vadd.f32 0.0, %v2269
        %v2271 = vpop.f32.mrb[0].mxu0
        %2272 = vmatprep.mubr.bf16.mxu0 0
        %2273 = vmatmul.mubr.bf16.gmra.mrb[0].mxu0 %v1931
        %v2274 = vpop.f32.mrb[0].mxu0
        %v2275 = vadd.f32 0.0, %v2274
        %v2276 = vpop.f32.mrb[0].mxu0
        %v2277 = vpop.f32.mrb[0].mxu0
        %v2278 = vadd.f32 0.0, %v2277
        %v2279 = vpop.f32.mrb[0].mxu0
        %2280 = vmatprep.mubr.bf16.mxu0 0
        %2281 = vmatmul.mubr.bf16.gmra.mrb[0].mxu0 %v1932
        %v2282 = vpop.f32.mrb[0].mxu0
        %v2283 = vadd.f32 0.0, %v2282
        %v2284 = vpop.f32.mrb[0].mxu0
        %v2285 = vpop.f32.mrb[0].mxu0
        %v2286 = vadd.f32 0.0, %v2285
        %v2287 = vpop.f32.mrb[0].mxu0
        %2288 = vmatprep.mubr.bf16.mxu0 0
        %2289 = vmatmul.mubr.bf16.gmra.mrb[0].mxu0 %v1933
        %v2290 = vpop.f32.mrb[0].mxu0
        %v2291 = vadd.f32 0.0, %v2290
        %v2292 = vpop.f32.mrb[0].mxu0
        %v2293 = vpop.f32.mrb[0].mxu0
        %v2294 = vadd.f32 0.0, %v2293
        %v2295 = vpop.f32.mrb[0].mxu0
        %2296 = vmatprep.mubr.bf16.mxu0 0
        %2297 = vmatmul.mubr.bf16.gmra.mrb[0].mxu0 %v1934
        %v2298 = vpop.f32.mrb[0].mxu0
        %v2299 = vadd.f32 0.0, %v2298
        %v2300 = vpop.f32.mrb[0].mxu0
        %v2301 = vpop.f32.mrb[0].mxu0
        %v2302 = vadd.f32 0.0, %v2301
        %v2303 = vpop.f32.mrb[0].mxu0
        %2304 = vmatprep.mubr.bf16.mxu0 0
        %2305 = vmatmul.mubr.bf16.gmra.mrb[0].mxu0 %v1935
        %v2306 = vpop.f32.mrb[0].mxu0
        %v2307 = vadd.f32 0.0, %v2306
        %v2308 = vpop.f32.mrb[0].mxu0
        %v2309 = vpop.f32.mrb[0].mxu0
        %v2310 = vadd.f32 0.0, %v2309
        %v2311 = vpop.f32.mrb[0].mxu0
        %2312 = vmatprep.mubr.bf16.mxu0 0
        %2313 = vmatmul.mubr.bf16.gmra.mrb[0].mxu0 %v1936
        %v2314 = vpop.f32.mrb[0].mxu0
        %v2315 = vadd.f32 0.0, %v2314
        %v2316 = vpop.f32.mrb[0].mxu0
        %v2317 = vpop.f32.mrb[0].mxu0
        %v2318 = vadd.f32 0.0, %v2317
        %v2319 = vpop.f32.mrb[0].mxu0
        %2320 = vmatprep.mubr.bf16.mxu0 0
        %2321 = vmatmul.mubr.bf16.gmra.mrb[0].mxu0 %v1937
        %v2322 = vpop.f32.mrb[0].mxu0
        %v2323 = vadd.f32 0.0, %v2322
        %v2324 = vpop.f32.mrb[0].mxu0
        %v2325 = vpop.f32.mrb[0].mxu0
        %v2326 = vadd.f32 0.0, %v2325
        %v2327 = vpop.f32.mrb[0].mxu0
        %2328 = vmatprep.mubr.bf16.mxu0 0
        %2329 = vmatmul.mubr.bf16.gmra.mrb[0].mxu0 %v1938
        %v2330 = vpop.f32.mrb[0].mxu0
        %v2331 = vadd.f32 0.0, %v2330
        %v2332 = vpop.f32.mrb[0].mxu0
        %v2333 = vpop.f32.mrb[0].mxu0
        %v2334 = vadd.f32 0.0, %v2333
        %v2335 = vpop.f32.mrb[0].mxu0
        %2336 = vmatprep.mubr.bf16.mxu0 0
        %2337 = vmatmul.mubr.bf16.gmra.mrb[0].mxu0 %v1939
        %v2338 = vpop.f32.mrb[0].mxu0
        %v2339 = vadd.f32 0.0, %v2338
        %v2340 = vpop.f32.mrb[0].mxu0
        %v2341 = vpop.f32.mrb[0].mxu0
        %v2342 = vadd.f32 0.0, %v2341
        %v2343 = vpop.f32.mrb[0].mxu0
        %2344 = vmatprep.mubr.bf16.mxu0 0
        %2345 = vmatmul.mubr.bf16.gmra.mrb[0].mxu0 %v1940
        %v2346 = vpop.f32.mrb[0].mxu0
        %v2347 = vadd.f32 0.0, %v2346
        %v2348 = vpop.f32.mrb[0].mxu0
        %v2349 = vpop.f32.mrb[0].mxu0
        %v2350 = vadd.f32 0.0, %v2349
        %v2351 = vpop.f32.mrb[0].mxu0
        %2352 = vmatprep.mubr.bf16.mxu0 0
        %2353 = vmatmul.mubr.bf16.gmra.mrb[0].mxu0 %v1941
        %v2354 = vpop.f32.mrb[0].mxu0
        %v2355 = vadd.f32 0.0, %v2354
        %v2356 = vpop.f32.mrb[0].mxu0
        %v2357 = vpop.f32.mrb[0].mxu0
        %v2358 = vadd.f32 0.0, %v2357
        %v2359 = vpop.f32.mrb[0].mxu0
        %2360 = vmatprep.mubr.bf16.mxu0 0
        %2361 = vmatmul.mubr.bf16.gmra.mrb[0].mxu0 %v1942
        %v2362 = vpop.f32.mrb[0].mxu0
        %v2363 = vadd.f32 0.0, %v2362
        %v2364 = vpop.f32.mrb[0].mxu0
        %v2365 = vpop.f32.mrb[0].mxu0
        %v2366 = vadd.f32 0.0, %v2365
        %v2367 = vpop.f32.mrb[0].mxu0
        %2368 = vmatprep.mubr.bf16.mxu0 0
        %2369 = vmatmul.mubr.bf16.gmra.mrb[0].mxu0 %v1943
        %v2370 = vpop.f32.mrb[0].mxu0
        %v2371 = vadd.f32 0.0, %v2370
        %v2372 = vpop.f32.mrb[0].mxu0
        %v2373 = vpop.f32.mrb[0].mxu0
        %v2374 = vadd.f32 0.0, %v2373
        %v2375 = vpop.f32.mrb[0].mxu0
        %2376 = vmatprep.mubr.bf16.mxu0 0
        %2377 = vmatmul.mubr.bf16.gmra.mrb[0].mxu0 %v1944
        %v2378 = vpop.f32.mrb[0].mxu0
        %v2379 = vadd.f32 0.0, %v2378
        %v2380 = vpop.f32.mrb[0].mxu0
        %v2381 = vpop.f32.mrb[0].mxu0
        %v2382 = vadd.f32 0.0, %v2381
        %v2383 = vpop.f32.mrb[0].mxu0
        %2384 = vmatprep.mubr.bf16.mxu0 0
        %2385 = vmatmul.mubr.bf16.gmra.mrb[0].mxu0 %v1945
        %v2386 = vpop.f32.mrb[0].mxu0
        %v2387 = vadd.f32 0.0, %v2386
        %v2388 = vpop.f32.mrb[0].mxu0
        %v2389 = vpop.f32.mrb[0].mxu0
        %v2390 = vadd.f32 0.0, %v2389
        %v2391 = vpop.f32.mrb[0].mxu0
        %2392 = vmatprep.mubr.bf16.mxu0 0
        %2393 = vmatmul.mubr.bf16.gmra.mrb[0].mxu0 %v1946
        %v2394 = vpop.f32.mrb[0].mxu0
        %v2395 = vadd.f32 0.0, %v2394
        %v2396 = vpop.f32.mrb[0].mxu0
        %v2397 = vpop.f32.mrb[0].mxu0
        %v2398 = vadd.f32 0.0, %v2397
        %v2399 = vpop.f32.mrb[0].mxu0
        %2400 = vmatprep.mubr.bf16.mxu0 0
        %2401 = vmatmul.mubr.bf16.gmra.mrb[0].mxu0 %v1947
        %v2402 = vpop.f32.mrb[0].mxu0
        %v2403 = vadd.f32 0.0, %v2402
        %v2404 = vpop.f32.mrb[0].mxu0
        %v2405 = vpop.f32.mrb[0].mxu0
        %v2406 = vadd.f32 0.0, %v2405
        %v2407 = vpop.f32.mrb[0].mxu0
        %2408 = vmatprep.mubr.bf16.mxu0 0
        %2409 = vmatmul.mubr.bf16.gmra.mrb[0].mxu0 %v1948
        %v2410 = vpop.f32.mrb[0].mxu0
        %v2411 = vadd.f32 0.0, %v2410
        %v2412 = vpop.f32.mrb[0].mxu0
        %v2413 = vpop.f32.mrb[0].mxu0
        %v2414 = vadd.f32 0.0, %v2413
        %v2415 = vpop.f32.mrb[0].mxu0
        %2416 = vmatprep.mubr.bf16.mxu0 0
        %2417 = vmatmul.mubr.bf16.gmra.mrb[0].mxu0 %v1949
        %v2418 = vpop.f32.mrb[0].mxu0
        %v2419 = vadd.f32 0.0, %v2418
        %v2420 = vpop.f32.mrb[0].mxu0
        %v2421 = vpop.f32.mrb[0].mxu0
        %v2422 = vadd.f32 0.0, %v2421
        %v2423 = vpop.f32.mrb[0].mxu0
        %2424 = vmatprep.mubr.bf16.mxu0 0
        %2425 = vmatmul.mubr.bf16.gmra.mrb[0].mxu0 %v1950
        %v2426 = vpop.f32.mrb[0].mxu0
        %v2427 = vadd.f32 0.0, %v2426
        %v2428 = vpop.f32.mrb[0].mxu0
        %v2429 = vpop.f32.mrb[0].mxu0
        %v2430 = vadd.f32 0.0, %v2429
        %v2431 = vpop.f32.mrb[0].mxu0
        %2432 = vmatprep.mubr.bf16.mxu0 0
        %2433 = vmatmul.mubr.bf16.gmra.mrb[0].mxu0 %v1951
        %v2434 = vpop.f32.mrb[0].mxu0
        %v2435 = vadd.f32 0.0, %v2434
        %v2436 = vpop.f32.mrb[0].mxu0
        %v2437 = vpop.f32.mrb[0].mxu0
        %v2438 = vadd.f32 0.0, %v2437
        %v2439 = vpop.f32.mrb[0].mxu0
        %2440 = vmatprep.mubr.bf16.mxu0 0
        %2441 = vmatmul.mubr.bf16.gmra.mrb[0].mxu0 %v1952
        %v2442 = vpop.f32.mrb[0].mxu0
        %v2443 = vadd.f32 0.0, %v2442
        %v2444 = vpop.f32.mrb[0].mxu0
        %v2445 = vpop.f32.mrb[0].mxu0
        %v2446 = vadd.f32 0.0, %v2445
        %v2447 = vpop.f32.mrb[0].mxu0
        %2448 = vmatprep.mubr.bf16.mxu0 0
        %2449 = vmatmul.mubr.bf16.gmra.mrb[0].mxu0 %v1953
        %v2450 = vpop.f32.mrb[0].mxu0
        %v2451 = vadd.f32 0.0, %v2450
        %v2452 = vpop.f32.mrb[0].mxu0
        %v2453 = vpop.f32.mrb[0].mxu0
        %v2454 = vadd.f32 0.0, %v2453
        %v2455 = vpop.f32.mrb[0].mxu0
        %2456 = vmatprep.mubr.bf16.mxu0 0
        %2457 = vmatmul.mubr.bf16.gmra.mrb[0].mxu0 %v1954
        %v2458 = vpop.f32.mrb[0].mxu0
        %v2459 = vadd.f32 0.0, %v2458
        %v2460 = vpop.f32.mrb[0].mxu0
        %v2461 = vpop.f32.mrb[0].mxu0
        %v2462 = vadd.f32 0.0, %v2461
        %v2463 = vpop.f32.mrb[0].mxu0
        %2464 = vmatprep.mubr.bf16.mxu0 0
        %2465 = vmatmul.mubr.bf16.gmra.mrb[0].mxu0 %v1955
        %v2466 = vpop.f32.mrb[0].mxu0
        %v2467 = vadd.f32 0.0, %v2466
        %v2468 = vpop.f32.mrb[0].mxu0
        %v2469 = vpop.f32.mrb[0].mxu0
        %v2470 = vadd.f32 0.0, %v2469
        %v2471 = vpop.f32.mrb[0].mxu0
        %2472 = vmatprep.mubr.bf16.mxu0 0
        %2473 = vmatmul.mubr.bf16.gmra.mrb[0].mxu0 %v1956
        %v2474 = vpop.f32.mrb[0].mxu0
        %v2475 = vadd.f32 0.0, %v2474
        %v2476 = vpop.f32.mrb[0].mxu0
        %v2477 = vpop.f32.mrb[0].mxu0
        %v2478 = vadd.f32 0.0, %v2477
        %v2479 = vpop.f32.mrb[0].mxu0
        %2480 = vmatprep.mubr.bf16.mxu0 0
        %2481 = vmatmul.mubr.bf16.gmra.mrb[0].mxu0 %v1957
        %v2482 = vpop.f32.mrb[0].mxu0
        %v2483 = vadd.f32 0.0, %v2482
        %v2484 = vpop.f32.mrb[0].mxu0
        %v2485 = vpop.f32.mrb[0].mxu0
        %v2486 = vadd.f32 0.0, %v2485
        %v2487 = vpop.f32.mrb[0].mxu0
        %2488 = vmatprep.mubr.bf16.mxu0 0
        %2489 = vmatmul.mubr.bf16.gmra.mrb[0].mxu0 %v1958
        %v2490 = vpop.f32.mrb[0].mxu0
        %v2491 = vadd.f32 0.0, %v2490
        %v2492 = vpop.f32.mrb[0].mxu0
        %v2493 = vpop.f32.mrb[0].mxu0
        %v2494 = vadd.f32 0.0, %v2493
        %v2495 = vpop.f32.mrb[0].mxu0
        %2496 = vmatprep.mubr.bf16.mxu0 0
        %2497 = vmatmul.mubr.bf16.gmra.mrb[0].mxu0 %v1959
        %v2498 = vpop.f32.mrb[0].mxu0
        %v2499 = vadd.f32 0.0, %v2498
        %v2500 = vpop.f32.mrb[0].mxu0
        %v2501 = vpop.f32.mrb[0].mxu0
        %v2502 = vadd.f32 0.0, %v2501
        %v2503 = vpop.f32.mrb[0].mxu0
        %2504 = vmatprep.mubr.bf16.mxu0 0
        %2505 = vmatmul.mubr.bf16.gmra.mrb[0].mxu0 %v1960
        %v2506 = vpop.f32.mrb[0].mxu0
        %v2507 = vadd.f32 0.0, %v2506
        %v2508 = vpop.f32.mrb[0].mxu0
        %v2509 = vpop.f32.mrb[0].mxu0
        %v2510 = vadd.f32 0.0, %v2509
        %v2511 = vpop.f32.mrb[0].mxu0
        %2512 = vmatprep.mubr.bf16.mxu0 0
        %2513 = vmatmul.mubr.bf16.gmra.mrb[0].mxu0 %v1961
        %v2514 = vpop.f32.mrb[0].mxu0
        %v2515 = vadd.f32 0.0, %v2514
        %v2516 = vpop.f32.mrb[0].mxu0
        %v2517 = vpop.f32.mrb[0].mxu0
        %v2518 = vadd.f32 0.0, %v2517
        %v2519 = vpop.f32.mrb[0].mxu0
        %2520 = vmatprep.mubr.bf16.mxu0 0
        %2521 = vmatmul.mubr.bf16.gmra.mrb[0].mxu0 %v1962
        %v2522 = vpop.f32.mrb[0].mxu0
        %v2523 = vadd.f32 0.0, %v2522
        %v2524 = vpop.f32.mrb[0].mxu0
        %v2525 = vpop.f32.mrb[0].mxu0
        %v2526 = vadd.f32 0.0, %v2525
        %v2527 = vpop.f32.mrb[0].mxu0
        %2528 = vmatprep.mubr.bf16.mxu0 0
        %2529 = vmatmul.mubr.bf16.gmra.mrb[0].mxu0 %v1963
        %v2530 = vpop.f32.mrb[0].mxu0
        %v2531 = vadd.f32 0.0, %v2530
        %v2532 = vpop.f32.mrb[0].mxu0
        %v2533 = vpop.f32.mrb[0].mxu0
        %v2534 = vadd.f32 0.0, %v2533
        %v2535 = vpop.f32.mrb[0].mxu0
        %2536 = vmatprep.mubr.bf16.mxu0 0
        %2537 = vmatmul.mubr.bf16.gmra.mrb[0].mxu0 %v1964
        %v2538 = vpop.f32.mrb[0].mxu0
        %v2539 = vadd.f32 0.0, %v2538
        %v2540 = vpop.f32.mrb[0].mxu0
        %v2541 = vpop.f32.mrb[0].mxu0
        %v2542 = vadd.f32 0.0, %v2541
        %v2543 = vpop.f32.mrb[0].mxu0
        %2544 = vmatprep.mubr.bf16.mxu0 0
        %2545 = vmatmul.mubr.bf16.gmra.mrb[0].mxu0 %v1965
        %v2546 = vpop.f32.mrb[0].mxu0
        %v2547 = vadd.f32 0.0, %v2546
        %v2548 = vpop.f32.mrb[0].mxu0
        %v2549 = vpop.f32.mrb[0].mxu0
        %v2550 = vadd.f32 0.0, %v2549
        %v2551 = vpop.f32.mrb[0].mxu0
        %2552 = vmatprep.mubr.bf16.mxu0 0
        %2553 = vmatmul.mubr.bf16.gmra.mrb[0].mxu0 %v1966
        %v2554 = vpop.f32.mrb[0].mxu0
        %v2555 = vadd.f32 0.0, %v2554
        %v2556 = vpop.f32.mrb[0].mxu0
        %v2557 = vpop.f32.mrb[0].mxu0
        %v2558 = vadd.f32 0.0, %v2557
        %v2559 = vpop.f32.mrb[0].mxu0
        %2560 = vmatprep.mubr.bf16.mxu0 0
        %2561 = vmatmul.mubr.bf16.gmra.mrb[0].mxu0 %v1967
        %v2562 = vpop.f32.mrb[0].mxu0
        %v2563 = vadd.f32 0.0, %v2562
        %v2564 = vpop.f32.mrb[0].mxu0
        %v2565 = vpop.f32.mrb[0].mxu0
        %v2566 = vadd.f32 0.0, %v2565
        %v2567 = vpop.f32.mrb[0].mxu0
        %2568 = vmatprep.mubr.bf16.mxu0 0
        %2569 = vmatmul.mubr.bf16.gmra.mrb[0].mxu0 %v1968
        %v2570 = vpop.f32.mrb[0].mxu0
        %v2571 = vadd.f32 0.0, %v2570
        %v2572 = vpop.f32.mrb[0].mxu0
        %v2573 = vpop.f32.mrb[0].mxu0
        %v2574 = vadd.f32 0.0, %v2573
        %v2575 = vpop.f32.mrb[0].mxu0
        %2576 = vmatprep.mubr.bf16.mxu0 0
        %2577 = vmatmul.mubr.bf16.gmra.mrb[0].mxu0 %v1969
        %v2578 = vpop.f32.mrb[0].mxu0
        %v2579 = vadd.f32 0.0, %v2578
        %v2580 = vpop.f32.mrb[0].mxu0
        %v2581 = vpop.f32.mrb[0].mxu0
        %v2582 = vadd.f32 0.0, %v2581
        %v2583 = vpop.f32.mrb[0].mxu0
        %2584 = vmatprep.mubr.bf16.mxu0 0
        %2585 = vmatmul.mubr.bf16.gmra.mrb[0].mxu0 %v1970
        %v2586 = vpop.f32.mrb[0].mxu0
        %v2587 = vadd.f32 0.0, %v2586
        %v2588 = vpop.f32.mrb[0].mxu0
        %v2589 = vpop.f32.mrb[0].mxu0
        %v2590 = vadd.f32 0.0, %v2589
        %v2591 = vpop.f32.mrb[0].mxu0
        %2592 = vmatprep.mubr.bf16.mxu0 0
        %2593 = vmatmul.mubr.bf16.gmra.mrb[0].mxu0 %v1971
        %v2594 = vpop.f32.mrb[0].mxu0
        %v2595 = vadd.f32 0.0, %v2594
        %v2596 = vpop.f32.mrb[0].mxu0
        %v2597 = vpop.f32.mrb[0].mxu0
        %v2598 = vadd.f32 0.0, %v2597
        %v2599 = vpop.f32.mrb[0].mxu0
        %2600 = vmatprep.mubr.bf16.mxu0 0
        %2601 = vmatmul.mubr.bf16.gmra.mrb[0].mxu0 %v1972
        %v2602 = vpop.f32.mrb[0].mxu0
        %v2603 = vadd.f32 0.0, %v2602
        %v2604 = vpop.f32.mrb[0].mxu0
        %v2605 = vpop.f32.mrb[0].mxu0
        %v2606 = vadd.f32 0.0, %v2605
        %v2607 = vpop.f32.mrb[0].mxu0
        %2608 = vmatprep.mubr.bf16.mxu0 0
        %2609 = vmatmul.mubr.bf16.gmra.mrb[0].mxu0 %v1973
        %v2610 = vpop.f32.mrb[0].mxu0
        %v2611 = vadd.f32 0.0, %v2610
        %v2612 = vpop.f32.mrb[0].mxu0
        %v2613 = vpop.f32.mrb[0].mxu0
        %v2614 = vadd.f32 0.0, %v2613
        %v2615 = vpop.f32.mrb[0].mxu0
        %2616 = vmatprep.mubr.bf16.mxu0 0
        %2617 = vmatmul.mubr.bf16.gmra.mrb[0].mxu0 %v1974
        %v2618 = vpop.f32.mrb[0].mxu0
        %v2619 = vadd.f32 0.0, %v2618
        %v2620 = vpop.f32.mrb[0].mxu0
        %v2621 = vpop.f32.mrb[0].mxu0
        %v2622 = vadd.f32 0.0, %v2621
        %v2623 = vpop.f32.mrb[0].mxu0
        %2624 = vmatprep.mubr.bf16.mxu0 0
        %2625 = vmatmul.mubr.bf16.gmra.mrb[0].mxu0 %v1975
        %v2626 = vpop.f32.mrb[0].mxu0
        %v2627 = vadd.f32 0.0, %v2626
        %v2628 = vpop.f32.mrb[0].mxu0
        %v2629 = vpop.f32.mrb[0].mxu0
        %v2630 = vadd.f32 0.0, %v2629
        %v2631 = vpop.f32.mrb[0].mxu0
        %2632 = vdwg.mxu0
        %v2761 = vunpack.c.l.b16 %v170
        %v2762 = vunpack.c.l.b16 %v171
        %v2763 = vunpack.c.l.b16 %v172
        %v2764 = vunpack.c.l.b16 %v173
        %v2765 = vunpack.c.l.b16 %v175
        %v2766 = vunpack.c.l.b16 %v176
        %v2767 = vunpack.c.l.b16 %v177
        %v2768 = vunpack.c.l.b16 %v178
        %v2769 = vunpack.c.l.b16 %v180
        %v2770 = vunpack.c.l.b16 %v181
        %v2771 = vunpack.c.l.b16 %v182
        %v2772 = vunpack.c.l.b16 %v183
        %v2773 = vunpack.c.l.b16 %v185
        %v2774 = vunpack.c.l.b16 %v186
        %v2775 = vunpack.c.l.b16 %v187
        %v2776 = vunpack.c.l.b16 %v188
        %v2777 = vunpack.c.l.b16 %v190
        %v2778 = vunpack.c.l.b16 %v191
        %v2779 = vunpack.c.l.b16 %v192
        %v2780 = vunpack.c.l.b16 %v193
        %v2781 = vunpack.c.l.b16 %v195
        %v2782 = vunpack.c.l.b16 %v196
        %v2783 = vunpack.c.l.b16 %v197
        %v2784 = vunpack.c.l.b16 %v198
        %v2785 = vunpack.c.l.b16 %v200
        %v2786 = vunpack.c.l.b16 %v201
        %v2787 = vunpack.c.l.b16 %v202
        %v2788 = vunpack.c.l.b16 %v203
        %v2789 = vunpack.c.l.b16 %v205
        %v2790 = vunpack.c.l.b16 %v206
        %v2791 = vunpack.c.l.b16 %v207
        %v2792 = vunpack.c.l.b16 %v208
        %v2793 = vunpack.c.l.b16 %v210
        %v2794 = vunpack.c.l.b16 %v211
        %v2795 = vunpack.c.l.b16 %v212
        %v2796 = vunpack.c.l.b16 %v213
        %v2797 = vunpack.c.l.b16 %v215
        %v2798 = vunpack.c.l.b16 %v216
        %v2799 = vunpack.c.l.b16 %v217
        %v2800 = vunpack.c.l.b16 %v218
        %v2801 = vunpack.c.l.b16 %v220
        %v2802 = vunpack.c.l.b16 %v221
        %v2803 = vunpack.c.l.b16 %v222
        %v2804 = vunpack.c.l.b16 %v223
        %v2805 = vunpack.c.l.b16 %v225
        %v2806 = vunpack.c.l.b16 %v226
        %v2807 = vunpack.c.l.b16 %v227
        %v2808 = vunpack.c.l.b16 %v228
        %v2809 = vunpack.c.l.b16 %v230
        %v2810 = vunpack.c.l.b16 %v231
        %v2811 = vunpack.c.l.b16 %v232
        %v2812 = vunpack.c.l.b16 %v233
        %v2813 = vunpack.c.l.b16 %v235
        %v2814 = vunpack.c.l.b16 %v236
        %v2815 = vunpack.c.l.b16 %v237
        %v2816 = vunpack.c.l.b16 %v238
        %v2817 = vunpack.c.l.b16 %v240
        %v2818 = vunpack.c.l.b16 %v241
        %v2819 = vunpack.c.l.b16 %v242
        %v2820 = vunpack.c.l.b16 %v243
        %v2821 = vunpack.c.l.b16 %v245
        %v2822 = vunpack.c.l.b16 %v246
        %v2823 = vunpack.c.l.b16 %v247
        %v2824 = vunpack.c.l.b16 %v248
        %v2825 = vunpack.c.l.b16 %v250
        %v2826 = vunpack.c.l.b16 %v251
        %v2827 = vunpack.c.l.b16 %v252
        %v2828 = vunpack.c.l.b16 %v253
        %v2829 = vunpack.c.l.b16 %v255
        %v2830 = vunpack.c.l.b16 %v256
        %v2831 = vunpack.c.l.b16 %v257
        %v2832 = vunpack.c.l.b16 %v258
        %v2833 = vunpack.c.l.b16 %v260
        %v2834 = vunpack.c.l.b16 %v261
        %v2835 = vunpack.c.l.b16 %v262
        %v2836 = vunpack.c.l.b16 %v263
        %v2837 = vunpack.c.l.b16 %v265
        %v2838 = vunpack.c.l.b16 %v266
        %v2839 = vunpack.c.l.b16 %v267
        %v2840 = vunpack.c.l.b16 %v268
        %v2841 = vunpack.c.l.b16 %v270
        %v2842 = vunpack.c.l.b16 %v271
        %v2843 = vunpack.c.l.b16 %v272
        %v2844 = vunpack.c.l.b16 %v273
        %v2845 = vunpack.c.l.b16 %v275
        %v2846 = vunpack.c.l.b16 %v276
        %v2847 = vunpack.c.l.b16 %v277
        %v2848 = vunpack.c.l.b16 %v278
        %v2849 = vunpack.c.l.b16 %v280
        %v2850 = vunpack.c.l.b16 %v281
        %v2851 = vunpack.c.l.b16 %v282
        %v2852 = vunpack.c.l.b16 %v283
        %v2853 = vunpack.c.l.b16 %v285
        %v2854 = vunpack.c.l.b16 %v286
        %v2855 = vunpack.c.l.b16 %v287
        %v2856 = vunpack.c.l.b16 %v288
        %v2857 = vunpack.c.l.b16 %v290
        %v2858 = vunpack.c.l.b16 %v291
        %v2859 = vunpack.c.l.b16 %v292
        %v2860 = vunpack.c.l.b16 %v293
        %v2861 = vunpack.c.l.b16 %v295
        %v2862 = vunpack.c.l.b16 %v296
        %v2863 = vunpack.c.l.b16 %v297
        %v2864 = vunpack.c.l.b16 %v298
        %v2865 = vunpack.c.l.b16 %v300
        %v2866 = vunpack.c.l.b16 %v301
        %v2867 = vunpack.c.l.b16 %v302
        %v2868 = vunpack.c.l.b16 %v303
        %v2869 = vunpack.c.l.b16 %v305
        %v2870 = vunpack.c.l.b16 %v306
        %v2871 = vunpack.c.l.b16 %v307
        %v2872 = vunpack.c.l.b16 %v308
        %v2873 = vunpack.c.l.b16 %v310
        %v2874 = vunpack.c.l.b16 %v311
        %v2875 = vunpack.c.l.b16 %v312
        %v2876 = vunpack.c.l.b16 %v313
        %v2877 = vunpack.c.l.b16 %v315
        %v2878 = vunpack.c.l.b16 %v316
        %v2879 = vunpack.c.l.b16 %v317
        %v2880 = vunpack.c.l.b16 %v318
        %v2881 = vunpack.c.l.b16 %v320
        %v2882 = vunpack.c.l.b16 %v321
        %v2883 = vunpack.c.l.b16 %v322
        %v2884 = vunpack.c.l.b16 %v323
        %v2885 = vunpack.c.l.b16 %v325
        %v2886 = vunpack.c.l.b16 %v326
        %v2887 = vunpack.c.l.b16 %v327
        %v2888 = vunpack.c.l.b16 %v328
        %v2889 = vpack.c.b16 %v2762, %v2761
        %v2890 = vpack.c.b16 %v2764, %v2763
        %v2891 = vpack.c.b16 %v2766, %v2765
        %v2892 = vpack.c.b16 %v2768, %v2767
        %v2893 = vpack.c.b16 %v2770, %v2769
        %v2894 = vpack.c.b16 %v2772, %v2771
        %v2895 = vpack.c.b16 %v2774, %v2773
        %v2896 = vpack.c.b16 %v2776, %v2775
        %v2897 = vpack.c.b16 %v2778, %v2777
        %v2898 = vpack.c.b16 %v2780, %v2779
        %v2899 = vpack.c.b16 %v2782, %v2781
        %v2900 = vpack.c.b16 %v2784, %v2783
        %v2901 = vpack.c.b16 %v2786, %v2785
        %v2902 = vpack.c.b16 %v2788, %v2787
        %v2903 = vpack.c.b16 %v2790, %v2789
        %v2904 = vpack.c.b16 %v2792, %v2791
        %v2905 = vpack.c.b16 %v2794, %v2793
        %v2906 = vpack.c.b16 %v2796, %v2795
        %v2907 = vpack.c.b16 %v2798, %v2797
        %v2908 = vpack.c.b16 %v2800, %v2799
        %v2909 = vpack.c.b16 %v2802, %v2801
        %v2910 = vpack.c.b16 %v2804, %v2803
        %v2911 = vpack.c.b16 %v2806, %v2805
        %v2912 = vpack.c.b16 %v2808, %v2807
        %v2913 = vpack.c.b16 %v2810, %v2809
        %v2914 = vpack.c.b16 %v2812, %v2811
        %v2915 = vpack.c.b16 %v2814, %v2813
        %v2916 = vpack.c.b16 %v2816, %v2815
        %v2917 = vpack.c.b16 %v2818, %v2817
        %v2918 = vpack.c.b16 %v2820, %v2819
        %v2919 = vpack.c.b16 %v2822, %v2821
        %v2920 = vpack.c.b16 %v2824, %v2823
        %v2921 = vpack.c.b16 %v2826, %v2825
        %v2922 = vpack.c.b16 %v2828, %v2827
        %v2923 = vpack.c.b16 %v2830, %v2829
        %v2924 = vpack.c.b16 %v2832, %v2831
        %v2925 = vpack.c.b16 %v2834, %v2833
        %v2926 = vpack.c.b16 %v2836, %v2835
        %v2927 = vpack.c.b16 %v2838, %v2837
        %v2928 = vpack.c.b16 %v2840, %v2839
        %v2929 = vpack.c.b16 %v2842, %v2841
        %v2930 = vpack.c.b16 %v2844, %v2843
        %v2931 = vpack.c.b16 %v2846, %v2845
        %v2932 = vpack.c.b16 %v2848, %v2847
        %v2933 = vpack.c.b16 %v2850, %v2849
        %v2934 = vpack.c.b16 %v2852, %v2851
        %v2935 = vpack.c.b16 %v2854, %v2853
        %v2936 = vpack.c.b16 %v2856, %v2855
        %v2937 = vpack.c.b16 %v2858, %v2857
        %v2938 = vpack.c.b16 %v2860, %v2859
        %v2939 = vpack.c.b16 %v2862, %v2861
        %v2940 = vpack.c.b16 %v2864, %v2863
        %v2941 = vpack.c.b16 %v2866, %v2865
        %v2942 = vpack.c.b16 %v2868, %v2867
        %v2943 = vpack.c.b16 %v2870, %v2869
        %v2944 = vpack.c.b16 %v2872, %v2871
        %v2945 = vpack.c.b16 %v2874, %v2873
        %v2946 = vpack.c.b16 %v2876, %v2875
        %v2947 = vpack.c.b16 %v2878, %v2877
        %v2948 = vpack.c.b16 %v2880, %v2879
        %v2949 = vpack.c.b16 %v2882, %v2881
        %v2950 = vpack.c.b16 %v2884, %v2883
        %v2951 = vpack.c.b16 %v2886, %v2885
        %v2952 = vpack.c.b16 %v2888, %v2887
        %v3033 = vunpack.c.l.b16 %v340
        %v3034 = vunpack.c.l.b16 %v341
        %v3035 = vunpack.c.l.b16 %v342
        %v3036 = vunpack.c.l.b16 %v343
        %v3037 = vunpack.c.l.b16 %v344
        %v3038 = vunpack.c.l.b16 %v345
        %v3039 = vunpack.c.l.b16 %v346
        %v3040 = vunpack.c.l.b16 %v347
        %v3041 = vunpack.c.l.b16 %v348
        %v3042 = vunpack.c.l.b16 %v349
        %v3043 = vunpack.c.l.b16 %v350
        %v3044 = vunpack.c.l.b16 %v351
        %v3045 = vunpack.c.l.b16 %v352
        %v3046 = vunpack.c.l.b16 %v353
        %v3047 = vunpack.c.l.b16 %v354
        %v3048 = vunpack.c.l.b16 %v355
        %v3049 = vpack.c.b16 %v3034, %v3033
        %v3050 = vpack.c.b16 %v3036, %v3035
        %v3051 = vpack.c.b16 %v3038, %v3037
        %v3052 = vpack.c.b16 %v3040, %v3039
        %v3053 = vpack.c.b16 %v3042, %v3041
        %v3054 = vpack.c.b16 %v3044, %v3043
        %v3055 = vpack.c.b16 %v3046, %v3045
        %v3056 = vpack.c.b16 %v3048, %v3047
        %3065 = vmatprep.subr.bf16.mxu0 0
        %3066 = vmatpush1.bf16.msra.mxu0 %v3049
        %3067 = vmatprep.subr.bf16.mxu0 0
        %3068 = vmatpush1.bf16.msra.mxu0 %v3050
        %3069 = vmatprep.subr.bf16.mxu0 0
        %3070 = vmatpush1.bf16.msra.mxu0 %v3051
        %3071 = vmatprep.subr.bf16.mxu0 0
        %3072 = vmatpush1.bf16.msra.mxu0 %v3052
        %3073 = vmatprep.subr.bf16.mxu0 0
        %3074 = vmatpush1.bf16.msra.mxu0 %v3053
        %3075 = vmatprep.subr.bf16.mxu0 0
        %3076 = vmatpush1.bf16.msra.mxu0 %v3054
        %3077 = vmatprep.subr.bf16.mxu0 0
        %3078 = vmatpush1.bf16.msra.mxu0 %v3055
        %3079 = vmatprep.subr.bf16.mxu0 0
        %3080 = vmatpush1.bf16.msra.mxu0 %v3056
        %3081 = vmatprep.subr.bf16.mxu0 0
        %3082 = vmatpush1.bf16.msra.mxu0 0
        %3083 = vmatprep.subr.bf16.mxu0 0
        %3084 = vmatpush1.bf16.msra.mxu0 0
        %3085 = vmatprep.subr.bf16.mxu0 0
        %3086 = vmatpush1.bf16.msra.mxu0 0
        %3087 = vmatprep.subr.bf16.mxu0 0
        %3088 = vmatpush1.bf16.msra.mxu0 0
        %3089 = vmatprep.subr.bf16.mxu0 0
        %3090 = vmatpush1.bf16.msra.mxu0 0
        %3091 = vmatprep.subr.bf16.mxu0 0
        %3092 = vmatpush1.bf16.msra.mxu0 0
        %3093 = vmatprep.subr.bf16.mxu0 0
        %3094 = vmatpush1.bf16.msra.mxu0 0
        %3095 = vmatprep.subr.bf16.mxu0 0
        %3096 = vmatpush1.bf16.msra.mxu0 0
        %3097 = vmatprep.mubr.bf16.mxu0 0
        %3098 = vmatmul.mubr.bf16.gmra.mrb[0].mxu0 %v2889
        %v3099 = vpop.f32.mrb[0].mxu0
        %v3100 = vadd.f32 %v2123, %v3099
        %v3101 = vpop.f32.mrb[0].mxu0
        %v3102 = vpop.f32.mrb[0].mxu0
        %v3103 = vadd.f32 %v2126, %v3102
        %v3104 = vpop.f32.mrb[0].mxu0
        %3105 = vmatprep.mubr.bf16.mxu0 0
        %3106 = vmatmul.mubr.bf16.gmra.mrb[0].mxu0 %v2890
        %v3107 = vpop.f32.mrb[0].mxu0
        %v3108 = vadd.f32 %v2131, %v3107
        %v3109 = vpop.f32.mrb[0].mxu0
        %v3110 = vpop.f32.mrb[0].mxu0
        %v3111 = vadd.f32 %v2134, %v3110
        %v3112 = vpop.f32.mrb[0].mxu0
        %3113 = vmatprep.mubr.bf16.mxu0 0
        %3114 = vmatmul.mubr.bf16.gmra.mrb[0].mxu0 %v2891
        %v3115 = vpop.f32.mrb[0].mxu0
        %v3116 = vadd.f32 %v2139, %v3115
        %v3117 = vpop.f32.mrb[0].mxu0
        %v3118 = vpop.f32.mrb[0].mxu0
        %v3119 = vadd.f32 %v2142, %v3118
        %v3120 = vpop.f32.mrb[0].mxu0
        %3121 = vmatprep.mubr.bf16.mxu0 0
        %3122 = vmatmul.mubr.bf16.gmra.mrb[0].mxu0 %v2892
        %v3123 = vpop.f32.mrb[0].mxu0
        %v3124 = vadd.f32 %v2147, %v3123
        %v3125 = vpop.f32.mrb[0].mxu0
        %v3126 = vpop.f32.mrb[0].mxu0
        %v3127 = vadd.f32 %v2150, %v3126
        %v3128 = vpop.f32.mrb[0].mxu0
        %3129 = vmatprep.mubr.bf16.mxu0 0
        %3130 = vmatmul.mubr.bf16.gmra.mrb[0].mxu0 %v2893
        %v3131 = vpop.f32.mrb[0].mxu0
        %v3132 = vadd.f32 %v2155, %v3131
        %v3133 = vpop.f32.mrb[0].mxu0
        %v3134 = vpop.f32.mrb[0].mxu0
        %v3135 = vadd.f32 %v2158, %v3134
        %v3136 = vpop.f32.mrb[0].mxu0
        %3137 = vmatprep.mubr.bf16.mxu0 0
        %3138 = vmatmul.mubr.bf16.gmra.mrb[0].mxu0 %v2894
        %v3139 = vpop.f32.mrb[0].mxu0
        %v3140 = vadd.f32 %v2163, %v3139
        %v3141 = vpop.f32.mrb[0].mxu0
        %v3142 = vpop.f32.mrb[0].mxu0
        %v3143 = vadd.f32 %v2166, %v3142
        %v3144 = vpop.f32.mrb[0].mxu0
        %3145 = vmatprep.mubr.bf16.mxu0 0
        %3146 = vmatmul.mubr.bf16.gmra.mrb[0].mxu0 %v2895
        %v3147 = vpop.f32.mrb[0].mxu0
        %v3148 = vadd.f32 %v2171, %v3147
        %v3149 = vpop.f32.mrb[0].mxu0
        %v3150 = vpop.f32.mrb[0].mxu0
        %v3151 = vadd.f32 %v2174, %v3150
        %v3152 = vpop.f32.mrb[0].mxu0
        %3153 = vmatprep.mubr.bf16.mxu0 0
        %3154 = vmatmul.mubr.bf16.gmra.mrb[0].mxu0 %v2896
        %v3155 = vpop.f32.mrb[0].mxu0
        %v3156 = vadd.f32 %v2179, %v3155
        %v3157 = vpop.f32.mrb[0].mxu0
        %v3158 = vpop.f32.mrb[0].mxu0
        %v3159 = vadd.f32 %v2182, %v3158
        %v3160 = vpop.f32.mrb[0].mxu0
        %3161 = vmatprep.mubr.bf16.mxu0 0
        %3162 = vmatmul.mubr.bf16.gmra.mrb[0].mxu0 %v2897
        %v3163 = vpop.f32.mrb[0].mxu0
        %v3164 = vadd.f32 %v2187, %v3163
        %v3165 = vpop.f32.mrb[0].mxu0
        %v3166 = vpop.f32.mrb[0].mxu0
        %v3167 = vadd.f32 %v2190, %v3166
        %v3168 = vpop.f32.mrb[0].mxu0
        %3169 = vmatprep.mubr.bf16.mxu0 0
        %3170 = vmatmul.mubr.bf16.gmra.mrb[0].mxu0 %v2898
        %v3171 = vpop.f32.mrb[0].mxu0
        %v3172 = vadd.f32 %v2195, %v3171
        %v3173 = vpop.f32.mrb[0].mxu0
        %v3174 = vpop.f32.mrb[0].mxu0
        %v3175 = vadd.f32 %v2198, %v3174
        %v3176 = vpop.f32.mrb[0].mxu0
        %3177 = vmatprep.mubr.bf16.mxu0 0
        %3178 = vmatmul.mubr.bf16.gmra.mrb[0].mxu0 %v2899
        %v3179 = vpop.f32.mrb[0].mxu0
        %v3180 = vadd.f32 %v2203, %v3179
        %v3181 = vpop.f32.mrb[0].mxu0
        %v3182 = vpop.f32.mrb[0].mxu0
        %v3183 = vadd.f32 %v2206, %v3182
        %v3184 = vpop.f32.mrb[0].mxu0
        %3185 = vmatprep.mubr.bf16.mxu0 0
        %3186 = vmatmul.mubr.bf16.gmra.mrb[0].mxu0 %v2900
        %v3187 = vpop.f32.mrb[0].mxu0
        %v3188 = vadd.f32 %v2211, %v3187
        %v3189 = vpop.f32.mrb[0].mxu0
        %v3190 = vpop.f32.mrb[0].mxu0
        %v3191 = vadd.f32 %v2214, %v3190
        %v3192 = vpop.f32.mrb[0].mxu0
        %3193 = vmatprep.mubr.bf16.mxu0 0
        %3194 = vmatmul.mubr.bf16.gmra.mrb[0].mxu0 %v2901
        %v3195 = vpop.f32.mrb[0].mxu0
        %v3196 = vadd.f32 %v2219, %v3195
        %v3197 = vpop.f32.mrb[0].mxu0
        %v3198 = vpop.f32.mrb[0].mxu0
        %v3199 = vadd.f32 %v2222, %v3198
        %v3200 = vpop.f32.mrb[0].mxu0
        %3201 = vmatprep.mubr.bf16.mxu0 0
        %3202 = vmatmul.mubr.bf16.gmra.mrb[0].mxu0 %v2902
        %v3203 = vpop.f32.mrb[0].mxu0
        %v3204 = vadd.f32 %v2227, %v3203
        %v3205 = vpop.f32.mrb[0].mxu0
        %v3206 = vpop.f32.mrb[0].mxu0
        %v3207 = vadd.f32 %v2230, %v3206
        %v3208 = vpop.f32.mrb[0].mxu0
        %3209 = vmatprep.mubr.bf16.mxu0 0
        %3210 = vmatmul.mubr.bf16.gmra.mrb[0].mxu0 %v2903
        %v3211 = vpop.f32.mrb[0].mxu0
        %v3212 = vadd.f32 %v2235, %v3211
        %v3213 = vpop.f32.mrb[0].mxu0
        %v3214 = vpop.f32.mrb[0].mxu0
        %v3215 = vadd.f32 %v2238, %v3214
        %v3216 = vpop.f32.mrb[0].mxu0
        %3217 = vmatprep.mubr.bf16.mxu0 0
        %3218 = vmatmul.mubr.bf16.gmra.mrb[0].mxu0 %v2904
        %v3219 = vpop.f32.mrb[0].mxu0
        %v3220 = vadd.f32 %v2243, %v3219
        %v3221 = vpop.f32.mrb[0].mxu0
        %v3222 = vpop.f32.mrb[0].mxu0
        %v3223 = vadd.f32 %v2246, %v3222
        %v3224 = vpop.f32.mrb[0].mxu0
        %3225 = vmatprep.mubr.bf16.mxu0 0
        %3226 = vmatmul.mubr.bf16.gmra.mrb[0].mxu0 %v2905
        %v3227 = vpop.f32.mrb[0].mxu0
        %v3228 = vadd.f32 %v2251, %v3227
        %v3229 = vpop.f32.mrb[0].mxu0
        %v3230 = vpop.f32.mrb[0].mxu0
        %v3231 = vadd.f32 %v2254, %v3230
        %v3232 = vpop.f32.mrb[0].mxu0
        %3233 = vmatprep.mubr.bf16.mxu0 0
        %3234 = vmatmul.mubr.bf16.gmra.mrb[0].mxu0 %v2906
        %v3235 = vpop.f32.mrb[0].mxu0
        %v3236 = vadd.f32 %v2259, %v3235
        %v3237 = vpop.f32.mrb[0].mxu0
        %v3238 = vpop.f32.mrb[0].mxu0
        %v3239 = vadd.f32 %v2262, %v3238
        %v3240 = vpop.f32.mrb[0].mxu0
        %3241 = vmatprep.mubr.bf16.mxu0 0
        %3242 = vmatmul.mubr.bf16.gmra.mrb[0].mxu0 %v2907
        %v3243 = vpop.f32.mrb[0].mxu0
        %v3244 = vadd.f32 %v2267, %v3243
        %v3245 = vpop.f32.mrb[0].mxu0
        %v3246 = vpop.f32.mrb[0].mxu0
        %v3247 = vadd.f32 %v2270, %v3246
        %v3248 = vpop.f32.mrb[0].mxu0
        %3249 = vmatprep.mubr.bf16.mxu0 0
        %3250 = vmatmul.mubr.bf16.gmra.mrb[0].mxu0 %v2908
        %v3251 = vpop.f32.mrb[0].mxu0
        %v3252 = vadd.f32 %v2275, %v3251
        %v3253 = vpop.f32.mrb[0].mxu0
        %v3254 = vpop.f32.mrb[0].mxu0
        %v3255 = vadd.f32 %v2278, %v3254
        %v3256 = vpop.f32.mrb[0].mxu0
        %3257 = vmatprep.mubr.bf16.mxu0 0
        %3258 = vmatmul.mubr.bf16.gmra.mrb[0].mxu0 %v2909
        %v3259 = vpop.f32.mrb[0].mxu0
        %v3260 = vadd.f32 %v2283, %v3259
        %v3261 = vpop.f32.mrb[0].mxu0
        %v3262 = vpop.f32.mrb[0].mxu0
        %v3263 = vadd.f32 %v2286, %v3262
        %v3264 = vpop.f32.mrb[0].mxu0
        %3265 = vmatprep.mubr.bf16.mxu0 0
        %3266 = vmatmul.mubr.bf16.gmra.mrb[0].mxu0 %v2910
        %v3267 = vpop.f32.mrb[0].mxu0
        %v3268 = vadd.f32 %v2291, %v3267
        %v3269 = vpop.f32.mrb[0].mxu0
        %v3270 = vpop.f32.mrb[0].mxu0
        %v3271 = vadd.f32 %v2294, %v3270
        %v3272 = vpop.f32.mrb[0].mxu0
        %3273 = vmatprep.mubr.bf16.mxu0 0
        %3274 = vmatmul.mubr.bf16.gmra.mrb[0].mxu0 %v2911
        %v3275 = vpop.f32.mrb[0].mxu0
        %v3276 = vadd.f32 %v2299, %v3275
        %v3277 = vpop.f32.mrb[0].mxu0
        %v3278 = vpop.f32.mrb[0].mxu0
        %v3279 = vadd.f32 %v2302, %v3278
        %v3280 = vpop.f32.mrb[0].mxu0
        %3281 = vmatprep.mubr.bf16.mxu0 0
        %3282 = vmatmul.mubr.bf16.gmra.mrb[0].mxu0 %v2912
        %v3283 = vpop.f32.mrb[0].mxu0
        %v3284 = vadd.f32 %v2307, %v3283
        %v3285 = vpop.f32.mrb[0].mxu0
        %v3286 = vpop.f32.mrb[0].mxu0
        %v3287 = vadd.f32 %v2310, %v3286
        %v3288 = vpop.f32.mrb[0].mxu0
        %3289 = vmatprep.mubr.bf16.mxu0 0
        %3290 = vmatmul.mubr.bf16.gmra.mrb[0].mxu0 %v2913
        %v3291 = vpop.f32.mrb[0].mxu0
        %v3292 = vadd.f32 %v2315, %v3291
        %v3293 = vpop.f32.mrb[0].mxu0
        %v3294 = vpop.f32.mrb[0].mxu0
        %v3295 = vadd.f32 %v2318, %v3294
        %v3296 = vpop.f32.mrb[0].mxu0
        %3297 = vmatprep.mubr.bf16.mxu0 0
        %3298 = vmatmul.mubr.bf16.gmra.mrb[0].mxu0 %v2914
        %v3299 = vpop.f32.mrb[0].mxu0
        %v3300 = vadd.f32 %v2323, %v3299
        %v3301 = vpop.f32.mrb[0].mxu0
        %v3302 = vpop.f32.mrb[0].mxu0
        %v3303 = vadd.f32 %v2326, %v3302
        %v3304 = vpop.f32.mrb[0].mxu0
        %3305 = vmatprep.mubr.bf16.mxu0 0
        %3306 = vmatmul.mubr.bf16.gmra.mrb[0].mxu0 %v2915
        %v3307 = vpop.f32.mrb[0].mxu0
        %v3308 = vadd.f32 %v2331, %v3307
        %v3309 = vpop.f32.mrb[0].mxu0
        %v3310 = vpop.f32.mrb[0].mxu0
        %v3311 = vadd.f32 %v2334, %v3310
        %v3312 = vpop.f32.mrb[0].mxu0
        %3313 = vmatprep.mubr.bf16.mxu0 0
        %3314 = vmatmul.mubr.bf16.gmra.mrb[0].mxu0 %v2916
        %v3315 = vpop.f32.mrb[0].mxu0
        %v3316 = vadd.f32 %v2339, %v3315
        %v3317 = vpop.f32.mrb[0].mxu0
        %v3318 = vpop.f32.mrb[0].mxu0
        %v3319 = vadd.f32 %v2342, %v3318
        %v3320 = vpop.f32.mrb[0].mxu0
        %3321 = vmatprep.mubr.bf16.mxu0 0
        %3322 = vmatmul.mubr.bf16.gmra.mrb[0].mxu0 %v2917
        %v3323 = vpop.f32.mrb[0].mxu0
        %v3324 = vadd.f32 %v2347, %v3323
        %v3325 = vpop.f32.mrb[0].mxu0
        %v3326 = vpop.f32.mrb[0].mxu0
        %v3327 = vadd.f32 %v2350, %v3326
        %v3328 = vpop.f32.mrb[0].mxu0
        %3329 = vmatprep.mubr.bf16.mxu0 0
        %3330 = vmatmul.mubr.bf16.gmra.mrb[0].mxu0 %v2918
        %v3331 = vpop.f32.mrb[0].mxu0
        %v3332 = vadd.f32 %v2355, %v3331
        %v3333 = vpop.f32.mrb[0].mxu0
        %v3334 = vpop.f32.mrb[0].mxu0
        %v3335 = vadd.f32 %v2358, %v3334
        %v3336 = vpop.f32.mrb[0].mxu0
        %3337 = vmatprep.mubr.bf16.mxu0 0
        %3338 = vmatmul.mubr.bf16.gmra.mrb[0].mxu0 %v2919
        %v3339 = vpop.f32.mrb[0].mxu0
        %v3340 = vadd.f32 %v2363, %v3339
        %v3341 = vpop.f32.mrb[0].mxu0
        %v3342 = vpop.f32.mrb[0].mxu0
        %v3343 = vadd.f32 %v2366, %v3342
        %v3344 = vpop.f32.mrb[0].mxu0
        %3345 = vmatprep.mubr.bf16.mxu0 0
        %3346 = vmatmul.mubr.bf16.gmra.mrb[0].mxu0 %v2920
        %v3347 = vpop.f32.mrb[0].mxu0
        %v3348 = vadd.f32 %v2371, %v3347
        %v3349 = vpop.f32.mrb[0].mxu0
        %v3350 = vpop.f32.mrb[0].mxu0
        %v3351 = vadd.f32 %v2374, %v3350
        %v3352 = vpop.f32.mrb[0].mxu0
        %3353 = vmatprep.mubr.bf16.mxu0 0
        %3354 = vmatmul.mubr.bf16.gmra.mrb[0].mxu0 %v2921
        %v3355 = vpop.f32.mrb[0].mxu0
        %v3356 = vadd.f32 %v2379, %v3355
        %v3357 = vpop.f32.mrb[0].mxu0
        %v3358 = vpop.f32.mrb[0].mxu0
        %v3359 = vadd.f32 %v2382, %v3358
        %v3360 = vpop.f32.mrb[0].mxu0
        %3361 = vmatprep.mubr.bf16.mxu0 0
        %3362 = vmatmul.mubr.bf16.gmra.mrb[0].mxu0 %v2922
        %v3363 = vpop.f32.mrb[0].mxu0
        %v3364 = vadd.f32 %v2387, %v3363
        %v3365 = vpop.f32.mrb[0].mxu0
        %v3366 = vpop.f32.mrb[0].mxu0
        %v3367 = vadd.f32 %v2390, %v3366
        %v3368 = vpop.f32.mrb[0].mxu0
        %3369 = vmatprep.mubr.bf16.mxu0 0
        %3370 = vmatmul.mubr.bf16.gmra.mrb[0].mxu0 %v2923
        %v3371 = vpop.f32.mrb[0].mxu0
        %v3372 = vadd.f32 %v2395, %v3371
        %v3373 = vpop.f32.mrb[0].mxu0
        %v3374 = vpop.f32.mrb[0].mxu0
        %v3375 = vadd.f32 %v2398, %v3374
        %v3376 = vpop.f32.mrb[0].mxu0
        %3377 = vmatprep.mubr.bf16.mxu0 0
        %3378 = vmatmul.mubr.bf16.gmra.mrb[0].mxu0 %v2924
        %v3379 = vpop.f32.mrb[0].mxu0
        %v3380 = vadd.f32 %v2403, %v3379
        %v3381 = vpop.f32.mrb[0].mxu0
        %v3382 = vpop.f32.mrb[0].mxu0
        %v3383 = vadd.f32 %v2406, %v3382
        %v3384 = vpop.f32.mrb[0].mxu0
        %3385 = vmatprep.mubr.bf16.mxu0 0
        %3386 = vmatmul.mubr.bf16.gmra.mrb[0].mxu0 %v2925
        %v3387 = vpop.f32.mrb[0].mxu0
        %v3388 = vadd.f32 %v2411, %v3387
        %v3389 = vpop.f32.mrb[0].mxu0
        %v3390 = vpop.f32.mrb[0].mxu0
        %v3391 = vadd.f32 %v2414, %v3390
        %v3392 = vpop.f32.mrb[0].mxu0
        %3393 = vmatprep.mubr.bf16.mxu0 0
        %3394 = vmatmul.mubr.bf16.gmra.mrb[0].mxu0 %v2926
        %v3395 = vpop.f32.mrb[0].mxu0
        %v3396 = vadd.f32 %v2419, %v3395
        %v3397 = vpop.f32.mrb[0].mxu0
        %v3398 = vpop.f32.mrb[0].mxu0
        %v3399 = vadd.f32 %v2422, %v3398
        %v3400 = vpop.f32.mrb[0].mxu0
        %3401 = vmatprep.mubr.bf16.mxu0 0
        %3402 = vmatmul.mubr.bf16.gmra.mrb[0].mxu0 %v2927
        %v3403 = vpop.f32.mrb[0].mxu0
        %v3404 = vadd.f32 %v2427, %v3403
        %v3405 = vpop.f32.mrb[0].mxu0
        %v3406 = vpop.f32.mrb[0].mxu0
        %v3407 = vadd.f32 %v2430, %v3406
        %v3408 = vpop.f32.mrb[0].mxu0
        %3409 = vmatprep.mubr.bf16.mxu0 0
        %3410 = vmatmul.mubr.bf16.gmra.mrb[0].mxu0 %v2928
        %v3411 = vpop.f32.mrb[0].mxu0
        %v3412 = vadd.f32 %v2435, %v3411
        %v3413 = vpop.f32.mrb[0].mxu0
        %v3414 = vpop.f32.mrb[0].mxu0
        %v3415 = vadd.f32 %v2438, %v3414
        %v3416 = vpop.f32.mrb[0].mxu0
        %3417 = vmatprep.mubr.bf16.mxu0 0
        %3418 = vmatmul.mubr.bf16.gmra.mrb[0].mxu0 %v2929
        %v3419 = vpop.f32.mrb[0].mxu0
        %v3420 = vadd.f32 %v2443, %v3419
        %v3421 = vpop.f32.mrb[0].mxu0
        %v3422 = vpop.f32.mrb[0].mxu0
        %v3423 = vadd.f32 %v2446, %v3422
        %v3424 = vpop.f32.mrb[0].mxu0
        %3425 = vmatprep.mubr.bf16.mxu0 0
        %3426 = vmatmul.mubr.bf16.gmra.mrb[0].mxu0 %v2930
        %v3427 = vpop.f32.mrb[0].mxu0
        %v3428 = vadd.f32 %v2451, %v3427
        %v3429 = vpop.f32.mrb[0].mxu0
        %v3430 = vpop.f32.mrb[0].mxu0
        %v3431 = vadd.f32 %v2454, %v3430
        %v3432 = vpop.f32.mrb[0].mxu0
        %3433 = vmatprep.mubr.bf16.mxu0 0
        %3434 = vmatmul.mubr.bf16.gmra.mrb[0].mxu0 %v2931
        %v3435 = vpop.f32.mrb[0].mxu0
        %v3436 = vadd.f32 %v2459, %v3435
        %v3437 = vpop.f32.mrb[0].mxu0
        %v3438 = vpop.f32.mrb[0].mxu0
        %v3439 = vadd.f32 %v2462, %v3438
        %v3440 = vpop.f32.mrb[0].mxu0
        %3441 = vmatprep.mubr.bf16.mxu0 0
        %3442 = vmatmul.mubr.bf16.gmra.mrb[0].mxu0 %v2932
        %v3443 = vpop.f32.mrb[0].mxu0
        %v3444 = vadd.f32 %v2467, %v3443
        %v3445 = vpop.f32.mrb[0].mxu0
        %v3446 = vpop.f32.mrb[0].mxu0
        %v3447 = vadd.f32 %v2470, %v3446
        %v3448 = vpop.f32.mrb[0].mxu0
        %3449 = vmatprep.mubr.bf16.mxu0 0
        %3450 = vmatmul.mubr.bf16.gmra.mrb[0].mxu0 %v2933
        %v3451 = vpop.f32.mrb[0].mxu0
        %v3452 = vadd.f32 %v2475, %v3451
        %v3453 = vpop.f32.mrb[0].mxu0
        %v3454 = vpop.f32.mrb[0].mxu0
        %v3455 = vadd.f32 %v2478, %v3454
        %v3456 = vpop.f32.mrb[0].mxu0
        %3457 = vmatprep.mubr.bf16.mxu0 0
        %3458 = vmatmul.mubr.bf16.gmra.mrb[0].mxu0 %v2934
        %v3459 = vpop.f32.mrb[0].mxu0
        %v3460 = vadd.f32 %v2483, %v3459
        %v3461 = vpop.f32.mrb[0].mxu0
        %v3462 = vpop.f32.mrb[0].mxu0
        %v3463 = vadd.f32 %v2486, %v3462
        %v3464 = vpop.f32.mrb[0].mxu0
        %3465 = vmatprep.mubr.bf16.mxu0 0
        %3466 = vmatmul.mubr.bf16.gmra.mrb[0].mxu0 %v2935
        %v3467 = vpop.f32.mrb[0].mxu0
        %v3468 = vadd.f32 %v2491, %v3467
        %v3469 = vpop.f32.mrb[0].mxu0
        %v3470 = vpop.f32.mrb[0].mxu0
        %v3471 = vadd.f32 %v2494, %v3470
        %v3472 = vpop.f32.mrb[0].mxu0
        %3473 = vmatprep.mubr.bf16.mxu0 0
        %3474 = vmatmul.mubr.bf16.gmra.mrb[0].mxu0 %v2936
        %v3475 = vpop.f32.mrb[0].mxu0
        %v3476 = vadd.f32 %v2499, %v3475
        %v3477 = vpop.f32.mrb[0].mxu0
        %v3478 = vpop.f32.mrb[0].mxu0
        %v3479 = vadd.f32 %v2502, %v3478
        %v3480 = vpop.f32.mrb[0].mxu0
        %3481 = vmatprep.mubr.bf16.mxu0 0
        %3482 = vmatmul.mubr.bf16.gmra.mrb[0].mxu0 %v2937
        %v3483 = vpop.f32.mrb[0].mxu0
        %v3484 = vadd.f32 %v2507, %v3483
        %v3485 = vpop.f32.mrb[0].mxu0
        %v3486 = vpop.f32.mrb[0].mxu0
        %v3487 = vadd.f32 %v2510, %v3486
        %v3488 = vpop.f32.mrb[0].mxu0
        %3489 = vmatprep.mubr.bf16.mxu0 0
        %3490 = vmatmul.mubr.bf16.gmra.mrb[0].mxu0 %v2938
        %v3491 = vpop.f32.mrb[0].mxu0
        %v3492 = vadd.f32 %v2515, %v3491
        %v3493 = vpop.f32.mrb[0].mxu0
        %v3494 = vpop.f32.mrb[0].mxu0
        %v3495 = vadd.f32 %v2518, %v3494
        %v3496 = vpop.f32.mrb[0].mxu0
        %3497 = vmatprep.mubr.bf16.mxu0 0
        %3498 = vmatmul.mubr.bf16.gmra.mrb[0].mxu0 %v2939
        %v3499 = vpop.f32.mrb[0].mxu0
        %v3500 = vadd.f32 %v2523, %v3499
        %v3501 = vpop.f32.mrb[0].mxu0
        %v3502 = vpop.f32.mrb[0].mxu0
        %v3503 = vadd.f32 %v2526, %v3502
        %v3504 = vpop.f32.mrb[0].mxu0
        %3505 = vmatprep.mubr.bf16.mxu0 0
        %3506 = vmatmul.mubr.bf16.gmra.mrb[0].mxu0 %v2940
        %v3507 = vpop.f32.mrb[0].mxu0
        %v3508 = vadd.f32 %v2531, %v3507
        %v3509 = vpop.f32.mrb[0].mxu0
        %v3510 = vpop.f32.mrb[0].mxu0
        %v3511 = vadd.f32 %v2534, %v3510
        %v3512 = vpop.f32.mrb[0].mxu0
        %3513 = vmatprep.mubr.bf16.mxu0 0
        %3514 = vmatmul.mubr.bf16.gmra.mrb[0].mxu0 %v2941
        %v3515 = vpop.f32.mrb[0].mxu0
        %v3516 = vadd.f32 %v2539, %v3515
        %v3517 = vpop.f32.mrb[0].mxu0
        %v3518 = vpop.f32.mrb[0].mxu0
        %v3519 = vadd.f32 %v2542, %v3518
        %v3520 = vpop.f32.mrb[0].mxu0
        %3521 = vmatprep.mubr.bf16.mxu0 0
        %3522 = vmatmul.mubr.bf16.gmra.mrb[0].mxu0 %v2942
        %v3523 = vpop.f32.mrb[0].mxu0
        %v3524 = vadd.f32 %v2547, %v3523
        %v3525 = vpop.f32.mrb[0].mxu0
        %v3526 = vpop.f32.mrb[0].mxu0
        %v3527 = vadd.f32 %v2550, %v3526
        %v3528 = vpop.f32.mrb[0].mxu0
        %3529 = vmatprep.mubr.bf16.mxu0 0
        %3530 = vmatmul.mubr.bf16.gmra.mrb[0].mxu0 %v2943
        %v3531 = vpop.f32.mrb[0].mxu0
        %v3532 = vadd.f32 %v2555, %v3531
        %v3533 = vpop.f32.mrb[0].mxu0
        %v3534 = vpop.f32.mrb[0].mxu0
        %v3535 = vadd.f32 %v2558, %v3534
        %v3536 = vpop.f32.mrb[0].mxu0
        %3537 = vmatprep.mubr.bf16.mxu0 0
        %3538 = vmatmul.mubr.bf16.gmra.mrb[0].mxu0 %v2944
        %v3539 = vpop.f32.mrb[0].mxu0
        %v3540 = vadd.f32 %v2563, %v3539
        %v3541 = vpop.f32.mrb[0].mxu0
        %v3542 = vpop.f32.mrb[0].mxu0
        %v3543 = vadd.f32 %v2566, %v3542
        %v3544 = vpop.f32.mrb[0].mxu0
        %3545 = vmatprep.mubr.bf16.mxu0 0
        %3546 = vmatmul.mubr.bf16.gmra.mrb[0].mxu0 %v2945
        %v3547 = vpop.f32.mrb[0].mxu0
        %v3548 = vadd.f32 %v2571, %v3547
        %v3549 = vpop.f32.mrb[0].mxu0
        %v3550 = vpop.f32.mrb[0].mxu0
        %v3551 = vadd.f32 %v2574, %v3550
        %v3552 = vpop.f32.mrb[0].mxu0
        %3553 = vmatprep.mubr.bf16.mxu0 0
        %3554 = vmatmul.mubr.bf16.gmra.mrb[0].mxu0 %v2946
        %v3555 = vpop.f32.mrb[0].mxu0
        %v3556 = vadd.f32 %v2579, %v3555
        %v3557 = vpop.f32.mrb[0].mxu0
        %v3558 = vpop.f32.mrb[0].mxu0
        %v3559 = vadd.f32 %v2582, %v3558
        %v3560 = vpop.f32.mrb[0].mxu0
        %3561 = vmatprep.mubr.bf16.mxu0 0
        %3562 = vmatmul.mubr.bf16.gmra.mrb[0].mxu0 %v2947
        %v3563 = vpop.f32.mrb[0].mxu0
        %v3564 = vadd.f32 %v2587, %v3563
        %v3565 = vpop.f32.mrb[0].mxu0
        %v3566 = vpop.f32.mrb[0].mxu0
        %v3567 = vadd.f32 %v2590, %v3566
        %v3568 = vpop.f32.mrb[0].mxu0
        %3569 = vmatprep.mubr.bf16.mxu0 0
        %3570 = vmatmul.mubr.bf16.gmra.mrb[0].mxu0 %v2948
        %v3571 = vpop.f32.mrb[0].mxu0
        %v3572 = vadd.f32 %v2595, %v3571
        %v3573 = vpop.f32.mrb[0].mxu0
        %v3574 = vpop.f32.mrb[0].mxu0
        %v3575 = vadd.f32 %v2598, %v3574
        %v3576 = vpop.f32.mrb[0].mxu0
        %3577 = vmatprep.mubr.bf16.mxu0 0
        %3578 = vmatmul.mubr.bf16.gmra.mrb[0].mxu0 %v2949
        %v3579 = vpop.f32.mrb[0].mxu0
        %v3580 = vadd.f32 %v2603, %v3579
        %v3581 = vpop.f32.mrb[0].mxu0
        %v3582 = vpop.f32.mrb[0].mxu0
        %v3583 = vadd.f32 %v2606, %v3582
        %v3584 = vpop.f32.mrb[0].mxu0
        %3585 = vmatprep.mubr.bf16.mxu0 0
        %3586 = vmatmul.mubr.bf16.gmra.mrb[0].mxu0 %v2950
        %v3587 = vpop.f32.mrb[0].mxu0
        %v3588 = vadd.f32 %v2611, %v3587
        %v3589 = vpop.f32.mrb[0].mxu0
        %v3590 = vpop.f32.mrb[0].mxu0
        %v3591 = vadd.f32 %v2614, %v3590
        %v3592 = vpop.f32.mrb[0].mxu0
        %3593 = vmatprep.mubr.bf16.mxu0 0
        %3594 = vmatmul.mubr.bf16.gmra.mrb[0].mxu0 %v2951
        %v3595 = vpop.f32.mrb[0].mxu0
        %v3596 = vadd.f32 %v2619, %v3595
        %v3597 = vpop.f32.mrb[0].mxu0
        %v3598 = vpop.f32.mrb[0].mxu0
        %v3599 = vadd.f32 %v2622, %v3598
        %v3600 = vpop.f32.mrb[0].mxu0
        %3601 = vmatprep.mubr.bf16.mxu0 0
        %3602 = vmatmul.mubr.bf16.gmra.mrb[0].mxu0 %v2952
        %v3603 = vpop.f32.mrb[0].mxu0
        %v3604 = vadd.f32 %v2627, %v3603
        %v3605 = vpop.f32.mrb[0].mxu0
        %v3606 = vpop.f32.mrb[0].mxu0
        %v3607 = vadd.f32 %v2630, %v3606
        %v3608 = vpop.f32.mrb[0].mxu0
        %3609 = vdwg.mxu0
        %vm3642 = vcmask 1042432
        %vm3643 = vcmask 1046532
        %vm3644 = vmor %vm3642, %vm3643
        %v3645 = vrot.slane %v170, 5
        %v3646 = vrot.slane %v3645, 4
        %v3647 = vrot.slane %v171, 5
        %v3648 = vsel %vm3644, %v3646, %v3647
        %v3649 = vrot.slane %v3647, 4
        %v3650 = vrot.slane %v172, 5
        %v3651 = vsel %vm3644, %v3649, %v3650
        %v3652 = vrot.slane %v3650, 4
        %v3653 = vrot.slane %v173, 5
        %v3654 = vsel %vm3644, %v3652, %v3653
        %v3655 = vrot.slane %v3653, 4
        %v3656 = vrot.slane %v174, 5
        %v3657 = vsel %vm3644, %v3655, %v3656
        %v3658 = vrot.slane %v175, 5
        %v3659 = vrot.slane %v3658, 4
        %v3660 = vrot.slane %v176, 5
        %v3661 = vsel %vm3644, %v3659, %v3660
        %v3662 = vrot.slane %v3660, 4
        %v3663 = vrot.slane %v177, 5
        %v3664 = vsel %vm3644, %v3662, %v3663
        %v3665 = vrot.slane %v3663, 4
        %v3666 = vrot.slane %v178, 5
        %v3667 = vsel %vm3644, %v3665, %v3666
        %v3668 = vrot.slane %v3666, 4
        %v3669 = vrot.slane %v179, 5
        %v3670 = vsel %vm3644, %v3668, %v3669
        %v3671 = vrot.slane %v180, 5
        %v3672 = vrot.slane %v3671, 4
        %v3673 = vrot.slane %v181, 5
        %v3674 = vsel %vm3644, %v3672, %v3673
        %v3675 = vrot.slane %v3673, 4
        %v3676 = vrot.slane %v182, 5
        %v3677 = vsel %vm3644, %v3675, %v3676
        %v3678 = vrot.slane %v3676, 4
        %v3679 = vrot.slane %v183, 5
        %v3680 = vsel %vm3644, %v3678, %v3679
        %v3681 = vrot.slane %v3679, 4
        %v3682 = vrot.slane %v184, 5
        %v3683 = vsel %vm3644, %v3681, %v3682
        %v3684 = vrot.slane %v185, 5
        %v3685 = vrot.slane %v3684, 4
        %v3686 = vrot.slane %v186, 5
        %v3687 = vsel %vm3644, %v3685, %v3686
        %v3688 = vrot.slane %v3686, 4
        %v3689 = vrot.slane %v187, 5
        %v3690 = vsel %vm3644, %v3688, %v3689
        %v3691 = vrot.slane %v3689, 4
        %v3692 = vrot.slane %v188, 5
        %v3693 = vsel %vm3644, %v3691, %v3692
        %v3694 = vrot.slane %v3692, 4
        %v3695 = vrot.slane %v189, 5
        %v3696 = vsel %vm3644, %v3694, %v3695
        %v3697 = vrot.slane %v190, 5
        %v3698 = vrot.slane %v3697, 4
        %v3699 = vrot.slane %v191, 5
        %v3700 = vsel %vm3644, %v3698, %v3699
        %v3701 = vrot.slane %v3699, 4
        %v3702 = vrot.slane %v192, 5
        %v3703 = vsel %vm3644, %v3701, %v3702
        %v3704 = vrot.slane %v3702, 4
        %v3705 = vrot.slane %v193, 5
        %v3706 = vsel %vm3644, %v3704, %v3705
        %v3707 = vrot.slane %v3705, 4
        %v3708 = vrot.slane %v194, 5
        %v3709 = vsel %vm3644, %v3707, %v3708
        %v3710 = vrot.slane %v195, 5
        %v3711 = vrot.slane %v3710, 4
        %v3712 = vrot.slane %v196, 5
        %v3713 = vsel %vm3644, %v3711, %v3712
        %v3714 = vrot.slane %v3712, 4
        %v3715 = vrot.slane %v197, 5
        %v3716 = vsel %vm3644, %v3714, %v3715
        %v3717 = vrot.slane %v3715, 4
        %v3718 = vrot.slane %v198, 5
        %v3719 = vsel %vm3644, %v3717, %v3718
        %v3720 = vrot.slane %v3718, 4
        %v3721 = vrot.slane %v199, 5
        %v3722 = vsel %vm3644, %v3720, %v3721
        %v3723 = vrot.slane %v200, 5
        %v3724 = vrot.slane %v3723, 4
        %v3725 = vrot.slane %v201, 5
        %v3726 = vsel %vm3644, %v3724, %v3725
        %v3727 = vrot.slane %v3725, 4
        %v3728 = vrot.slane %v202, 5
        %v3729 = vsel %vm3644, %v3727, %v3728
        %v3730 = vrot.slane %v3728, 4
        %v3731 = vrot.slane %v203, 5
        %v3732 = vsel %vm3644, %v3730, %v3731
        %v3733 = vrot.slane %v3731, 4
        %v3734 = vrot.slane %v204, 5
        %v3735 = vsel %vm3644, %v3733, %v3734
        %v3736 = vrot.slane %v205, 5
        %v3737 = vrot.slane %v3736, 4
        %v3738 = vrot.slane %v206, 5
        %v3739 = vsel %vm3644, %v3737, %v3738
        %v3740 = vrot.slane %v3738, 4
        %v3741 = vrot.slane %v207, 5
        %v3742 = vsel %vm3644, %v3740, %v3741
        %v3743 = vrot.slane %v3741, 4
        %v3744 = vrot.slane %v208, 5
        %v3745 = vsel %vm3644, %v3743, %v3744
        %v3746 = vrot.slane %v3744, 4
        %v3747 = vrot.slane %v209, 5
        %v3748 = vsel %vm3644, %v3746, %v3747
        %v3749 = vrot.slane %v210, 5
        %v3750 = vrot.slane %v3749, 4
        %v3751 = vrot.slane %v211, 5
        %v3752 = vsel %vm3644, %v3750, %v3751
        %v3753 = vrot.slane %v3751, 4
        %v3754 = vrot.slane %v212, 5
        %v3755 = vsel %vm3644, %v3753, %v3754
        %v3756 = vrot.slane %v3754, 4
        %v3757 = vrot.slane %v213, 5
        %v3758 = vsel %vm3644, %v3756, %v3757
        %v3759 = vrot.slane %v3757, 4
        %v3760 = vrot.slane %v214, 5
        %v3761 = vsel %vm3644, %v3759, %v3760
        %v3762 = vrot.slane %v215, 5
        %v3763 = vrot.slane %v3762, 4
        %v3764 = vrot.slane %v216, 5
        %v3765 = vsel %vm3644, %v3763, %v3764
        %v3766 = vrot.slane %v3764, 4
        %v3767 = vrot.slane %v217, 5
        %v3768 = vsel %vm3644, %v3766, %v3767
        %v3769 = vrot.slane %v3767, 4
        %v3770 = vrot.slane %v218, 5
        %v3771 = vsel %vm3644, %v3769, %v3770
        %v3772 = vrot.slane %v3770, 4
        %v3773 = vrot.slane %v219, 5
        %v3774 = vsel %vm3644, %v3772, %v3773
        %v3775 = vrot.slane %v220, 5
        %v3776 = vrot.slane %v3775, 4
        %v3777 = vrot.slane %v221, 5
        %v3778 = vsel %vm3644, %v3776, %v3777
        %v3779 = vrot.slane %v3777, 4
        %v3780 = vrot.slane %v222, 5
        %v3781 = vsel %vm3644, %v3779, %v3780
        %v3782 = vrot.slane %v3780, 4
        %v3783 = vrot.slane %v223, 5
        %v3784 = vsel %vm3644, %v3782, %v3783
        %v3785 = vrot.slane %v3783, 4
        %v3786 = vrot.slane %v224, 5
        %v3787 = vsel %vm3644, %v3785, %v3786
        %v3788 = vrot.slane %v225, 5
        %v3789 = vrot.slane %v3788, 4
        %v3790 = vrot.slane %v226, 5
        %v3791 = vsel %vm3644, %v3789, %v3790
        %v3792 = vrot.slane %v3790, 4
        %v3793 = vrot.slane %v227, 5
        %v3794 = vsel %vm3644, %v3792, %v3793
        %v3795 = vrot.slane %v3793, 4
        %v3796 = vrot.slane %v228, 5
        %v3797 = vsel %vm3644, %v3795, %v3796
        %v3798 = vrot.slane %v3796, 4
        %v3799 = vrot.slane %v229, 5
        %v3800 = vsel %vm3644, %v3798, %v3799
        %v3801 = vrot.slane %v230, 5
        %v3802 = vrot.slane %v3801, 4
        %v3803 = vrot.slane %v231, 5
        %v3804 = vsel %vm3644, %v3802, %v3803
        %v3805 = vrot.slane %v3803, 4
        %v3806 = vrot.slane %v232, 5
        %v3807 = vsel %vm3644, %v3805, %v3806
        %v3808 = vrot.slane %v3806, 4
        %v3809 = vrot.slane %v233, 5
        %v3810 = vsel %vm3644, %v3808, %v3809
        %v3811 = vrot.slane %v3809, 4
        %v3812 = vrot.slane %v234, 5
        %v3813 = vsel %vm3644, %v3811, %v3812
        %v3814 = vrot.slane %v235, 5
        %v3815 = vrot.slane %v3814, 4
        %v3816 = vrot.slane %v236, 5
        %v3817 = vsel %vm3644, %v3815, %v3816
        %v3818 = vrot.slane %v3816, 4
        %v3819 = vrot.slane %v237, 5
        %v3820 = vsel %vm3644, %v3818, %v3819
        %v3821 = vrot.slane %v3819, 4
        %v3822 = vrot.slane %v238, 5
        %v3823 = vsel %vm3644, %v3821, %v3822
        %v3824 = vrot.slane %v3822, 4
        %v3825 = vrot.slane %v239, 5
        %v3826 = vsel %vm3644, %v3824, %v3825
        %v3827 = vrot.slane %v240, 5
        %v3828 = vrot.slane %v3827, 4
        %v3829 = vrot.slane %v241, 5
        %v3830 = vsel %vm3644, %v3828, %v3829
        %v3831 = vrot.slane %v3829, 4
        %v3832 = vrot.slane %v242, 5
        %v3833 = vsel %vm3644, %v3831, %v3832
        %v3834 = vrot.slane %v3832, 4
        %v3835 = vrot.slane %v243, 5
        %v3836 = vsel %vm3644, %v3834, %v3835
        %v3837 = vrot.slane %v3835, 4
        %v3838 = vrot.slane %v244, 5
        %v3839 = vsel %vm3644, %v3837, %v3838
        %v3840 = vrot.slane %v245, 5
        %v3841 = vrot.slane %v3840, 4
        %v3842 = vrot.slane %v246, 5
        %v3843 = vsel %vm3644, %v3841, %v3842
        %v3844 = vrot.slane %v3842, 4
        %v3845 = vrot.slane %v247, 5
        %v3846 = vsel %vm3644, %v3844, %v3845
        %v3847 = vrot.slane %v3845, 4
        %v3848 = vrot.slane %v248, 5
        %v3849 = vsel %vm3644, %v3847, %v3848
        %v3850 = vrot.slane %v3848, 4
        %v3851 = vrot.slane %v249, 5
        %v3852 = vsel %vm3644, %v3850, %v3851
        %v3853 = vrot.slane %v250, 5
        %v3854 = vrot.slane %v3853, 4
        %v3855 = vrot.slane %v251, 5
        %v3856 = vsel %vm3644, %v3854, %v3855
        %v3857 = vrot.slane %v3855, 4
        %v3858 = vrot.slane %v252, 5
        %v3859 = vsel %vm3644, %v3857, %v3858
        %v3860 = vrot.slane %v3858, 4
        %v3861 = vrot.slane %v253, 5
        %v3862 = vsel %vm3644, %v3860, %v3861
        %v3863 = vrot.slane %v3861, 4
        %v3864 = vrot.slane %v254, 5
        %v3865 = vsel %vm3644, %v3863, %v3864
        %v3866 = vrot.slane %v255, 5
        %v3867 = vrot.slane %v3866, 4
        %v3868 = vrot.slane %v256, 5
        %v3869 = vsel %vm3644, %v3867, %v3868
        %v3870 = vrot.slane %v3868, 4
        %v3871 = vrot.slane %v257, 5
        %v3872 = vsel %vm3644, %v3870, %v3871
        %v3873 = vrot.slane %v3871, 4
        %v3874 = vrot.slane %v258, 5
        %v3875 = vsel %vm3644, %v3873, %v3874
        %v3876 = vrot.slane %v3874, 4
        %v3877 = vrot.slane %v259, 5
        %v3878 = vsel %vm3644, %v3876, %v3877
        %v3879 = vrot.slane %v260, 5
        %v3880 = vrot.slane %v3879, 4
        %v3881 = vrot.slane %v261, 5
        %v3882 = vsel %vm3644, %v3880, %v3881
        %v3883 = vrot.slane %v3881, 4
        %v3884 = vrot.slane %v262, 5
        %v3885 = vsel %vm3644, %v3883, %v3884
        %v3886 = vrot.slane %v3884, 4
        %v3887 = vrot.slane %v263, 5
        %v3888 = vsel %vm3644, %v3886, %v3887
        %v3889 = vrot.slane %v3887, 4
        %v3890 = vrot.slane %v264, 5
        %v3891 = vsel %vm3644, %v3889, %v3890
        %v3892 = vrot.slane %v265, 5
        %v3893 = vrot.slane %v3892, 4
        %v3894 = vrot.slane %v266, 5
        %v3895 = vsel %vm3644, %v3893, %v3894
        %v3896 = vrot.slane %v3894, 4
        %v3897 = vrot.slane %v267, 5
        %v3898 = vsel %vm3644, %v3896, %v3897
        %v3899 = vrot.slane %v3897, 4
        %v3900 = vrot.slane %v268, 5
        %v3901 = vsel %vm3644, %v3899, %v3900
        %v3902 = vrot.slane %v3900, 4
        %v3903 = vrot.slane %v269, 5
        %v3904 = vsel %vm3644, %v3902, %v3903
        %v3905 = vrot.slane %v270, 5
        %v3906 = vrot.slane %v3905, 4
        %v3907 = vrot.slane %v271, 5
        %v3908 = vsel %vm3644, %v3906, %v3907
        %v3909 = vrot.slane %v3907, 4
        %v3910 = vrot.slane %v272, 5
        %v3911 = vsel %vm3644, %v3909, %v3910
        %v3912 = vrot.slane %v3910, 4
        %v3913 = vrot.slane %v273, 5
        %v3914 = vsel %vm3644, %v3912, %v3913
        %v3915 = vrot.slane %v3913, 4
        %v3916 = vrot.slane %v274, 5
        %v3917 = vsel %vm3644, %v3915, %v3916
        %v3918 = vrot.slane %v275, 5
        %v3919 = vrot.slane %v3918, 4
        %v3920 = vrot.slane %v276, 5
        %v3921 = vsel %vm3644, %v3919, %v3920
        %v3922 = vrot.slane %v3920, 4
        %v3923 = vrot.slane %v277, 5
        %v3924 = vsel %vm3644, %v3922, %v3923
        %v3925 = vrot.slane %v3923, 4
        %v3926 = vrot.slane %v278, 5
        %v3927 = vsel %vm3644, %v3925, %v3926
        %v3928 = vrot.slane %v3926, 4
        %v3929 = vrot.slane %v279, 5
        %v3930 = vsel %vm3644, %v3928, %v3929
        %v3931 = vrot.slane %v280, 5
        %v3932 = vrot.slane %v3931, 4
        %v3933 = vrot.slane %v281, 5
        %v3934 = vsel %vm3644, %v3932, %v3933
        %v3935 = vrot.slane %v3933, 4
        %v3936 = vrot.slane %v282, 5
        %v3937 = vsel %vm3644, %v3935, %v3936
        %v3938 = vrot.slane %v3936, 4
        %v3939 = vrot.slane %v283, 5
        %v3940 = vsel %vm3644, %v3938, %v3939
        %v3941 = vrot.slane %v3939, 4
        %v3942 = vrot.slane %v284, 5
        %v3943 = vsel %vm3644, %v3941, %v3942
        %v3944 = vrot.slane %v285, 5
        %v3945 = vrot.slane %v3944, 4
        %v3946 = vrot.slane %v286, 5
        %v3947 = vsel %vm3644, %v3945, %v3946
        %v3948 = vrot.slane %v3946, 4
        %v3949 = vrot.slane %v287, 5
        %v3950 = vsel %vm3644, %v3948, %v3949
        %v3951 = vrot.slane %v3949, 4
        %v3952 = vrot.slane %v288, 5
        %v3953 = vsel %vm3644, %v3951, %v3952
        %v3954 = vrot.slane %v3952, 4
        %v3955 = vrot.slane %v289, 5
        %v3956 = vsel %vm3644, %v3954, %v3955
        %v3957 = vrot.slane %v290, 5
        %v3958 = vrot.slane %v3957, 4
        %v3959 = vrot.slane %v291, 5
        %v3960 = vsel %vm3644, %v3958, %v3959
        %v3961 = vrot.slane %v3959, 4
        %v3962 = vrot.slane %v292, 5
        %v3963 = vsel %vm3644, %v3961, %v3962
        %v3964 = vrot.slane %v3962, 4
        %v3965 = vrot.slane %v293, 5
        %v3966 = vsel %vm3644, %v3964, %v3965
        %v3967 = vrot.slane %v3965, 4
        %v3968 = vrot.slane %v294, 5
        %v3969 = vsel %vm3644, %v3967, %v3968
        %v3970 = vrot.slane %v295, 5
        %v3971 = vrot.slane %v3970, 4
        %v3972 = vrot.slane %v296, 5
        %v3973 = vsel %vm3644, %v3971, %v3972
        %v3974 = vrot.slane %v3972, 4
        %v3975 = vrot.slane %v297, 5
        %v3976 = vsel %vm3644, %v3974, %v3975
        %v3977 = vrot.slane %v3975, 4
        %v3978 = vrot.slane %v298, 5
        %v3979 = vsel %vm3644, %v3977, %v3978
        %v3980 = vrot.slane %v3978, 4
        %v3981 = vrot.slane %v299, 5
        %v3982 = vsel %vm3644, %v3980, %v3981
        %v3983 = vrot.slane %v300, 5
        %v3984 = vrot.slane %v3983, 4
        %v3985 = vrot.slane %v301, 5
        %v3986 = vsel %vm3644, %v3984, %v3985
        %v3987 = vrot.slane %v3985, 4
        %v3988 = vrot.slane %v302, 5
        %v3989 = vsel %vm3644, %v3987, %v3988
        %v3990 = vrot.slane %v3988, 4
        %v3991 = vrot.slane %v303, 5
        %v3992 = vsel %vm3644, %v3990, %v3991
        %v3993 = vrot.slane %v3991, 4
        %v3994 = vrot.slane %v304, 5
        %v3995 = vsel %vm3644, %v3993, %v3994
        %v3996 = vrot.slane %v305, 5
        %v3997 = vrot.slane %v3996, 4
        %v3998 = vrot.slane %v306, 5
        %v3999 = vsel %vm3644, %v3997, %v3998
        %v4000 = vrot.slane %v3998, 4
        %v4001 = vrot.slane %v307, 5
        %v4002 = vsel %vm3644, %v4000, %v4001
        %v4003 = vrot.slane %v4001, 4
        %v4004 = vrot.slane %v308, 5
        %v4005 = vsel %vm3644, %v4003, %v4004
        %v4006 = vrot.slane %v4004, 4
        %v4007 = vrot.slane %v309, 5
        %v4008 = vsel %vm3644, %v4006, %v4007
        %v4009 = vrot.slane %v310, 5
        %v4010 = vrot.slane %v4009, 4
        %v4011 = vrot.slane %v311, 5
        %v4012 = vsel %vm3644, %v4010, %v4011
        %v4013 = vrot.slane %v4011, 4
        %v4014 = vrot.slane %v312, 5
        %v4015 = vsel %vm3644, %v4013, %v4014
        %v4016 = vrot.slane %v4014, 4
        %v4017 = vrot.slane %v313, 5
        %v4018 = vsel %vm3644, %v4016, %v4017
        %v4019 = vrot.slane %v4017, 4
        %v4020 = vrot.slane %v314, 5
        %v4021 = vsel %vm3644, %v4019, %v4020
        %v4022 = vrot.slane %v315, 5
        %v4023 = vrot.slane %v4022, 4
        %v4024 = vrot.slane %v316, 5
        %v4025 = vsel %vm3644, %v4023, %v4024
        %v4026 = vrot.slane %v4024, 4
        %v4027 = vrot.slane %v317, 5
        %v4028 = vsel %vm3644, %v4026, %v4027
        %v4029 = vrot.slane %v4027, 4
        %v4030 = vrot.slane %v318, 5
        %v4031 = vsel %vm3644, %v4029, %v4030
        %v4032 = vrot.slane %v4030, 4
        %v4033 = vrot.slane %v319, 5
        %v4034 = vsel %vm3644, %v4032, %v4033
        %v4035 = vrot.slane %v320, 5
        %v4036 = vrot.slane %v4035, 4
        %v4037 = vrot.slane %v321, 5
        %v4038 = vsel %vm3644, %v4036, %v4037
        %v4039 = vrot.slane %v4037, 4
        %v4040 = vrot.slane %v322, 5
        %v4041 = vsel %vm3644, %v4039, %v4040
        %v4042 = vrot.slane %v4040, 4
        %v4043 = vrot.slane %v323, 5
        %v4044 = vsel %vm3644, %v4042, %v4043
        %v4045 = vrot.slane %v4043, 4
        %v4046 = vrot.slane %v324, 5
        %v4047 = vsel %vm3644, %v4045, %v4046
        %v4048 = vrot.slane %v325, 5
        %v4049 = vrot.slane %v4048, 4
        %v4050 = vrot.slane %v326, 5
        %v4051 = vsel %vm3644, %v4049, %v4050
        %v4052 = vrot.slane %v4050, 4
        %v4053 = vrot.slane %v327, 5
        %v4054 = vsel %vm3644, %v4052, %v4053
        %v4055 = vrot.slane %v4053, 4
        %v4056 = vrot.slane %v328, 5
        %v4057 = vsel %vm3644, %v4055, %v4056
        %v4058 = vrot.slane %v4056, 4
        %v4059 = vrot.slane %v329, 5
        %v4060 = vsel %vm3644, %v4058, %v4059
        %s4061 = scalar_lea.vmem %s1, 128
        %v4062 = vld [vmem:[%s4061] sm:$0xf]
        %v4063 = vld [vmem:[%s4061 + $0x4] sm:$0xf]
        %v4064 = vld [vmem:[%s4061 + $0x8] sm:$0xf]
        %v4065 = vld [vmem:[%s4061 + $0xc] sm:$0xf]
        %v4066 = vld [vmem:[%s4061 + $0x10] sm:$0xf]
        %v4067 = vld [vmem:[%s4061 + $0x14] sm:$0xf]
        %v4068 = vld [vmem:[%s4061 + $0x18] sm:$0xf]
        %v4069 = vld [vmem:[%s4061 + $0x1c] sm:$0xf]
        %v4070 = vld [vmem:[%s4061 + $0x20] sm:$0xf]
        %v4071 = vld [vmem:[%s4061 + $0x24] sm:$0xf]
        %v4072 = vld [vmem:[%s4061 + $0x28] sm:$0xf]
        %v4073 = vld [vmem:[%s4061 + $0x2c] sm:$0xf]
        %v4074 = vld [vmem:[%s4061 + $0x30] sm:$0xf]
        %v4075 = vld [vmem:[%s4061 + $0x34] sm:$0xf]
        %v4076 = vld [vmem:[%s4061 + $0x38] sm:$0xf]
        %v4077 = vld [vmem:[%s4061 + $0x3c] sm:$0xf]
        %v4078 = vunpack.c.l.b16 %v3648
        %v4079 = vunpack.c.l.b16 %v3651
        %v4080 = vunpack.c.l.b16 %v3654
        %v4081 = vunpack.c.l.b16 %v3657
        %v4082 = vunpack.c.l.b16 %v3661
        %v4083 = vunpack.c.l.b16 %v3664
        %v4084 = vunpack.c.l.b16 %v3667
        %v4085 = vunpack.c.l.b16 %v3670
        %v4086 = vunpack.c.l.b16 %v3674
        %v4087 = vunpack.c.l.b16 %v3677
        %v4088 = vunpack.c.l.b16 %v3680
        %v4089 = vunpack.c.l.b16 %v3683
        %v4090 = vunpack.c.l.b16 %v3687
        %v4091 = vunpack.c.l.b16 %v3690
        %v4092 = vunpack.c.l.b16 %v3693
        %v4093 = vunpack.c.l.b16 %v3696
        %v4094 = vunpack.c.l.b16 %v3700
        %v4095 = vunpack.c.l.b16 %v3703
        %v4096 = vunpack.c.l.b16 %v3706
        %v4097 = vunpack.c.l.b16 %v3709
        %v4098 = vunpack.c.l.b16 %v3713
        %v4099 = vunpack.c.l.b16 %v3716
        %v4100 = vunpack.c.l.b16 %v3719
        %v4101 = vunpack.c.l.b16 %v3722
        %v4102 = vunpack.c.l.b16 %v3726
        %v4103 = vunpack.c.l.b16 %v3729
        %v4104 = vunpack.c.l.b16 %v3732
        %v4105 = vunpack.c.l.b16 %v3735
        %v4106 = vunpack.c.l.b16 %v3739
        %v4107 = vunpack.c.l.b16 %v3742
        %v4108 = vunpack.c.l.b16 %v3745
        %v4109 = vunpack.c.l.b16 %v3748
        %v4110 = vunpack.c.l.b16 %v3752
        %v4111 = vunpack.c.l.b16 %v3755
        %v4112 = vunpack.c.l.b16 %v3758
        %v4113 = vunpack.c.l.b16 %v3761
        %v4114 = vunpack.c.l.b16 %v3765
        %v4115 = vunpack.c.l.b16 %v3768
        %v4116 = vunpack.c.l.b16 %v3771
        %v4117 = vunpack.c.l.b16 %v3774
        %v4118 = vunpack.c.l.b16 %v3778
        %v4119 = vunpack.c.l.b16 %v3781
        %v4120 = vunpack.c.l.b16 %v3784
        %v4121 = vunpack.c.l.b16 %v3787
        %v4122 = vunpack.c.l.b16 %v3791
        %v4123 = vunpack.c.l.b16 %v3794
        %v4124 = vunpack.c.l.b16 %v3797
        %v4125 = vunpack.c.l.b16 %v3800
        %v4126 = vunpack.c.l.b16 %v3804
        %v4127 = vunpack.c.l.b16 %v3807
        %v4128 = vunpack.c.l.b16 %v3810
        %v4129 = vunpack.c.l.b16 %v3813
        %v4130 = vunpack.c.l.b16 %v3817
        %v4131 = vunpack.c.l.b16 %v3820
        %v4132 = vunpack.c.l.b16 %v3823
        %v4133 = vunpack.c.l.b16 %v3826
        %v4134 = vunpack.c.l.b16 %v3830
        %v4135 = vunpack.c.l.b16 %v3833
        %v4136 = vunpack.c.l.b16 %v3836
        %v4137 = vunpack.c.l.b16 %v3839
        %v4138 = vunpack.c.l.b16 %v3843
        %v4139 = vunpack.c.l.b16 %v3846
        %v4140 = vunpack.c.l.b16 %v3849
        %v4141 = vunpack.c.l.b16 %v3852
        %v4142 = vunpack.c.l.b16 %v3856
        %v4143 = vunpack.c.l.b16 %v3859
        %v4144 = vunpack.c.l.b16 %v3862
        %v4145 = vunpack.c.l.b16 %v3865
        %v4146 = vunpack.c.l.b16 %v3869
        %v4147 = vunpack.c.l.b16 %v3872
        %v4148 = vunpack.c.l.b16 %v3875
        %v4149 = vunpack.c.l.b16 %v3878
        %v4150 = vunpack.c.l.b16 %v3882
        %v4151 = vunpack.c.l.b16 %v3885
        %v4152 = vunpack.c.l.b16 %v3888
        %v4153 = vunpack.c.l.b16 %v3891
        %v4154 = vunpack.c.l.b16 %v3895
        %v4155 = vunpack.c.l.b16 %v3898
        %v4156 = vunpack.c.l.b16 %v3901
        %v4157 = vunpack.c.l.b16 %v3904
        %v4158 = vunpack.c.l.b16 %v3908
        %v4159 = vunpack.c.l.b16 %v3911
        %v4160 = vunpack.c.l.b16 %v3914
        %v4161 = vunpack.c.l.b16 %v3917
        %v4162 = vunpack.c.l.b16 %v3921
        %v4163 = vunpack.c.l.b16 %v3924
        %v4164 = vunpack.c.l.b16 %v3927
        %v4165 = vunpack.c.l.b16 %v3930
        %v4166 = vunpack.c.l.b16 %v3934
        %v4167 = vunpack.c.l.b16 %v3937
        %v4168 = vunpack.c.l.b16 %v3940
        %v4169 = vunpack.c.l.b16 %v3943
        %v4170 = vunpack.c.l.b16 %v3947
        %v4171 = vunpack.c.l.b16 %v3950
        %v4172 = vunpack.c.l.b16 %v3953
        %v4173 = vunpack.c.l.b16 %v3956
        %v4174 = vunpack.c.l.b16 %v3960
        %v4175 = vunpack.c.l.b16 %v3963
        %v4176 = vunpack.c.l.b16 %v3966
        %v4177 = vunpack.c.l.b16 %v3969
        %v4178 = vunpack.c.l.b16 %v3973
        %v4179 = vunpack.c.l.b16 %v3976
        %v4180 = vunpack.c.l.b16 %v3979
        %v4181 = vunpack.c.l.b16 %v3982
        %v4182 = vunpack.c.l.b16 %v3986
        %v4183 = vunpack.c.l.b16 %v3989
        %v4184 = vunpack.c.l.b16 %v3992
        %v4185 = vunpack.c.l.b16 %v3995
        %v4186 = vunpack.c.l.b16 %v3999
        %v4187 = vunpack.c.l.b16 %v4002
        %v4188 = vunpack.c.l.b16 %v4005
        %v4189 = vunpack.c.l.b16 %v4008
        %v4190 = vunpack.c.l.b16 %v4012
        %v4191 = vunpack.c.l.b16 %v4015
        %v4192 = vunpack.c.l.b16 %v4018
        %v4193 = vunpack.c.l.b16 %v4021
        %v4194 = vunpack.c.l.b16 %v4025
        %v4195 = vunpack.c.l.b16 %v4028
        %v4196 = vunpack.c.l.b16 %v4031
        %v4197 = vunpack.c.l.b16 %v4034
        %v4198 = vunpack.c.l.b16 %v4038
        %v4199 = vunpack.c.l.b16 %v4041
        %v4200 = vunpack.c.l.b16 %v4044
        %v4201 = vunpack.c.l.b16 %v4047
        %v4202 = vunpack.c.l.b16 %v4051
        %v4203 = vunpack.c.l.b16 %v4054
        %v4204 = vunpack.c.l.b16 %v4057
        %v4205 = vunpack.c.l.b16 %v4060
        %v4206 = vpack.c.b16 %v4079, %v4078
        %v4207 = vpack.c.b16 %v4081, %v4080
        %v4208 = vpack.c.b16 %v4083, %v4082
        %v4209 = vpack.c.b16 %v4085, %v4084
        %v4210 = vpack.c.b16 %v4087, %v4086
        %v4211 = vpack.c.b16 %v4089, %v4088
        %v4212 = vpack.c.b16 %v4091, %v4090
        %v4213 = vpack.c.b16 %v4093, %v4092
        %v4214 = vpack.c.b16 %v4095, %v4094
        %v4215 = vpack.c.b16 %v4097, %v4096
        %v4216 = vpack.c.b16 %v4099, %v4098
        %v4217 = vpack.c.b16 %v4101, %v4100
        %v4218 = vpack.c.b16 %v4103, %v4102
        %v4219 = vpack.c.b16 %v4105, %v4104
        %v4220 = vpack.c.b16 %v4107, %v4106
        %v4221 = vpack.c.b16 %v4109, %v4108
        %v4222 = vpack.c.b16 %v4111, %v4110
        %v4223 = vpack.c.b16 %v4113, %v4112
        %v4224 = vpack.c.b16 %v4115, %v4114
        %v4225 = vpack.c.b16 %v4117, %v4116
        %v4226 = vpack.c.b16 %v4119, %v4118
        %v4227 = vpack.c.b16 %v4121, %v4120
        %v4228 = vpack.c.b16 %v4123, %v4122
        %v4229 = vpack.c.b16 %v4125, %v4124
        %v4230 = vpack.c.b16 %v4127, %v4126
        %v4231 = vpack.c.b16 %v4129, %v4128
        %v4232 = vpack.c.b16 %v4131, %v4130
        %v4233 = vpack.c.b16 %v4133, %v4132
        %v4234 = vpack.c.b16 %v4135, %v4134
        %v4235 = vpack.c.b16 %v4137, %v4136
        %v4236 = vpack.c.b16 %v4139, %v4138
        %v4237 = vpack.c.b16 %v4141, %v4140
        %v4238 = vpack.c.b16 %v4143, %v4142
        %v4239 = vpack.c.b16 %v4145, %v4144
        %v4240 = vpack.c.b16 %v4147, %v4146
        %v4241 = vpack.c.b16 %v4149, %v4148
        %v4242 = vpack.c.b16 %v4151, %v4150
        %v4243 = vpack.c.b16 %v4153, %v4152
        %v4244 = vpack.c.b16 %v4155, %v4154
        %v4245 = vpack.c.b16 %v4157, %v4156
        %v4246 = vpack.c.b16 %v4159, %v4158
        %v4247 = vpack.c.b16 %v4161, %v4160
        %v4248 = vpack.c.b16 %v4163, %v4162
        %v4249 = vpack.c.b16 %v4165, %v4164
        %v4250 = vpack.c.b16 %v4167, %v4166
        %v4251 = vpack.c.b16 %v4169, %v4168
        %v4252 = vpack.c.b16 %v4171, %v4170
        %v4253 = vpack.c.b16 %v4173, %v4172
        %v4254 = vpack.c.b16 %v4175, %v4174
        %v4255 = vpack.c.b16 %v4177, %v4176
        %v4256 = vpack.c.b16 %v4179, %v4178
        %v4257 = vpack.c.b16 %v4181, %v4180
        %v4258 = vpack.c.b16 %v4183, %v4182
        %v4259 = vpack.c.b16 %v4185, %v4184
        %v4260 = vpack.c.b16 %v4187, %v4186
        %v4261 = vpack.c.b16 %v4189, %v4188
        %v4262 = vpack.c.b16 %v4191, %v4190
        %v4263 = vpack.c.b16 %v4193, %v4192
        %v4264 = vpack.c.b16 %v4195, %v4194
        %v4265 = vpack.c.b16 %v4197, %v4196
        %v4266 = vpack.c.b16 %v4199, %v4198
        %v4267 = vpack.c.b16 %v4201, %v4200
        %v4268 = vpack.c.b16 %v4203, %v4202
        %v4269 = vpack.c.b16 %v4205, %v4204
        %v4350 = vunpack.c.l.b16 %v4062
        %v4351 = vunpack.c.l.b16 %v4063
        %v4352 = vunpack.c.l.b16 %v4064
        %v4353 = vunpack.c.l.b16 %v4065
        %v4354 = vunpack.c.l.b16 %v4066
        %v4355 = vunpack.c.l.b16 %v4067
        %v4356 = vunpack.c.l.b16 %v4068
        %v4357 = vunpack.c.l.b16 %v4069
        %v4358 = vunpack.c.l.b16 %v4070
        %v4359 = vunpack.c.l.b16 %v4071
        %v4360 = vunpack.c.l.b16 %v4072
        %v4361 = vunpack.c.l.b16 %v4073
        %v4362 = vunpack.c.l.b16 %v4074
        %v4363 = vunpack.c.l.b16 %v4075
        %v4364 = vunpack.c.l.b16 %v4076
        %v4365 = vunpack.c.l.b16 %v4077
        %v4366 = vpack.c.b16 %v4351, %v4350
        %v4367 = vpack.c.b16 %v4353, %v4352
        %v4368 = vpack.c.b16 %v4355, %v4354
        %v4369 = vpack.c.b16 %v4357, %v4356
        %v4370 = vpack.c.b16 %v4359, %v4358
        %v4371 = vpack.c.b16 %v4361, %v4360
        %v4372 = vpack.c.b16 %v4363, %v4362
        %v4373 = vpack.c.b16 %v4365, %v4364
        %4382 = vmatprep.subr.bf16.mxu0 0
        %4383 = vmatpush1.bf16.msra.mxu0 %v4366
        %4384 = vmatprep.subr.bf16.mxu0 0
        %4385 = vmatpush1.bf16.msra.mxu0 %v4367
        %4386 = vmatprep.subr.bf16.mxu0 0
        %4387 = vmatpush1.bf16.msra.mxu0 %v4368
        %4388 = vmatprep.subr.bf16.mxu0 0
        %4389 = vmatpush1.bf16.msra.mxu0 %v4369
        %4390 = vmatprep.subr.bf16.mxu0 0
        %4391 = vmatpush1.bf16.msra.mxu0 %v4370
        %4392 = vmatprep.subr.bf16.mxu0 0
        %4393 = vmatpush1.bf16.msra.mxu0 %v4371
        %4394 = vmatprep.subr.bf16.mxu0 0
        %4395 = vmatpush1.bf16.msra.mxu0 %v4372
        %4396 = vmatprep.subr.bf16.mxu0 0
        %4397 = vmatpush1.bf16.msra.mxu0 %v4373
        %4398 = vmatprep.subr.bf16.mxu0 0
        %4399 = vmatpush1.bf16.msra.mxu0 0
        %4400 = vmatprep.subr.bf16.mxu0 0
        %4401 = vmatpush1.bf16.msra.mxu0 0
        %4402 = vmatprep.subr.bf16.mxu0 0
        %4403 = vmatpush1.bf16.msra.mxu0 0
        %4404 = vmatprep.subr.bf16.mxu0 0
        %4405 = vmatpush1.bf16.msra.mxu0 0
        %4406 = vmatprep.subr.bf16.mxu0 0
        %4407 = vmatpush1.bf16.msra.mxu0 0
        %4408 = vmatprep.subr.bf16.mxu0 0
        %4409 = vmatpush1.bf16.msra.mxu0 0
        %4410 = vmatprep.subr.bf16.mxu0 0
        %4411 = vmatpush1.bf16.msra.mxu0 0
        %4412 = vmatprep.subr.bf16.mxu0 0
        %4413 = vmatpush1.bf16.msra.mxu0 0
        %4414 = vmatprep.mubr.bf16.mxu0 0
        %4415 = vmatmul.mubr.bf16.gmra.mrb[0].mxu0 %v4206
        %v4416 = vpop.f32.mrb[0].mxu0
        %v4417 = vadd.f32 0.0, %v4416
        %v4418 = vpop.f32.mrb[0].mxu0
        %v4419 = vpop.f32.mrb[0].mxu0
        %v4420 = vadd.f32 0.0, %v4419
        %v4421 = vpop.f32.mrb[0].mxu0
        %4422 = vmatprep.mubr.bf16.mxu0 0
        %4423 = vmatmul.mubr.bf16.gmra.mrb[0].mxu0 %v4207
        %v4424 = vpop.f32.mrb[0].mxu0
        %v4425 = vadd.f32 0.0, %v4424
        %v4426 = vpop.f32.mrb[0].mxu0
        %v4427 = vpop.f32.mrb[0].mxu0
        %v4428 = vadd.f32 0.0, %v4427
        %v4429 = vpop.f32.mrb[0].mxu0
        %4430 = vmatprep.mubr.bf16.mxu0 0
        %4431 = vmatmul.mubr.bf16.gmra.mrb[0].mxu0 %v4208
        %v4432 = vpop.f32.mrb[0].mxu0
        %v4433 = vadd.f32 0.0, %v4432
        %v4434 = vpop.f32.mrb[0].mxu0
        %v4435 = vpop.f32.mrb[0].mxu0
        %v4436 = vadd.f32 0.0, %v4435
        %v4437 = vpop.f32.mrb[0].mxu0
        %4438 = vmatprep.mubr.bf16.mxu0 0
        %4439 = vmatmul.mubr.bf16.gmra.mrb[0].mxu0 %v4209
        %v4440 = vpop.f32.mrb[0].mxu0
        %v4441 = vadd.f32 0.0, %v4440
        %v4442 = vpop.f32.mrb[0].mxu0
        %v4443 = vpop.f32.mrb[0].mxu0
        %v4444 = vadd.f32 0.0, %v4443
        %v4445 = vpop.f32.mrb[0].mxu0
        %4446 = vmatprep.mubr.bf16.mxu0 0
        %4447 = vmatmul.mubr.bf16.gmra.mrb[0].mxu0 %v4210
        %v4448 = vpop.f32.mrb[0].mxu0
        %v4449 = vadd.f32 0.0, %v4448
        %v4450 = vpop.f32.mrb[0].mxu0
        %v4451 = vpop.f32.mrb[0].mxu0
        %v4452 = vadd.f32 0.0, %v4451
        %v4453 = vpop.f32.mrb[0].mxu0
        %4454 = vmatprep.mubr.bf16.mxu0 0
        %4455 = vmatmul.mubr.bf16.gmra.mrb[0].mxu0 %v4211
        %v4456 = vpop.f32.mrb[0].mxu0
        %v4457 = vadd.f32 0.0, %v4456
        %v4458 = vpop.f32.mrb[0].mxu0
        %v4459 = vpop.f32.mrb[0].mxu0
        %v4460 = vadd.f32 0.0, %v4459
        %v4461 = vpop.f32.mrb[0].mxu0
        %4462 = vmatprep.mubr.bf16.mxu0 0
        %4463 = vmatmul.mubr.bf16.gmra.mrb[0].mxu0 %v4212
        %v4464 = vpop.f32.mrb[0].mxu0
        %v4465 = vadd.f32 0.0, %v4464
        %v4466 = vpop.f32.mrb[0].mxu0
        %v4467 = vpop.f32.mrb[0].mxu0
        %v4468 = vadd.f32 0.0, %v4467
        %v4469 = vpop.f32.mrb[0].mxu0
        %4470 = vmatprep.mubr.bf16.mxu0 0
        %4471 = vmatmul.mubr.bf16.gmra.mrb[0].mxu0 %v4213
        %v4472 = vpop.f32.mrb[0].mxu0
        %v4473 = vadd.f32 0.0, %v4472
        %v4474 = vpop.f32.mrb[0].mxu0
        %v4475 = vpop.f32.mrb[0].mxu0
        %v4476 = vadd.f32 0.0, %v4475
        %v4477 = vpop.f32.mrb[0].mxu0
        %4478 = vmatprep.mubr.bf16.mxu0 0
        %4479 = vmatmul.mubr.bf16.gmra.mrb[0].mxu0 %v4214
        %v4480 = vpop.f32.mrb[0].mxu0
        %v4481 = vadd.f32 0.0, %v4480
        %v4482 = vpop.f32.mrb[0].mxu0
        %v4483 = vpop.f32.mrb[0].mxu0
        %v4484 = vadd.f32 0.0, %v4483
        %v4485 = vpop.f32.mrb[0].mxu0
        %4486 = vmatprep.mubr.bf16.mxu0 0
        %4487 = vmatmul.mubr.bf16.gmra.mrb[0].mxu0 %v4215
        %v4488 = vpop.f32.mrb[0].mxu0
        %v4489 = vadd.f32 0.0, %v4488
        %v4490 = vpop.f32.mrb[0].mxu0
        %v4491 = vpop.f32.mrb[0].mxu0
        %v4492 = vadd.f32 0.0, %v4491
        %v4493 = vpop.f32.mrb[0].mxu0
        %4494 = vmatprep.mubr.bf16.mxu0 0
        %4495 = vmatmul.mubr.bf16.gmra.mrb[0].mxu0 %v4216
        %v4496 = vpop.f32.mrb[0].mxu0
        %v4497 = vadd.f32 0.0, %v4496
        %v4498 = vpop.f32.mrb[0].mxu0
        %v4499 = vpop.f32.mrb[0].mxu0
        %v4500 = vadd.f32 0.0, %v4499
        %v4501 = vpop.f32.mrb[0].mxu0
        %4502 = vmatprep.mubr.bf16.mxu0 0
        %4503 = vmatmul.mubr.bf16.gmra.mrb[0].mxu0 %v4217
        %v4504 = vpop.f32.mrb[0].mxu0
        %v4505 = vadd.f32 0.0, %v4504
        %v4506 = vpop.f32.mrb[0].mxu0
        %v4507 = vpop.f32.mrb[0].mxu0
        %v4508 = vadd.f32 0.0, %v4507
        %v4509 = vpop.f32.mrb[0].mxu0
        %4510 = vmatprep.mubr.bf16.mxu0 0
        %4511 = vmatmul.mubr.bf16.gmra.mrb[0].mxu0 %v4218
        %v4512 = vpop.f32.mrb[0].mxu0
        %v4513 = vadd.f32 0.0, %v4512
        %v4514 = vpop.f32.mrb[0].mxu0
        %v4515 = vpop.f32.mrb[0].mxu0
        %v4516 = vadd.f32 0.0, %v4515
        %v4517 = vpop.f32.mrb[0].mxu0
        %4518 = vmatprep.mubr.bf16.mxu0 0
        %4519 = vmatmul.mubr.bf16.gmra.mrb[0].mxu0 %v4219
        %v4520 = vpop.f32.mrb[0].mxu0
        %v4521 = vadd.f32 0.0, %v4520
        %v4522 = vpop.f32.mrb[0].mxu0
        %v4523 = vpop.f32.mrb[0].mxu0
        %v4524 = vadd.f32 0.0, %v4523
        %v4525 = vpop.f32.mrb[0].mxu0
        %4526 = vmatprep.mubr.bf16.mxu0 0
        %4527 = vmatmul.mubr.bf16.gmra.mrb[0].mxu0 %v4220
        %v4528 = vpop.f32.mrb[0].mxu0
        %v4529 = vadd.f32 0.0, %v4528
        %v4530 = vpop.f32.mrb[0].mxu0
        %v4531 = vpop.f32.mrb[0].mxu0
        %v4532 = vadd.f32 0.0, %v4531
        %v4533 = vpop.f32.mrb[0].mxu0
        %4534 = vmatprep.mubr.bf16.mxu0 0
        %4535 = vmatmul.mubr.bf16.gmra.mrb[0].mxu0 %v4221
        %v4536 = vpop.f32.mrb[0].mxu0
        %v4537 = vadd.f32 0.0, %v4536
        %v4538 = vpop.f32.mrb[0].mxu0
        %v4539 = vpop.f32.mrb[0].mxu0
        %v4540 = vadd.f32 0.0, %v4539
        %v4541 = vpop.f32.mrb[0].mxu0
        %4542 = vmatprep.mubr.bf16.mxu0 0
        %4543 = vmatmul.mubr.bf16.gmra.mrb[0].mxu0 %v4222
        %v4544 = vpop.f32.mrb[0].mxu0
        %v4545 = vadd.f32 0.0, %v4544
        %v4546 = vpop.f32.mrb[0].mxu0
        %v4547 = vpop.f32.mrb[0].mxu0
        %v4548 = vadd.f32 0.0, %v4547
        %v4549 = vpop.f32.mrb[0].mxu0
        %4550 = vmatprep.mubr.bf16.mxu0 0
        %4551 = vmatmul.mubr.bf16.gmra.mrb[0].mxu0 %v4223
        %v4552 = vpop.f32.mrb[0].mxu0
        %v4553 = vadd.f32 0.0, %v4552
        %v4554 = vpop.f32.mrb[0].mxu0
        %v4555 = vpop.f32.mrb[0].mxu0
        %v4556 = vadd.f32 0.0, %v4555
        %v4557 = vpop.f32.mrb[0].mxu0
        %4558 = vmatprep.mubr.bf16.mxu0 0
        %4559 = vmatmul.mubr.bf16.gmra.mrb[0].mxu0 %v4224
        %v4560 = vpop.f32.mrb[0].mxu0
        %v4561 = vadd.f32 0.0, %v4560
        %v4562 = vpop.f32.mrb[0].mxu0
        %v4563 = vpop.f32.mrb[0].mxu0
        %v4564 = vadd.f32 0.0, %v4563
        %v4565 = vpop.f32.mrb[0].mxu0
        %4566 = vmatprep.mubr.bf16.mxu0 0
        %4567 = vmatmul.mubr.bf16.gmra.mrb[0].mxu0 %v4225
        %v4568 = vpop.f32.mrb[0].mxu0
        %v4569 = vadd.f32 0.0, %v4568
        %v4570 = vpop.f32.mrb[0].mxu0
        %v4571 = vpop.f32.mrb[0].mxu0
        %v4572 = vadd.f32 0.0, %v4571
        %v4573 = vpop.f32.mrb[0].mxu0
        %4574 = vmatprep.mubr.bf16.mxu0 0
        %4575 = vmatmul.mubr.bf16.gmra.mrb[0].mxu0 %v4226
        %v4576 = vpop.f32.mrb[0].mxu0
        %v4577 = vadd.f32 0.0, %v4576
        %v4578 = vpop.f32.mrb[0].mxu0
        %v4579 = vpop.f32.mrb[0].mxu0
        %v4580 = vadd.f32 0.0, %v4579
        %v4581 = vpop.f32.mrb[0].mxu0
        %4582 = vmatprep.mubr.bf16.mxu0 0
        %4583 = vmatmul.mubr.bf16.gmra.mrb[0].mxu0 %v4227
        %v4584 = vpop.f32.mrb[0].mxu0
        %v4585 = vadd.f32 0.0, %v4584
        %v4586 = vpop.f32.mrb[0].mxu0
        %v4587 = vpop.f32.mrb[0].mxu0
        %v4588 = vadd.f32 0.0, %v4587
        %v4589 = vpop.f32.mrb[0].mxu0
        %4590 = vmatprep.mubr.bf16.mxu0 0
        %4591 = vmatmul.mubr.bf16.gmra.mrb[0].mxu0 %v4228
        %v4592 = vpop.f32.mrb[0].mxu0
        %v4593 = vadd.f32 0.0, %v4592
        %v4594 = vpop.f32.mrb[0].mxu0
        %v4595 = vpop.f32.mrb[0].mxu0
        %v4596 = vadd.f32 0.0, %v4595
        %v4597 = vpop.f32.mrb[0].mxu0
        %4598 = vmatprep.mubr.bf16.mxu0 0
        %4599 = vmatmul.mubr.bf16.gmra.mrb[0].mxu0 %v4229
        %v4600 = vpop.f32.mrb[0].mxu0
        %v4601 = vadd.f32 0.0, %v4600
        %v4602 = vpop.f32.mrb[0].mxu0
        %v4603 = vpop.f32.mrb[0].mxu0
        %v4604 = vadd.f32 0.0, %v4603
        %v4605 = vpop.f32.mrb[0].mxu0
        %4606 = vmatprep.mubr.bf16.mxu0 0
        %4607 = vmatmul.mubr.bf16.gmra.mrb[0].mxu0 %v4230
        %v4608 = vpop.f32.mrb[0].mxu0
        %v4609 = vadd.f32 0.0, %v4608
        %v4610 = vpop.f32.mrb[0].mxu0
        %v4611 = vpop.f32.mrb[0].mxu0
        %v4612 = vadd.f32 0.0, %v4611
        %v4613 = vpop.f32.mrb[0].mxu0
        %4614 = vmatprep.mubr.bf16.mxu0 0
        %4615 = vmatmul.mubr.bf16.gmra.mrb[0].mxu0 %v4231
        %v4616 = vpop.f32.mrb[0].mxu0
        %v4617 = vadd.f32 0.0, %v4616
        %v4618 = vpop.f32.mrb[0].mxu0
        %v4619 = vpop.f32.mrb[0].mxu0
        %v4620 = vadd.f32 0.0, %v4619
        %v4621 = vpop.f32.mrb[0].mxu0
        %4622 = vmatprep.mubr.bf16.mxu0 0
        %4623 = vmatmul.mubr.bf16.gmra.mrb[0].mxu0 %v4232
        %v4624 = vpop.f32.mrb[0].mxu0
        %v4625 = vadd.f32 0.0, %v4624
        %v4626 = vpop.f32.mrb[0].mxu0
        %v4627 = vpop.f32.mrb[0].mxu0
        %v4628 = vadd.f32 0.0, %v4627
        %v4629 = vpop.f32.mrb[0].mxu0
        %4630 = vmatprep.mubr.bf16.mxu0 0
        %4631 = vmatmul.mubr.bf16.gmra.mrb[0].mxu0 %v4233
        %v4632 = vpop.f32.mrb[0].mxu0
        %v4633 = vadd.f32 0.0, %v4632
        %v4634 = vpop.f32.mrb[0].mxu0
        %v4635 = vpop.f32.mrb[0].mxu0
        %v4636 = vadd.f32 0.0, %v4635
        %v4637 = vpop.f32.mrb[0].mxu0
        %4638 = vmatprep.mubr.bf16.mxu0 0
        %4639 = vmatmul.mubr.bf16.gmra.mrb[0].mxu0 %v4234
        %v4640 = vpop.f32.mrb[0].mxu0
        %v4641 = vadd.f32 0.0, %v4640
        %v4642 = vpop.f32.mrb[0].mxu0
        %v4643 = vpop.f32.mrb[0].mxu0
        %v4644 = vadd.f32 0.0, %v4643
        %v4645 = vpop.f32.mrb[0].mxu0
        %4646 = vmatprep.mubr.bf16.mxu0 0
        %4647 = vmatmul.mubr.bf16.gmra.mrb[0].mxu0 %v4235
        %v4648 = vpop.f32.mrb[0].mxu0
        %v4649 = vadd.f32 0.0, %v4648
        %v4650 = vpop.f32.mrb[0].mxu0
        %v4651 = vpop.f32.mrb[0].mxu0
        %v4652 = vadd.f32 0.0, %v4651
        %v4653 = vpop.f32.mrb[0].mxu0
        %4654 = vmatprep.mubr.bf16.mxu0 0
        %4655 = vmatmul.mubr.bf16.gmra.mrb[0].mxu0 %v4236
        %v4656 = vpop.f32.mrb[0].mxu0
        %v4657 = vadd.f32 0.0, %v4656
        %v4658 = vpop.f32.mrb[0].mxu0
        %v4659 = vpop.f32.mrb[0].mxu0
        %v4660 = vadd.f32 0.0, %v4659
        %v4661 = vpop.f32.mrb[0].mxu0
        %4662 = vmatprep.mubr.bf16.mxu0 0
        %4663 = vmatmul.mubr.bf16.gmra.mrb[0].mxu0 %v4237
        %v4664 = vpop.f32.mrb[0].mxu0
        %v4665 = vadd.f32 0.0, %v4664
        %v4666 = vpop.f32.mrb[0].mxu0
        %v4667 = vpop.f32.mrb[0].mxu0
        %v4668 = vadd.f32 0.0, %v4667
        %v4669 = vpop.f32.mrb[0].mxu0
        %4670 = vmatprep.mubr.bf16.mxu0 0
        %4671 = vmatmul.mubr.bf16.gmra.mrb[0].mxu0 %v4238
        %v4672 = vpop.f32.mrb[0].mxu0
        %v4673 = vadd.f32 0.0, %v4672
        %v4674 = vpop.f32.mrb[0].mxu0
        %v4675 = vpop.f32.mrb[0].mxu0
        %v4676 = vadd.f32 0.0, %v4675
        %v4677 = vpop.f32.mrb[0].mxu0
        %4678 = vmatprep.mubr.bf16.mxu0 0
        %4679 = vmatmul.mubr.bf16.gmra.mrb[0].mxu0 %v4239
        %v4680 = vpop.f32.mrb[0].mxu0
        %v4681 = vadd.f32 0.0, %v4680
        %v4682 = vpop.f32.mrb[0].mxu0
        %v4683 = vpop.f32.mrb[0].mxu0
        %v4684 = vadd.f32 0.0, %v4683
        %v4685 = vpop.f32.mrb[0].mxu0
        %4686 = vmatprep.mubr.bf16.mxu0 0
        %4687 = vmatmul.mubr.bf16.gmra.mrb[0].mxu0 %v4240
        %v4688 = vpop.f32.mrb[0].mxu0
        %v4689 = vadd.f32 0.0, %v4688
        %v4690 = vpop.f32.mrb[0].mxu0
        %v4691 = vpop.f32.mrb[0].mxu0
        %v4692 = vadd.f32 0.0, %v4691
        %v4693 = vpop.f32.mrb[0].mxu0
        %4694 = vmatprep.mubr.bf16.mxu0 0
        %4695 = vmatmul.mubr.bf16.gmra.mrb[0].mxu0 %v4241
        %v4696 = vpop.f32.mrb[0].mxu0
        %v4697 = vadd.f32 0.0, %v4696
        %v4698 = vpop.f32.mrb[0].mxu0
        %v4699 = vpop.f32.mrb[0].mxu0
        %v4700 = vadd.f32 0.0, %v4699
        %v4701 = vpop.f32.mrb[0].mxu0
        %4702 = vmatprep.mubr.bf16.mxu0 0
        %4703 = vmatmul.mubr.bf16.gmra.mrb[0].mxu0 %v4242
        %v4704 = vpop.f32.mrb[0].mxu0
        %v4705 = vadd.f32 0.0, %v4704
        %v4706 = vpop.f32.mrb[0].mxu0
        %v4707 = vpop.f32.mrb[0].mxu0
        %v4708 = vadd.f32 0.0, %v4707
        %v4709 = vpop.f32.mrb[0].mxu0
        %4710 = vmatprep.mubr.bf16.mxu0 0
        %4711 = vmatmul.mubr.bf16.gmra.mrb[0].mxu0 %v4243
        %v4712 = vpop.f32.mrb[0].mxu0
        %v4713 = vadd.f32 0.0, %v4712
        %v4714 = vpop.f32.mrb[0].mxu0
        %v4715 = vpop.f32.mrb[0].mxu0
        %v4716 = vadd.f32 0.0, %v4715
        %v4717 = vpop.f32.mrb[0].mxu0
        %4718 = vmatprep.mubr.bf16.mxu0 0
        %4719 = vmatmul.mubr.bf16.gmra.mrb[0].mxu0 %v4244
        %v4720 = vpop.f32.mrb[0].mxu0
        %v4721 = vadd.f32 0.0, %v4720
        %v4722 = vpop.f32.mrb[0].mxu0
        %v4723 = vpop.f32.mrb[0].mxu0
        %v4724 = vadd.f32 0.0, %v4723
        %v4725 = vpop.f32.mrb[0].mxu0
        %4726 = vmatprep.mubr.bf16.mxu0 0
        %4727 = vmatmul.mubr.bf16.gmra.mrb[0].mxu0 %v4245
        %v4728 = vpop.f32.mrb[0].mxu0
        %v4729 = vadd.f32 0.0, %v4728
        %v4730 = vpop.f32.mrb[0].mxu0
        %v4731 = vpop.f32.mrb[0].mxu0
        %v4732 = vadd.f32 0.0, %v4731
        %v4733 = vpop.f32.mrb[0].mxu0
        %4734 = vmatprep.mubr.bf16.mxu0 0
        %4735 = vmatmul.mubr.bf16.gmra.mrb[0].mxu0 %v4246
        %v4736 = vpop.f32.mrb[0].mxu0
        %v4737 = vadd.f32 0.0, %v4736
        %v4738 = vpop.f32.mrb[0].mxu0
        %v4739 = vpop.f32.mrb[0].mxu0
        %v4740 = vadd.f32 0.0, %v4739
        %v4741 = vpop.f32.mrb[0].mxu0
        %4742 = vmatprep.mubr.bf16.mxu0 0
        %4743 = vmatmul.mubr.bf16.gmra.mrb[0].mxu0 %v4247
        %v4744 = vpop.f32.mrb[0].mxu0
        %v4745 = vadd.f32 0.0, %v4744
        %v4746 = vpop.f32.mrb[0].mxu0
        %v4747 = vpop.f32.mrb[0].mxu0
        %v4748 = vadd.f32 0.0, %v4747
        %v4749 = vpop.f32.mrb[0].mxu0
        %4750 = vmatprep.mubr.bf16.mxu0 0
        %4751 = vmatmul.mubr.bf16.gmra.mrb[0].mxu0 %v4248
        %v4752 = vpop.f32.mrb[0].mxu0
        %v4753 = vadd.f32 0.0, %v4752
        %v4754 = vpop.f32.mrb[0].mxu0
        %v4755 = vpop.f32.mrb[0].mxu0
        %v4756 = vadd.f32 0.0, %v4755
        %v4757 = vpop.f32.mrb[0].mxu0
        %4758 = vmatprep.mubr.bf16.mxu0 0
        %4759 = vmatmul.mubr.bf16.gmra.mrb[0].mxu0 %v4249
        %v4760 = vpop.f32.mrb[0].mxu0
        %v4761 = vadd.f32 0.0, %v4760
        %v4762 = vpop.f32.mrb[0].mxu0
        %v4763 = vpop.f32.mrb[0].mxu0
        %v4764 = vadd.f32 0.0, %v4763
        %v4765 = vpop.f32.mrb[0].mxu0
        %4766 = vmatprep.mubr.bf16.mxu0 0
        %4767 = vmatmul.mubr.bf16.gmra.mrb[0].mxu0 %v4250
        %v4768 = vpop.f32.mrb[0].mxu0
        %v4769 = vadd.f32 0.0, %v4768
        %v4770 = vpop.f32.mrb[0].mxu0
        %v4771 = vpop.f32.mrb[0].mxu0
        %v4772 = vadd.f32 0.0, %v4771
        %v4773 = vpop.f32.mrb[0].mxu0
        %4774 = vmatprep.mubr.bf16.mxu0 0
        %4775 = vmatmul.mubr.bf16.gmra.mrb[0].mxu0 %v4251
        %v4776 = vpop.f32.mrb[0].mxu0
        %v4777 = vadd.f32 0.0, %v4776
        %v4778 = vpop.f32.mrb[0].mxu0
        %v4779 = vpop.f32.mrb[0].mxu0
        %v4780 = vadd.f32 0.0, %v4779
        %v4781 = vpop.f32.mrb[0].mxu0
        %4782 = vmatprep.mubr.bf16.mxu0 0
        %4783 = vmatmul.mubr.bf16.gmra.mrb[0].mxu0 %v4252
        %v4784 = vpop.f32.mrb[0].mxu0
        %v4785 = vadd.f32 0.0, %v4784
        %v4786 = vpop.f32.mrb[0].mxu0
        %v4787 = vpop.f32.mrb[0].mxu0
        %v4788 = vadd.f32 0.0, %v4787
        %v4789 = vpop.f32.mrb[0].mxu0
        %4790 = vmatprep.mubr.bf16.mxu0 0
        %4791 = vmatmul.mubr.bf16.gmra.mrb[0].mxu0 %v4253
        %v4792 = vpop.f32.mrb[0].mxu0
        %v4793 = vadd.f32 0.0, %v4792
        %v4794 = vpop.f32.mrb[0].mxu0
        %v4795 = vpop.f32.mrb[0].mxu0
        %v4796 = vadd.f32 0.0, %v4795
        %v4797 = vpop.f32.mrb[0].mxu0
        %4798 = vmatprep.mubr.bf16.mxu0 0
        %4799 = vmatmul.mubr.bf16.gmra.mrb[0].mxu0 %v4254
        %v4800 = vpop.f32.mrb[0].mxu0
        %v4801 = vadd.f32 0.0, %v4800
        %v4802 = vpop.f32.mrb[0].mxu0
        %v4803 = vpop.f32.mrb[0].mxu0
        %v4804 = vadd.f32 0.0, %v4803
        %v4805 = vpop.f32.mrb[0].mxu0
        %4806 = vmatprep.mubr.bf16.mxu0 0
        %4807 = vmatmul.mubr.bf16.gmra.mrb[0].mxu0 %v4255
        %v4808 = vpop.f32.mrb[0].mxu0
        %v4809 = vadd.f32 0.0, %v4808
        %v4810 = vpop.f32.mrb[0].mxu0
        %v4811 = vpop.f32.mrb[0].mxu0
        %v4812 = vadd.f32 0.0, %v4811
        %v4813 = vpop.f32.mrb[0].mxu0
        %4814 = vmatprep.mubr.bf16.mxu0 0
        %4815 = vmatmul.mubr.bf16.gmra.mrb[0].mxu0 %v4256
        %v4816 = vpop.f32.mrb[0].mxu0
        %v4817 = vadd.f32 0.0, %v4816
        %v4818 = vpop.f32.mrb[0].mxu0
        %v4819 = vpop.f32.mrb[0].mxu0
        %v4820 = vadd.f32 0.0, %v4819
        %v4821 = vpop.f32.mrb[0].mxu0
        %4822 = vmatprep.mubr.bf16.mxu0 0
        %4823 = vmatmul.mubr.bf16.gmra.mrb[0].mxu0 %v4257
        %v4824 = vpop.f32.mrb[0].mxu0
        %v4825 = vadd.f32 0.0, %v4824
        %v4826 = vpop.f32.mrb[0].mxu0
        %v4827 = vpop.f32.mrb[0].mxu0
        %v4828 = vadd.f32 0.0, %v4827
        %v4829 = vpop.f32.mrb[0].mxu0
        %4830 = vmatprep.mubr.bf16.mxu0 0
        %4831 = vmatmul.mubr.bf16.gmra.mrb[0].mxu0 %v4258
        %v4832 = vpop.f32.mrb[0].mxu0
        %v4833 = vadd.f32 0.0, %v4832
        %v4834 = vpop.f32.mrb[0].mxu0
        %v4835 = vpop.f32.mrb[0].mxu0
        %v4836 = vadd.f32 0.0, %v4835
        %v4837 = vpop.f32.mrb[0].mxu0
        %4838 = vmatprep.mubr.bf16.mxu0 0
        %4839 = vmatmul.mubr.bf16.gmra.mrb[0].mxu0 %v4259
        %v4840 = vpop.f32.mrb[0].mxu0
        %v4841 = vadd.f32 0.0, %v4840
        %v4842 = vpop.f32.mrb[0].mxu0
        %v4843 = vpop.f32.mrb[0].mxu0
        %v4844 = vadd.f32 0.0, %v4843
        %v4845 = vpop.f32.mrb[0].mxu0
        %4846 = vmatprep.mubr.bf16.mxu0 0
        %4847 = vmatmul.mubr.bf16.gmra.mrb[0].mxu0 %v4260
        %v4848 = vpop.f32.mrb[0].mxu0
        %v4849 = vadd.f32 0.0, %v4848
        %v4850 = vpop.f32.mrb[0].mxu0
        %v4851 = vpop.f32.mrb[0].mxu0
        %v4852 = vadd.f32 0.0, %v4851
        %v4853 = vpop.f32.mrb[0].mxu0
        %4854 = vmatprep.mubr.bf16.mxu0 0
        %4855 = vmatmul.mubr.bf16.gmra.mrb[0].mxu0 %v4261
        %v4856 = vpop.f32.mrb[0].mxu0
        %v4857 = vadd.f32 0.0, %v4856
        %v4858 = vpop.f32.mrb[0].mxu0
        %v4859 = vpop.f32.mrb[0].mxu0
        %v4860 = vadd.f32 0.0, %v4859
        %v4861 = vpop.f32.mrb[0].mxu0
        %4862 = vmatprep.mubr.bf16.mxu0 0
        %4863 = vmatmul.mubr.bf16.gmra.mrb[0].mxu0 %v4262
        %v4864 = vpop.f32.mrb[0].mxu0
        %v4865 = vadd.f32 0.0, %v4864
        %v4866 = vpop.f32.mrb[0].mxu0
        %v4867 = vpop.f32.mrb[0].mxu0
        %v4868 = vadd.f32 0.0, %v4867
        %v4869 = vpop.f32.mrb[0].mxu0
        %4870 = vmatprep.mubr.bf16.mxu0 0
        %4871 = vmatmul.mubr.bf16.gmra.mrb[0].mxu0 %v4263
        %v4872 = vpop.f32.mrb[0].mxu0
        %v4873 = vadd.f32 0.0, %v4872
        %v4874 = vpop.f32.mrb[0].mxu0
        %v4875 = vpop.f32.mrb[0].mxu0
        %v4876 = vadd.f32 0.0, %v4875
        %v4877 = vpop.f32.mrb[0].mxu0
        %4878 = vmatprep.mubr.bf16.mxu0 0
        %4879 = vmatmul.mubr.bf16.gmra.mrb[0].mxu0 %v4264
        %v4880 = vpop.f32.mrb[0].mxu0
        %v4881 = vadd.f32 0.0, %v4880
        %v4882 = vpop.f32.mrb[0].mxu0
        %v4883 = vpop.f32.mrb[0].mxu0
        %v4884 = vadd.f32 0.0, %v4883
        %v4885 = vpop.f32.mrb[0].mxu0
        %4886 = vmatprep.mubr.bf16.mxu0 0
        %4887 = vmatmul.mubr.bf16.gmra.mrb[0].mxu0 %v4265
        %v4888 = vpop.f32.mrb[0].mxu0
        %v4889 = vadd.f32 0.0, %v4888
        %v4890 = vpop.f32.mrb[0].mxu0
        %v4891 = vpop.f32.mrb[0].mxu0
        %v4892 = vadd.f32 0.0, %v4891
        %v4893 = vpop.f32.mrb[0].mxu0
        %4894 = vmatprep.mubr.bf16.mxu0 0
        %4895 = vmatmul.mubr.bf16.gmra.mrb[0].mxu0 %v4266
        %v4896 = vpop.f32.mrb[0].mxu0
        %v4897 = vadd.f32 0.0, %v4896
        %v4898 = vpop.f32.mrb[0].mxu0
        %v4899 = vpop.f32.mrb[0].mxu0
        %v4900 = vadd.f32 0.0, %v4899
        %v4901 = vpop.f32.mrb[0].mxu0
        %4902 = vmatprep.mubr.bf16.mxu0 0
        %4903 = vmatmul.mubr.bf16.gmra.mrb[0].mxu0 %v4267
        %v4904 = vpop.f32.mrb[0].mxu0
        %v4905 = vadd.f32 0.0, %v4904
        %v4906 = vpop.f32.mrb[0].mxu0
        %v4907 = vpop.f32.mrb[0].mxu0
        %v4908 = vadd.f32 0.0, %v4907
        %v4909 = vpop.f32.mrb[0].mxu0
        %4910 = vmatprep.mubr.bf16.mxu0 0
        %4911 = vmatmul.mubr.bf16.gmra.mrb[0].mxu0 %v4268
        %v4912 = vpop.f32.mrb[0].mxu0
        %v4913 = vadd.f32 0.0, %v4912
        %v4914 = vpop.f32.mrb[0].mxu0
        %v4915 = vpop.f32.mrb[0].mxu0
        %v4916 = vadd.f32 0.0, %v4915
        %v4917 = vpop.f32.mrb[0].mxu0
        %4918 = vmatprep.mubr.bf16.mxu0 0
        %4919 = vmatmul.mubr.bf16.gmra.mrb[0].mxu0 %v4269
        %v4920 = vpop.f32.mrb[0].mxu0
        %v4921 = vadd.f32 0.0, %v4920
        %v4922 = vpop.f32.mrb[0].mxu0
        %v4923 = vpop.f32.mrb[0].mxu0
        %v4924 = vadd.f32 0.0, %v4923
        %v4925 = vpop.f32.mrb[0].mxu0
        %4926 = vdwg.mxu0
        %v4927 = vadd.f32 %v3100, %v4417
        %v4928 = vadd.f32 %v3103, %v4420
        %v4929 = vadd.f32 %v3108, %v4425
        %v4930 = vadd.f32 %v3111, %v4428
        %v4931 = vadd.f32 %v3116, %v4433
        %v4932 = vadd.f32 %v3119, %v4436
        %v4933 = vadd.f32 %v3124, %v4441
        %v4934 = vadd.f32 %v3127, %v4444
        %v4935 = vadd.f32 %v3132, %v4449
        %v4936 = vadd.f32 %v3135, %v4452
        %v4937 = vadd.f32 %v3140, %v4457
        %v4938 = vadd.f32 %v3143, %v4460
        %v4939 = vadd.f32 %v3148, %v4465
        %v4940 = vadd.f32 %v3151, %v4468
        %v4941 = vadd.f32 %v3156, %v4473
        %v4942 = vadd.f32 %v3159, %v4476
        %v4943 = vadd.f32 %v3164, %v4481
        %v4944 = vadd.f32 %v3167, %v4484
        %v4945 = vadd.f32 %v3172, %v4489
        %v4946 = vadd.f32 %v3175, %v4492
        %v4947 = vadd.f32 %v3180, %v4497
        %v4948 = vadd.f32 %v3183, %v4500
        %v4949 = vadd.f32 %v3188, %v4505
        %v4950 = vadd.f32 %v3191, %v4508
        %v4951 = vadd.f32 %v3196, %v4513
        %v4952 = vadd.f32 %v3199, %v4516
        %v4953 = vadd.f32 %v3204, %v4521
        %v4954 = vadd.f32 %v3207, %v4524
        %v4955 = vadd.f32 %v3212, %v4529
        %v4956 = vadd.f32 %v3215, %v4532
        %v4957 = vadd.f32 %v3220, %v4537
        %v4958 = vadd.f32 %v3223, %v4540
        %v4959 = vadd.f32 %v3228, %v4545
        %v4960 = vadd.f32 %v3231, %v4548
        %v4961 = vadd.f32 %v3236, %v4553
        %v4962 = vadd.f32 %v3239, %v4556
        %v4963 = vadd.f32 %v3244, %v4561
        %v4964 = vadd.f32 %v3247, %v4564
        %v4965 = vadd.f32 %v3252, %v4569
        %v4966 = vadd.f32 %v3255, %v4572
        %v4967 = vadd.f32 %v3260, %v4577
        %v4968 = vadd.f32 %v3263, %v4580
        %v4969 = vadd.f32 %v3268, %v4585
        %v4970 = vadd.f32 %v3271, %v4588
        %v4971 = vadd.f32 %v3276, %v4593
        %v4972 = vadd.f32 %v3279, %v4596
        %v4973 = vadd.f32 %v3284, %v4601
        %v4974 = vadd.f32 %v3287, %v4604
        %v4975 = vadd.f32 %v3292, %v4609
        %v4976 = vadd.f32 %v3295, %v4612
        %v4977 = vadd.f32 %v3300, %v4617
        %v4978 = vadd.f32 %v3303, %v4620
        %v4979 = vadd.f32 %v3308, %v4625
        %v4980 = vadd.f32 %v3311, %v4628
        %v4981 = vadd.f32 %v3316, %v4633
        %v4982 = vadd.f32 %v3319, %v4636
        %v4983 = vadd.f32 %v3324, %v4641
        %v4984 = vadd.f32 %v3327, %v4644
        %v4985 = vadd.f32 %v3332, %v4649
        %v4986 = vadd.f32 %v3335, %v4652
        %v4987 = vadd.f32 %v3340, %v4657
        %v4988 = vadd.f32 %v3343, %v4660
        %v4989 = vadd.f32 %v3348, %v4665
        %v4990 = vadd.f32 %v3351, %v4668
        %v4991 = vadd.f32 %v3356, %v4673
        %v4992 = vadd.f32 %v3359, %v4676
        %v4993 = vadd.f32 %v3364, %v4681
        %v4994 = vadd.f32 %v3367, %v4684
        %v4995 = vadd.f32 %v3372, %v4689
        %v4996 = vadd.f32 %v3375, %v4692
        %v4997 = vadd.f32 %v3380, %v4697
        %v4998 = vadd.f32 %v3383, %v4700
        %v4999 = vadd.f32 %v3388, %v4705
        %v5000 = vadd.f32 %v3391, %v4708
        %v5001 = vadd.f32 %v3396, %v4713
        %v5002 = vadd.f32 %v3399, %v4716
        %v5003 = vadd.f32 %v3404, %v4721
        %v5004 = vadd.f32 %v3407, %v4724
        %v5005 = vadd.f32 %v3412, %v4729
        %v5006 = vadd.f32 %v3415, %v4732
        %v5007 = vadd.f32 %v3420, %v4737
        %v5008 = vadd.f32 %v3423, %v4740
        %v5009 = vadd.f32 %v3428, %v4745
        %v5010 = vadd.f32 %v3431, %v4748
        %v5011 = vadd.f32 %v3436, %v4753
        %v5012 = vadd.f32 %v3439, %v4756
        %v5013 = vadd.f32 %v3444, %v4761
        %v5014 = vadd.f32 %v3447, %v4764
        %v5015 = vadd.f32 %v3452, %v4769
        %v5016 = vadd.f32 %v3455, %v4772
        %v5017 = vadd.f32 %v3460, %v4777
        %v5018 = vadd.f32 %v3463, %v4780
        %v5019 = vadd.f32 %v3468, %v4785
        %v5020 = vadd.f32 %v3471, %v4788
        %v5021 = vadd.f32 %v3476, %v4793
        %v5022 = vadd.f32 %v3479, %v4796
        %v5023 = vadd.f32 %v3484, %v4801
        %v5024 = vadd.f32 %v3487, %v4804
        %v5025 = vadd.f32 %v3492, %v4809
        %v5026 = vadd.f32 %v3495, %v4812
        %v5027 = vadd.f32 %v3500, %v4817
        %v5028 = vadd.f32 %v3503, %v4820
        %v5029 = vadd.f32 %v3508, %v4825
        %v5030 = vadd.f32 %v3511, %v4828
        %v5031 = vadd.f32 %v3516, %v4833
        %v5032 = vadd.f32 %v3519, %v4836
        %v5033 = vadd.f32 %v3524, %v4841
        %v5034 = vadd.f32 %v3527, %v4844
        %v5035 = vadd.f32 %v3532, %v4849
        %v5036 = vadd.f32 %v3535, %v4852
        %v5037 = vadd.f32 %v3540, %v4857
        %v5038 = vadd.f32 %v3543, %v4860
        %v5039 = vadd.f32 %v3548, %v4865
        %v5040 = vadd.f32 %v3551, %v4868
        %v5041 = vadd.f32 %v3556, %v4873
        %v5042 = vadd.f32 %v3559, %v4876
        %v5043 = vadd.f32 %v3564, %v4881
        %v5044 = vadd.f32 %v3567, %v4884
        %v5045 = vadd.f32 %v3572, %v4889
        %v5046 = vadd.f32 %v3575, %v4892
        %v5047 = vadd.f32 %v3580, %v4897
        %v5048 = vadd.f32 %v3583, %v4900
        %v5049 = vadd.f32 %v3588, %v4905
        %v5050 = vadd.f32 %v3591, %v4908
        %v5051 = vadd.f32 %v3596, %v4913
        %v5052 = vadd.f32 %v3599, %v4916
        %v5053 = vadd.f32 %v3604, %v4921
        %v5054 = vadd.f32 %v3607, %v4924
        %s5055 = scalar_lea.vmem %s1, 192
        %v5056 = vld [vmem:[%s5055] sm:$0xf]
        %v5057 = vld [vmem:[%s5055 + $0x4] sm:$0xf]
        %v5058 = vld [vmem:[%s5055 + $0x8] sm:$0xf]
        %v5059 = vld [vmem:[%s5055 + $0xc] sm:$0xf]
        %v5060 = vld [vmem:[%s5055 + $0x10] sm:$0xf]
        %v5061 = vld [vmem:[%s5055 + $0x14] sm:$0xf]
        %v5062 = vld [vmem:[%s5055 + $0x18] sm:$0xf]
        %v5063 = vld [vmem:[%s5055 + $0x1c] sm:$0xf]
        %v5064 = vld [vmem:[%s5055 + $0x20] sm:$0xf]
        %v5065 = vld [vmem:[%s5055 + $0x24] sm:$0xf]
        %v5066 = vld [vmem:[%s5055 + $0x28] sm:$0xf]
        %v5067 = vld [vmem:[%s5055 + $0x2c] sm:$0xf]
        %v5068 = vld [vmem:[%s5055 + $0x30] sm:$0xf]
        %v5069 = vld [vmem:[%s5055 + $0x34] sm:$0xf]
        %v5070 = vld [vmem:[%s5055 + $0x38] sm:$0xf]
        %v5071 = vld [vmem:[%s5055 + $0x3c] sm:$0xf]
        %v5076 = vunpack.c.l.b16 %v330
        %v5077 = vunpack.c.l.b16 %v331
        %v5078 = vunpack.c.l.b16 %v332
        %v5079 = vunpack.c.l.b16 %v333
        %v5080 = vpack.c.b16 %v5077, %v5076
        %v5081 = vpack.c.b16 %v5079, %v5078
        %v5100 = vunpack.c.l.b16 %v5056
        %v5101 = vunpack.c.l.b16 %v5057
        %v5102 = vunpack.c.l.b16 %v5058
        %v5103 = vunpack.c.l.b16 %v5059
        %v5104 = vunpack.c.l.b16 %v5060
        %v5105 = vunpack.c.l.b16 %v5061
        %v5106 = vunpack.c.l.b16 %v5062
        %v5107 = vunpack.c.l.b16 %v5063
        %v5108 = vunpack.c.l.b16 %v5064
        %v5109 = vunpack.c.l.b16 %v5065
        %v5110 = vunpack.c.l.b16 %v5066
        %v5111 = vunpack.c.l.b16 %v5067
        %v5112 = vunpack.c.l.b16 %v5068
        %v5113 = vunpack.c.l.b16 %v5069
        %v5114 = vunpack.c.l.b16 %v5070
        %v5115 = vunpack.c.l.b16 %v5071
        %v5116 = vpack.c.b16 %v5101, %v5100
        %v5117 = vpack.c.b16 %v5103, %v5102
        %v5118 = vpack.c.b16 %v5105, %v5104
        %v5119 = vpack.c.b16 %v5107, %v5106
        %v5120 = vpack.c.b16 %v5109, %v5108
        %v5121 = vpack.c.b16 %v5111, %v5110
        %v5122 = vpack.c.b16 %v5113, %v5112
        %v5123 = vpack.c.b16 %v5115, %v5114
        %5132 = vmatprep.subr.bf16.mxu0 0
        %5133 = vmatpush1.bf16.msra.mxu0 %v5116
        %5134 = vmatprep.subr.bf16.mxu0 0
        %5135 = vmatpush1.bf16.msra.mxu0 %v5117
        %5136 = vmatprep.subr.bf16.mxu0 0
        %5137 = vmatpush1.bf16.msra.mxu0 %v5118
        %5138 = vmatprep.subr.bf16.mxu0 0
        %5139 = vmatpush1.bf16.msra.mxu0 %v5119
        %5140 = vmatprep.subr.bf16.mxu0 0
        %5141 = vmatpush1.bf16.msra.mxu0 %v5120
        %5142 = vmatprep.subr.bf16.mxu0 0
        %5143 = vmatpush1.bf16.msra.mxu0 %v5121
        %5144 = vmatprep.subr.bf16.mxu0 0
        %5145 = vmatpush1.bf16.msra.mxu0 %v5122
        %5146 = vmatprep.subr.bf16.mxu0 0
        %5147 = vmatpush1.bf16.msra.mxu0 %v5123
        %5148 = vmatprep.subr.bf16.mxu0 0
        %5149 = vmatpush1.bf16.msra.mxu0 0
        %5150 = vmatprep.subr.bf16.mxu0 0
        %5151 = vmatpush1.bf16.msra.mxu0 0
        %5152 = vmatprep.subr.bf16.mxu0 0
        %5153 = vmatpush1.bf16.msra.mxu0 0
        %5154 = vmatprep.subr.bf16.mxu0 0
        %5155 = vmatpush1.bf16.msra.mxu0 0
        %5156 = vmatprep.subr.bf16.mxu0 0
        %5157 = vmatpush1.bf16.msra.mxu0 0
        %5158 = vmatprep.subr.bf16.mxu0 0
        %5159 = vmatpush1.bf16.msra.mxu0 0
        %5160 = vmatprep.subr.bf16.mxu0 0
        %5161 = vmatpush1.bf16.msra.mxu0 0
        %5162 = vmatprep.subr.bf16.mxu0 0
        %5163 = vmatpush1.bf16.msra.mxu0 0
        %5164 = vmatprep.mubr.bf16.mxu0 0
        %5165 = vmatmul.mubr.bf16.gmra.mrb[0].mxu0 %v2891
        %v5166 = vpop.f32.mrb[0].mxu0
        %v5167 = vadd.f32 0.0, %v5166
        %v5168 = vpop.f32.mrb[0].mxu0
        %v5169 = vpop.f32.mrb[0].mxu0
        %v5170 = vadd.f32 0.0, %v5169
        %v5171 = vpop.f32.mrb[0].mxu0
        %5172 = vmatprep.mubr.bf16.mxu0 0
        %5173 = vmatmul.mubr.bf16.gmra.mrb[0].mxu0 %v2892
        %v5174 = vpop.f32.mrb[0].mxu0
        %v5175 = vadd.f32 0.0, %v5174
        %v5176 = vpop.f32.mrb[0].mxu0
        %v5177 = vpop.f32.mrb[0].mxu0
        %v5178 = vadd.f32 0.0, %v5177
        %v5179 = vpop.f32.mrb[0].mxu0
        %5180 = vmatprep.mubr.bf16.mxu0 0
        %5181 = vmatmul.mubr.bf16.gmra.mrb[0].mxu0 %v2893
        %v5182 = vpop.f32.mrb[0].mxu0
        %v5183 = vadd.f32 0.0, %v5182
        %v5184 = vpop.f32.mrb[0].mxu0
        %v5185 = vpop.f32.mrb[0].mxu0
        %v5186 = vadd.f32 0.0, %v5185
        %v5187 = vpop.f32.mrb[0].mxu0
        %5188 = vmatprep.mubr.bf16.mxu0 0
        %5189 = vmatmul.mubr.bf16.gmra.mrb[0].mxu0 %v2894
        %v5190 = vpop.f32.mrb[0].mxu0
        %v5191 = vadd.f32 0.0, %v5190
        %v5192 = vpop.f32.mrb[0].mxu0
        %v5193 = vpop.f32.mrb[0].mxu0
        %v5194 = vadd.f32 0.0, %v5193
        %v5195 = vpop.f32.mrb[0].mxu0
        %5196 = vmatprep.mubr.bf16.mxu0 0
        %5197 = vmatmul.mubr.bf16.gmra.mrb[0].mxu0 %v2895
        %v5198 = vpop.f32.mrb[0].mxu0
        %v5199 = vadd.f32 0.0, %v5198
        %v5200 = vpop.f32.mrb[0].mxu0
        %v5201 = vpop.f32.mrb[0].mxu0
        %v5202 = vadd.f32 0.0, %v5201
        %v5203 = vpop.f32.mrb[0].mxu0
        %5204 = vmatprep.mubr.bf16.mxu0 0
        %5205 = vmatmul.mubr.bf16.gmra.mrb[0].mxu0 %v2896
        %v5206 = vpop.f32.mrb[0].mxu0
        %v5207 = vadd.f32 0.0, %v5206
        %v5208 = vpop.f32.mrb[0].mxu0
        %v5209 = vpop.f32.mrb[0].mxu0
        %v5210 = vadd.f32 0.0, %v5209
        %v5211 = vpop.f32.mrb[0].mxu0
        %5212 = vmatprep.mubr.bf16.mxu0 0
        %5213 = vmatmul.mubr.bf16.gmra.mrb[0].mxu0 %v2897
        %v5214 = vpop.f32.mrb[0].mxu0
        %v5215 = vadd.f32 0.0, %v5214
        %v5216 = vpop.f32.mrb[0].mxu0
        %v5217 = vpop.f32.mrb[0].mxu0
        %v5218 = vadd.f32 0.0, %v5217
        %v5219 = vpop.f32.mrb[0].mxu0
        %5220 = vmatprep.mubr.bf16.mxu0 0
        %5221 = vmatmul.mubr.bf16.gmra.mrb[0].mxu0 %v2898
        %v5222 = vpop.f32.mrb[0].mxu0
        %v5223 = vadd.f32 0.0, %v5222
        %v5224 = vpop.f32.mrb[0].mxu0
        %v5225 = vpop.f32.mrb[0].mxu0
        %v5226 = vadd.f32 0.0, %v5225
        %v5227 = vpop.f32.mrb[0].mxu0
        %5228 = vmatprep.mubr.bf16.mxu0 0
        %5229 = vmatmul.mubr.bf16.gmra.mrb[0].mxu0 %v2899
        %v5230 = vpop.f32.mrb[0].mxu0
        %v5231 = vadd.f32 0.0, %v5230
        %v5232 = vpop.f32.mrb[0].mxu0
        %v5233 = vpop.f32.mrb[0].mxu0
        %v5234 = vadd.f32 0.0, %v5233
        %v5235 = vpop.f32.mrb[0].mxu0
        %5236 = vmatprep.mubr.bf16.mxu0 0
        %5237 = vmatmul.mubr.bf16.gmra.mrb[0].mxu0 %v2900
        %v5238 = vpop.f32.mrb[0].mxu0
        %v5239 = vadd.f32 0.0, %v5238
        %v5240 = vpop.f32.mrb[0].mxu0
        %v5241 = vpop.f32.mrb[0].mxu0
        %v5242 = vadd.f32 0.0, %v5241
        %v5243 = vpop.f32.mrb[0].mxu0
        %5244 = vmatprep.mubr.bf16.mxu0 0
        %5245 = vmatmul.mubr.bf16.gmra.mrb[0].mxu0 %v2901
        %v5246 = vpop.f32.mrb[0].mxu0
        %v5247 = vadd.f32 0.0, %v5246
        %v5248 = vpop.f32.mrb[0].mxu0
        %v5249 = vpop.f32.mrb[0].mxu0
        %v5250 = vadd.f32 0.0, %v5249
        %v5251 = vpop.f32.mrb[0].mxu0
        %5252 = vmatprep.mubr.bf16.mxu0 0
        %5253 = vmatmul.mubr.bf16.gmra.mrb[0].mxu0 %v2902
        %v5254 = vpop.f32.mrb[0].mxu0
        %v5255 = vadd.f32 0.0, %v5254
        %v5256 = vpop.f32.mrb[0].mxu0
        %v5257 = vpop.f32.mrb[0].mxu0
        %v5258 = vadd.f32 0.0, %v5257
        %v5259 = vpop.f32.mrb[0].mxu0
        %5260 = vmatprep.mubr.bf16.mxu0 0
        %5261 = vmatmul.mubr.bf16.gmra.mrb[0].mxu0 %v2903
        %v5262 = vpop.f32.mrb[0].mxu0
        %v5263 = vadd.f32 0.0, %v5262
        %v5264 = vpop.f32.mrb[0].mxu0
        %v5265 = vpop.f32.mrb[0].mxu0
        %v5266 = vadd.f32 0.0, %v5265
        %v5267 = vpop.f32.mrb[0].mxu0
        %5268 = vmatprep.mubr.bf16.mxu0 0
        %5269 = vmatmul.mubr.bf16.gmra.mrb[0].mxu0 %v2904
        %v5270 = vpop.f32.mrb[0].mxu0
        %v5271 = vadd.f32 0.0, %v5270
        %v5272 = vpop.f32.mrb[0].mxu0
        %v5273 = vpop.f32.mrb[0].mxu0
        %v5274 = vadd.f32 0.0, %v5273
        %v5275 = vpop.f32.mrb[0].mxu0
        %5276 = vmatprep.mubr.bf16.mxu0 0
        %5277 = vmatmul.mubr.bf16.gmra.mrb[0].mxu0 %v2905
        %v5278 = vpop.f32.mrb[0].mxu0
        %v5279 = vadd.f32 0.0, %v5278
        %v5280 = vpop.f32.mrb[0].mxu0
        %v5281 = vpop.f32.mrb[0].mxu0
        %v5282 = vadd.f32 0.0, %v5281
        %v5283 = vpop.f32.mrb[0].mxu0
        %5284 = vmatprep.mubr.bf16.mxu0 0
        %5285 = vmatmul.mubr.bf16.gmra.mrb[0].mxu0 %v2906
        %v5286 = vpop.f32.mrb[0].mxu0
        %v5287 = vadd.f32 0.0, %v5286
        %v5288 = vpop.f32.mrb[0].mxu0
        %v5289 = vpop.f32.mrb[0].mxu0
        %v5290 = vadd.f32 0.0, %v5289
        %v5291 = vpop.f32.mrb[0].mxu0
        %5292 = vmatprep.mubr.bf16.mxu0 0
        %5293 = vmatmul.mubr.bf16.gmra.mrb[0].mxu0 %v2907
        %v5294 = vpop.f32.mrb[0].mxu0
        %v5295 = vadd.f32 0.0, %v5294
        %v5296 = vpop.f32.mrb[0].mxu0
        %v5297 = vpop.f32.mrb[0].mxu0
        %v5298 = vadd.f32 0.0, %v5297
        %v5299 = vpop.f32.mrb[0].mxu0
        %5300 = vmatprep.mubr.bf16.mxu0 0
        %5301 = vmatmul.mubr.bf16.gmra.mrb[0].mxu0 %v2908
        %v5302 = vpop.f32.mrb[0].mxu0
        %v5303 = vadd.f32 0.0, %v5302
        %v5304 = vpop.f32.mrb[0].mxu0
        %v5305 = vpop.f32.mrb[0].mxu0
        %v5306 = vadd.f32 0.0, %v5305
        %v5307 = vpop.f32.mrb[0].mxu0
        %5308 = vmatprep.mubr.bf16.mxu0 0
        %5309 = vmatmul.mubr.bf16.gmra.mrb[0].mxu0 %v2909
        %v5310 = vpop.f32.mrb[0].mxu0
        %v5311 = vadd.f32 0.0, %v5310
        %v5312 = vpop.f32.mrb[0].mxu0
        %v5313 = vpop.f32.mrb[0].mxu0
        %v5314 = vadd.f32 0.0, %v5313
        %v5315 = vpop.f32.mrb[0].mxu0
        %5316 = vmatprep.mubr.bf16.mxu0 0
        %5317 = vmatmul.mubr.bf16.gmra.mrb[0].mxu0 %v2910
        %v5318 = vpop.f32.mrb[0].mxu0
        %v5319 = vadd.f32 0.0, %v5318
        %v5320 = vpop.f32.mrb[0].mxu0
        %v5321 = vpop.f32.mrb[0].mxu0
        %v5322 = vadd.f32 0.0, %v5321
        %v5323 = vpop.f32.mrb[0].mxu0
        %5324 = vmatprep.mubr.bf16.mxu0 0
        %5325 = vmatmul.mubr.bf16.gmra.mrb[0].mxu0 %v2911
        %v5326 = vpop.f32.mrb[0].mxu0
        %v5327 = vadd.f32 0.0, %v5326
        %v5328 = vpop.f32.mrb[0].mxu0
        %v5329 = vpop.f32.mrb[0].mxu0
        %v5330 = vadd.f32 0.0, %v5329
        %v5331 = vpop.f32.mrb[0].mxu0
        %5332 = vmatprep.mubr.bf16.mxu0 0
        %5333 = vmatmul.mubr.bf16.gmra.mrb[0].mxu0 %v2912
        %v5334 = vpop.f32.mrb[0].mxu0
        %v5335 = vadd.f32 0.0, %v5334
        %v5336 = vpop.f32.mrb[0].mxu0
        %v5337 = vpop.f32.mrb[0].mxu0
        %v5338 = vadd.f32 0.0, %v5337
        %v5339 = vpop.f32.mrb[0].mxu0
        %5340 = vmatprep.mubr.bf16.mxu0 0
        %5341 = vmatmul.mubr.bf16.gmra.mrb[0].mxu0 %v2913
        %v5342 = vpop.f32.mrb[0].mxu0
        %v5343 = vadd.f32 0.0, %v5342
        %v5344 = vpop.f32.mrb[0].mxu0
        %v5345 = vpop.f32.mrb[0].mxu0
        %v5346 = vadd.f32 0.0, %v5345
        %v5347 = vpop.f32.mrb[0].mxu0
        %5348 = vmatprep.mubr.bf16.mxu0 0
        %5349 = vmatmul.mubr.bf16.gmra.mrb[0].mxu0 %v2914
        %v5350 = vpop.f32.mrb[0].mxu0
        %v5351 = vadd.f32 0.0, %v5350
        %v5352 = vpop.f32.mrb[0].mxu0
        %v5353 = vpop.f32.mrb[0].mxu0
        %v5354 = vadd.f32 0.0, %v5353
        %v5355 = vpop.f32.mrb[0].mxu0
        %5356 = vmatprep.mubr.bf16.mxu0 0
        %5357 = vmatmul.mubr.bf16.gmra.mrb[0].mxu0 %v2915
        %v5358 = vpop.f32.mrb[0].mxu0
        %v5359 = vadd.f32 0.0, %v5358
        %v5360 = vpop.f32.mrb[0].mxu0
        %v5361 = vpop.f32.mrb[0].mxu0
        %v5362 = vadd.f32 0.0, %v5361
        %v5363 = vpop.f32.mrb[0].mxu0
        %5364 = vmatprep.mubr.bf16.mxu0 0
        %5365 = vmatmul.mubr.bf16.gmra.mrb[0].mxu0 %v2916
        %v5366 = vpop.f32.mrb[0].mxu0
        %v5367 = vadd.f32 0.0, %v5366
        %v5368 = vpop.f32.mrb[0].mxu0
        %v5369 = vpop.f32.mrb[0].mxu0
        %v5370 = vadd.f32 0.0, %v5369
        %v5371 = vpop.f32.mrb[0].mxu0
        %5372 = vmatprep.mubr.bf16.mxu0 0
        %5373 = vmatmul.mubr.bf16.gmra.mrb[0].mxu0 %v2917
        %v5374 = vpop.f32.mrb[0].mxu0
        %v5375 = vadd.f32 0.0, %v5374
        %v5376 = vpop.f32.mrb[0].mxu0
        %v5377 = vpop.f32.mrb[0].mxu0
        %v5378 = vadd.f32 0.0, %v5377
        %v5379 = vpop.f32.mrb[0].mxu0
        %5380 = vmatprep.mubr.bf16.mxu0 0
        %5381 = vmatmul.mubr.bf16.gmra.mrb[0].mxu0 %v2918
        %v5382 = vpop.f32.mrb[0].mxu0
        %v5383 = vadd.f32 0.0, %v5382
        %v5384 = vpop.f32.mrb[0].mxu0
        %v5385 = vpop.f32.mrb[0].mxu0
        %v5386 = vadd.f32 0.0, %v5385
        %v5387 = vpop.f32.mrb[0].mxu0
        %5388 = vmatprep.mubr.bf16.mxu0 0
        %5389 = vmatmul.mubr.bf16.gmra.mrb[0].mxu0 %v2919
        %v5390 = vpop.f32.mrb[0].mxu0
        %v5391 = vadd.f32 0.0, %v5390
        %v5392 = vpop.f32.mrb[0].mxu0
        %v5393 = vpop.f32.mrb[0].mxu0
        %v5394 = vadd.f32 0.0, %v5393
        %v5395 = vpop.f32.mrb[0].mxu0
        %5396 = vmatprep.mubr.bf16.mxu0 0
        %5397 = vmatmul.mubr.bf16.gmra.mrb[0].mxu0 %v2920
        %v5398 = vpop.f32.mrb[0].mxu0
        %v5399 = vadd.f32 0.0, %v5398
        %v5400 = vpop.f32.mrb[0].mxu0
        %v5401 = vpop.f32.mrb[0].mxu0
        %v5402 = vadd.f32 0.0, %v5401
        %v5403 = vpop.f32.mrb[0].mxu0
        %5404 = vmatprep.mubr.bf16.mxu0 0
        %5405 = vmatmul.mubr.bf16.gmra.mrb[0].mxu0 %v2921
        %v5406 = vpop.f32.mrb[0].mxu0
        %v5407 = vadd.f32 0.0, %v5406
        %v5408 = vpop.f32.mrb[0].mxu0
        %v5409 = vpop.f32.mrb[0].mxu0
        %v5410 = vadd.f32 0.0, %v5409
        %v5411 = vpop.f32.mrb[0].mxu0
        %5412 = vmatprep.mubr.bf16.mxu0 0
        %5413 = vmatmul.mubr.bf16.gmra.mrb[0].mxu0 %v2922
        %v5414 = vpop.f32.mrb[0].mxu0
        %v5415 = vadd.f32 0.0, %v5414
        %v5416 = vpop.f32.mrb[0].mxu0
        %v5417 = vpop.f32.mrb[0].mxu0
        %v5418 = vadd.f32 0.0, %v5417
        %v5419 = vpop.f32.mrb[0].mxu0
        %5420 = vmatprep.mubr.bf16.mxu0 0
        %5421 = vmatmul.mubr.bf16.gmra.mrb[0].mxu0 %v2923
        %v5422 = vpop.f32.mrb[0].mxu0
        %v5423 = vadd.f32 0.0, %v5422
        %v5424 = vpop.f32.mrb[0].mxu0
        %v5425 = vpop.f32.mrb[0].mxu0
        %v5426 = vadd.f32 0.0, %v5425
        %v5427 = vpop.f32.mrb[0].mxu0
        %5428 = vmatprep.mubr.bf16.mxu0 0
        %5429 = vmatmul.mubr.bf16.gmra.mrb[0].mxu0 %v2924
        %v5430 = vpop.f32.mrb[0].mxu0
        %v5431 = vadd.f32 0.0, %v5430
        %v5432 = vpop.f32.mrb[0].mxu0
        %v5433 = vpop.f32.mrb[0].mxu0
        %v5434 = vadd.f32 0.0, %v5433
        %v5435 = vpop.f32.mrb[0].mxu0
        %5436 = vmatprep.mubr.bf16.mxu0 0
        %5437 = vmatmul.mubr.bf16.gmra.mrb[0].mxu0 %v2925
        %v5438 = vpop.f32.mrb[0].mxu0
        %v5439 = vadd.f32 0.0, %v5438
        %v5440 = vpop.f32.mrb[0].mxu0
        %v5441 = vpop.f32.mrb[0].mxu0
        %v5442 = vadd.f32 0.0, %v5441
        %v5443 = vpop.f32.mrb[0].mxu0
        %5444 = vmatprep.mubr.bf16.mxu0 0
        %5445 = vmatmul.mubr.bf16.gmra.mrb[0].mxu0 %v2926
        %v5446 = vpop.f32.mrb[0].mxu0
        %v5447 = vadd.f32 0.0, %v5446
        %v5448 = vpop.f32.mrb[0].mxu0
        %v5449 = vpop.f32.mrb[0].mxu0
        %v5450 = vadd.f32 0.0, %v5449
        %v5451 = vpop.f32.mrb[0].mxu0
        %5452 = vmatprep.mubr.bf16.mxu0 0
        %5453 = vmatmul.mubr.bf16.gmra.mrb[0].mxu0 %v2927
        %v5454 = vpop.f32.mrb[0].mxu0
        %v5455 = vadd.f32 0.0, %v5454
        %v5456 = vpop.f32.mrb[0].mxu0
        %v5457 = vpop.f32.mrb[0].mxu0
        %v5458 = vadd.f32 0.0, %v5457
        %v5459 = vpop.f32.mrb[0].mxu0
        %5460 = vmatprep.mubr.bf16.mxu0 0
        %5461 = vmatmul.mubr.bf16.gmra.mrb[0].mxu0 %v2928
        %v5462 = vpop.f32.mrb[0].mxu0
        %v5463 = vadd.f32 0.0, %v5462
        %v5464 = vpop.f32.mrb[0].mxu0
        %v5465 = vpop.f32.mrb[0].mxu0
        %v5466 = vadd.f32 0.0, %v5465
        %v5467 = vpop.f32.mrb[0].mxu0
        %5468 = vmatprep.mubr.bf16.mxu0 0
        %5469 = vmatmul.mubr.bf16.gmra.mrb[0].mxu0 %v2929
        %v5470 = vpop.f32.mrb[0].mxu0
        %v5471 = vadd.f32 0.0, %v5470
        %v5472 = vpop.f32.mrb[0].mxu0
        %v5473 = vpop.f32.mrb[0].mxu0
        %v5474 = vadd.f32 0.0, %v5473
        %v5475 = vpop.f32.mrb[0].mxu0
        %5476 = vmatprep.mubr.bf16.mxu0 0
        %5477 = vmatmul.mubr.bf16.gmra.mrb[0].mxu0 %v2930
        %v5478 = vpop.f32.mrb[0].mxu0
        %v5479 = vadd.f32 0.0, %v5478
        %v5480 = vpop.f32.mrb[0].mxu0
        %v5481 = vpop.f32.mrb[0].mxu0
        %v5482 = vadd.f32 0.0, %v5481
        %v5483 = vpop.f32.mrb[0].mxu0
        %5484 = vmatprep.mubr.bf16.mxu0 0
        %5485 = vmatmul.mubr.bf16.gmra.mrb[0].mxu0 %v2931
        %v5486 = vpop.f32.mrb[0].mxu0
        %v5487 = vadd.f32 0.0, %v5486
        %v5488 = vpop.f32.mrb[0].mxu0
        %v5489 = vpop.f32.mrb[0].mxu0
        %v5490 = vadd.f32 0.0, %v5489
        %v5491 = vpop.f32.mrb[0].mxu0
        %5492 = vmatprep.mubr.bf16.mxu0 0
        %5493 = vmatmul.mubr.bf16.gmra.mrb[0].mxu0 %v2932
        %v5494 = vpop.f32.mrb[0].mxu0
        %v5495 = vadd.f32 0.0, %v5494
        %v5496 = vpop.f32.mrb[0].mxu0
        %v5497 = vpop.f32.mrb[0].mxu0
        %v5498 = vadd.f32 0.0, %v5497
        %v5499 = vpop.f32.mrb[0].mxu0
        %5500 = vmatprep.mubr.bf16.mxu0 0
        %5501 = vmatmul.mubr.bf16.gmra.mrb[0].mxu0 %v2933
        %v5502 = vpop.f32.mrb[0].mxu0
        %v5503 = vadd.f32 0.0, %v5502
        %v5504 = vpop.f32.mrb[0].mxu0
        %v5505 = vpop.f32.mrb[0].mxu0
        %v5506 = vadd.f32 0.0, %v5505
        %v5507 = vpop.f32.mrb[0].mxu0
        %5508 = vmatprep.mubr.bf16.mxu0 0
        %5509 = vmatmul.mubr.bf16.gmra.mrb[0].mxu0 %v2934
        %v5510 = vpop.f32.mrb[0].mxu0
        %v5511 = vadd.f32 0.0, %v5510
        %v5512 = vpop.f32.mrb[0].mxu0
        %v5513 = vpop.f32.mrb[0].mxu0
        %v5514 = vadd.f32 0.0, %v5513
        %v5515 = vpop.f32.mrb[0].mxu0
        %5516 = vmatprep.mubr.bf16.mxu0 0
        %5517 = vmatmul.mubr.bf16.gmra.mrb[0].mxu0 %v2935
        %v5518 = vpop.f32.mrb[0].mxu0
        %v5519 = vadd.f32 0.0, %v5518
        %v5520 = vpop.f32.mrb[0].mxu0
        %v5521 = vpop.f32.mrb[0].mxu0
        %v5522 = vadd.f32 0.0, %v5521
        %v5523 = vpop.f32.mrb[0].mxu0
        %5524 = vmatprep.mubr.bf16.mxu0 0
        %5525 = vmatmul.mubr.bf16.gmra.mrb[0].mxu0 %v2936
        %v5526 = vpop.f32.mrb[0].mxu0
        %v5527 = vadd.f32 0.0, %v5526
        %v5528 = vpop.f32.mrb[0].mxu0
        %v5529 = vpop.f32.mrb[0].mxu0
        %v5530 = vadd.f32 0.0, %v5529
        %v5531 = vpop.f32.mrb[0].mxu0
        %5532 = vmatprep.mubr.bf16.mxu0 0
        %5533 = vmatmul.mubr.bf16.gmra.mrb[0].mxu0 %v2937
        %v5534 = vpop.f32.mrb[0].mxu0
        %v5535 = vadd.f32 0.0, %v5534
        %v5536 = vpop.f32.mrb[0].mxu0
        %v5537 = vpop.f32.mrb[0].mxu0
        %v5538 = vadd.f32 0.0, %v5537
        %v5539 = vpop.f32.mrb[0].mxu0
        %5540 = vmatprep.mubr.bf16.mxu0 0
        %5541 = vmatmul.mubr.bf16.gmra.mrb[0].mxu0 %v2938
        %v5542 = vpop.f32.mrb[0].mxu0
        %v5543 = vadd.f32 0.0, %v5542
        %v5544 = vpop.f32.mrb[0].mxu0
        %v5545 = vpop.f32.mrb[0].mxu0
        %v5546 = vadd.f32 0.0, %v5545
        %v5547 = vpop.f32.mrb[0].mxu0
        %5548 = vmatprep.mubr.bf16.mxu0 0
        %5549 = vmatmul.mubr.bf16.gmra.mrb[0].mxu0 %v2939
        %v5550 = vpop.f32.mrb[0].mxu0
        %v5551 = vadd.f32 0.0, %v5550
        %v5552 = vpop.f32.mrb[0].mxu0
        %v5553 = vpop.f32.mrb[0].mxu0
        %v5554 = vadd.f32 0.0, %v5553
        %v5555 = vpop.f32.mrb[0].mxu0
        %5556 = vmatprep.mubr.bf16.mxu0 0
        %5557 = vmatmul.mubr.bf16.gmra.mrb[0].mxu0 %v2940
        %v5558 = vpop.f32.mrb[0].mxu0
        %v5559 = vadd.f32 0.0, %v5558
        %v5560 = vpop.f32.mrb[0].mxu0
        %v5561 = vpop.f32.mrb[0].mxu0
        %v5562 = vadd.f32 0.0, %v5561
        %v5563 = vpop.f32.mrb[0].mxu0
        %5564 = vmatprep.mubr.bf16.mxu0 0
        %5565 = vmatmul.mubr.bf16.gmra.mrb[0].mxu0 %v2941
        %v5566 = vpop.f32.mrb[0].mxu0
        %v5567 = vadd.f32 0.0, %v5566
        %v5568 = vpop.f32.mrb[0].mxu0
        %v5569 = vpop.f32.mrb[0].mxu0
        %v5570 = vadd.f32 0.0, %v5569
        %v5571 = vpop.f32.mrb[0].mxu0
        %5572 = vmatprep.mubr.bf16.mxu0 0
        %5573 = vmatmul.mubr.bf16.gmra.mrb[0].mxu0 %v2942
        %v5574 = vpop.f32.mrb[0].mxu0
        %v5575 = vadd.f32 0.0, %v5574
        %v5576 = vpop.f32.mrb[0].mxu0
        %v5577 = vpop.f32.mrb[0].mxu0
        %v5578 = vadd.f32 0.0, %v5577
        %v5579 = vpop.f32.mrb[0].mxu0
        %5580 = vmatprep.mubr.bf16.mxu0 0
        %5581 = vmatmul.mubr.bf16.gmra.mrb[0].mxu0 %v2943
        %v5582 = vpop.f32.mrb[0].mxu0
        %v5583 = vadd.f32 0.0, %v5582
        %v5584 = vpop.f32.mrb[0].mxu0
        %v5585 = vpop.f32.mrb[0].mxu0
        %v5586 = vadd.f32 0.0, %v5585
        %v5587 = vpop.f32.mrb[0].mxu0
        %5588 = vmatprep.mubr.bf16.mxu0 0
        %5589 = vmatmul.mubr.bf16.gmra.mrb[0].mxu0 %v2944
        %v5590 = vpop.f32.mrb[0].mxu0
        %v5591 = vadd.f32 0.0, %v5590
        %v5592 = vpop.f32.mrb[0].mxu0
        %v5593 = vpop.f32.mrb[0].mxu0
        %v5594 = vadd.f32 0.0, %v5593
        %v5595 = vpop.f32.mrb[0].mxu0
        %5596 = vmatprep.mubr.bf16.mxu0 0
        %5597 = vmatmul.mubr.bf16.gmra.mrb[0].mxu0 %v2945
        %v5598 = vpop.f32.mrb[0].mxu0
        %v5599 = vadd.f32 0.0, %v5598
        %v5600 = vpop.f32.mrb[0].mxu0
        %v5601 = vpop.f32.mrb[0].mxu0
        %v5602 = vadd.f32 0.0, %v5601
        %v5603 = vpop.f32.mrb[0].mxu0
        %5604 = vmatprep.mubr.bf16.mxu0 0
        %5605 = vmatmul.mubr.bf16.gmra.mrb[0].mxu0 %v2946
        %v5606 = vpop.f32.mrb[0].mxu0
        %v5607 = vadd.f32 0.0, %v5606
        %v5608 = vpop.f32.mrb[0].mxu0
        %v5609 = vpop.f32.mrb[0].mxu0
        %v5610 = vadd.f32 0.0, %v5609
        %v5611 = vpop.f32.mrb[0].mxu0
        %5612 = vmatprep.mubr.bf16.mxu0 0
        %5613 = vmatmul.mubr.bf16.gmra.mrb[0].mxu0 %v2947
        %v5614 = vpop.f32.mrb[0].mxu0
        %v5615 = vadd.f32 0.0, %v5614
        %v5616 = vpop.f32.mrb[0].mxu0
        %v5617 = vpop.f32.mrb[0].mxu0
        %v5618 = vadd.f32 0.0, %v5617
        %v5619 = vpop.f32.mrb[0].mxu0
        %5620 = vmatprep.mubr.bf16.mxu0 0
        %5621 = vmatmul.mubr.bf16.gmra.mrb[0].mxu0 %v2948
        %v5622 = vpop.f32.mrb[0].mxu0
        %v5623 = vadd.f32 0.0, %v5622
        %v5624 = vpop.f32.mrb[0].mxu0
        %v5625 = vpop.f32.mrb[0].mxu0
        %v5626 = vadd.f32 0.0, %v5625
        %v5627 = vpop.f32.mrb[0].mxu0
        %5628 = vmatprep.mubr.bf16.mxu0 0
        %5629 = vmatmul.mubr.bf16.gmra.mrb[0].mxu0 %v2949
        %v5630 = vpop.f32.mrb[0].mxu0
        %v5631 = vadd.f32 0.0, %v5630
        %v5632 = vpop.f32.mrb[0].mxu0
        %v5633 = vpop.f32.mrb[0].mxu0
        %v5634 = vadd.f32 0.0, %v5633
        %v5635 = vpop.f32.mrb[0].mxu0
        %5636 = vmatprep.mubr.bf16.mxu0 0
        %5637 = vmatmul.mubr.bf16.gmra.mrb[0].mxu0 %v2950
        %v5638 = vpop.f32.mrb[0].mxu0
        %v5639 = vadd.f32 0.0, %v5638
        %v5640 = vpop.f32.mrb[0].mxu0
        %v5641 = vpop.f32.mrb[0].mxu0
        %v5642 = vadd.f32 0.0, %v5641
        %v5643 = vpop.f32.mrb[0].mxu0
        %5644 = vmatprep.mubr.bf16.mxu0 0
        %5645 = vmatmul.mubr.bf16.gmra.mrb[0].mxu0 %v2951
        %v5646 = vpop.f32.mrb[0].mxu0
        %v5647 = vadd.f32 0.0, %v5646
        %v5648 = vpop.f32.mrb[0].mxu0
        %v5649 = vpop.f32.mrb[0].mxu0
        %v5650 = vadd.f32 0.0, %v5649
        %v5651 = vpop.f32.mrb[0].mxu0
        %5652 = vmatprep.mubr.bf16.mxu0 0
        %5653 = vmatmul.mubr.bf16.gmra.mrb[0].mxu0 %v2952
        %v5654 = vpop.f32.mrb[0].mxu0
        %v5655 = vadd.f32 0.0, %v5654
        %v5656 = vpop.f32.mrb[0].mxu0
        %v5657 = vpop.f32.mrb[0].mxu0
        %v5658 = vadd.f32 0.0, %v5657
        %v5659 = vpop.f32.mrb[0].mxu0
        %5660 = vmatprep.mubr.bf16.mxu0 0
        %5661 = vmatmul.mubr.bf16.gmra.mrb[0].mxu0 %v5080
        %v5662 = vpop.f32.mrb[0].mxu0
        %v5663 = vadd.f32 0.0, %v5662
        %v5664 = vpop.f32.mrb[0].mxu0
        %v5665 = vpop.f32.mrb[0].mxu0
        %v5666 = vadd.f32 0.0, %v5665
        %v5667 = vpop.f32.mrb[0].mxu0
        %5668 = vmatprep.mubr.bf16.mxu0 0
        %5669 = vmatmul.mubr.bf16.gmra.mrb[0].mxu0 %v5081
        %v5670 = vpop.f32.mrb[0].mxu0
        %v5671 = vadd.f32 0.0, %v5670
        %v5672 = vpop.f32.mrb[0].mxu0
        %v5673 = vpop.f32.mrb[0].mxu0
        %v5674 = vadd.f32 0.0, %v5673
        %v5675 = vpop.f32.mrb[0].mxu0
        %5676 = vdwg.mxu0
        %v5677 = vadd.f32 %v4927, %v5167
        %v5678 = vadd.f32 %v4928, %v5170
        %v5679 = vadd.f32 %v4929, %v5175
        %v5680 = vadd.f32 %v4930, %v5178
        %v5681 = vadd.f32 %v4931, %v5183
        %v5682 = vadd.f32 %v4932, %v5186
        %v5683 = vadd.f32 %v4933, %v5191
        %v5684 = vadd.f32 %v4934, %v5194
        %v5685 = vadd.f32 %v4935, %v5199
        %v5686 = vadd.f32 %v4936, %v5202
        %v5687 = vadd.f32 %v4937, %v5207
        %v5688 = vadd.f32 %v4938, %v5210
        %v5689 = vadd.f32 %v4939, %v5215
        %v5690 = vadd.f32 %v4940, %v5218
        %v5691 = vadd.f32 %v4941, %v5223
        %v5692 = vadd.f32 %v4942, %v5226
        %v5693 = vadd.f32 %v4943, %v5231
        %v5694 = vadd.f32 %v4944, %v5234
        %v5695 = vadd.f32 %v4945, %v5239
        %v5696 = vadd.f32 %v4946, %v5242
        %v5697 = vadd.f32 %v4947, %v5247
        %v5698 = vadd.f32 %v4948, %v5250
        %v5699 = vadd.f32 %v4949, %v5255
        %v5700 = vadd.f32 %v4950, %v5258
        %v5701 = vadd.f32 %v4951, %v5263
        %v5702 = vadd.f32 %v4952, %v5266
        %v5703 = vadd.f32 %v4953, %v5271
        %v5704 = vadd.f32 %v4954, %v5274
        %v5705 = vadd.f32 %v4955, %v5279
        %v5706 = vadd.f32 %v4956, %v5282
        %v5707 = vadd.f32 %v4957, %v5287
        %v5708 = vadd.f32 %v4958, %v5290
        %v5709 = vadd.f32 %v4959, %v5295
        %v5710 = vadd.f32 %v4960, %v5298
        %v5711 = vadd.f32 %v4961, %v5303
        %v5712 = vadd.f32 %v4962, %v5306
        %v5713 = vadd.f32 %v4963, %v5311
        %v5714 = vadd.f32 %v4964, %v5314
        %v5715 = vadd.f32 %v4965, %v5319
        %v5716 = vadd.f32 %v4966, %v5322
        %v5717 = vadd.f32 %v4967, %v5327
        %v5718 = vadd.f32 %v4968, %v5330
        %v5719 = vadd.f32 %v4969, %v5335
        %v5720 = vadd.f32 %v4970, %v5338
        %v5721 = vadd.f32 %v4971, %v5343
        %v5722 = vadd.f32 %v4972, %v5346
        %v5723 = vadd.f32 %v4973, %v5351
        %v5724 = vadd.f32 %v4974, %v5354
        %v5725 = vadd.f32 %v4975, %v5359
        %v5726 = vadd.f32 %v4976, %v5362
        %v5727 = vadd.f32 %v4977, %v5367
        %v5728 = vadd.f32 %v4978, %v5370
        %v5729 = vadd.f32 %v4979, %v5375
        %v5730 = vadd.f32 %v4980, %v5378
        %v5731 = vadd.f32 %v4981, %v5383
        %v5732 = vadd.f32 %v4982, %v5386
        %v5733 = vadd.f32 %v4983, %v5391
        %v5734 = vadd.f32 %v4984, %v5394
        %v5735 = vadd.f32 %v4985, %v5399
        %v5736 = vadd.f32 %v4986, %v5402
        %v5737 = vadd.f32 %v4987, %v5407
        %v5738 = vadd.f32 %v4988, %v5410
        %v5739 = vadd.f32 %v4989, %v5415
        %v5740 = vadd.f32 %v4990, %v5418
        %v5741 = vadd.f32 %v4991, %v5423
        %v5742 = vadd.f32 %v4992, %v5426
        %v5743 = vadd.f32 %v4993, %v5431
        %v5744 = vadd.f32 %v4994, %v5434
        %v5745 = vadd.f32 %v4995, %v5439
        %v5746 = vadd.f32 %v4996, %v5442
        %v5747 = vadd.f32 %v4997, %v5447
        %v5748 = vadd.f32 %v4998, %v5450
        %v5749 = vadd.f32 %v4999, %v5455
        %v5750 = vadd.f32 %v5000, %v5458
        %v5751 = vadd.f32 %v5001, %v5463
        %v5752 = vadd.f32 %v5002, %v5466
        %v5753 = vadd.f32 %v5003, %v5471
        %v5754 = vadd.f32 %v5004, %v5474
        %v5755 = vadd.f32 %v5005, %v5479
        %v5756 = vadd.f32 %v5006, %v5482
        %v5757 = vadd.f32 %v5007, %v5487
        %v5758 = vadd.f32 %v5008, %v5490
        %v5759 = vadd.f32 %v5009, %v5495
        %v5760 = vadd.f32 %v5010, %v5498
        %v5761 = vadd.f32 %v5011, %v5503
        %v5762 = vadd.f32 %v5012, %v5506
        %v5763 = vadd.f32 %v5013, %v5511
        %v5764 = vadd.f32 %v5014, %v5514
        %v5765 = vadd.f32 %v5015, %v5519
        %v5766 = vadd.f32 %v5016, %v5522
        %v5767 = vadd.f32 %v5017, %v5527
        %v5768 = vadd.f32 %v5018, %v5530
        %v5769 = vadd.f32 %v5019, %v5535
        %v5770 = vadd.f32 %v5020, %v5538
        %v5771 = vadd.f32 %v5021, %v5543
        %v5772 = vadd.f32 %v5022, %v5546
        %v5773 = vadd.f32 %v5023, %v5551
        %v5774 = vadd.f32 %v5024, %v5554
        %v5775 = vadd.f32 %v5025, %v5559
        %v5776 = vadd.f32 %v5026, %v5562
        %v5777 = vadd.f32 %v5027, %v5567
        %v5778 = vadd.f32 %v5028, %v5570
        %v5779 = vadd.f32 %v5029, %v5575
        %v5780 = vadd.f32 %v5030, %v5578
        %v5781 = vadd.f32 %v5031, %v5583
        %v5782 = vadd.f32 %v5032, %v5586
        %v5783 = vadd.f32 %v5033, %v5591
        %v5784 = vadd.f32 %v5034, %v5594
        %v5785 = vadd.f32 %v5035, %v5599
        %v5786 = vadd.f32 %v5036, %v5602
        %v5787 = vadd.f32 %v5037, %v5607
        %v5788 = vadd.f32 %v5038, %v5610
        %v5789 = vadd.f32 %v5039, %v5615
        %v5790 = vadd.f32 %v5040, %v5618
        %v5791 = vadd.f32 %v5041, %v5623
        %v5792 = vadd.f32 %v5042, %v5626
        %v5793 = vadd.f32 %v5043, %v5631
        %v5794 = vadd.f32 %v5044, %v5634
        %v5795 = vadd.f32 %v5045, %v5639
        %v5796 = vadd.f32 %v5046, %v5642
        %v5797 = vadd.f32 %v5047, %v5647
        %v5798 = vadd.f32 %v5048, %v5650
        %v5799 = vadd.f32 %v5049, %v5655
        %v5800 = vadd.f32 %v5050, %v5658
        %v5801 = vadd.f32 %v5051, %v5663
        %v5802 = vadd.f32 %v5052, %v5666
        %v5803 = vadd.f32 %v5053, %v5671
        %v5804 = vadd.f32 %v5054, %v5674
        %v5806 = vshrl.u32 %v330, 16
        %v5808 = vrot.slane %v5806, 4
        %v5809 = vshll.u32 %v330, 16
        %v5811 = vrot.slane %v5809, 5
        %v5812 = vor.u32 %v5808, %v5811
        %v5813 = vrot.slane %v5812, 4
        %v5815 = vshll.u32 %v331, 16
        %v5817 = vrot.slane %v5815, 5
        %v5818 = vsel %vm358, %v5813, %v5817
        %v5819 = vshrl.u32 %v331, 16
        %v5821 = vrot.slane %v5819, 4
        %v5822 = vor.u32 %v5821, %v5817
        %v5823 = vrot.slane %v5822, 4
        %v5825 = vshll.u32 %v332, 16
        %v5827 = vrot.slane %v5825, 5
        %v5828 = vsel %vm358, %v5823, %v5827
        %v5829 = vshrl.u32 %v332, 16
        %v5831 = vrot.slane %v5829, 4
        %v5832 = vor.u32 %v5831, %v5827
        %v5833 = vrot.slane %v5832, 4
        %v5835 = vshll.u32 %v333, 16
        %v5837 = vrot.slane %v5835, 5
        %v5838 = vsel %vm358, %v5833, %v5837
        %v5839 = vshrl.u32 %v333, 16
        %v5841 = vrot.slane %v5839, 4
        %v5842 = vor.u32 %v5841, %v5837
        %v5843 = vrot.slane %v5842, 4
        %v5845 = vshll.u32 %v334, 16
        %v5847 = vrot.slane %v5845, 5
        %v5848 = vsel %vm358, %v5843, %v5847
        %s5849 = scalar_lea.vmem %s1, 256
        %v5850 = vld [vmem:[%s5849] sm:$0xf]
        %v5851 = vld [vmem:[%s5849 + $0x4] sm:$0xf]
        %v5852 = vld [vmem:[%s5849 + $0x8] sm:$0xf]
        %v5853 = vld [vmem:[%s5849 + $0xc] sm:$0xf]
        %v5854 = vld [vmem:[%s5849 + $0x10] sm:$0xf]
        %v5855 = vld [vmem:[%s5849 + $0x14] sm:$0xf]
        %v5856 = vld [vmem:[%s5849 + $0x18] sm:$0xf]
        %v5857 = vld [vmem:[%s5849 + $0x1c] sm:$0xf]
        %v5858 = vld [vmem:[%s5849 + $0x20] sm:$0xf]
        %v5859 = vld [vmem:[%s5849 + $0x24] sm:$0xf]
        %v5860 = vld [vmem:[%s5849 + $0x28] sm:$0xf]
        %v5861 = vld [vmem:[%s5849 + $0x2c] sm:$0xf]
        %v5862 = vld [vmem:[%s5849 + $0x30] sm:$0xf]
        %v5863 = vld [vmem:[%s5849 + $0x34] sm:$0xf]
        %v5864 = vld [vmem:[%s5849 + $0x38] sm:$0xf]
        %v5865 = vld [vmem:[%s5849 + $0x3c] sm:$0xf]
        %v5866 = vunpack.c.l.b16 %v5818
        %v5867 = vunpack.c.l.b16 %v5828
        %v5868 = vunpack.c.l.b16 %v5838
        %v5869 = vunpack.c.l.b16 %v5848
        %v5870 = vpack.c.b16 %v5867, %v5866
        %v5871 = vpack.c.b16 %v5869, %v5868
        %v5890 = vunpack.c.l.b16 %v5850
        %v5891 = vunpack.c.l.b16 %v5851
        %v5892 = vunpack.c.l.b16 %v5852
        %v5893 = vunpack.c.l.b16 %v5853
        %v5894 = vunpack.c.l.b16 %v5854
        %v5895 = vunpack.c.l.b16 %v5855
        %v5896 = vunpack.c.l.b16 %v5856
        %v5897 = vunpack.c.l.b16 %v5857
        %v5898 = vunpack.c.l.b16 %v5858
        %v5899 = vunpack.c.l.b16 %v5859
        %v5900 = vunpack.c.l.b16 %v5860
        %v5901 = vunpack.c.l.b16 %v5861
        %v5902 = vunpack.c.l.b16 %v5862
        %v5903 = vunpack.c.l.b16 %v5863
        %v5904 = vunpack.c.l.b16 %v5864
        %v5905 = vunpack.c.l.b16 %v5865
        %v5906 = vpack.c.b16 %v5891, %v5890
        %v5907 = vpack.c.b16 %v5893, %v5892
        %v5908 = vpack.c.b16 %v5895, %v5894
        %v5909 = vpack.c.b16 %v5897, %v5896
        %v5910 = vpack.c.b16 %v5899, %v5898
        %v5911 = vpack.c.b16 %v5901, %v5900
        %v5912 = vpack.c.b16 %v5903, %v5902
        %v5913 = vpack.c.b16 %v5905, %v5904
        %5922 = vmatprep.subr.bf16.mxu0 0
        %5923 = vmatpush1.bf16.msra.mxu0 %v5906
        %5924 = vmatprep.subr.bf16.mxu0 0
        %5925 = vmatpush1.bf16.msra.mxu0 %v5907
        %5926 = vmatprep.subr.bf16.mxu0 0
        %5927 = vmatpush1.bf16.msra.mxu0 %v5908
        %5928 = vmatprep.subr.bf16.mxu0 0
        %5929 = vmatpush1.bf16.msra.mxu0 %v5909
        %5930 = vmatprep.subr.bf16.mxu0 0
        %5931 = vmatpush1.bf16.msra.mxu0 %v5910
        %5932 = vmatprep.subr.bf16.mxu0 0
        %5933 = vmatpush1.bf16.msra.mxu0 %v5911
        %5934 = vmatprep.subr.bf16.mxu0 0
        %5935 = vmatpush1.bf16.msra.mxu0 %v5912
        %5936 = vmatprep.subr.bf16.mxu0 0
        %5937 = vmatpush1.bf16.msra.mxu0 %v5913
        %5938 = vmatprep.subr.bf16.mxu0 0
        %5939 = vmatpush1.bf16.msra.mxu0 0
        %5940 = vmatprep.subr.bf16.mxu0 0
        %5941 = vmatpush1.bf16.msra.mxu0 0
        %5942 = vmatprep.subr.bf16.mxu0 0
        %5943 = vmatpush1.bf16.msra.mxu0 0
        %5944 = vmatprep.subr.bf16.mxu0 0
        %5945 = vmatpush1.bf16.msra.mxu0 0
        %5946 = vmatprep.subr.bf16.mxu0 0
        %5947 = vmatpush1.bf16.msra.mxu0 0
        %5948 = vmatprep.subr.bf16.mxu0 0
        %5949 = vmatpush1.bf16.msra.mxu0 0
        %5950 = vmatprep.subr.bf16.mxu0 0
        %5951 = vmatpush1.bf16.msra.mxu0 0
        %5952 = vmatprep.subr.bf16.mxu0 0
        %5953 = vmatpush1.bf16.msra.mxu0 0
        %5954 = vmatprep.mubr.bf16.mxu0 0
        %5955 = vmatmul.mubr.bf16.gmra.mrb[0].mxu0 %v1914
        %v5956 = vpop.f32.mrb[0].mxu0
        %v5957 = vadd.f32 0.0, %v5956
        %v5958 = vpop.f32.mrb[0].mxu0
        %v5959 = vpop.f32.mrb[0].mxu0
        %v5960 = vadd.f32 0.0, %v5959
        %v5961 = vpop.f32.mrb[0].mxu0
        %5962 = vmatprep.mubr.bf16.mxu0 0
        %5963 = vmatmul.mubr.bf16.gmra.mrb[0].mxu0 %v1915
        %v5964 = vpop.f32.mrb[0].mxu0
        %v5965 = vadd.f32 0.0, %v5964
        %v5966 = vpop.f32.mrb[0].mxu0
        %v5967 = vpop.f32.mrb[0].mxu0
        %v5968 = vadd.f32 0.0, %v5967
        %v5969 = vpop.f32.mrb[0].mxu0
        %5970 = vmatprep.mubr.bf16.mxu0 0
        %5971 = vmatmul.mubr.bf16.gmra.mrb[0].mxu0 %v1916
        %v5972 = vpop.f32.mrb[0].mxu0
        %v5973 = vadd.f32 0.0, %v5972
        %v5974 = vpop.f32.mrb[0].mxu0
        %v5975 = vpop.f32.mrb[0].mxu0
        %v5976 = vadd.f32 0.0, %v5975
        %v5977 = vpop.f32.mrb[0].mxu0
        %5978 = vmatprep.mubr.bf16.mxu0 0
        %5979 = vmatmul.mubr.bf16.gmra.mrb[0].mxu0 %v1917
        %v5980 = vpop.f32.mrb[0].mxu0
        %v5981 = vadd.f32 0.0, %v5980
        %v5982 = vpop.f32.mrb[0].mxu0
        %v5983 = vpop.f32.mrb[0].mxu0
        %v5984 = vadd.f32 0.0, %v5983
        %v5985 = vpop.f32.mrb[0].mxu0
        %5986 = vmatprep.mubr.bf16.mxu0 0
        %5987 = vmatmul.mubr.bf16.gmra.mrb[0].mxu0 %v1918
        %v5988 = vpop.f32.mrb[0].mxu0
        %v5989 = vadd.f32 0.0, %v5988
        %v5990 = vpop.f32.mrb[0].mxu0
        %v5991 = vpop.f32.mrb[0].mxu0
        %v5992 = vadd.f32 0.0, %v5991
        %v5993 = vpop.f32.mrb[0].mxu0
        %5994 = vmatprep.mubr.bf16.mxu0 0
        %5995 = vmatmul.mubr.bf16.gmra.mrb[0].mxu0 %v1919
        %v5996 = vpop.f32.mrb[0].mxu0
        %v5997 = vadd.f32 0.0, %v5996
        %v5998 = vpop.f32.mrb[0].mxu0
        %v5999 = vpop.f32.mrb[0].mxu0
        %v6000 = vadd.f32 0.0, %v5999
        %v6001 = vpop.f32.mrb[0].mxu0
        %6002 = vmatprep.mubr.bf16.mxu0 0
        %6003 = vmatmul.mubr.bf16.gmra.mrb[0].mxu0 %v1920
        %v6004 = vpop.f32.mrb[0].mxu0
        %v6005 = vadd.f32 0.0, %v6004
        %v6006 = vpop.f32.mrb[0].mxu0
        %v6007 = vpop.f32.mrb[0].mxu0
        %v6008 = vadd.f32 0.0, %v6007
        %v6009 = vpop.f32.mrb[0].mxu0
        %6010 = vmatprep.mubr.bf16.mxu0 0
        %6011 = vmatmul.mubr.bf16.gmra.mrb[0].mxu0 %v1921
        %v6012 = vpop.f32.mrb[0].mxu0
        %v6013 = vadd.f32 0.0, %v6012
        %v6014 = vpop.f32.mrb[0].mxu0
        %v6015 = vpop.f32.mrb[0].mxu0
        %v6016 = vadd.f32 0.0, %v6015
        %v6017 = vpop.f32.mrb[0].mxu0
        %6018 = vmatprep.mubr.bf16.mxu0 0
        %6019 = vmatmul.mubr.bf16.gmra.mrb[0].mxu0 %v1922
        %v6020 = vpop.f32.mrb[0].mxu0
        %v6021 = vadd.f32 0.0, %v6020
        %v6022 = vpop.f32.mrb[0].mxu0
        %v6023 = vpop.f32.mrb[0].mxu0
        %v6024 = vadd.f32 0.0, %v6023
        %v6025 = vpop.f32.mrb[0].mxu0
        %6026 = vmatprep.mubr.bf16.mxu0 0
        %6027 = vmatmul.mubr.bf16.gmra.mrb[0].mxu0 %v1923
        %v6028 = vpop.f32.mrb[0].mxu0
        %v6029 = vadd.f32 0.0, %v6028
        %v6030 = vpop.f32.mrb[0].mxu0
        %v6031 = vpop.f32.mrb[0].mxu0
        %v6032 = vadd.f32 0.0, %v6031
        %v6033 = vpop.f32.mrb[0].mxu0
        %6034 = vmatprep.mubr.bf16.mxu0 0
        %6035 = vmatmul.mubr.bf16.gmra.mrb[0].mxu0 %v1924
        %v6036 = vpop.f32.mrb[0].mxu0
        %v6037 = vadd.f32 0.0, %v6036
        %v6038 = vpop.f32.mrb[0].mxu0
        %v6039 = vpop.f32.mrb[0].mxu0
        %v6040 = vadd.f32 0.0, %v6039
        %v6041 = vpop.f32.mrb[0].mxu0
        %6042 = vmatprep.mubr.bf16.mxu0 0
        %6043 = vmatmul.mubr.bf16.gmra.mrb[0].mxu0 %v1925
        %v6044 = vpop.f32.mrb[0].mxu0
        %v6045 = vadd.f32 0.0, %v6044
        %v6046 = vpop.f32.mrb[0].mxu0
        %v6047 = vpop.f32.mrb[0].mxu0
        %v6048 = vadd.f32 0.0, %v6047
        %v6049 = vpop.f32.mrb[0].mxu0
        %6050 = vmatprep.mubr.bf16.mxu0 0
        %6051 = vmatmul.mubr.bf16.gmra.mrb[0].mxu0 %v1926
        %v6052 = vpop.f32.mrb[0].mxu0
        %v6053 = vadd.f32 0.0, %v6052
        %v6054 = vpop.f32.mrb[0].mxu0
        %v6055 = vpop.f32.mrb[0].mxu0
        %v6056 = vadd.f32 0.0, %v6055
        %v6057 = vpop.f32.mrb[0].mxu0
        %6058 = vmatprep.mubr.bf16.mxu0 0
        %6059 = vmatmul.mubr.bf16.gmra.mrb[0].mxu0 %v1927
        %v6060 = vpop.f32.mrb[0].mxu0
        %v6061 = vadd.f32 0.0, %v6060
        %v6062 = vpop.f32.mrb[0].mxu0
        %v6063 = vpop.f32.mrb[0].mxu0
        %v6064 = vadd.f32 0.0, %v6063
        %v6065 = vpop.f32.mrb[0].mxu0
        %6066 = vmatprep.mubr.bf16.mxu0 0
        %6067 = vmatmul.mubr.bf16.gmra.mrb[0].mxu0 %v1928
        %v6068 = vpop.f32.mrb[0].mxu0
        %v6069 = vadd.f32 0.0, %v6068
        %v6070 = vpop.f32.mrb[0].mxu0
        %v6071 = vpop.f32.mrb[0].mxu0
        %v6072 = vadd.f32 0.0, %v6071
        %v6073 = vpop.f32.mrb[0].mxu0
        %6074 = vmatprep.mubr.bf16.mxu0 0
        %6075 = vmatmul.mubr.bf16.gmra.mrb[0].mxu0 %v1929
        %v6076 = vpop.f32.mrb[0].mxu0
        %v6077 = vadd.f32 0.0, %v6076
        %v6078 = vpop.f32.mrb[0].mxu0
        %v6079 = vpop.f32.mrb[0].mxu0
        %v6080 = vadd.f32 0.0, %v6079
        %v6081 = vpop.f32.mrb[0].mxu0
        %6082 = vmatprep.mubr.bf16.mxu0 0
        %6083 = vmatmul.mubr.bf16.gmra.mrb[0].mxu0 %v1930
        %v6084 = vpop.f32.mrb[0].mxu0
        %v6085 = vadd.f32 0.0, %v6084
        %v6086 = vpop.f32.mrb[0].mxu0
        %v6087 = vpop.f32.mrb[0].mxu0
        %v6088 = vadd.f32 0.0, %v6087
        %v6089 = vpop.f32.mrb[0].mxu0
        %6090 = vmatprep.mubr.bf16.mxu0 0
        %6091 = vmatmul.mubr.bf16.gmra.mrb[0].mxu0 %v1931
        %v6092 = vpop.f32.mrb[0].mxu0
        %v6093 = vadd.f32 0.0, %v6092
        %v6094 = vpop.f32.mrb[0].mxu0
        %v6095 = vpop.f32.mrb[0].mxu0
        %v6096 = vadd.f32 0.0, %v6095
        %v6097 = vpop.f32.mrb[0].mxu0
        %6098 = vmatprep.mubr.bf16.mxu0 0
        %6099 = vmatmul.mubr.bf16.gmra.mrb[0].mxu0 %v1932
        %v6100 = vpop.f32.mrb[0].mxu0
        %v6101 = vadd.f32 0.0, %v6100
        %v6102 = vpop.f32.mrb[0].mxu0
        %v6103 = vpop.f32.mrb[0].mxu0
        %v6104 = vadd.f32 0.0, %v6103
        %v6105 = vpop.f32.mrb[0].mxu0
        %6106 = vmatprep.mubr.bf16.mxu0 0
        %6107 = vmatmul.mubr.bf16.gmra.mrb[0].mxu0 %v1933
        %v6108 = vpop.f32.mrb[0].mxu0
        %v6109 = vadd.f32 0.0, %v6108
        %v6110 = vpop.f32.mrb[0].mxu0
        %v6111 = vpop.f32.mrb[0].mxu0
        %v6112 = vadd.f32 0.0, %v6111
        %v6113 = vpop.f32.mrb[0].mxu0
        %6114 = vmatprep.mubr.bf16.mxu0 0
        %6115 = vmatmul.mubr.bf16.gmra.mrb[0].mxu0 %v1934
        %v6116 = vpop.f32.mrb[0].mxu0
        %v6117 = vadd.f32 0.0, %v6116
        %v6118 = vpop.f32.mrb[0].mxu0
        %v6119 = vpop.f32.mrb[0].mxu0
        %v6120 = vadd.f32 0.0, %v6119
        %v6121 = vpop.f32.mrb[0].mxu0
        %6122 = vmatprep.mubr.bf16.mxu0 0
        %6123 = vmatmul.mubr.bf16.gmra.mrb[0].mxu0 %v1935
        %v6124 = vpop.f32.mrb[0].mxu0
        %v6125 = vadd.f32 0.0, %v6124
        %v6126 = vpop.f32.mrb[0].mxu0
        %v6127 = vpop.f32.mrb[0].mxu0
        %v6128 = vadd.f32 0.0, %v6127
        %v6129 = vpop.f32.mrb[0].mxu0
        %6130 = vmatprep.mubr.bf16.mxu0 0
        %6131 = vmatmul.mubr.bf16.gmra.mrb[0].mxu0 %v1936
        %v6132 = vpop.f32.mrb[0].mxu0
        %v6133 = vadd.f32 0.0, %v6132
        %v6134 = vpop.f32.mrb[0].mxu0
        %v6135 = vpop.f32.mrb[0].mxu0
        %v6136 = vadd.f32 0.0, %v6135
        %v6137 = vpop.f32.mrb[0].mxu0
        %6138 = vmatprep.mubr.bf16.mxu0 0
        %6139 = vmatmul.mubr.bf16.gmra.mrb[0].mxu0 %v1937
        %v6140 = vpop.f32.mrb[0].mxu0
        %v6141 = vadd.f32 0.0, %v6140
        %v6142 = vpop.f32.mrb[0].mxu0
        %v6143 = vpop.f32.mrb[0].mxu0
        %v6144 = vadd.f32 0.0, %v6143
        %v6145 = vpop.f32.mrb[0].mxu0
        %6146 = vmatprep.mubr.bf16.mxu0 0
        %6147 = vmatmul.mubr.bf16.gmra.mrb[0].mxu0 %v1938
        %v6148 = vpop.f32.mrb[0].mxu0
        %v6149 = vadd.f32 0.0, %v6148
        %v6150 = vpop.f32.mrb[0].mxu0
        %v6151 = vpop.f32.mrb[0].mxu0
        %v6152 = vadd.f32 0.0, %v6151
        %v6153 = vpop.f32.mrb[0].mxu0
        %6154 = vmatprep.mubr.bf16.mxu0 0
        %6155 = vmatmul.mubr.bf16.gmra.mrb[0].mxu0 %v1939
        %v6156 = vpop.f32.mrb[0].mxu0
        %v6157 = vadd.f32 0.0, %v6156
        %v6158 = vpop.f32.mrb[0].mxu0
        %v6159 = vpop.f32.mrb[0].mxu0
        %v6160 = vadd.f32 0.0, %v6159
        %v6161 = vpop.f32.mrb[0].mxu0
        %6162 = vmatprep.mubr.bf16.mxu0 0
        %6163 = vmatmul.mubr.bf16.gmra.mrb[0].mxu0 %v1940
        %v6164 = vpop.f32.mrb[0].mxu0
        %v6165 = vadd.f32 0.0, %v6164
        %v6166 = vpop.f32.mrb[0].mxu0
        %v6167 = vpop.f32.mrb[0].mxu0
        %v6168 = vadd.f32 0.0, %v6167
        %v6169 = vpop.f32.mrb[0].mxu0
        %6170 = vmatprep.mubr.bf16.mxu0 0
        %6171 = vmatmul.mubr.bf16.gmra.mrb[0].mxu0 %v1941
        %v6172 = vpop.f32.mrb[0].mxu0
        %v6173 = vadd.f32 0.0, %v6172
        %v6174 = vpop.f32.mrb[0].mxu0
        %v6175 = vpop.f32.mrb[0].mxu0
        %v6176 = vadd.f32 0.0, %v6175
        %v6177 = vpop.f32.mrb[0].mxu0
        %6178 = vmatprep.mubr.bf16.mxu0 0
        %6179 = vmatmul.mubr.bf16.gmra.mrb[0].mxu0 %v1942
        %v6180 = vpop.f32.mrb[0].mxu0
        %v6181 = vadd.f32 0.0, %v6180
        %v6182 = vpop.f32.mrb[0].mxu0
        %v6183 = vpop.f32.mrb[0].mxu0
        %v6184 = vadd.f32 0.0, %v6183
        %v6185 = vpop.f32.mrb[0].mxu0
        %6186 = vmatprep.mubr.bf16.mxu0 0
        %6187 = vmatmul.mubr.bf16.gmra.mrb[0].mxu0 %v1943
        %v6188 = vpop.f32.mrb[0].mxu0
        %v6189 = vadd.f32 0.0, %v6188
        %v6190 = vpop.f32.mrb[0].mxu0
        %v6191 = vpop.f32.mrb[0].mxu0
        %v6192 = vadd.f32 0.0, %v6191
        %v6193 = vpop.f32.mrb[0].mxu0
        %6194 = vmatprep.mubr.bf16.mxu0 0
        %6195 = vmatmul.mubr.bf16.gmra.mrb[0].mxu0 %v1944
        %v6196 = vpop.f32.mrb[0].mxu0
        %v6197 = vadd.f32 0.0, %v6196
        %v6198 = vpop.f32.mrb[0].mxu0
        %v6199 = vpop.f32.mrb[0].mxu0
        %v6200 = vadd.f32 0.0, %v6199
        %v6201 = vpop.f32.mrb[0].mxu0
        %6202 = vmatprep.mubr.bf16.mxu0 0
        %6203 = vmatmul.mubr.bf16.gmra.mrb[0].mxu0 %v1945
        %v6204 = vpop.f32.mrb[0].mxu0
        %v6205 = vadd.f32 0.0, %v6204
        %v6206 = vpop.f32.mrb[0].mxu0
        %v6207 = vpop.f32.mrb[0].mxu0
        %v6208 = vadd.f32 0.0, %v6207
        %v6209 = vpop.f32.mrb[0].mxu0
        %6210 = vmatprep.mubr.bf16.mxu0 0
        %6211 = vmatmul.mubr.bf16.gmra.mrb[0].mxu0 %v1946
        %v6212 = vpop.f32.mrb[0].mxu0
        %v6213 = vadd.f32 0.0, %v6212
        %v6214 = vpop.f32.mrb[0].mxu0
        %v6215 = vpop.f32.mrb[0].mxu0
        %v6216 = vadd.f32 0.0, %v6215
        %v6217 = vpop.f32.mrb[0].mxu0
        %6218 = vmatprep.mubr.bf16.mxu0 0
        %6219 = vmatmul.mubr.bf16.gmra.mrb[0].mxu0 %v1947
        %v6220 = vpop.f32.mrb[0].mxu0
        %v6221 = vadd.f32 0.0, %v6220
        %v6222 = vpop.f32.mrb[0].mxu0
        %v6223 = vpop.f32.mrb[0].mxu0
        %v6224 = vadd.f32 0.0, %v6223
        %v6225 = vpop.f32.mrb[0].mxu0
        %6226 = vmatprep.mubr.bf16.mxu0 0
        %6227 = vmatmul.mubr.bf16.gmra.mrb[0].mxu0 %v1948
        %v6228 = vpop.f32.mrb[0].mxu0
        %v6229 = vadd.f32 0.0, %v6228
        %v6230 = vpop.f32.mrb[0].mxu0
        %v6231 = vpop.f32.mrb[0].mxu0
        %v6232 = vadd.f32 0.0, %v6231
        %v6233 = vpop.f32.mrb[0].mxu0
        %6234 = vmatprep.mubr.bf16.mxu0 0
        %6235 = vmatmul.mubr.bf16.gmra.mrb[0].mxu0 %v1949
        %v6236 = vpop.f32.mrb[0].mxu0
        %v6237 = vadd.f32 0.0, %v6236
        %v6238 = vpop.f32.mrb[0].mxu0
        %v6239 = vpop.f32.mrb[0].mxu0
        %v6240 = vadd.f32 0.0, %v6239
        %v6241 = vpop.f32.mrb[0].mxu0
        %6242 = vmatprep.mubr.bf16.mxu0 0
        %6243 = vmatmul.mubr.bf16.gmra.mrb[0].mxu0 %v1950
        %v6244 = vpop.f32.mrb[0].mxu0
        %v6245 = vadd.f32 0.0, %v6244
        %v6246 = vpop.f32.mrb[0].mxu0
        %v6247 = vpop.f32.mrb[0].mxu0
        %v6248 = vadd.f32 0.0, %v6247
        %v6249 = vpop.f32.mrb[0].mxu0
        %6250 = vmatprep.mubr.bf16.mxu0 0
        %6251 = vmatmul.mubr.bf16.gmra.mrb[0].mxu0 %v1951
        %v6252 = vpop.f32.mrb[0].mxu0
        %v6253 = vadd.f32 0.0, %v6252
        %v6254 = vpop.f32.mrb[0].mxu0
        %v6255 = vpop.f32.mrb[0].mxu0
        %v6256 = vadd.f32 0.0, %v6255
        %v6257 = vpop.f32.mrb[0].mxu0
        %6258 = vmatprep.mubr.bf16.mxu0 0
        %6259 = vmatmul.mubr.bf16.gmra.mrb[0].mxu0 %v1952
        %v6260 = vpop.f32.mrb[0].mxu0
        %v6261 = vadd.f32 0.0, %v6260
        %v6262 = vpop.f32.mrb[0].mxu0
        %v6263 = vpop.f32.mrb[0].mxu0
        %v6264 = vadd.f32 0.0, %v6263
        %v6265 = vpop.f32.mrb[0].mxu0
        %6266 = vmatprep.mubr.bf16.mxu0 0
        %6267 = vmatmul.mubr.bf16.gmra.mrb[0].mxu0 %v1953
        %v6268 = vpop.f32.mrb[0].mxu0
        %v6269 = vadd.f32 0.0, %v6268
        %v6270 = vpop.f32.mrb[0].mxu0
        %v6271 = vpop.f32.mrb[0].mxu0
        %v6272 = vadd.f32 0.0, %v6271
        %v6273 = vpop.f32.mrb[0].mxu0
        %6274 = vmatprep.mubr.bf16.mxu0 0
        %6275 = vmatmul.mubr.bf16.gmra.mrb[0].mxu0 %v1954
        %v6276 = vpop.f32.mrb[0].mxu0
        %v6277 = vadd.f32 0.0, %v6276
        %v6278 = vpop.f32.mrb[0].mxu0
        %v6279 = vpop.f32.mrb[0].mxu0
        %v6280 = vadd.f32 0.0, %v6279
        %v6281 = vpop.f32.mrb[0].mxu0
        %6282 = vmatprep.mubr.bf16.mxu0 0
        %6283 = vmatmul.mubr.bf16.gmra.mrb[0].mxu0 %v1955
        %v6284 = vpop.f32.mrb[0].mxu0
        %v6285 = vadd.f32 0.0, %v6284
        %v6286 = vpop.f32.mrb[0].mxu0
        %v6287 = vpop.f32.mrb[0].mxu0
        %v6288 = vadd.f32 0.0, %v6287
        %v6289 = vpop.f32.mrb[0].mxu0
        %6290 = vmatprep.mubr.bf16.mxu0 0
        %6291 = vmatmul.mubr.bf16.gmra.mrb[0].mxu0 %v1956
        %v6292 = vpop.f32.mrb[0].mxu0
        %v6293 = vadd.f32 0.0, %v6292
        %v6294 = vpop.f32.mrb[0].mxu0
        %v6295 = vpop.f32.mrb[0].mxu0
        %v6296 = vadd.f32 0.0, %v6295
        %v6297 = vpop.f32.mrb[0].mxu0
        %6298 = vmatprep.mubr.bf16.mxu0 0
        %6299 = vmatmul.mubr.bf16.gmra.mrb[0].mxu0 %v1957
        %v6300 = vpop.f32.mrb[0].mxu0
        %v6301 = vadd.f32 0.0, %v6300
        %v6302 = vpop.f32.mrb[0].mxu0
        %v6303 = vpop.f32.mrb[0].mxu0
        %v6304 = vadd.f32 0.0, %v6303
        %v6305 = vpop.f32.mrb[0].mxu0
        %6306 = vmatprep.mubr.bf16.mxu0 0
        %6307 = vmatmul.mubr.bf16.gmra.mrb[0].mxu0 %v1958
        %v6308 = vpop.f32.mrb[0].mxu0
        %v6309 = vadd.f32 0.0, %v6308
        %v6310 = vpop.f32.mrb[0].mxu0
        %v6311 = vpop.f32.mrb[0].mxu0
        %v6312 = vadd.f32 0.0, %v6311
        %v6313 = vpop.f32.mrb[0].mxu0
        %6314 = vmatprep.mubr.bf16.mxu0 0
        %6315 = vmatmul.mubr.bf16.gmra.mrb[0].mxu0 %v1959
        %v6316 = vpop.f32.mrb[0].mxu0
        %v6317 = vadd.f32 0.0, %v6316
        %v6318 = vpop.f32.mrb[0].mxu0
        %v6319 = vpop.f32.mrb[0].mxu0
        %v6320 = vadd.f32 0.0, %v6319
        %v6321 = vpop.f32.mrb[0].mxu0
        %6322 = vmatprep.mubr.bf16.mxu0 0
        %6323 = vmatmul.mubr.bf16.gmra.mrb[0].mxu0 %v1960
        %v6324 = vpop.f32.mrb[0].mxu0
        %v6325 = vadd.f32 0.0, %v6324
        %v6326 = vpop.f32.mrb[0].mxu0
        %v6327 = vpop.f32.mrb[0].mxu0
        %v6328 = vadd.f32 0.0, %v6327
        %v6329 = vpop.f32.mrb[0].mxu0
        %6330 = vmatprep.mubr.bf16.mxu0 0
        %6331 = vmatmul.mubr.bf16.gmra.mrb[0].mxu0 %v1961
        %v6332 = vpop.f32.mrb[0].mxu0
        %v6333 = vadd.f32 0.0, %v6332
        %v6334 = vpop.f32.mrb[0].mxu0
        %v6335 = vpop.f32.mrb[0].mxu0
        %v6336 = vadd.f32 0.0, %v6335
        %v6337 = vpop.f32.mrb[0].mxu0
        %6338 = vmatprep.mubr.bf16.mxu0 0
        %6339 = vmatmul.mubr.bf16.gmra.mrb[0].mxu0 %v1962
        %v6340 = vpop.f32.mrb[0].mxu0
        %v6341 = vadd.f32 0.0, %v6340
        %v6342 = vpop.f32.mrb[0].mxu0
        %v6343 = vpop.f32.mrb[0].mxu0
        %v6344 = vadd.f32 0.0, %v6343
        %v6345 = vpop.f32.mrb[0].mxu0
        %6346 = vmatprep.mubr.bf16.mxu0 0
        %6347 = vmatmul.mubr.bf16.gmra.mrb[0].mxu0 %v1963
        %v6348 = vpop.f32.mrb[0].mxu0
        %v6349 = vadd.f32 0.0, %v6348
        %v6350 = vpop.f32.mrb[0].mxu0
        %v6351 = vpop.f32.mrb[0].mxu0
        %v6352 = vadd.f32 0.0, %v6351
        %v6353 = vpop.f32.mrb[0].mxu0
        %6354 = vmatprep.mubr.bf16.mxu0 0
        %6355 = vmatmul.mubr.bf16.gmra.mrb[0].mxu0 %v1964
        %v6356 = vpop.f32.mrb[0].mxu0
        %v6357 = vadd.f32 0.0, %v6356
        %v6358 = vpop.f32.mrb[0].mxu0
        %v6359 = vpop.f32.mrb[0].mxu0
        %v6360 = vadd.f32 0.0, %v6359
        %v6361 = vpop.f32.mrb[0].mxu0
        %6362 = vmatprep.mubr.bf16.mxu0 0
        %6363 = vmatmul.mubr.bf16.gmra.mrb[0].mxu0 %v1965
        %v6364 = vpop.f32.mrb[0].mxu0
        %v6365 = vadd.f32 0.0, %v6364
        %v6366 = vpop.f32.mrb[0].mxu0
        %v6367 = vpop.f32.mrb[0].mxu0
        %v6368 = vadd.f32 0.0, %v6367
        %v6369 = vpop.f32.mrb[0].mxu0
        %6370 = vmatprep.mubr.bf16.mxu0 0
        %6371 = vmatmul.mubr.bf16.gmra.mrb[0].mxu0 %v1966
        %v6372 = vpop.f32.mrb[0].mxu0
        %v6373 = vadd.f32 0.0, %v6372
        %v6374 = vpop.f32.mrb[0].mxu0
        %v6375 = vpop.f32.mrb[0].mxu0
        %v6376 = vadd.f32 0.0, %v6375
        %v6377 = vpop.f32.mrb[0].mxu0
        %6378 = vmatprep.mubr.bf16.mxu0 0
        %6379 = vmatmul.mubr.bf16.gmra.mrb[0].mxu0 %v1967
        %v6380 = vpop.f32.mrb[0].mxu0
        %v6381 = vadd.f32 0.0, %v6380
        %v6382 = vpop.f32.mrb[0].mxu0
        %v6383 = vpop.f32.mrb[0].mxu0
        %v6384 = vadd.f32 0.0, %v6383
        %v6385 = vpop.f32.mrb[0].mxu0
        %6386 = vmatprep.mubr.bf16.mxu0 0
        %6387 = vmatmul.mubr.bf16.gmra.mrb[0].mxu0 %v1968
        %v6388 = vpop.f32.mrb[0].mxu0
        %v6389 = vadd.f32 0.0, %v6388
        %v6390 = vpop.f32.mrb[0].mxu0
        %v6391 = vpop.f32.mrb[0].mxu0
        %v6392 = vadd.f32 0.0, %v6391
        %v6393 = vpop.f32.mrb[0].mxu0
        %6394 = vmatprep.mubr.bf16.mxu0 0
        %6395 = vmatmul.mubr.bf16.gmra.mrb[0].mxu0 %v1969
        %v6396 = vpop.f32.mrb[0].mxu0
        %v6397 = vadd.f32 0.0, %v6396
        %v6398 = vpop.f32.mrb[0].mxu0
        %v6399 = vpop.f32.mrb[0].mxu0
        %v6400 = vadd.f32 0.0, %v6399
        %v6401 = vpop.f32.mrb[0].mxu0
        %6402 = vmatprep.mubr.bf16.mxu0 0
        %6403 = vmatmul.mubr.bf16.gmra.mrb[0].mxu0 %v1970
        %v6404 = vpop.f32.mrb[0].mxu0
        %v6405 = vadd.f32 0.0, %v6404
        %v6406 = vpop.f32.mrb[0].mxu0
        %v6407 = vpop.f32.mrb[0].mxu0
        %v6408 = vadd.f32 0.0, %v6407
        %v6409 = vpop.f32.mrb[0].mxu0
        %6410 = vmatprep.mubr.bf16.mxu0 0
        %6411 = vmatmul.mubr.bf16.gmra.mrb[0].mxu0 %v1971
        %v6412 = vpop.f32.mrb[0].mxu0
        %v6413 = vadd.f32 0.0, %v6412
        %v6414 = vpop.f32.mrb[0].mxu0
        %v6415 = vpop.f32.mrb[0].mxu0
        %v6416 = vadd.f32 0.0, %v6415
        %v6417 = vpop.f32.mrb[0].mxu0
        %6418 = vmatprep.mubr.bf16.mxu0 0
        %6419 = vmatmul.mubr.bf16.gmra.mrb[0].mxu0 %v1972
        %v6420 = vpop.f32.mrb[0].mxu0
        %v6421 = vadd.f32 0.0, %v6420
        %v6422 = vpop.f32.mrb[0].mxu0
        %v6423 = vpop.f32.mrb[0].mxu0
        %v6424 = vadd.f32 0.0, %v6423
        %v6425 = vpop.f32.mrb[0].mxu0
        %6426 = vmatprep.mubr.bf16.mxu0 0
        %6427 = vmatmul.mubr.bf16.gmra.mrb[0].mxu0 %v1973
        %v6428 = vpop.f32.mrb[0].mxu0
        %v6429 = vadd.f32 0.0, %v6428
        %v6430 = vpop.f32.mrb[0].mxu0
        %v6431 = vpop.f32.mrb[0].mxu0
        %v6432 = vadd.f32 0.0, %v6431
        %v6433 = vpop.f32.mrb[0].mxu0
        %6434 = vmatprep.mubr.bf16.mxu0 0
        %6435 = vmatmul.mubr.bf16.gmra.mrb[0].mxu0 %v1974
        %v6436 = vpop.f32.mrb[0].mxu0
        %v6437 = vadd.f32 0.0, %v6436
        %v6438 = vpop.f32.mrb[0].mxu0
        %v6439 = vpop.f32.mrb[0].mxu0
        %v6440 = vadd.f32 0.0, %v6439
        %v6441 = vpop.f32.mrb[0].mxu0
        %6442 = vmatprep.mubr.bf16.mxu0 0
        %6443 = vmatmul.mubr.bf16.gmra.mrb[0].mxu0 %v1975
        %v6444 = vpop.f32.mrb[0].mxu0
        %v6445 = vadd.f32 0.0, %v6444
        %v6446 = vpop.f32.mrb[0].mxu0
        %v6447 = vpop.f32.mrb[0].mxu0
        %v6448 = vadd.f32 0.0, %v6447
        %v6449 = vpop.f32.mrb[0].mxu0
        %6450 = vmatprep.mubr.bf16.mxu0 0
        %6451 = vmatmul.mubr.bf16.gmra.mrb[0].mxu0 %v5870
        %v6452 = vpop.f32.mrb[0].mxu0
        %v6453 = vadd.f32 0.0, %v6452
        %v6454 = vpop.f32.mrb[0].mxu0
        %v6455 = vpop.f32.mrb[0].mxu0
        %v6456 = vadd.f32 0.0, %v6455
        %v6457 = vpop.f32.mrb[0].mxu0
        %6458 = vmatprep.mubr.bf16.mxu0 0
        %6459 = vmatmul.mubr.bf16.gmra.mrb[0].mxu0 %v5871
        %v6460 = vpop.f32.mrb[0].mxu0
        %v6461 = vadd.f32 0.0, %v6460
        %v6462 = vpop.f32.mrb[0].mxu0
        %v6463 = vpop.f32.mrb[0].mxu0
        %v6464 = vadd.f32 0.0, %v6463
        %v6465 = vpop.f32.mrb[0].mxu0
        %6466 = vdwg.mxu0
        %v6467 = vadd.f32 %v5677, %v5957
        %v6468 = vadd.f32 %v5678, %v5960
        %v6469 = vadd.f32 %v5679, %v5965
        %v6470 = vadd.f32 %v5680, %v5968
        %v6471 = vadd.f32 %v5681, %v5973
        %v6472 = vadd.f32 %v5682, %v5976
        %v6473 = vadd.f32 %v5683, %v5981
        %v6474 = vadd.f32 %v5684, %v5984
        %v6475 = vadd.f32 %v5685, %v5989
        %v6476 = vadd.f32 %v5686, %v5992
        %v6477 = vadd.f32 %v5687, %v5997
        %v6478 = vadd.f32 %v5688, %v6000
        %v6479 = vadd.f32 %v5689, %v6005
        %v6480 = vadd.f32 %v5690, %v6008
        %v6481 = vadd.f32 %v5691, %v6013
        %v6482 = vadd.f32 %v5692, %v6016
        %v6483 = vadd.f32 %v5693, %v6021
        %v6484 = vadd.f32 %v5694, %v6024
        %v6485 = vadd.f32 %v5695, %v6029
        %v6486 = vadd.f32 %v5696, %v6032
        %v6487 = vadd.f32 %v5697, %v6037
        %v6488 = vadd.f32 %v5698, %v6040
        %v6489 = vadd.f32 %v5699, %v6045
        %v6490 = vadd.f32 %v5700, %v6048
        %v6491 = vadd.f32 %v5701, %v6053
        %v6492 = vadd.f32 %v5702, %v6056
        %v6493 = vadd.f32 %v5703, %v6061
        %v6494 = vadd.f32 %v5704, %v6064
        %v6495 = vadd.f32 %v5705, %v6069
        %v6496 = vadd.f32 %v5706, %v6072
        %v6497 = vadd.f32 %v5707, %v6077
        %v6498 = vadd.f32 %v5708, %v6080
        %v6499 = vadd.f32 %v5709, %v6085
        %v6500 = vadd.f32 %v5710, %v6088
        %v6501 = vadd.f32 %v5711, %v6093
        %v6502 = vadd.f32 %v5712, %v6096
        %v6503 = vadd.f32 %v5713, %v6101
        %v6504 = vadd.f32 %v5714, %v6104
        %v6505 = vadd.f32 %v5715, %v6109
        %v6506 = vadd.f32 %v5716, %v6112
        %v6507 = vadd.f32 %v5717, %v6117
        %v6508 = vadd.f32 %v5718, %v6120
        %v6509 = vadd.f32 %v5719, %v6125
        %v6510 = vadd.f32 %v5720, %v6128
        %v6511 = vadd.f32 %v5721, %v6133
        %v6512 = vadd.f32 %v5722, %v6136
        %v6513 = vadd.f32 %v5723, %v6141
        %v6514 = vadd.f32 %v5724, %v6144
        %v6515 = vadd.f32 %v5725, %v6149
        %v6516 = vadd.f32 %v5726, %v6152
        %v6517 = vadd.f32 %v5727, %v6157
        %v6518 = vadd.f32 %v5728, %v6160
        %v6519 = vadd.f32 %v5729, %v6165
        %v6520 = vadd.f32 %v5730, %v6168
        %v6521 = vadd.f32 %v5731, %v6173
        %v6522 = vadd.f32 %v5732, %v6176
        %v6523 = vadd.f32 %v5733, %v6181
        %v6524 = vadd.f32 %v5734, %v6184
        %v6525 = vadd.f32 %v5735, %v6189
        %v6526 = vadd.f32 %v5736, %v6192
        %v6527 = vadd.f32 %v5737, %v6197
        %v6528 = vadd.f32 %v5738, %v6200
        %v6529 = vadd.f32 %v5739, %v6205
        %v6530 = vadd.f32 %v5740, %v6208
        %v6531 = vadd.f32 %v5741, %v6213
        %v6532 = vadd.f32 %v5742, %v6216
        %v6533 = vadd.f32 %v5743, %v6221
        %v6534 = vadd.f32 %v5744, %v6224
        %v6535 = vadd.f32 %v5745, %v6229
        %v6536 = vadd.f32 %v5746, %v6232
        %v6537 = vadd.f32 %v5747, %v6237
        %v6538 = vadd.f32 %v5748, %v6240
        %v6539 = vadd.f32 %v5749, %v6245
        %v6540 = vadd.f32 %v5750, %v6248
        %v6541 = vadd.f32 %v5751, %v6253
        %v6542 = vadd.f32 %v5752, %v6256
        %v6543 = vadd.f32 %v5753, %v6261
        %v6544 = vadd.f32 %v5754, %v6264
        %v6545 = vadd.f32 %v5755, %v6269
        %v6546 = vadd.f32 %v5756, %v6272
        %v6547 = vadd.f32 %v5757, %v6277
        %v6548 = vadd.f32 %v5758, %v6280
        %v6549 = vadd.f32 %v5759, %v6285
        %v6550 = vadd.f32 %v5760, %v6288
        %v6551 = vadd.f32 %v5761, %v6293
        %v6552 = vadd.f32 %v5762, %v6296
        %v6553 = vadd.f32 %v5763, %v6301
        %v6554 = vadd.f32 %v5764, %v6304
        %v6555 = vadd.f32 %v5765, %v6309
        %v6556 = vadd.f32 %v5766, %v6312
        %v6557 = vadd.f32 %v5767, %v6317
        %v6558 = vadd.f32 %v5768, %v6320
        %v6559 = vadd.f32 %v5769, %v6325
        %v6560 = vadd.f32 %v5770, %v6328
        %v6561 = vadd.f32 %v5771, %v6333
        %v6562 = vadd.f32 %v5772, %v6336
        %v6563 = vadd.f32 %v5773, %v6341
        %v6564 = vadd.f32 %v5774, %v6344
        %v6565 = vadd.f32 %v5775, %v6349
        %v6566 = vadd.f32 %v5776, %v6352
        %v6567 = vadd.f32 %v5777, %v6357
        %v6568 = vadd.f32 %v5778, %v6360
        %v6569 = vadd.f32 %v5779, %v6365
        %v6570 = vadd.f32 %v5780, %v6368
        %v6571 = vadd.f32 %v5781, %v6373
        %v6572 = vadd.f32 %v5782, %v6376
        %v6573 = vadd.f32 %v5783, %v6381
        %v6574 = vadd.f32 %v5784, %v6384
        %v6575 = vadd.f32 %v5785, %v6389
        %v6576 = vadd.f32 %v5786, %v6392
        %v6577 = vadd.f32 %v5787, %v6397
        %v6578 = vadd.f32 %v5788, %v6400
        %v6579 = vadd.f32 %v5789, %v6405
        %v6580 = vadd.f32 %v5790, %v6408
        %v6581 = vadd.f32 %v5791, %v6413
        %v6582 = vadd.f32 %v5792, %v6416
        %v6583 = vadd.f32 %v5793, %v6421
        %v6584 = vadd.f32 %v5794, %v6424
        %v6585 = vadd.f32 %v5795, %v6429
        %v6586 = vadd.f32 %v5796, %v6432
        %v6587 = vadd.f32 %v5797, %v6437
        %v6588 = vadd.f32 %v5798, %v6440
        %v6589 = vadd.f32 %v5799, %v6445
        %v6590 = vadd.f32 %v5800, %v6448
        %v6591 = vadd.f32 %v5801, %v6453
        %v6592 = vadd.f32 %v5802, %v6456
        %v6593 = vadd.f32 %v5803, %v6461
        %v6594 = vadd.f32 %v5804, %v6464
        %v6596 = vrot.slane %v330, 5
        %v6597 = vrot.slane %v6596, 4
        %v6598 = vrot.slane %v331, 5
        %v6599 = vsel %vm3644, %v6597, %v6598
        %v6600 = vrot.slane %v6598, 4
        %v6601 = vrot.slane %v332, 5
        %v6602 = vsel %vm3644, %v6600, %v6601
        %v6603 = vrot.slane %v6601, 4
        %v6604 = vrot.slane %v333, 5
        %v6605 = vsel %vm3644, %v6603, %v6604
        %v6606 = vrot.slane %v6604, 4
        %v6607 = vrot.slane %v334, 5
        %v6608 = vsel %vm3644, %v6606, %v6607
        %s6609 = scalar_lea.vmem %s1, 320
        %v6610 = vld [vmem:[%s6609] sm:$0xf]
        %v6611 = vld [vmem:[%s6609 + $0x4] sm:$0xf]
        %v6612 = vld [vmem:[%s6609 + $0x8] sm:$0xf]
        %v6613 = vld [vmem:[%s6609 + $0xc] sm:$0xf]
        %v6614 = vld [vmem:[%s6609 + $0x10] sm:$0xf]
        %v6615 = vld [vmem:[%s6609 + $0x14] sm:$0xf]
        %v6616 = vld [vmem:[%s6609 + $0x18] sm:$0xf]
        %v6617 = vld [vmem:[%s6609 + $0x1c] sm:$0xf]
        %v6618 = vld [vmem:[%s6609 + $0x20] sm:$0xf]
        %v6619 = vld [vmem:[%s6609 + $0x24] sm:$0xf]
        %v6620 = vld [vmem:[%s6609 + $0x28] sm:$0xf]
        %v6621 = vld [vmem:[%s6609 + $0x2c] sm:$0xf]
        %v6622 = vld [vmem:[%s6609 + $0x30] sm:$0xf]
        %v6623 = vld [vmem:[%s6609 + $0x34] sm:$0xf]
        %v6624 = vld [vmem:[%s6609 + $0x38] sm:$0xf]
        %v6625 = vld [vmem:[%s6609 + $0x3c] sm:$0xf]
        %v6626 = vunpack.c.l.b16 %v6599
        %v6627 = vunpack.c.l.b16 %v6602
        %v6628 = vunpack.c.l.b16 %v6605
        %v6629 = vunpack.c.l.b16 %v6608
        %v6630 = vpack.c.b16 %v6627, %v6626
        %v6631 = vpack.c.b16 %v6629, %v6628
        %v6650 = vunpack.c.l.b16 %v6610
        %v6651 = vunpack.c.l.b16 %v6611
        %v6652 = vunpack.c.l.b16 %v6612
        %v6653 = vunpack.c.l.b16 %v6613
        %v6654 = vunpack.c.l.b16 %v6614
        %v6655 = vunpack.c.l.b16 %v6615
        %v6656 = vunpack.c.l.b16 %v6616
        %v6657 = vunpack.c.l.b16 %v6617
        %v6658 = vunpack.c.l.b16 %v6618
        %v6659 = vunpack.c.l.b16 %v6619
        %v6660 = vunpack.c.l.b16 %v6620
        %v6661 = vunpack.c.l.b16 %v6621
        %v6662 = vunpack.c.l.b16 %v6622
        %v6663 = vunpack.c.l.b16 %v6623
        %v6664 = vunpack.c.l.b16 %v6624
        %v6665 = vunpack.c.l.b16 %v6625
        %v6666 = vpack.c.b16 %v6651, %v6650
        %v6667 = vpack.c.b16 %v6653, %v6652
        %v6668 = vpack.c.b16 %v6655, %v6654
        %v6669 = vpack.c.b16 %v6657, %v6656
        %v6670 = vpack.c.b16 %v6659, %v6658
        %v6671 = vpack.c.b16 %v6661, %v6660
        %v6672 = vpack.c.b16 %v6663, %v6662
        %v6673 = vpack.c.b16 %v6665, %v6664
        %6682 = vmatprep.subr.bf16.mxu0 0
        %6683 = vmatpush1.bf16.msra.mxu0 %v6666
        %6684 = vmatprep.subr.bf16.mxu0 0
        %6685 = vmatpush1.bf16.msra.mxu0 %v6667
        %6686 = vmatprep.subr.bf16.mxu0 0
        %6687 = vmatpush1.bf16.msra.mxu0 %v6668
        %6688 = vmatprep.subr.bf16.mxu0 0
        %6689 = vmatpush1.bf16.msra.mxu0 %v6669
        %6690 = vmatprep.subr.bf16.mxu0 0
        %6691 = vmatpush1.bf16.msra.mxu0 %v6670
        %6692 = vmatprep.subr.bf16.mxu0 0
        %6693 = vmatpush1.bf16.msra.mxu0 %v6671
        %6694 = vmatprep.subr.bf16.mxu0 0
        %6695 = vmatpush1.bf16.msra.mxu0 %v6672
        %6696 = vmatprep.subr.bf16.mxu0 0
        %6697 = vmatpush1.bf16.msra.mxu0 %v6673
        %6698 = vmatprep.subr.bf16.mxu0 0
        %6699 = vmatpush1.bf16.msra.mxu0 0
        %6700 = vmatprep.subr.bf16.mxu0 0
        %6701 = vmatpush1.bf16.msra.mxu0 0
        %6702 = vmatprep.subr.bf16.mxu0 0
        %6703 = vmatpush1.bf16.msra.mxu0 0
        %6704 = vmatprep.subr.bf16.mxu0 0
        %6705 = vmatpush1.bf16.msra.mxu0 0
        %6706 = vmatprep.subr.bf16.mxu0 0
        %6707 = vmatpush1.bf16.msra.mxu0 0
        %6708 = vmatprep.subr.bf16.mxu0 0
        %6709 = vmatpush1.bf16.msra.mxu0 0
        %6710 = vmatprep.subr.bf16.mxu0 0
        %6711 = vmatpush1.bf16.msra.mxu0 0
        %6712 = vmatprep.subr.bf16.mxu0 0
        %6713 = vmatpush1.bf16.msra.mxu0 0
        %6714 = vmatprep.mubr.bf16.mxu0 0
        %6715 = vmatmul.mubr.bf16.gmra.mrb[0].mxu0 %v4208
        %v6716 = vpop.f32.mrb[0].mxu0
        %v6717 = vadd.f32 0.0, %v6716
        %v6718 = vpop.f32.mrb[0].mxu0
        %v6719 = vpop.f32.mrb[0].mxu0
        %v6720 = vadd.f32 0.0, %v6719
        %v6721 = vpop.f32.mrb[0].mxu0
        %6722 = vmatprep.mubr.bf16.mxu0 0
        %6723 = vmatmul.mubr.bf16.gmra.mrb[0].mxu0 %v4209
        %v6724 = vpop.f32.mrb[0].mxu0
        %v6725 = vadd.f32 0.0, %v6724
        %v6726 = vpop.f32.mrb[0].mxu0
        %v6727 = vpop.f32.mrb[0].mxu0
        %v6728 = vadd.f32 0.0, %v6727
        %v6729 = vpop.f32.mrb[0].mxu0
        %6730 = vmatprep.mubr.bf16.mxu0 0
        %6731 = vmatmul.mubr.bf16.gmra.mrb[0].mxu0 %v4210
        %v6732 = vpop.f32.mrb[0].mxu0
        %v6733 = vadd.f32 0.0, %v6732
        %v6734 = vpop.f32.mrb[0].mxu0
        %v6735 = vpop.f32.mrb[0].mxu0
        %v6736 = vadd.f32 0.0, %v6735
        %v6737 = vpop.f32.mrb[0].mxu0
        %6738 = vmatprep.mubr.bf16.mxu0 0
        %6739 = vmatmul.mubr.bf16.gmra.mrb[0].mxu0 %v4211
        %v6740 = vpop.f32.mrb[0].mxu0
        %v6741 = vadd.f32 0.0, %v6740
        %v6742 = vpop.f32.mrb[0].mxu0
        %v6743 = vpop.f32.mrb[0].mxu0
        %v6744 = vadd.f32 0.0, %v6743
        %v6745 = vpop.f32.mrb[0].mxu0
        %6746 = vmatprep.mubr.bf16.mxu0 0
        %6747 = vmatmul.mubr.bf16.gmra.mrb[0].mxu0 %v4212
        %v6748 = vpop.f32.mrb[0].mxu0
        %v6749 = vadd.f32 0.0, %v6748
        %v6750 = vpop.f32.mrb[0].mxu0
        %v6751 = vpop.f32.mrb[0].mxu0
        %v6752 = vadd.f32 0.0, %v6751
        %v6753 = vpop.f32.mrb[0].mxu0
        %6754 = vmatprep.mubr.bf16.mxu0 0
        %6755 = vmatmul.mubr.bf16.gmra.mrb[0].mxu0 %v4213
        %v6756 = vpop.f32.mrb[0].mxu0
        %v6757 = vadd.f32 0.0, %v6756
        %v6758 = vpop.f32.mrb[0].mxu0
        %v6759 = vpop.f32.mrb[0].mxu0
        %v6760 = vadd.f32 0.0, %v6759
        %v6761 = vpop.f32.mrb[0].mxu0
        %6762 = vmatprep.mubr.bf16.mxu0 0
        %6763 = vmatmul.mubr.bf16.gmra.mrb[0].mxu0 %v4214
        %v6764 = vpop.f32.mrb[0].mxu0
        %v6765 = vadd.f32 0.0, %v6764
        %v6766 = vpop.f32.mrb[0].mxu0
        %v6767 = vpop.f32.mrb[0].mxu0
        %v6768 = vadd.f32 0.0, %v6767
        %v6769 = vpop.f32.mrb[0].mxu0
        %6770 = vmatprep.mubr.bf16.mxu0 0
        %6771 = vmatmul.mubr.bf16.gmra.mrb[0].mxu0 %v4215
        %v6772 = vpop.f32.mrb[0].mxu0
        %v6773 = vadd.f32 0.0, %v6772
        %v6774 = vpop.f32.mrb[0].mxu0
        %v6775 = vpop.f32.mrb[0].mxu0
        %v6776 = vadd.f32 0.0, %v6775
        %v6777 = vpop.f32.mrb[0].mxu0
        %6778 = vmatprep.mubr.bf16.mxu0 0
        %6779 = vmatmul.mubr.bf16.gmra.mrb[0].mxu0 %v4216
        %v6780 = vpop.f32.mrb[0].mxu0
        %v6781 = vadd.f32 0.0, %v6780
        %v6782 = vpop.f32.mrb[0].mxu0
        %v6783 = vpop.f32.mrb[0].mxu0
        %v6784 = vadd.f32 0.0, %v6783
        %v6785 = vpop.f32.mrb[0].mxu0
        %6786 = vmatprep.mubr.bf16.mxu0 0
        %6787 = vmatmul.mubr.bf16.gmra.mrb[0].mxu0 %v4217
        %v6788 = vpop.f32.mrb[0].mxu0
        %v6789 = vadd.f32 0.0, %v6788
        %v6790 = vpop.f32.mrb[0].mxu0
        %v6791 = vpop.f32.mrb[0].mxu0
        %v6792 = vadd.f32 0.0, %v6791
        %v6793 = vpop.f32.mrb[0].mxu0
        %6794 = vmatprep.mubr.bf16.mxu0 0
        %6795 = vmatmul.mubr.bf16.gmra.mrb[0].mxu0 %v4218
        %v6796 = vpop.f32.mrb[0].mxu0
        %v6797 = vadd.f32 0.0, %v6796
        %v6798 = vpop.f32.mrb[0].mxu0
        %v6799 = vpop.f32.mrb[0].mxu0
        %v6800 = vadd.f32 0.0, %v6799
        %v6801 = vpop.f32.mrb[0].mxu0
        %6802 = vmatprep.mubr.bf16.mxu0 0
        %6803 = vmatmul.mubr.bf16.gmra.mrb[0].mxu0 %v4219
        %v6804 = vpop.f32.mrb[0].mxu0
        %v6805 = vadd.f32 0.0, %v6804
        %v6806 = vpop.f32.mrb[0].mxu0
        %v6807 = vpop.f32.mrb[0].mxu0
        %v6808 = vadd.f32 0.0, %v6807
        %v6809 = vpop.f32.mrb[0].mxu0
        %6810 = vmatprep.mubr.bf16.mxu0 0
        %6811 = vmatmul.mubr.bf16.gmra.mrb[0].mxu0 %v4220
        %v6812 = vpop.f32.mrb[0].mxu0
        %v6813 = vadd.f32 0.0, %v6812
        %v6814 = vpop.f32.mrb[0].mxu0
        %v6815 = vpop.f32.mrb[0].mxu0
        %v6816 = vadd.f32 0.0, %v6815
        %v6817 = vpop.f32.mrb[0].mxu0
        %6818 = vmatprep.mubr.bf16.mxu0 0
        %6819 = vmatmul.mubr.bf16.gmra.mrb[0].mxu0 %v4221
        %v6820 = vpop.f32.mrb[0].mxu0
        %v6821 = vadd.f32 0.0, %v6820
        %v6822 = vpop.f32.mrb[0].mxu0
        %v6823 = vpop.f32.mrb[0].mxu0
        %v6824 = vadd.f32 0.0, %v6823
        %v6825 = vpop.f32.mrb[0].mxu0
        %6826 = vmatprep.mubr.bf16.mxu0 0
        %6827 = vmatmul.mubr.bf16.gmra.mrb[0].mxu0 %v4222
        %v6828 = vpop.f32.mrb[0].mxu0
        %v6829 = vadd.f32 0.0, %v6828
        %v6830 = vpop.f32.mrb[0].mxu0
        %v6831 = vpop.f32.mrb[0].mxu0
        %v6832 = vadd.f32 0.0, %v6831
        %v6833 = vpop.f32.mrb[0].mxu0
        %6834 = vmatprep.mubr.bf16.mxu0 0
        %6835 = vmatmul.mubr.bf16.gmra.mrb[0].mxu0 %v4223
        %v6836 = vpop.f32.mrb[0].mxu0
        %v6837 = vadd.f32 0.0, %v6836
        %v6838 = vpop.f32.mrb[0].mxu0
        %v6839 = vpop.f32.mrb[0].mxu0
        %v6840 = vadd.f32 0.0, %v6839
        %v6841 = vpop.f32.mrb[0].mxu0
        %6842 = vmatprep.mubr.bf16.mxu0 0
        %6843 = vmatmul.mubr.bf16.gmra.mrb[0].mxu0 %v4224
        %v6844 = vpop.f32.mrb[0].mxu0
        %v6845 = vadd.f32 0.0, %v6844
        %v6846 = vpop.f32.mrb[0].mxu0
        %v6847 = vpop.f32.mrb[0].mxu0
        %v6848 = vadd.f32 0.0, %v6847
        %v6849 = vpop.f32.mrb[0].mxu0
        %6850 = vmatprep.mubr.bf16.mxu0 0
        %6851 = vmatmul.mubr.bf16.gmra.mrb[0].mxu0 %v4225
        %v6852 = vpop.f32.mrb[0].mxu0
        %v6853 = vadd.f32 0.0, %v6852
        %v6854 = vpop.f32.mrb[0].mxu0
        %v6855 = vpop.f32.mrb[0].mxu0
        %v6856 = vadd.f32 0.0, %v6855
        %v6857 = vpop.f32.mrb[0].mxu0
        %6858 = vmatprep.mubr.bf16.mxu0 0
        %6859 = vmatmul.mubr.bf16.gmra.mrb[0].mxu0 %v4226
        %v6860 = vpop.f32.mrb[0].mxu0
        %v6861 = vadd.f32 0.0, %v6860
        %v6862 = vpop.f32.mrb[0].mxu0
        %v6863 = vpop.f32.mrb[0].mxu0
        %v6864 = vadd.f32 0.0, %v6863
        %v6865 = vpop.f32.mrb[0].mxu0
        %6866 = vmatprep.mubr.bf16.mxu0 0
        %6867 = vmatmul.mubr.bf16.gmra.mrb[0].mxu0 %v4227
        %v6868 = vpop.f32.mrb[0].mxu0
        %v6869 = vadd.f32 0.0, %v6868
        %v6870 = vpop.f32.mrb[0].mxu0
        %v6871 = vpop.f32.mrb[0].mxu0
        %v6872 = vadd.f32 0.0, %v6871
        %v6873 = vpop.f32.mrb[0].mxu0
        %6874 = vmatprep.mubr.bf16.mxu0 0
        %6875 = vmatmul.mubr.bf16.gmra.mrb[0].mxu0 %v4228
        %v6876 = vpop.f32.mrb[0].mxu0
        %v6877 = vadd.f32 0.0, %v6876
        %v6878 = vpop.f32.mrb[0].mxu0
        %v6879 = vpop.f32.mrb[0].mxu0
        %v6880 = vadd.f32 0.0, %v6879
        %v6881 = vpop.f32.mrb[0].mxu0
        %6882 = vmatprep.mubr.bf16.mxu0 0
        %6883 = vmatmul.mubr.bf16.gmra.mrb[0].mxu0 %v4229
        %v6884 = vpop.f32.mrb[0].mxu0
        %v6885 = vadd.f32 0.0, %v6884
        %v6886 = vpop.f32.mrb[0].mxu0
        %v6887 = vpop.f32.mrb[0].mxu0
        %v6888 = vadd.f32 0.0, %v6887
        %v6889 = vpop.f32.mrb[0].mxu0
        %6890 = vmatprep.mubr.bf16.mxu0 0
        %6891 = vmatmul.mubr.bf16.gmra.mrb[0].mxu0 %v4230
        %v6892 = vpop.f32.mrb[0].mxu0
        %v6893 = vadd.f32 0.0, %v6892
        %v6894 = vpop.f32.mrb[0].mxu0
        %v6895 = vpop.f32.mrb[0].mxu0
        %v6896 = vadd.f32 0.0, %v6895
        %v6897 = vpop.f32.mrb[0].mxu0
        %6898 = vmatprep.mubr.bf16.mxu0 0
        %6899 = vmatmul.mubr.bf16.gmra.mrb[0].mxu0 %v4231
        %v6900 = vpop.f32.mrb[0].mxu0
        %v6901 = vadd.f32 0.0, %v6900
        %v6902 = vpop.f32.mrb[0].mxu0
        %v6903 = vpop.f32.mrb[0].mxu0
        %v6904 = vadd.f32 0.0, %v6903
        %v6905 = vpop.f32.mrb[0].mxu0
        %6906 = vmatprep.mubr.bf16.mxu0 0
        %6907 = vmatmul.mubr.bf16.gmra.mrb[0].mxu0 %v4232
        %v6908 = vpop.f32.mrb[0].mxu0
        %v6909 = vadd.f32 0.0, %v6908
        %v6910 = vpop.f32.mrb[0].mxu0
        %v6911 = vpop.f32.mrb[0].mxu0
        %v6912 = vadd.f32 0.0, %v6911
        %v6913 = vpop.f32.mrb[0].mxu0
        %6914 = vmatprep.mubr.bf16.mxu0 0
        %6915 = vmatmul.mubr.bf16.gmra.mrb[0].mxu0 %v4233
        %v6916 = vpop.f32.mrb[0].mxu0
        %v6917 = vadd.f32 0.0, %v6916
        %v6918 = vpop.f32.mrb[0].mxu0
        %v6919 = vpop.f32.mrb[0].mxu0
        %v6920 = vadd.f32 0.0, %v6919
        %v6921 = vpop.f32.mrb[0].mxu0
        %6922 = vmatprep.mubr.bf16.mxu0 0
        %6923 = vmatmul.mubr.bf16.gmra.mrb[0].mxu0 %v4234
        %v6924 = vpop.f32.mrb[0].mxu0
        %v6925 = vadd.f32 0.0, %v6924
        %v6926 = vpop.f32.mrb[0].mxu0
        %v6927 = vpop.f32.mrb[0].mxu0
        %v6928 = vadd.f32 0.0, %v6927
        %v6929 = vpop.f32.mrb[0].mxu0
        %6930 = vmatprep.mubr.bf16.mxu0 0
        %6931 = vmatmul.mubr.bf16.gmra.mrb[0].mxu0 %v4235
        %v6932 = vpop.f32.mrb[0].mxu0
        %v6933 = vadd.f32 0.0, %v6932
        %v6934 = vpop.f32.mrb[0].mxu0
        %v6935 = vpop.f32.mrb[0].mxu0
        %v6936 = vadd.f32 0.0, %v6935
        %v6937 = vpop.f32.mrb[0].mxu0
        %6938 = vmatprep.mubr.bf16.mxu0 0
        %6939 = vmatmul.mubr.bf16.gmra.mrb[0].mxu0 %v4236
        %v6940 = vpop.f32.mrb[0].mxu0
        %v6941 = vadd.f32 0.0, %v6940
        %v6942 = vpop.f32.mrb[0].mxu0
        %v6943 = vpop.f32.mrb[0].mxu0
        %v6944 = vadd.f32 0.0, %v6943
        %v6945 = vpop.f32.mrb[0].mxu0
        %6946 = vmatprep.mubr.bf16.mxu0 0
        %6947 = vmatmul.mubr.bf16.gmra.mrb[0].mxu0 %v4237
        %v6948 = vpop.f32.mrb[0].mxu0
        %v6949 = vadd.f32 0.0, %v6948
        %v6950 = vpop.f32.mrb[0].mxu0
        %v6951 = vpop.f32.mrb[0].mxu0
        %v6952 = vadd.f32 0.0, %v6951
        %v6953 = vpop.f32.mrb[0].mxu0
        %6954 = vmatprep.mubr.bf16.mxu0 0
        %6955 = vmatmul.mubr.bf16.gmra.mrb[0].mxu0 %v4238
        %v6956 = vpop.f32.mrb[0].mxu0
        %v6957 = vadd.f32 0.0, %v6956
        %v6958 = vpop.f32.mrb[0].mxu0
        %v6959 = vpop.f32.mrb[0].mxu0
        %v6960 = vadd.f32 0.0, %v6959
        %v6961 = vpop.f32.mrb[0].mxu0
        %6962 = vmatprep.mubr.bf16.mxu0 0
        %6963 = vmatmul.mubr.bf16.gmra.mrb[0].mxu0 %v4239
        %v6964 = vpop.f32.mrb[0].mxu0
        %v6965 = vadd.f32 0.0, %v6964
        %v6966 = vpop.f32.mrb[0].mxu0
        %v6967 = vpop.f32.mrb[0].mxu0
        %v6968 = vadd.f32 0.0, %v6967
        %v6969 = vpop.f32.mrb[0].mxu0
        %6970 = vmatprep.mubr.bf16.mxu0 0
        %6971 = vmatmul.mubr.bf16.gmra.mrb[0].mxu0 %v4240
        %v6972 = vpop.f32.mrb[0].mxu0
        %v6973 = vadd.f32 0.0, %v6972
        %v6974 = vpop.f32.mrb[0].mxu0
        %v6975 = vpop.f32.mrb[0].mxu0
        %v6976 = vadd.f32 0.0, %v6975
        %v6977 = vpop.f32.mrb[0].mxu0
        %6978 = vmatprep.mubr.bf16.mxu0 0
        %6979 = vmatmul.mubr.bf16.gmra.mrb[0].mxu0 %v4241
        %v6980 = vpop.f32.mrb[0].mxu0
        %v6981 = vadd.f32 0.0, %v6980
        %v6982 = vpop.f32.mrb[0].mxu0
        %v6983 = vpop.f32.mrb[0].mxu0
        %v6984 = vadd.f32 0.0, %v6983
        %v6985 = vpop.f32.mrb[0].mxu0
        %6986 = vmatprep.mubr.bf16.mxu0 0
        %6987 = vmatmul.mubr.bf16.gmra.mrb[0].mxu0 %v4242
        %v6988 = vpop.f32.mrb[0].mxu0
        %v6989 = vadd.f32 0.0, %v6988
        %v6990 = vpop.f32.mrb[0].mxu0
        %v6991 = vpop.f32.mrb[0].mxu0
        %v6992 = vadd.f32 0.0, %v6991
        %v6993 = vpop.f32.mrb[0].mxu0
        %6994 = vmatprep.mubr.bf16.mxu0 0
        %6995 = vmatmul.mubr.bf16.gmra.mrb[0].mxu0 %v4243
        %v6996 = vpop.f32.mrb[0].mxu0
        %v6997 = vadd.f32 0.0, %v6996
        %v6998 = vpop.f32.mrb[0].mxu0
        %v6999 = vpop.f32.mrb[0].mxu0
        %v7000 = vadd.f32 0.0, %v6999
        %v7001 = vpop.f32.mrb[0].mxu0
        %7002 = vmatprep.mubr.bf16.mxu0 0
        %7003 = vmatmul.mubr.bf16.gmra.mrb[0].mxu0 %v4244
        %v7004 = vpop.f32.mrb[0].mxu0
        %v7005 = vadd.f32 0.0, %v7004
        %v7006 = vpop.f32.mrb[0].mxu0
        %v7007 = vpop.f32.mrb[0].mxu0
        %v7008 = vadd.f32 0.0, %v7007
        %v7009 = vpop.f32.mrb[0].mxu0
        %7010 = vmatprep.mubr.bf16.mxu0 0
        %7011 = vmatmul.mubr.bf16.gmra.mrb[0].mxu0 %v4245
        %v7012 = vpop.f32.mrb[0].mxu0
        %v7013 = vadd.f32 0.0, %v7012
        %v7014 = vpop.f32.mrb[0].mxu0
        %v7015 = vpop.f32.mrb[0].mxu0
        %v7016 = vadd.f32 0.0, %v7015
        %v7017 = vpop.f32.mrb[0].mxu0
        %7018 = vmatprep.mubr.bf16.mxu0 0
        %7019 = vmatmul.mubr.bf16.gmra.mrb[0].mxu0 %v4246
        %v7020 = vpop.f32.mrb[0].mxu0
        %v7021 = vadd.f32 0.0, %v7020
        %v7022 = vpop.f32.mrb[0].mxu0
        %v7023 = vpop.f32.mrb[0].mxu0
        %v7024 = vadd.f32 0.0, %v7023
        %v7025 = vpop.f32.mrb[0].mxu0
        %7026 = vmatprep.mubr.bf16.mxu0 0
        %7027 = vmatmul.mubr.bf16.gmra.mrb[0].mxu0 %v4247
        %v7028 = vpop.f32.mrb[0].mxu0
        %v7029 = vadd.f32 0.0, %v7028
        %v7030 = vpop.f32.mrb[0].mxu0
        %v7031 = vpop.f32.mrb[0].mxu0
        %v7032 = vadd.f32 0.0, %v7031
        %v7033 = vpop.f32.mrb[0].mxu0
        %7034 = vmatprep.mubr.bf16.mxu0 0
        %7035 = vmatmul.mubr.bf16.gmra.mrb[0].mxu0 %v4248
        %v7036 = vpop.f32.mrb[0].mxu0
        %v7037 = vadd.f32 0.0, %v7036
        %v7038 = vpop.f32.mrb[0].mxu0
        %v7039 = vpop.f32.mrb[0].mxu0
        %v7040 = vadd.f32 0.0, %v7039
        %v7041 = vpop.f32.mrb[0].mxu0
        %7042 = vmatprep.mubr.bf16.mxu0 0
        %7043 = vmatmul.mubr.bf16.gmra.mrb[0].mxu0 %v4249
        %v7044 = vpop.f32.mrb[0].mxu0
        %v7045 = vadd.f32 0.0, %v7044
        %v7046 = vpop.f32.mrb[0].mxu0
        %v7047 = vpop.f32.mrb[0].mxu0
        %v7048 = vadd.f32 0.0, %v7047
        %v7049 = vpop.f32.mrb[0].mxu0
        %7050 = vmatprep.mubr.bf16.mxu0 0
        %7051 = vmatmul.mubr.bf16.gmra.mrb[0].mxu0 %v4250
        %v7052 = vpop.f32.mrb[0].mxu0
        %v7053 = vadd.f32 0.0, %v7052
        %v7054 = vpop.f32.mrb[0].mxu0
        %v7055 = vpop.f32.mrb[0].mxu0
        %v7056 = vadd.f32 0.0, %v7055
        %v7057 = vpop.f32.mrb[0].mxu0
        %7058 = vmatprep.mubr.bf16.mxu0 0
        %7059 = vmatmul.mubr.bf16.gmra.mrb[0].mxu0 %v4251
        %v7060 = vpop.f32.mrb[0].mxu0
        %v7061 = vadd.f32 0.0, %v7060
        %v7062 = vpop.f32.mrb[0].mxu0
        %v7063 = vpop.f32.mrb[0].mxu0
        %v7064 = vadd.f32 0.0, %v7063
        %v7065 = vpop.f32.mrb[0].mxu0
        %7066 = vmatprep.mubr.bf16.mxu0 0
        %7067 = vmatmul.mubr.bf16.gmra.mrb[0].mxu0 %v4252
        %v7068 = vpop.f32.mrb[0].mxu0
        %v7069 = vadd.f32 0.0, %v7068
        %v7070 = vpop.f32.mrb[0].mxu0
        %v7071 = vpop.f32.mrb[0].mxu0
        %v7072 = vadd.f32 0.0, %v7071
        %v7073 = vpop.f32.mrb[0].mxu0
        %7074 = vmatprep.mubr.bf16.mxu0 0
        %7075 = vmatmul.mubr.bf16.gmra.mrb[0].mxu0 %v4253
        %v7076 = vpop.f32.mrb[0].mxu0
        %v7077 = vadd.f32 0.0, %v7076
        %v7078 = vpop.f32.mrb[0].mxu0
        %v7079 = vpop.f32.mrb[0].mxu0
        %v7080 = vadd.f32 0.0, %v7079
        %v7081 = vpop.f32.mrb[0].mxu0
        %7082 = vmatprep.mubr.bf16.mxu0 0
        %7083 = vmatmul.mubr.bf16.gmra.mrb[0].mxu0 %v4254
        %v7084 = vpop.f32.mrb[0].mxu0
        %v7085 = vadd.f32 0.0, %v7084
        %v7086 = vpop.f32.mrb[0].mxu0
        %v7087 = vpop.f32.mrb[0].mxu0
        %v7088 = vadd.f32 0.0, %v7087
        %v7089 = vpop.f32.mrb[0].mxu0
        %7090 = vmatprep.mubr.bf16.mxu0 0
        %7091 = vmatmul.mubr.bf16.gmra.mrb[0].mxu0 %v4255
        %v7092 = vpop.f32.mrb[0].mxu0
        %v7093 = vadd.f32 0.0, %v7092
        %v7094 = vpop.f32.mrb[0].mxu0
        %v7095 = vpop.f32.mrb[0].mxu0
        %v7096 = vadd.f32 0.0, %v7095
        %v7097 = vpop.f32.mrb[0].mxu0
        %7098 = vmatprep.mubr.bf16.mxu0 0
        %7099 = vmatmul.mubr.bf16.gmra.mrb[0].mxu0 %v4256
        %v7100 = vpop.f32.mrb[0].mxu0
        %v7101 = vadd.f32 0.0, %v7100
        %v7102 = vpop.f32.mrb[0].mxu0
        %v7103 = vpop.f32.mrb[0].mxu0
        %v7104 = vadd.f32 0.0, %v7103
        %v7105 = vpop.f32.mrb[0].mxu0
        %7106 = vmatprep.mubr.bf16.mxu0 0
        %7107 = vmatmul.mubr.bf16.gmra.mrb[0].mxu0 %v4257
        %v7108 = vpop.f32.mrb[0].mxu0
        %v7109 = vadd.f32 0.0, %v7108
        %v7110 = vpop.f32.mrb[0].mxu0
        %v7111 = vpop.f32.mrb[0].mxu0
        %v7112 = vadd.f32 0.0, %v7111
        %v7113 = vpop.f32.mrb[0].mxu0
        %7114 = vmatprep.mubr.bf16.mxu0 0
        %7115 = vmatmul.mubr.bf16.gmra.mrb[0].mxu0 %v4258
        %v7116 = vpop.f32.mrb[0].mxu0
        %v7117 = vadd.f32 0.0, %v7116
        %v7118 = vpop.f32.mrb[0].mxu0
        %v7119 = vpop.f32.mrb[0].mxu0
        %v7120 = vadd.f32 0.0, %v7119
        %v7121 = vpop.f32.mrb[0].mxu0
        %7122 = vmatprep.mubr.bf16.mxu0 0
        %7123 = vmatmul.mubr.bf16.gmra.mrb[0].mxu0 %v4259
        %v7124 = vpop.f32.mrb[0].mxu0
        %v7125 = vadd.f32 0.0, %v7124
        %v7126 = vpop.f32.mrb[0].mxu0
        %v7127 = vpop.f32.mrb[0].mxu0
        %v7128 = vadd.f32 0.0, %v7127
        %v7129 = vpop.f32.mrb[0].mxu0
        %7130 = vmatprep.mubr.bf16.mxu0 0
        %7131 = vmatmul.mubr.bf16.gmra.mrb[0].mxu0 %v4260
        %v7132 = vpop.f32.mrb[0].mxu0
        %v7133 = vadd.f32 0.0, %v7132
        %v7134 = vpop.f32.mrb[0].mxu0
        %v7135 = vpop.f32.mrb[0].mxu0
        %v7136 = vadd.f32 0.0, %v7135
        %v7137 = vpop.f32.mrb[0].mxu0
        %7138 = vmatprep.mubr.bf16.mxu0 0
        %7139 = vmatmul.mubr.bf16.gmra.mrb[0].mxu0 %v4261
        %v7140 = vpop.f32.mrb[0].mxu0
        %v7141 = vadd.f32 0.0, %v7140
        %v7142 = vpop.f32.mrb[0].mxu0
        %v7143 = vpop.f32.mrb[0].mxu0
        %v7144 = vadd.f32 0.0, %v7143
        %v7145 = vpop.f32.mrb[0].mxu0
        %7146 = vmatprep.mubr.bf16.mxu0 0
        %7147 = vmatmul.mubr.bf16.gmra.mrb[0].mxu0 %v4262
        %v7148 = vpop.f32.mrb[0].mxu0
        %v7149 = vadd.f32 0.0, %v7148
        %v7150 = vpop.f32.mrb[0].mxu0
        %v7151 = vpop.f32.mrb[0].mxu0
        %v7152 = vadd.f32 0.0, %v7151
        %v7153 = vpop.f32.mrb[0].mxu0
        %7154 = vmatprep.mubr.bf16.mxu0 0
        %7155 = vmatmul.mubr.bf16.gmra.mrb[0].mxu0 %v4263
        %v7156 = vpop.f32.mrb[0].mxu0
        %v7157 = vadd.f32 0.0, %v7156
        %v7158 = vpop.f32.mrb[0].mxu0
        %v7159 = vpop.f32.mrb[0].mxu0
        %v7160 = vadd.f32 0.0, %v7159
        %v7161 = vpop.f32.mrb[0].mxu0
        %7162 = vmatprep.mubr.bf16.mxu0 0
        %7163 = vmatmul.mubr.bf16.gmra.mrb[0].mxu0 %v4264
        %v7164 = vpop.f32.mrb[0].mxu0
        %v7165 = vadd.f32 0.0, %v7164
        %v7166 = vpop.f32.mrb[0].mxu0
        %v7167 = vpop.f32.mrb[0].mxu0
        %v7168 = vadd.f32 0.0, %v7167
        %v7169 = vpop.f32.mrb[0].mxu0
        %7170 = vmatprep.mubr.bf16.mxu0 0
        %7171 = vmatmul.mubr.bf16.gmra.mrb[0].mxu0 %v4265
        %v7172 = vpop.f32.mrb[0].mxu0
        %v7173 = vadd.f32 0.0, %v7172
        %v7174 = vpop.f32.mrb[0].mxu0
        %v7175 = vpop.f32.mrb[0].mxu0
        %v7176 = vadd.f32 0.0, %v7175
        %v7177 = vpop.f32.mrb[0].mxu0
        %7178 = vmatprep.mubr.bf16.mxu0 0
        %7179 = vmatmul.mubr.bf16.gmra.mrb[0].mxu0 %v4266
        %v7180 = vpop.f32.mrb[0].mxu0
        %v7181 = vadd.f32 0.0, %v7180
        %v7182 = vpop.f32.mrb[0].mxu0
        %v7183 = vpop.f32.mrb[0].mxu0
        %v7184 = vadd.f32 0.0, %v7183
        %v7185 = vpop.f32.mrb[0].mxu0
        %7186 = vmatprep.mubr.bf16.mxu0 0
        %7187 = vmatmul.mubr.bf16.gmra.mrb[0].mxu0 %v4267
        %v7188 = vpop.f32.mrb[0].mxu0
        %v7189 = vadd.f32 0.0, %v7188
        %v7190 = vpop.f32.mrb[0].mxu0
        %v7191 = vpop.f32.mrb[0].mxu0
        %v7192 = vadd.f32 0.0, %v7191
        %v7193 = vpop.f32.mrb[0].mxu0
        %7194 = vmatprep.mubr.bf16.mxu0 0
        %7195 = vmatmul.mubr.bf16.gmra.mrb[0].mxu0 %v4268
        %v7196 = vpop.f32.mrb[0].mxu0
        %v7197 = vadd.f32 0.0, %v7196
        %v7198 = vpop.f32.mrb[0].mxu0
        %v7199 = vpop.f32.mrb[0].mxu0
        %v7200 = vadd.f32 0.0, %v7199
        %v7201 = vpop.f32.mrb[0].mxu0
        %7202 = vmatprep.mubr.bf16.mxu0 0
        %7203 = vmatmul.mubr.bf16.gmra.mrb[0].mxu0 %v4269
        %v7204 = vpop.f32.mrb[0].mxu0
        %v7205 = vadd.f32 0.0, %v7204
        %v7206 = vpop.f32.mrb[0].mxu0
        %v7207 = vpop.f32.mrb[0].mxu0
        %v7208 = vadd.f32 0.0, %v7207
        %v7209 = vpop.f32.mrb[0].mxu0
        %7210 = vmatprep.mubr.bf16.mxu0 0
        %7211 = vmatmul.mubr.bf16.gmra.mrb[0].mxu0 %v6630
        %v7212 = vpop.f32.mrb[0].mxu0
        %v7213 = vadd.f32 0.0, %v7212
        %v7214 = vpop.f32.mrb[0].mxu0
        %v7215 = vpop.f32.mrb[0].mxu0
        %v7216 = vadd.f32 0.0, %v7215
        %v7217 = vpop.f32.mrb[0].mxu0
        %7218 = vmatprep.mubr.bf16.mxu0 0
        %7219 = vmatmul.mubr.bf16.gmra.mrb[0].mxu0 %v6631
        %v7220 = vpop.f32.mrb[0].mxu0
        %v7221 = vadd.f32 0.0, %v7220
        %v7222 = vpop.f32.mrb[0].mxu0
        %v7223 = vpop.f32.mrb[0].mxu0
        %v7224 = vadd.f32 0.0, %v7223
        %v7225 = vpop.f32.mrb[0].mxu0
        %7226 = vdwg.mxu0
        %v7227 = vadd.f32 %v6467, %v6717
        %v7228 = vadd.f32 %v6468, %v6720
        %v7229 = vadd.f32 %v6469, %v6725
        %v7230 = vadd.f32 %v6470, %v6728
        %v7231 = vadd.f32 %v6471, %v6733
        %v7232 = vadd.f32 %v6472, %v6736
        %v7233 = vadd.f32 %v6473, %v6741
        %v7234 = vadd.f32 %v6474, %v6744
        %v7235 = vadd.f32 %v6475, %v6749
        %v7236 = vadd.f32 %v6476, %v6752
        %v7237 = vadd.f32 %v6477, %v6757
        %v7238 = vadd.f32 %v6478, %v6760
        %v7239 = vadd.f32 %v6479, %v6765
        %v7240 = vadd.f32 %v6480, %v6768
        %v7241 = vadd.f32 %v6481, %v6773
        %v7242 = vadd.f32 %v6482, %v6776
        %v7243 = vadd.f32 %v6483, %v6781
        %v7244 = vadd.f32 %v6484, %v6784
        %v7245 = vadd.f32 %v6485, %v6789
        %v7246 = vadd.f32 %v6486, %v6792
        %v7247 = vadd.f32 %v6487, %v6797
        %v7248 = vadd.f32 %v6488, %v6800
        %v7249 = vadd.f32 %v6489, %v6805
        %v7250 = vadd.f32 %v6490, %v6808
        %v7251 = vadd.f32 %v6491, %v6813
        %v7252 = vadd.f32 %v6492, %v6816
        %v7253 = vadd.f32 %v6493, %v6821
        %v7254 = vadd.f32 %v6494, %v6824
        %v7255 = vadd.f32 %v6495, %v6829
        %v7256 = vadd.f32 %v6496, %v6832
        %v7257 = vadd.f32 %v6497, %v6837
        %v7258 = vadd.f32 %v6498, %v6840
        %v7259 = vadd.f32 %v6499, %v6845
        %v7260 = vadd.f32 %v6500, %v6848
        %v7261 = vadd.f32 %v6501, %v6853
        %v7262 = vadd.f32 %v6502, %v6856
        %v7263 = vadd.f32 %v6503, %v6861
        %v7264 = vadd.f32 %v6504, %v6864
        %v7265 = vadd.f32 %v6505, %v6869
        %v7266 = vadd.f32 %v6506, %v6872
        %v7267 = vadd.f32 %v6507, %v6877
        %v7268 = vadd.f32 %v6508, %v6880
        %v7269 = vadd.f32 %v6509, %v6885
        %v7270 = vadd.f32 %v6510, %v6888
        %v7271 = vadd.f32 %v6511, %v6893
        %v7272 = vadd.f32 %v6512, %v6896
        %v7273 = vadd.f32 %v6513, %v6901
        %v7274 = vadd.f32 %v6514, %v6904
        %v7275 = vadd.f32 %v6515, %v6909
        %v7276 = vadd.f32 %v6516, %v6912
        %v7277 = vadd.f32 %v6517, %v6917
        %v7278 = vadd.f32 %v6518, %v6920
        %v7279 = vadd.f32 %v6519, %v6925
        %v7280 = vadd.f32 %v6520, %v6928
        %v7281 = vadd.f32 %v6521, %v6933
        %v7282 = vadd.f32 %v6522, %v6936
        %v7283 = vadd.f32 %v6523, %v6941
        %v7284 = vadd.f32 %v6524, %v6944
        %v7285 = vadd.f32 %v6525, %v6949
        %v7286 = vadd.f32 %v6526, %v6952
        %v7287 = vadd.f32 %v6527, %v6957
        %v7288 = vadd.f32 %v6528, %v6960
        %v7289 = vadd.f32 %v6529, %v6965
        %v7290 = vadd.f32 %v6530, %v6968
        %v7291 = vadd.f32 %v6531, %v6973
        %v7292 = vadd.f32 %v6532, %v6976
        %v7293 = vadd.f32 %v6533, %v6981
        %v7294 = vadd.f32 %v6534, %v6984
        %v7295 = vadd.f32 %v6535, %v6989
        %v7296 = vadd.f32 %v6536, %v6992
        %v7297 = vadd.f32 %v6537, %v6997
        %v7298 = vadd.f32 %v6538, %v7000
        %v7299 = vadd.f32 %v6539, %v7005
        %v7300 = vadd.f32 %v6540, %v7008
        %v7301 = vadd.f32 %v6541, %v7013
        %v7302 = vadd.f32 %v6542, %v7016
        %v7303 = vadd.f32 %v6543, %v7021
        %v7304 = vadd.f32 %v6544, %v7024
        %v7305 = vadd.f32 %v6545, %v7029
        %v7306 = vadd.f32 %v6546, %v7032
        %v7307 = vadd.f32 %v6547, %v7037
        %v7308 = vadd.f32 %v6548, %v7040
        %v7309 = vadd.f32 %v6549, %v7045
        %v7310 = vadd.f32 %v6550, %v7048
        %v7311 = vadd.f32 %v6551, %v7053
        %v7312 = vadd.f32 %v6552, %v7056
        %v7313 = vadd.f32 %v6553, %v7061
        %v7314 = vadd.f32 %v6554, %v7064
        %v7315 = vadd.f32 %v6555, %v7069
        %v7316 = vadd.f32 %v6556, %v7072
        %v7317 = vadd.f32 %v6557, %v7077
        %v7318 = vadd.f32 %v6558, %v7080
        %v7319 = vadd.f32 %v6559, %v7085
        %v7320 = vadd.f32 %v6560, %v7088
        %v7321 = vadd.f32 %v6561, %v7093
        %v7322 = vadd.f32 %v6562, %v7096
        %v7323 = vadd.f32 %v6563, %v7101
        %v7324 = vadd.f32 %v6564, %v7104
        %v7325 = vadd.f32 %v6565, %v7109
        %v7326 = vadd.f32 %v6566, %v7112
        %v7327 = vadd.f32 %v6567, %v7117
        %v7328 = vadd.f32 %v6568, %v7120
        %v7329 = vadd.f32 %v6569, %v7125
        %v7330 = vadd.f32 %v6570, %v7128
        %v7331 = vadd.f32 %v6571, %v7133
        %v7332 = vadd.f32 %v6572, %v7136
        %v7333 = vadd.f32 %v6573, %v7141
        %v7334 = vadd.f32 %v6574, %v7144
        %v7335 = vadd.f32 %v6575, %v7149
        %v7336 = vadd.f32 %v6576, %v7152
        %v7337 = vadd.f32 %v6577, %v7157
        %v7338 = vadd.f32 %v6578, %v7160
        %v7339 = vadd.f32 %v6579, %v7165
        %v7340 = vadd.f32 %v6580, %v7168
        %v7341 = vadd.f32 %v6581, %v7173
        %v7342 = vadd.f32 %v6582, %v7176
        %v7343 = vadd.f32 %v6583, %v7181
        %v7344 = vadd.f32 %v6584, %v7184
        %v7345 = vadd.f32 %v6585, %v7189
        %v7346 = vadd.f32 %v6586, %v7192
        %v7347 = vadd.f32 %v6587, %v7197
        %v7348 = vadd.f32 %v6588, %v7200
        %v7349 = vadd.f32 %v6589, %v7205
        %v7350 = vadd.f32 %v6590, %v7208
        %v7351 = vadd.f32 %v6591, %v7213
        %v7352 = vadd.f32 %v6592, %v7216
        %v7353 = vadd.f32 %v6593, %v7221
        %v7354 = vadd.f32 %v6594, %v7224
        %s7355 = scalar_lea.vmem %s1, 384
        %v7356 = vld [vmem:[%s7355] sm:$0xf]
        %v7357 = vld [vmem:[%s7355 + $0x4] sm:$0xf]
        %v7358 = vld [vmem:[%s7355 + $0x8] sm:$0xf]
        %v7359 = vld [vmem:[%s7355 + $0xc] sm:$0xf]
        %v7360 = vld [vmem:[%s7355 + $0x10] sm:$0xf]
        %v7361 = vld [vmem:[%s7355 + $0x14] sm:$0xf]
        %v7362 = vld [vmem:[%s7355 + $0x18] sm:$0xf]
        %v7363 = vld [vmem:[%s7355 + $0x1c] sm:$0xf]
        %v7364 = vld [vmem:[%s7355 + $0x20] sm:$0xf]
        %v7365 = vld [vmem:[%s7355 + $0x24] sm:$0xf]
        %v7366 = vld [vmem:[%s7355 + $0x28] sm:$0xf]
        %v7367 = vld [vmem:[%s7355 + $0x2c] sm:$0xf]
        %v7368 = vld [vmem:[%s7355 + $0x30] sm:$0xf]
        %v7369 = vld [vmem:[%s7355 + $0x34] sm:$0xf]
        %v7370 = vld [vmem:[%s7355 + $0x38] sm:$0xf]
        %v7371 = vld [vmem:[%s7355 + $0x3c] sm:$0xf]
        %v7376 = vunpack.c.l.b16 %v335
        %v7377 = vunpack.c.l.b16 %v336
        %v7378 = vunpack.c.l.b16 %v337
        %v7379 = vunpack.c.l.b16 %v338
        %v7380 = vpack.c.b16 %v7377, %v7376
        %v7381 = vpack.c.b16 %v7379, %v7378
        %v7400 = vunpack.c.l.b16 %v7356
        %v7401 = vunpack.c.l.b16 %v7357
        %v7402 = vunpack.c.l.b16 %v7358
        %v7403 = vunpack.c.l.b16 %v7359
        %v7404 = vunpack.c.l.b16 %v7360
        %v7405 = vunpack.c.l.b16 %v7361
        %v7406 = vunpack.c.l.b16 %v7362
        %v7407 = vunpack.c.l.b16 %v7363
        %v7408 = vunpack.c.l.b16 %v7364
        %v7409 = vunpack.c.l.b16 %v7365
        %v7410 = vunpack.c.l.b16 %v7366
        %v7411 = vunpack.c.l.b16 %v7367
        %v7412 = vunpack.c.l.b16 %v7368
        %v7413 = vunpack.c.l.b16 %v7369
        %v7414 = vunpack.c.l.b16 %v7370
        %v7415 = vunpack.c.l.b16 %v7371
        %v7416 = vpack.c.b16 %v7401, %v7400
        %v7417 = vpack.c.b16 %v7403, %v7402
        %v7418 = vpack.c.b16 %v7405, %v7404
        %v7419 = vpack.c.b16 %v7407, %v7406
        %v7420 = vpack.c.b16 %v7409, %v7408
        %v7421 = vpack.c.b16 %v7411, %v7410
        %v7422 = vpack.c.b16 %v7413, %v7412
        %v7423 = vpack.c.b16 %v7415, %v7414
        %7432 = vmatprep.subr.bf16.mxu0 0
        %7433 = vmatpush1.bf16.msra.mxu0 %v7416
        %7434 = vmatprep.subr.bf16.mxu0 0
        %7435 = vmatpush1.bf16.msra.mxu0 %v7417
        %7436 = vmatprep.subr.bf16.mxu0 0
        %7437 = vmatpush1.bf16.msra.mxu0 %v7418
        %7438 = vmatprep.subr.bf16.mxu0 0
        %7439 = vmatpush1.bf16.msra.mxu0 %v7419
        %7440 = vmatprep.subr.bf16.mxu0 0
        %7441 = vmatpush1.bf16.msra.mxu0 %v7420
        %7442 = vmatprep.subr.bf16.mxu0 0
        %7443 = vmatpush1.bf16.msra.mxu0 %v7421
        %7444 = vmatprep.subr.bf16.mxu0 0
        %7445 = vmatpush1.bf16.msra.mxu0 %v7422
        %7446 = vmatprep.subr.bf16.mxu0 0
        %7447 = vmatpush1.bf16.msra.mxu0 %v7423
        %7448 = vmatprep.subr.bf16.mxu0 0
        %7449 = vmatpush1.bf16.msra.mxu0 0
        %7450 = vmatprep.subr.bf16.mxu0 0
        %7451 = vmatpush1.bf16.msra.mxu0 0
        %7452 = vmatprep.subr.bf16.mxu0 0
        %7453 = vmatpush1.bf16.msra.mxu0 0
        %7454 = vmatprep.subr.bf16.mxu0 0
        %7455 = vmatpush1.bf16.msra.mxu0 0
        %7456 = vmatprep.subr.bf16.mxu0 0
        %7457 = vmatpush1.bf16.msra.mxu0 0
        %7458 = vmatprep.subr.bf16.mxu0 0
        %7459 = vmatpush1.bf16.msra.mxu0 0
        %7460 = vmatprep.subr.bf16.mxu0 0
        %7461 = vmatpush1.bf16.msra.mxu0 0
        %7462 = vmatprep.subr.bf16.mxu0 0
        %7463 = vmatpush1.bf16.msra.mxu0 0
        %7464 = vmatprep.mubr.bf16.mxu0 0
        %7465 = vmatmul.mubr.bf16.gmra.mrb[0].mxu0 %v2893
        %v7466 = vpop.f32.mrb[0].mxu0
        %v7467 = vadd.f32 0.0, %v7466
        %v7468 = vpop.f32.mrb[0].mxu0
        %v7469 = vpop.f32.mrb[0].mxu0
        %v7470 = vadd.f32 0.0, %v7469
        %v7471 = vpop.f32.mrb[0].mxu0
        %7472 = vmatprep.mubr.bf16.mxu0 0
        %7473 = vmatmul.mubr.bf16.gmra.mrb[0].mxu0 %v2894
        %v7474 = vpop.f32.mrb[0].mxu0
        %v7475 = vadd.f32 0.0, %v7474
        %v7476 = vpop.f32.mrb[0].mxu0
        %v7477 = vpop.f32.mrb[0].mxu0
        %v7478 = vadd.f32 0.0, %v7477
        %v7479 = vpop.f32.mrb[0].mxu0
        %7480 = vmatprep.mubr.bf16.mxu0 0
        %7481 = vmatmul.mubr.bf16.gmra.mrb[0].mxu0 %v2895
        %v7482 = vpop.f32.mrb[0].mxu0
        %v7483 = vadd.f32 0.0, %v7482
        %v7484 = vpop.f32.mrb[0].mxu0
        %v7485 = vpop.f32.mrb[0].mxu0
        %v7486 = vadd.f32 0.0, %v7485
        %v7487 = vpop.f32.mrb[0].mxu0
        %7488 = vmatprep.mubr.bf16.mxu0 0
        %7489 = vmatmul.mubr.bf16.gmra.mrb[0].mxu0 %v2896
        %v7490 = vpop.f32.mrb[0].mxu0
        %v7491 = vadd.f32 0.0, %v7490
        %v7492 = vpop.f32.mrb[0].mxu0
        %v7493 = vpop.f32.mrb[0].mxu0
        %v7494 = vadd.f32 0.0, %v7493
        %v7495 = vpop.f32.mrb[0].mxu0
        %7496 = vmatprep.mubr.bf16.mxu0 0
        %7497 = vmatmul.mubr.bf16.gmra.mrb[0].mxu0 %v2897
        %v7498 = vpop.f32.mrb[0].mxu0
        %v7499 = vadd.f32 0.0, %v7498
        %v7500 = vpop.f32.mrb[0].mxu0
        %v7501 = vpop.f32.mrb[0].mxu0
        %v7502 = vadd.f32 0.0, %v7501
        %v7503 = vpop.f32.mrb[0].mxu0
        %7504 = vmatprep.mubr.bf16.mxu0 0
        %7505 = vmatmul.mubr.bf16.gmra.mrb[0].mxu0 %v2898
        %v7506 = vpop.f32.mrb[0].mxu0
        %v7507 = vadd.f32 0.0, %v7506
        %v7508 = vpop.f32.mrb[0].mxu0
        %v7509 = vpop.f32.mrb[0].mxu0
        %v7510 = vadd.f32 0.0, %v7509
        %v7511 = vpop.f32.mrb[0].mxu0
        %7512 = vmatprep.mubr.bf16.mxu0 0
        %7513 = vmatmul.mubr.bf16.gmra.mrb[0].mxu0 %v2899
        %v7514 = vpop.f32.mrb[0].mxu0
        %v7515 = vadd.f32 0.0, %v7514
        %v7516 = vpop.f32.mrb[0].mxu0
        %v7517 = vpop.f32.mrb[0].mxu0
        %v7518 = vadd.f32 0.0, %v7517
        %v7519 = vpop.f32.mrb[0].mxu0
        %7520 = vmatprep.mubr.bf16.mxu0 0
        %7521 = vmatmul.mubr.bf16.gmra.mrb[0].mxu0 %v2900
        %v7522 = vpop.f32.mrb[0].mxu0
        %v7523 = vadd.f32 0.0, %v7522
        %v7524 = vpop.f32.mrb[0].mxu0
        %v7525 = vpop.f32.mrb[0].mxu0
        %v7526 = vadd.f32 0.0, %v7525
        %v7527 = vpop.f32.mrb[0].mxu0
        %7528 = vmatprep.mubr.bf16.mxu0 0
        %7529 = vmatmul.mubr.bf16.gmra.mrb[0].mxu0 %v2901
        %v7530 = vpop.f32.mrb[0].mxu0
        %v7531 = vadd.f32 0.0, %v7530
        %v7532 = vpop.f32.mrb[0].mxu0
        %v7533 = vpop.f32.mrb[0].mxu0
        %v7534 = vadd.f32 0.0, %v7533
        %v7535 = vpop.f32.mrb[0].mxu0
        %7536 = vmatprep.mubr.bf16.mxu0 0
        %7537 = vmatmul.mubr.bf16.gmra.mrb[0].mxu0 %v2902
        %v7538 = vpop.f32.mrb[0].mxu0
        %v7539 = vadd.f32 0.0, %v7538
        %v7540 = vpop.f32.mrb[0].mxu0
        %v7541 = vpop.f32.mrb[0].mxu0
        %v7542 = vadd.f32 0.0, %v7541
        %v7543 = vpop.f32.mrb[0].mxu0
        %7544 = vmatprep.mubr.bf16.mxu0 0
        %7545 = vmatmul.mubr.bf16.gmra.mrb[0].mxu0 %v2903
        %v7546 = vpop.f32.mrb[0].mxu0
        %v7547 = vadd.f32 0.0, %v7546
        %v7548 = vpop.f32.mrb[0].mxu0
        %v7549 = vpop.f32.mrb[0].mxu0
        %v7550 = vadd.f32 0.0, %v7549
        %v7551 = vpop.f32.mrb[0].mxu0
        %7552 = vmatprep.mubr.bf16.mxu0 0
        %7553 = vmatmul.mubr.bf16.gmra.mrb[0].mxu0 %v2904
        %v7554 = vpop.f32.mrb[0].mxu0
        %v7555 = vadd.f32 0.0, %v7554
        %v7556 = vpop.f32.mrb[0].mxu0
        %v7557 = vpop.f32.mrb[0].mxu0
        %v7558 = vadd.f32 0.0, %v7557
        %v7559 = vpop.f32.mrb[0].mxu0
        %7560 = vmatprep.mubr.bf16.mxu0 0
        %7561 = vmatmul.mubr.bf16.gmra.mrb[0].mxu0 %v2905
        %v7562 = vpop.f32.mrb[0].mxu0
        %v7563 = vadd.f32 0.0, %v7562
        %v7564 = vpop.f32.mrb[0].mxu0
        %v7565 = vpop.f32.mrb[0].mxu0
        %v7566 = vadd.f32 0.0, %v7565
        %v7567 = vpop.f32.mrb[0].mxu0
        %7568 = vmatprep.mubr.bf16.mxu0 0
        %7569 = vmatmul.mubr.bf16.gmra.mrb[0].mxu0 %v2906
        %v7570 = vpop.f32.mrb[0].mxu0
        %v7571 = vadd.f32 0.0, %v7570
        %v7572 = vpop.f32.mrb[0].mxu0
        %v7573 = vpop.f32.mrb[0].mxu0
        %v7574 = vadd.f32 0.0, %v7573
        %v7575 = vpop.f32.mrb[0].mxu0
        %7576 = vmatprep.mubr.bf16.mxu0 0
        %7577 = vmatmul.mubr.bf16.gmra.mrb[0].mxu0 %v2907
        %v7578 = vpop.f32.mrb[0].mxu0
        %v7579 = vadd.f32 0.0, %v7578
        %v7580 = vpop.f32.mrb[0].mxu0
        %v7581 = vpop.f32.mrb[0].mxu0
        %v7582 = vadd.f32 0.0, %v7581
        %v7583 = vpop.f32.mrb[0].mxu0
        %7584 = vmatprep.mubr.bf16.mxu0 0
        %7585 = vmatmul.mubr.bf16.gmra.mrb[0].mxu0 %v2908
        %v7586 = vpop.f32.mrb[0].mxu0
        %v7587 = vadd.f32 0.0, %v7586
        %v7588 = vpop.f32.mrb[0].mxu0
        %v7589 = vpop.f32.mrb[0].mxu0
        %v7590 = vadd.f32 0.0, %v7589
        %v7591 = vpop.f32.mrb[0].mxu0
        %7592 = vmatprep.mubr.bf16.mxu0 0
        %7593 = vmatmul.mubr.bf16.gmra.mrb[0].mxu0 %v2909
        %v7594 = vpop.f32.mrb[0].mxu0
        %v7595 = vadd.f32 0.0, %v7594
        %v7596 = vpop.f32.mrb[0].mxu0
        %v7597 = vpop.f32.mrb[0].mxu0
        %v7598 = vadd.f32 0.0, %v7597
        %v7599 = vpop.f32.mrb[0].mxu0
        %7600 = vmatprep.mubr.bf16.mxu0 0
        %7601 = vmatmul.mubr.bf16.gmra.mrb[0].mxu0 %v2910
        %v7602 = vpop.f32.mrb[0].mxu0
        %v7603 = vadd.f32 0.0, %v7602
        %v7604 = vpop.f32.mrb[0].mxu0
        %v7605 = vpop.f32.mrb[0].mxu0
        %v7606 = vadd.f32 0.0, %v7605
        %v7607 = vpop.f32.mrb[0].mxu0
        %7608 = vmatprep.mubr.bf16.mxu0 0
        %7609 = vmatmul.mubr.bf16.gmra.mrb[0].mxu0 %v2911
        %v7610 = vpop.f32.mrb[0].mxu0
        %v7611 = vadd.f32 0.0, %v7610
        %v7612 = vpop.f32.mrb[0].mxu0
        %v7613 = vpop.f32.mrb[0].mxu0
        %v7614 = vadd.f32 0.0, %v7613
        %v7615 = vpop.f32.mrb[0].mxu0
        %7616 = vmatprep.mubr.bf16.mxu0 0
        %7617 = vmatmul.mubr.bf16.gmra.mrb[0].mxu0 %v2912
        %v7618 = vpop.f32.mrb[0].mxu0
        %v7619 = vadd.f32 0.0, %v7618
        %v7620 = vpop.f32.mrb[0].mxu0
        %v7621 = vpop.f32.mrb[0].mxu0
        %v7622 = vadd.f32 0.0, %v7621
        %v7623 = vpop.f32.mrb[0].mxu0
        %7624 = vmatprep.mubr.bf16.mxu0 0
        %7625 = vmatmul.mubr.bf16.gmra.mrb[0].mxu0 %v2913
        %v7626 = vpop.f32.mrb[0].mxu0
        %v7627 = vadd.f32 0.0, %v7626
        %v7628 = vpop.f32.mrb[0].mxu0
        %v7629 = vpop.f32.mrb[0].mxu0
        %v7630 = vadd.f32 0.0, %v7629
        %v7631 = vpop.f32.mrb[0].mxu0
        %7632 = vmatprep.mubr.bf16.mxu0 0
        %7633 = vmatmul.mubr.bf16.gmra.mrb[0].mxu0 %v2914
        %v7634 = vpop.f32.mrb[0].mxu0
        %v7635 = vadd.f32 0.0, %v7634
        %v7636 = vpop.f32.mrb[0].mxu0
        %v7637 = vpop.f32.mrb[0].mxu0
        %v7638 = vadd.f32 0.0, %v7637
        %v7639 = vpop.f32.mrb[0].mxu0
        %7640 = vmatprep.mubr.bf16.mxu0 0
        %7641 = vmatmul.mubr.bf16.gmra.mrb[0].mxu0 %v2915
        %v7642 = vpop.f32.mrb[0].mxu0
        %v7643 = vadd.f32 0.0, %v7642
        %v7644 = vpop.f32.mrb[0].mxu0
        %v7645 = vpop.f32.mrb[0].mxu0
        %v7646 = vadd.f32 0.0, %v7645
        %v7647 = vpop.f32.mrb[0].mxu0
        %7648 = vmatprep.mubr.bf16.mxu0 0
        %7649 = vmatmul.mubr.bf16.gmra.mrb[0].mxu0 %v2916
        %v7650 = vpop.f32.mrb[0].mxu0
        %v7651 = vadd.f32 0.0, %v7650
        %v7652 = vpop.f32.mrb[0].mxu0
        %v7653 = vpop.f32.mrb[0].mxu0
        %v7654 = vadd.f32 0.0, %v7653
        %v7655 = vpop.f32.mrb[0].mxu0
        %7656 = vmatprep.mubr.bf16.mxu0 0
        %7657 = vmatmul.mubr.bf16.gmra.mrb[0].mxu0 %v2917
        %v7658 = vpop.f32.mrb[0].mxu0
        %v7659 = vadd.f32 0.0, %v7658
        %v7660 = vpop.f32.mrb[0].mxu0
        %v7661 = vpop.f32.mrb[0].mxu0
        %v7662 = vadd.f32 0.0, %v7661
        %v7663 = vpop.f32.mrb[0].mxu0
        %7664 = vmatprep.mubr.bf16.mxu0 0
        %7665 = vmatmul.mubr.bf16.gmra.mrb[0].mxu0 %v2918
        %v7666 = vpop.f32.mrb[0].mxu0
        %v7667 = vadd.f32 0.0, %v7666
        %v7668 = vpop.f32.mrb[0].mxu0
        %v7669 = vpop.f32.mrb[0].mxu0
        %v7670 = vadd.f32 0.0, %v7669
        %v7671 = vpop.f32.mrb[0].mxu0
        %7672 = vmatprep.mubr.bf16.mxu0 0
        %7673 = vmatmul.mubr.bf16.gmra.mrb[0].mxu0 %v2919
        %v7674 = vpop.f32.mrb[0].mxu0
        %v7675 = vadd.f32 0.0, %v7674
        %v7676 = vpop.f32.mrb[0].mxu0
        %v7677 = vpop.f32.mrb[0].mxu0
        %v7678 = vadd.f32 0.0, %v7677
        %v7679 = vpop.f32.mrb[0].mxu0
        %7680 = vmatprep.mubr.bf16.mxu0 0
        %7681 = vmatmul.mubr.bf16.gmra.mrb[0].mxu0 %v2920
        %v7682 = vpop.f32.mrb[0].mxu0
        %v7683 = vadd.f32 0.0, %v7682
        %v7684 = vpop.f32.mrb[0].mxu0
        %v7685 = vpop.f32.mrb[0].mxu0
        %v7686 = vadd.f32 0.0, %v7685
        %v7687 = vpop.f32.mrb[0].mxu0
        %7688 = vmatprep.mubr.bf16.mxu0 0
        %7689 = vmatmul.mubr.bf16.gmra.mrb[0].mxu0 %v2921
        %v7690 = vpop.f32.mrb[0].mxu0
        %v7691 = vadd.f32 0.0, %v7690
        %v7692 = vpop.f32.mrb[0].mxu0
        %v7693 = vpop.f32.mrb[0].mxu0
        %v7694 = vadd.f32 0.0, %v7693
        %v7695 = vpop.f32.mrb[0].mxu0
        %7696 = vmatprep.mubr.bf16.mxu0 0
        %7697 = vmatmul.mubr.bf16.gmra.mrb[0].mxu0 %v2922
        %v7698 = vpop.f32.mrb[0].mxu0
        %v7699 = vadd.f32 0.0, %v7698
        %v7700 = vpop.f32.mrb[0].mxu0
        %v7701 = vpop.f32.mrb[0].mxu0
        %v7702 = vadd.f32 0.0, %v7701
        %v7703 = vpop.f32.mrb[0].mxu0
        %7704 = vmatprep.mubr.bf16.mxu0 0
        %7705 = vmatmul.mubr.bf16.gmra.mrb[0].mxu0 %v2923
        %v7706 = vpop.f32.mrb[0].mxu0
        %v7707 = vadd.f32 0.0, %v7706
        %v7708 = vpop.f32.mrb[0].mxu0
        %v7709 = vpop.f32.mrb[0].mxu0
        %v7710 = vadd.f32 0.0, %v7709
        %v7711 = vpop.f32.mrb[0].mxu0
        %7712 = vmatprep.mubr.bf16.mxu0 0
        %7713 = vmatmul.mubr.bf16.gmra.mrb[0].mxu0 %v2924
        %v7714 = vpop.f32.mrb[0].mxu0
        %v7715 = vadd.f32 0.0, %v7714
        %v7716 = vpop.f32.mrb[0].mxu0
        %v7717 = vpop.f32.mrb[0].mxu0
        %v7718 = vadd.f32 0.0, %v7717
        %v7719 = vpop.f32.mrb[0].mxu0
        %7720 = vmatprep.mubr.bf16.mxu0 0
        %7721 = vmatmul.mubr.bf16.gmra.mrb[0].mxu0 %v2925
        %v7722 = vpop.f32.mrb[0].mxu0
        %v7723 = vadd.f32 0.0, %v7722
        %v7724 = vpop.f32.mrb[0].mxu0
        %v7725 = vpop.f32.mrb[0].mxu0
        %v7726 = vadd.f32 0.0, %v7725
        %v7727 = vpop.f32.mrb[0].mxu0
        %7728 = vmatprep.mubr.bf16.mxu0 0
        %7729 = vmatmul.mubr.bf16.gmra.mrb[0].mxu0 %v2926
        %v7730 = vpop.f32.mrb[0].mxu0
        %v7731 = vadd.f32 0.0, %v7730
        %v7732 = vpop.f32.mrb[0].mxu0
        %v7733 = vpop.f32.mrb[0].mxu0
        %v7734 = vadd.f32 0.0, %v7733
        %v7735 = vpop.f32.mrb[0].mxu0
        %7736 = vmatprep.mubr.bf16.mxu0 0
        %7737 = vmatmul.mubr.bf16.gmra.mrb[0].mxu0 %v2927
        %v7738 = vpop.f32.mrb[0].mxu0
        %v7739 = vadd.f32 0.0, %v7738
        %v7740 = vpop.f32.mrb[0].mxu0
        %v7741 = vpop.f32.mrb[0].mxu0
        %v7742 = vadd.f32 0.0, %v7741
        %v7743 = vpop.f32.mrb[0].mxu0
        %7744 = vmatprep.mubr.bf16.mxu0 0
        %7745 = vmatmul.mubr.bf16.gmra.mrb[0].mxu0 %v2928
        %v7746 = vpop.f32.mrb[0].mxu0
        %v7747 = vadd.f32 0.0, %v7746
        %v7748 = vpop.f32.mrb[0].mxu0
        %v7749 = vpop.f32.mrb[0].mxu0
        %v7750 = vadd.f32 0.0, %v7749
        %v7751 = vpop.f32.mrb[0].mxu0
        %7752 = vmatprep.mubr.bf16.mxu0 0
        %7753 = vmatmul.mubr.bf16.gmra.mrb[0].mxu0 %v2929
        %v7754 = vpop.f32.mrb[0].mxu0
        %v7755 = vadd.f32 0.0, %v7754
        %v7756 = vpop.f32.mrb[0].mxu0
        %v7757 = vpop.f32.mrb[0].mxu0
        %v7758 = vadd.f32 0.0, %v7757
        %v7759 = vpop.f32.mrb[0].mxu0
        %7760 = vmatprep.mubr.bf16.mxu0 0
        %7761 = vmatmul.mubr.bf16.gmra.mrb[0].mxu0 %v2930
        %v7762 = vpop.f32.mrb[0].mxu0
        %v7763 = vadd.f32 0.0, %v7762
        %v7764 = vpop.f32.mrb[0].mxu0
        %v7765 = vpop.f32.mrb[0].mxu0
        %v7766 = vadd.f32 0.0, %v7765
        %v7767 = vpop.f32.mrb[0].mxu0
        %7768 = vmatprep.mubr.bf16.mxu0 0
        %7769 = vmatmul.mubr.bf16.gmra.mrb[0].mxu0 %v2931
        %v7770 = vpop.f32.mrb[0].mxu0
        %v7771 = vadd.f32 0.0, %v7770
        %v7772 = vpop.f32.mrb[0].mxu0
        %v7773 = vpop.f32.mrb[0].mxu0
        %v7774 = vadd.f32 0.0, %v7773
        %v7775 = vpop.f32.mrb[0].mxu0
        %7776 = vmatprep.mubr.bf16.mxu0 0
        %7777 = vmatmul.mubr.bf16.gmra.mrb[0].mxu0 %v2932
        %v7778 = vpop.f32.mrb[0].mxu0
        %v7779 = vadd.f32 0.0, %v7778
        %v7780 = vpop.f32.mrb[0].mxu0
        %v7781 = vpop.f32.mrb[0].mxu0
        %v7782 = vadd.f32 0.0, %v7781
        %v7783 = vpop.f32.mrb[0].mxu0
        %7784 = vmatprep.mubr.bf16.mxu0 0
        %7785 = vmatmul.mubr.bf16.gmra.mrb[0].mxu0 %v2933
        %v7786 = vpop.f32.mrb[0].mxu0
        %v7787 = vadd.f32 0.0, %v7786
        %v7788 = vpop.f32.mrb[0].mxu0
        %v7789 = vpop.f32.mrb[0].mxu0
        %v7790 = vadd.f32 0.0, %v7789
        %v7791 = vpop.f32.mrb[0].mxu0
        %7792 = vmatprep.mubr.bf16.mxu0 0
        %7793 = vmatmul.mubr.bf16.gmra.mrb[0].mxu0 %v2934
        %v7794 = vpop.f32.mrb[0].mxu0
        %v7795 = vadd.f32 0.0, %v7794
        %v7796 = vpop.f32.mrb[0].mxu0
        %v7797 = vpop.f32.mrb[0].mxu0
        %v7798 = vadd.f32 0.0, %v7797
        %v7799 = vpop.f32.mrb[0].mxu0
        %7800 = vmatprep.mubr.bf16.mxu0 0
        %7801 = vmatmul.mubr.bf16.gmra.mrb[0].mxu0 %v2935
        %v7802 = vpop.f32.mrb[0].mxu0
        %v7803 = vadd.f32 0.0, %v7802
        %v7804 = vpop.f32.mrb[0].mxu0
        %v7805 = vpop.f32.mrb[0].mxu0
        %v7806 = vadd.f32 0.0, %v7805
        %v7807 = vpop.f32.mrb[0].mxu0
        %7808 = vmatprep.mubr.bf16.mxu0 0
        %7809 = vmatmul.mubr.bf16.gmra.mrb[0].mxu0 %v2936
        %v7810 = vpop.f32.mrb[0].mxu0
        %v7811 = vadd.f32 0.0, %v7810
        %v7812 = vpop.f32.mrb[0].mxu0
        %v7813 = vpop.f32.mrb[0].mxu0
        %v7814 = vadd.f32 0.0, %v7813
        %v7815 = vpop.f32.mrb[0].mxu0
        %7816 = vmatprep.mubr.bf16.mxu0 0
        %7817 = vmatmul.mubr.bf16.gmra.mrb[0].mxu0 %v2937
        %v7818 = vpop.f32.mrb[0].mxu0
        %v7819 = vadd.f32 0.0, %v7818
        %v7820 = vpop.f32.mrb[0].mxu0
        %v7821 = vpop.f32.mrb[0].mxu0
        %v7822 = vadd.f32 0.0, %v7821
        %v7823 = vpop.f32.mrb[0].mxu0
        %7824 = vmatprep.mubr.bf16.mxu0 0
        %7825 = vmatmul.mubr.bf16.gmra.mrb[0].mxu0 %v2938
        %v7826 = vpop.f32.mrb[0].mxu0
        %v7827 = vadd.f32 0.0, %v7826
        %v7828 = vpop.f32.mrb[0].mxu0
        %v7829 = vpop.f32.mrb[0].mxu0
        %v7830 = vadd.f32 0.0, %v7829
        %v7831 = vpop.f32.mrb[0].mxu0
        %7832 = vmatprep.mubr.bf16.mxu0 0
        %7833 = vmatmul.mubr.bf16.gmra.mrb[0].mxu0 %v2939
        %v7834 = vpop.f32.mrb[0].mxu0
        %v7835 = vadd.f32 0.0, %v7834
        %v7836 = vpop.f32.mrb[0].mxu0
        %v7837 = vpop.f32.mrb[0].mxu0
        %v7838 = vadd.f32 0.0, %v7837
        %v7839 = vpop.f32.mrb[0].mxu0
        %7840 = vmatprep.mubr.bf16.mxu0 0
        %7841 = vmatmul.mubr.bf16.gmra.mrb[0].mxu0 %v2940
        %v7842 = vpop.f32.mrb[0].mxu0
        %v7843 = vadd.f32 0.0, %v7842
        %v7844 = vpop.f32.mrb[0].mxu0
        %v7845 = vpop.f32.mrb[0].mxu0
        %v7846 = vadd.f32 0.0, %v7845
        %v7847 = vpop.f32.mrb[0].mxu0
        %7848 = vmatprep.mubr.bf16.mxu0 0
        %7849 = vmatmul.mubr.bf16.gmra.mrb[0].mxu0 %v2941
        %v7850 = vpop.f32.mrb[0].mxu0
        %v7851 = vadd.f32 0.0, %v7850
        %v7852 = vpop.f32.mrb[0].mxu0
        %v7853 = vpop.f32.mrb[0].mxu0
        %v7854 = vadd.f32 0.0, %v7853
        %v7855 = vpop.f32.mrb[0].mxu0
        %7856 = vmatprep.mubr.bf16.mxu0 0
        %7857 = vmatmul.mubr.bf16.gmra.mrb[0].mxu0 %v2942
        %v7858 = vpop.f32.mrb[0].mxu0
        %v7859 = vadd.f32 0.0, %v7858
        %v7860 = vpop.f32.mrb[0].mxu0
        %v7861 = vpop.f32.mrb[0].mxu0
        %v7862 = vadd.f32 0.0, %v7861
        %v7863 = vpop.f32.mrb[0].mxu0
        %7864 = vmatprep.mubr.bf16.mxu0 0
        %7865 = vmatmul.mubr.bf16.gmra.mrb[0].mxu0 %v2943
        %v7866 = vpop.f32.mrb[0].mxu0
        %v7867 = vadd.f32 0.0, %v7866
        %v7868 = vpop.f32.mrb[0].mxu0
        %v7869 = vpop.f32.mrb[0].mxu0
        %v7870 = vadd.f32 0.0, %v7869
        %v7871 = vpop.f32.mrb[0].mxu0
        %7872 = vmatprep.mubr.bf16.mxu0 0
        %7873 = vmatmul.mubr.bf16.gmra.mrb[0].mxu0 %v2944
        %v7874 = vpop.f32.mrb[0].mxu0
        %v7875 = vadd.f32 0.0, %v7874
        %v7876 = vpop.f32.mrb[0].mxu0
        %v7877 = vpop.f32.mrb[0].mxu0
        %v7878 = vadd.f32 0.0, %v7877
        %v7879 = vpop.f32.mrb[0].mxu0
        %7880 = vmatprep.mubr.bf16.mxu0 0
        %7881 = vmatmul.mubr.bf16.gmra.mrb[0].mxu0 %v2945
        %v7882 = vpop.f32.mrb[0].mxu0
        %v7883 = vadd.f32 0.0, %v7882
        %v7884 = vpop.f32.mrb[0].mxu0
        %v7885 = vpop.f32.mrb[0].mxu0
        %v7886 = vadd.f32 0.0, %v7885
        %v7887 = vpop.f32.mrb[0].mxu0
        %7888 = vmatprep.mubr.bf16.mxu0 0
        %7889 = vmatmul.mubr.bf16.gmra.mrb[0].mxu0 %v2946
        %v7890 = vpop.f32.mrb[0].mxu0
        %v7891 = vadd.f32 0.0, %v7890
        %v7892 = vpop.f32.mrb[0].mxu0
        %v7893 = vpop.f32.mrb[0].mxu0
        %v7894 = vadd.f32 0.0, %v7893
        %v7895 = vpop.f32.mrb[0].mxu0
        %7896 = vmatprep.mubr.bf16.mxu0 0
        %7897 = vmatmul.mubr.bf16.gmra.mrb[0].mxu0 %v2947
        %v7898 = vpop.f32.mrb[0].mxu0
        %v7899 = vadd.f32 0.0, %v7898
        %v7900 = vpop.f32.mrb[0].mxu0
        %v7901 = vpop.f32.mrb[0].mxu0
        %v7902 = vadd.f32 0.0, %v7901
        %v7903 = vpop.f32.mrb[0].mxu0
        %7904 = vmatprep.mubr.bf16.mxu0 0
        %7905 = vmatmul.mubr.bf16.gmra.mrb[0].mxu0 %v2948
        %v7906 = vpop.f32.mrb[0].mxu0
        %v7907 = vadd.f32 0.0, %v7906
        %v7908 = vpop.f32.mrb[0].mxu0
        %v7909 = vpop.f32.mrb[0].mxu0
        %v7910 = vadd.f32 0.0, %v7909
        %v7911 = vpop.f32.mrb[0].mxu0
        %7912 = vmatprep.mubr.bf16.mxu0 0
        %7913 = vmatmul.mubr.bf16.gmra.mrb[0].mxu0 %v2949
        %v7914 = vpop.f32.mrb[0].mxu0
        %v7915 = vadd.f32 0.0, %v7914
        %v7916 = vpop.f32.mrb[0].mxu0
        %v7917 = vpop.f32.mrb[0].mxu0
        %v7918 = vadd.f32 0.0, %v7917
        %v7919 = vpop.f32.mrb[0].mxu0
        %7920 = vmatprep.mubr.bf16.mxu0 0
        %7921 = vmatmul.mubr.bf16.gmra.mrb[0].mxu0 %v2950
        %v7922 = vpop.f32.mrb[0].mxu0
        %v7923 = vadd.f32 0.0, %v7922
        %v7924 = vpop.f32.mrb[0].mxu0
        %v7925 = vpop.f32.mrb[0].mxu0
        %v7926 = vadd.f32 0.0, %v7925
        %v7927 = vpop.f32.mrb[0].mxu0
        %7928 = vmatprep.mubr.bf16.mxu0 0
        %7929 = vmatmul.mubr.bf16.gmra.mrb[0].mxu0 %v2951
        %v7930 = vpop.f32.mrb[0].mxu0
        %v7931 = vadd.f32 0.0, %v7930
        %v7932 = vpop.f32.mrb[0].mxu0
        %v7933 = vpop.f32.mrb[0].mxu0
        %v7934 = vadd.f32 0.0, %v7933
        %v7935 = vpop.f32.mrb[0].mxu0
        %7936 = vmatprep.mubr.bf16.mxu0 0
        %7937 = vmatmul.mubr.bf16.gmra.mrb[0].mxu0 %v2952
        %v7938 = vpop.f32.mrb[0].mxu0
        %v7939 = vadd.f32 0.0, %v7938
        %v7940 = vpop.f32.mrb[0].mxu0
        %v7941 = vpop.f32.mrb[0].mxu0
        %v7942 = vadd.f32 0.0, %v7941
        %v7943 = vpop.f32.mrb[0].mxu0
        %7944 = vmatprep.mubr.bf16.mxu0 0
        %7945 = vmatmul.mubr.bf16.gmra.mrb[0].mxu0 %v5080
        %v7946 = vpop.f32.mrb[0].mxu0
        %v7947 = vadd.f32 0.0, %v7946
        %v7948 = vpop.f32.mrb[0].mxu0
        %v7949 = vpop.f32.mrb[0].mxu0
        %v7950 = vadd.f32 0.0, %v7949
        %v7951 = vpop.f32.mrb[0].mxu0
        %7952 = vmatprep.mubr.bf16.mxu0 0
        %7953 = vmatmul.mubr.bf16.gmra.mrb[0].mxu0 %v5081
        %v7954 = vpop.f32.mrb[0].mxu0
        %v7955 = vadd.f32 0.0, %v7954
        %v7956 = vpop.f32.mrb[0].mxu0
        %v7957 = vpop.f32.mrb[0].mxu0
        %v7958 = vadd.f32 0.0, %v7957
        %v7959 = vpop.f32.mrb[0].mxu0
        %7960 = vmatprep.mubr.bf16.mxu0 0
        %7961 = vmatmul.mubr.bf16.gmra.mrb[0].mxu0 %v7380
        %v7962 = vpop.f32.mrb[0].mxu0
        %v7963 = vadd.f32 0.0, %v7962
        %v7964 = vpop.f32.mrb[0].mxu0
        %v7965 = vpop.f32.mrb[0].mxu0
        %v7966 = vadd.f32 0.0, %v7965
        %v7967 = vpop.f32.mrb[0].mxu0
        %7968 = vmatprep.mubr.bf16.mxu0 0
        %7969 = vmatmul.mubr.bf16.gmra.mrb[0].mxu0 %v7381
        %v7970 = vpop.f32.mrb[0].mxu0
        %v7971 = vadd.f32 0.0, %v7970
        %v7972 = vpop.f32.mrb[0].mxu0
        %v7973 = vpop.f32.mrb[0].mxu0
        %v7974 = vadd.f32 0.0, %v7973
        %v7975 = vpop.f32.mrb[0].mxu0
        %7976 = vdwg.mxu0
        %v7977 = vadd.f32 %v7227, %v7467
        %v7978 = vadd.f32 %v7228, %v7470
        %v7979 = vadd.f32 %v7229, %v7475
        %v7980 = vadd.f32 %v7230, %v7478
        %v7981 = vadd.f32 %v7231, %v7483
        %v7982 = vadd.f32 %v7232, %v7486
        %v7983 = vadd.f32 %v7233, %v7491
        %v7984 = vadd.f32 %v7234, %v7494
        %v7985 = vadd.f32 %v7235, %v7499
        %v7986 = vadd.f32 %v7236, %v7502
        %v7987 = vadd.f32 %v7237, %v7507
        %v7988 = vadd.f32 %v7238, %v7510
        %v7989 = vadd.f32 %v7239, %v7515
        %v7990 = vadd.f32 %v7240, %v7518
        %v7991 = vadd.f32 %v7241, %v7523
        %v7992 = vadd.f32 %v7242, %v7526
        %v7993 = vadd.f32 %v7243, %v7531
        %v7994 = vadd.f32 %v7244, %v7534
        %v7995 = vadd.f32 %v7245, %v7539
        %v7996 = vadd.f32 %v7246, %v7542
        %v7997 = vadd.f32 %v7247, %v7547
        %v7998 = vadd.f32 %v7248, %v7550
        %v7999 = vadd.f32 %v7249, %v7555
        %v8000 = vadd.f32 %v7250, %v7558
        %v8001 = vadd.f32 %v7251, %v7563
        %v8002 = vadd.f32 %v7252, %v7566
        %v8003 = vadd.f32 %v7253, %v7571
        %v8004 = vadd.f32 %v7254, %v7574
        %v8005 = vadd.f32 %v7255, %v7579
        %v8006 = vadd.f32 %v7256, %v7582
        %v8007 = vadd.f32 %v7257, %v7587
        %v8008 = vadd.f32 %v7258, %v7590
        %v8009 = vadd.f32 %v7259, %v7595
        %v8010 = vadd.f32 %v7260, %v7598
        %v8011 = vadd.f32 %v7261, %v7603
        %v8012 = vadd.f32 %v7262, %v7606
        %v8013 = vadd.f32 %v7263, %v7611
        %v8014 = vadd.f32 %v7264, %v7614
        %v8015 = vadd.f32 %v7265, %v7619
        %v8016 = vadd.f32 %v7266, %v7622
        %v8017 = vadd.f32 %v7267, %v7627
        %v8018 = vadd.f32 %v7268, %v7630
        %v8019 = vadd.f32 %v7269, %v7635
        %v8020 = vadd.f32 %v7270, %v7638
        %v8021 = vadd.f32 %v7271, %v7643
        %v8022 = vadd.f32 %v7272, %v7646
        %v8023 = vadd.f32 %v7273, %v7651
        %v8024 = vadd.f32 %v7274, %v7654
        %v8025 = vadd.f32 %v7275, %v7659
        %v8026 = vadd.f32 %v7276, %v7662
        %v8027 = vadd.f32 %v7277, %v7667
        %v8028 = vadd.f32 %v7278, %v7670
        %v8029 = vadd.f32 %v7279, %v7675
        %v8030 = vadd.f32 %v7280, %v7678
        %v8031 = vadd.f32 %v7281, %v7683
        %v8032 = vadd.f32 %v7282, %v7686
        %v8033 = vadd.f32 %v7283, %v7691
        %v8034 = vadd.f32 %v7284, %v7694
        %v8035 = vadd.f32 %v7285, %v7699
        %v8036 = vadd.f32 %v7286, %v7702
        %v8037 = vadd.f32 %v7287, %v7707
        %v8038 = vadd.f32 %v7288, %v7710
        %v8039 = vadd.f32 %v7289, %v7715
        %v8040 = vadd.f32 %v7290, %v7718
        %v8041 = vadd.f32 %v7291, %v7723
        %v8042 = vadd.f32 %v7292, %v7726
        %v8043 = vadd.f32 %v7293, %v7731
        %v8044 = vadd.f32 %v7294, %v7734
        %v8045 = vadd.f32 %v7295, %v7739
        %v8046 = vadd.f32 %v7296, %v7742
        %v8047 = vadd.f32 %v7297, %v7747
        %v8048 = vadd.f32 %v7298, %v7750
        %v8049 = vadd.f32 %v7299, %v7755
        %v8050 = vadd.f32 %v7300, %v7758
        %v8051 = vadd.f32 %v7301, %v7763
        %v8052 = vadd.f32 %v7302, %v7766
        %v8053 = vadd.f32 %v7303, %v7771
        %v8054 = vadd.f32 %v7304, %v7774
        %v8055 = vadd.f32 %v7305, %v7779
        %v8056 = vadd.f32 %v7306, %v7782
        %v8057 = vadd.f32 %v7307, %v7787
        %v8058 = vadd.f32 %v7308, %v7790
        %v8059 = vadd.f32 %v7309, %v7795
        %v8060 = vadd.f32 %v7310, %v7798
        %v8061 = vadd.f32 %v7311, %v7803
        %v8062 = vadd.f32 %v7312, %v7806
        %v8063 = vadd.f32 %v7313, %v7811
        %v8064 = vadd.f32 %v7314, %v7814
        %v8065 = vadd.f32 %v7315, %v7819
        %v8066 = vadd.f32 %v7316, %v7822
        %v8067 = vadd.f32 %v7317, %v7827
        %v8068 = vadd.f32 %v7318, %v7830
        %v8069 = vadd.f32 %v7319, %v7835
        %v8070 = vadd.f32 %v7320, %v7838
        %v8071 = vadd.f32 %v7321, %v7843
        %v8072 = vadd.f32 %v7322, %v7846
        %v8073 = vadd.f32 %v7323, %v7851
        %v8074 = vadd.f32 %v7324, %v7854
        %v8075 = vadd.f32 %v7325, %v7859
        %v8076 = vadd.f32 %v7326, %v7862
        %v8077 = vadd.f32 %v7327, %v7867
        %v8078 = vadd.f32 %v7328, %v7870
        %v8079 = vadd.f32 %v7329, %v7875
        %v8080 = vadd.f32 %v7330, %v7878
        %v8081 = vadd.f32 %v7331, %v7883
        %v8082 = vadd.f32 %v7332, %v7886
        %v8083 = vadd.f32 %v7333, %v7891
        %v8084 = vadd.f32 %v7334, %v7894
        %v8085 = vadd.f32 %v7335, %v7899
        %v8086 = vadd.f32 %v7336, %v7902
        %v8087 = vadd.f32 %v7337, %v7907
        %v8088 = vadd.f32 %v7338, %v7910
        %v8089 = vadd.f32 %v7339, %v7915
        %v8090 = vadd.f32 %v7340, %v7918
        %v8091 = vadd.f32 %v7341, %v7923
        %v8092 = vadd.f32 %v7342, %v7926
        %v8093 = vadd.f32 %v7343, %v7931
        %v8094 = vadd.f32 %v7344, %v7934
        %v8095 = vadd.f32 %v7345, %v7939
        %v8096 = vadd.f32 %v7346, %v7942
        %v8097 = vadd.f32 %v7347, %v7947
        %v8098 = vadd.f32 %v7348, %v7950
        %v8099 = vadd.f32 %v7349, %v7955
        %v8100 = vadd.f32 %v7350, %v7958
        %v8101 = vadd.f32 %v7351, %v7963
        %v8102 = vadd.f32 %v7352, %v7966
        %v8103 = vadd.f32 %v7353, %v7971
        %v8104 = vadd.f32 %v7354, %v7974
        %v8106 = vshrl.u32 %v335, 16
        %v8108 = vrot.slane %v8106, 4
        %v8109 = vshll.u32 %v335, 16
        %v8111 = vrot.slane %v8109, 5
        %v8112 = vor.u32 %v8108, %v8111
        %v8113 = vrot.slane %v8112, 4
        %v8115 = vshll.u32 %v336, 16
        %v8117 = vrot.slane %v8115, 5
        %v8118 = vsel %vm358, %v8113, %v8117
        %v8119 = vshrl.u32 %v336, 16
        %v8121 = vrot.slane %v8119, 4
        %v8122 = vor.u32 %v8121, %v8117
        %v8123 = vrot.slane %v8122, 4
        %v8125 = vshll.u32 %v337, 16
        %v8127 = vrot.slane %v8125, 5
        %v8128 = vsel %vm358, %v8123, %v8127
        %v8129 = vshrl.u32 %v337, 16
        %v8131 = vrot.slane %v8129, 4
        %v8132 = vor.u32 %v8131, %v8127
        %v8133 = vrot.slane %v8132, 4
        %v8135 = vshll.u32 %v338, 16
        %v8137 = vrot.slane %v8135, 5
        %v8138 = vsel %vm358, %v8133, %v8137
        %v8139 = vshrl.u32 %v338, 16
        %v8141 = vrot.slane %v8139, 4
        %v8142 = vor.u32 %v8141, %v8137
        %v8143 = vrot.slane %v8142, 4
        %v8145 = vshll.u32 %v339, 16
        %v8147 = vrot.slane %v8145, 5
        %v8148 = vsel %vm358, %v8143, %v8147
        %s8149 = scalar_lea.vmem %s1, 448
        %v8150 = vld [vmem:[%s8149] sm:$0xf]
        %v8151 = vld [vmem:[%s8149 + $0x4] sm:$0xf]
        %v8152 = vld [vmem:[%s8149 + $0x8] sm:$0xf]
        %v8153 = vld [vmem:[%s8149 + $0xc] sm:$0xf]
        %v8154 = vld [vmem:[%s8149 + $0x10] sm:$0xf]
        %v8155 = vld [vmem:[%s8149 + $0x14] sm:$0xf]
        %v8156 = vld [vmem:[%s8149 + $0x18] sm:$0xf]
        %v8157 = vld [vmem:[%s8149 + $0x1c] sm:$0xf]
        %v8158 = vld [vmem:[%s8149 + $0x20] sm:$0xf]
        %v8159 = vld [vmem:[%s8149 + $0x24] sm:$0xf]
        %v8160 = vld [vmem:[%s8149 + $0x28] sm:$0xf]
        %v8161 = vld [vmem:[%s8149 + $0x2c] sm:$0xf]
        %v8162 = vld [vmem:[%s8149 + $0x30] sm:$0xf]
        %v8163 = vld [vmem:[%s8149 + $0x34] sm:$0xf]
        %v8164 = vld [vmem:[%s8149 + $0x38] sm:$0xf]
        %v8165 = vld [vmem:[%s8149 + $0x3c] sm:$0xf]
        %v8166 = vunpack.c.l.b16 %v8118
        %v8167 = vunpack.c.l.b16 %v8128
        %v8168 = vunpack.c.l.b16 %v8138
        %v8169 = vunpack.c.l.b16 %v8148
        %v8170 = vpack.c.b16 %v8167, %v8166
        %v8171 = vpack.c.b16 %v8169, %v8168
        %v8190 = vunpack.c.l.b16 %v8150
        %v8191 = vunpack.c.l.b16 %v8151
        %v8192 = vunpack.c.l.b16 %v8152
        %v8193 = vunpack.c.l.b16 %v8153
        %v8194 = vunpack.c.l.b16 %v8154
        %v8195 = vunpack.c.l.b16 %v8155
        %v8196 = vunpack.c.l.b16 %v8156
        %v8197 = vunpack.c.l.b16 %v8157
        %v8198 = vunpack.c.l.b16 %v8158
        %v8199 = vunpack.c.l.b16 %v8159
        %v8200 = vunpack.c.l.b16 %v8160
        %v8201 = vunpack.c.l.b16 %v8161
        %v8202 = vunpack.c.l.b16 %v8162
        %v8203 = vunpack.c.l.b16 %v8163
        %v8204 = vunpack.c.l.b16 %v8164
        %v8205 = vunpack.c.l.b16 %v8165
        %v8206 = vpack.c.b16 %v8191, %v8190
        %v8207 = vpack.c.b16 %v8193, %v8192
        %v8208 = vpack.c.b16 %v8195, %v8194
        %v8209 = vpack.c.b16 %v8197, %v8196
        %v8210 = vpack.c.b16 %v8199, %v8198
        %v8211 = vpack.c.b16 %v8201, %v8200
        %v8212 = vpack.c.b16 %v8203, %v8202
        %v8213 = vpack.c.b16 %v8205, %v8204
        %8222 = vmatprep.subr.bf16.mxu0 0
        %8223 = vmatpush1.bf16.msra.mxu0 %v8206
        %8224 = vmatprep.subr.bf16.mxu0 0
        %8225 = vmatpush1.bf16.msra.mxu0 %v8207
        %8226 = vmatprep.subr.bf16.mxu0 0
        %8227 = vmatpush1.bf16.msra.mxu0 %v8208
        %8228 = vmatprep.subr.bf16.mxu0 0
        %8229 = vmatpush1.bf16.msra.mxu0 %v8209
        %8230 = vmatprep.subr.bf16.mxu0 0
        %8231 = vmatpush1.bf16.msra.mxu0 %v8210
        %8232 = vmatprep.subr.bf16.mxu0 0
        %8233 = vmatpush1.bf16.msra.mxu0 %v8211
        %8234 = vmatprep.subr.bf16.mxu0 0
        %8235 = vmatpush1.bf16.msra.mxu0 %v8212
        %8236 = vmatprep.subr.bf16.mxu0 0
        %8237 = vmatpush1.bf16.msra.mxu0 %v8213
        %8238 = vmatprep.subr.bf16.mxu0 0
        %8239 = vmatpush1.bf16.msra.mxu0 0
        %8240 = vmatprep.subr.bf16.mxu0 0
        %8241 = vmatpush1.bf16.msra.mxu0 0
        %8242 = vmatprep.subr.bf16.mxu0 0
        %8243 = vmatpush1.bf16.msra.mxu0 0
        %8244 = vmatprep.subr.bf16.mxu0 0
        %8245 = vmatpush1.bf16.msra.mxu0 0
        %8246 = vmatprep.subr.bf16.mxu0 0
        %8247 = vmatpush1.bf16.msra.mxu0 0
        %8248 = vmatprep.subr.bf16.mxu0 0
        %8249 = vmatpush1.bf16.msra.mxu0 0
        %8250 = vmatprep.subr.bf16.mxu0 0
        %8251 = vmatpush1.bf16.msra.mxu0 0
        %8252 = vmatprep.subr.bf16.mxu0 0
        %8253 = vmatpush1.bf16.msra.mxu0 0
        %8254 = vmatprep.mubr.bf16.mxu0 0
        %8255 = vmatmul.mubr.bf16.gmra.mrb[0].mxu0 %v1916
        %v8256 = vpop.f32.mrb[0].mxu0
        %v8257 = vadd.f32 0.0, %v8256
        %v8258 = vpop.f32.mrb[0].mxu0
        %v8259 = vpop.f32.mrb[0].mxu0
        %v8260 = vadd.f32 0.0, %v8259
        %v8261 = vpop.f32.mrb[0].mxu0
        %8262 = vmatprep.mubr.bf16.mxu0 0
        %8263 = vmatmul.mubr.bf16.gmra.mrb[0].mxu0 %v1917
        %v8264 = vpop.f32.mrb[0].mxu0
        %v8265 = vadd.f32 0.0, %v8264
        %v8266 = vpop.f32.mrb[0].mxu0
        %v8267 = vpop.f32.mrb[0].mxu0
        %v8268 = vadd.f32 0.0, %v8267
        %v8269 = vpop.f32.mrb[0].mxu0
        %8270 = vmatprep.mubr.bf16.mxu0 0
        %8271 = vmatmul.mubr.bf16.gmra.mrb[0].mxu0 %v1918
        %v8272 = vpop.f32.mrb[0].mxu0
        %v8273 = vadd.f32 0.0, %v8272
        %v8274 = vpop.f32.mrb[0].mxu0
        %v8275 = vpop.f32.mrb[0].mxu0
        %v8276 = vadd.f32 0.0, %v8275
        %v8277 = vpop.f32.mrb[0].mxu0
        %8278 = vmatprep.mubr.bf16.mxu0 0
        %8279 = vmatmul.mubr.bf16.gmra.mrb[0].mxu0 %v1919
        %v8280 = vpop.f32.mrb[0].mxu0
        %v8281 = vadd.f32 0.0, %v8280
        %v8282 = vpop.f32.mrb[0].mxu0
        %v8283 = vpop.f32.mrb[0].mxu0
        %v8284 = vadd.f32 0.0, %v8283
        %v8285 = vpop.f32.mrb[0].mxu0
        %8286 = vmatprep.mubr.bf16.mxu0 0
        %8287 = vmatmul.mubr.bf16.gmra.mrb[0].mxu0 %v1920
        %v8288 = vpop.f32.mrb[0].mxu0
        %v8289 = vadd.f32 0.0, %v8288
        %v8290 = vpop.f32.mrb[0].mxu0
        %v8291 = vpop.f32.mrb[0].mxu0
        %v8292 = vadd.f32 0.0, %v8291
        %v8293 = vpop.f32.mrb[0].mxu0
        %8294 = vmatprep.mubr.bf16.mxu0 0
        %8295 = vmatmul.mubr.bf16.gmra.mrb[0].mxu0 %v1921
        %v8296 = vpop.f32.mrb[0].mxu0
        %v8297 = vadd.f32 0.0, %v8296
        %v8298 = vpop.f32.mrb[0].mxu0
        %v8299 = vpop.f32.mrb[0].mxu0
        %v8300 = vadd.f32 0.0, %v8299
        %v8301 = vpop.f32.mrb[0].mxu0
        %8302 = vmatprep.mubr.bf16.mxu0 0
        %8303 = vmatmul.mubr.bf16.gmra.mrb[0].mxu0 %v1922
        %v8304 = vpop.f32.mrb[0].mxu0
        %v8305 = vadd.f32 0.0, %v8304
        %v8306 = vpop.f32.mrb[0].mxu0
        %v8307 = vpop.f32.mrb[0].mxu0
        %v8308 = vadd.f32 0.0, %v8307
        %v8309 = vpop.f32.mrb[0].mxu0
        %8310 = vmatprep.mubr.bf16.mxu0 0
        %8311 = vmatmul.mubr.bf16.gmra.mrb[0].mxu0 %v1923
        %v8312 = vpop.f32.mrb[0].mxu0
        %v8313 = vadd.f32 0.0, %v8312
        %v8314 = vpop.f32.mrb[0].mxu0
        %v8315 = vpop.f32.mrb[0].mxu0
        %v8316 = vadd.f32 0.0, %v8315
        %v8317 = vpop.f32.mrb[0].mxu0
        %8318 = vmatprep.mubr.bf16.mxu0 0
        %8319 = vmatmul.mubr.bf16.gmra.mrb[0].mxu0 %v1924
        %v8320 = vpop.f32.mrb[0].mxu0
        %v8321 = vadd.f32 0.0, %v8320
        %v8322 = vpop.f32.mrb[0].mxu0
        %v8323 = vpop.f32.mrb[0].mxu0
        %v8324 = vadd.f32 0.0, %v8323
        %v8325 = vpop.f32.mrb[0].mxu0
        %8326 = vmatprep.mubr.bf16.mxu0 0
        %8327 = vmatmul.mubr.bf16.gmra.mrb[0].mxu0 %v1925
        %v8328 = vpop.f32.mrb[0].mxu0
        %v8329 = vadd.f32 0.0, %v8328
        %v8330 = vpop.f32.mrb[0].mxu0
        %v8331 = vpop.f32.mrb[0].mxu0
        %v8332 = vadd.f32 0.0, %v8331
        %v8333 = vpop.f32.mrb[0].mxu0
        %8334 = vmatprep.mubr.bf16.mxu0 0
        %8335 = vmatmul.mubr.bf16.gmra.mrb[0].mxu0 %v1926
        %v8336 = vpop.f32.mrb[0].mxu0
        %v8337 = vadd.f32 0.0, %v8336
        %v8338 = vpop.f32.mrb[0].mxu0
        %v8339 = vpop.f32.mrb[0].mxu0
        %v8340 = vadd.f32 0.0, %v8339
        %v8341 = vpop.f32.mrb[0].mxu0
        %8342 = vmatprep.mubr.bf16.mxu0 0
        %8343 = vmatmul.mubr.bf16.gmra.mrb[0].mxu0 %v1927
        %v8344 = vpop.f32.mrb[0].mxu0
        %v8345 = vadd.f32 0.0, %v8344
        %v8346 = vpop.f32.mrb[0].mxu0
        %v8347 = vpop.f32.mrb[0].mxu0
        %v8348 = vadd.f32 0.0, %v8347
        %v8349 = vpop.f32.mrb[0].mxu0
        %8350 = vmatprep.mubr.bf16.mxu0 0
        %8351 = vmatmul.mubr.bf16.gmra.mrb[0].mxu0 %v1928
        %v8352 = vpop.f32.mrb[0].mxu0
        %v8353 = vadd.f32 0.0, %v8352
        %v8354 = vpop.f32.mrb[0].mxu0
        %v8355 = vpop.f32.mrb[0].mxu0
        %v8356 = vadd.f32 0.0, %v8355
        %v8357 = vpop.f32.mrb[0].mxu0
        %8358 = vmatprep.mubr.bf16.mxu0 0
        %8359 = vmatmul.mubr.bf16.gmra.mrb[0].mxu0 %v1929
        %v8360 = vpop.f32.mrb[0].mxu0
        %v8361 = vadd.f32 0.0, %v8360
        %v8362 = vpop.f32.mrb[0].mxu0
        %v8363 = vpop.f32.mrb[0].mxu0
        %v8364 = vadd.f32 0.0, %v8363
        %v8365 = vpop.f32.mrb[0].mxu0
        %8366 = vmatprep.mubr.bf16.mxu0 0
        %8367 = vmatmul.mubr.bf16.gmra.mrb[0].mxu0 %v1930
        %v8368 = vpop.f32.mrb[0].mxu0
        %v8369 = vadd.f32 0.0, %v8368
        %v8370 = vpop.f32.mrb[0].mxu0
        %v8371 = vpop.f32.mrb[0].mxu0
        %v8372 = vadd.f32 0.0, %v8371
        %v8373 = vpop.f32.mrb[0].mxu0
        %8374 = vmatprep.mubr.bf16.mxu0 0
        %8375 = vmatmul.mubr.bf16.gmra.mrb[0].mxu0 %v1931
        %v8376 = vpop.f32.mrb[0].mxu0
        %v8377 = vadd.f32 0.0, %v8376
        %v8378 = vpop.f32.mrb[0].mxu0
        %v8379 = vpop.f32.mrb[0].mxu0
        %v8380 = vadd.f32 0.0, %v8379
        %v8381 = vpop.f32.mrb[0].mxu0
        %8382 = vmatprep.mubr.bf16.mxu0 0
        %8383 = vmatmul.mubr.bf16.gmra.mrb[0].mxu0 %v1932
        %v8384 = vpop.f32.mrb[0].mxu0
        %v8385 = vadd.f32 0.0, %v8384
        %v8386 = vpop.f32.mrb[0].mxu0
        %v8387 = vpop.f32.mrb[0].mxu0
        %v8388 = vadd.f32 0.0, %v8387
        %v8389 = vpop.f32.mrb[0].mxu0
        %8390 = vmatprep.mubr.bf16.mxu0 0
        %8391 = vmatmul.mubr.bf16.gmra.mrb[0].mxu0 %v1933
        %v8392 = vpop.f32.mrb[0].mxu0
        %v8393 = vadd.f32 0.0, %v8392
        %v8394 = vpop.f32.mrb[0].mxu0
        %v8395 = vpop.f32.mrb[0].mxu0
        %v8396 = vadd.f32 0.0, %v8395
        %v8397 = vpop.f32.mrb[0].mxu0
        %8398 = vmatprep.mubr.bf16.mxu0 0
        %8399 = vmatmul.mubr.bf16.gmra.mrb[0].mxu0 %v1934
        %v8400 = vpop.f32.mrb[0].mxu0
        %v8401 = vadd.f32 0.0, %v8400
        %v8402 = vpop.f32.mrb[0].mxu0
        %v8403 = vpop.f32.mrb[0].mxu0
        %v8404 = vadd.f32 0.0, %v8403
        %v8405 = vpop.f32.mrb[0].mxu0
        %8406 = vmatprep.mubr.bf16.mxu0 0
        %8407 = vmatmul.mubr.bf16.gmra.mrb[0].mxu0 %v1935
        %v8408 = vpop.f32.mrb[0].mxu0
        %v8409 = vadd.f32 0.0, %v8408
        %v8410 = vpop.f32.mrb[0].mxu0
        %v8411 = vpop.f32.mrb[0].mxu0
        %v8412 = vadd.f32 0.0, %v8411
        %v8413 = vpop.f32.mrb[0].mxu0
        %8414 = vmatprep.mubr.bf16.mxu0 0
        %8415 = vmatmul.mubr.bf16.gmra.mrb[0].mxu0 %v1936
        %v8416 = vpop.f32.mrb[0].mxu0
        %v8417 = vadd.f32 0.0, %v8416
        %v8418 = vpop.f32.mrb[0].mxu0
        %v8419 = vpop.f32.mrb[0].mxu0
        %v8420 = vadd.f32 0.0, %v8419
        %v8421 = vpop.f32.mrb[0].mxu0
        %8422 = vmatprep.mubr.bf16.mxu0 0
        %8423 = vmatmul.mubr.bf16.gmra.mrb[0].mxu0 %v1937
        %v8424 = vpop.f32.mrb[0].mxu0
        %v8425 = vadd.f32 0.0, %v8424
        %v8426 = vpop.f32.mrb[0].mxu0
        %v8427 = vpop.f32.mrb[0].mxu0
        %v8428 = vadd.f32 0.0, %v8427
        %v8429 = vpop.f32.mrb[0].mxu0
        %8430 = vmatprep.mubr.bf16.mxu0 0
        %8431 = vmatmul.mubr.bf16.gmra.mrb[0].mxu0 %v1938
        %v8432 = vpop.f32.mrb[0].mxu0
        %v8433 = vadd.f32 0.0, %v8432
        %v8434 = vpop.f32.mrb[0].mxu0
        %v8435 = vpop.f32.mrb[0].mxu0
        %v8436 = vadd.f32 0.0, %v8435
        %v8437 = vpop.f32.mrb[0].mxu0
        %8438 = vmatprep.mubr.bf16.mxu0 0
        %8439 = vmatmul.mubr.bf16.gmra.mrb[0].mxu0 %v1939
        %v8440 = vpop.f32.mrb[0].mxu0
        %v8441 = vadd.f32 0.0, %v8440
        %v8442 = vpop.f32.mrb[0].mxu0
        %v8443 = vpop.f32.mrb[0].mxu0
        %v8444 = vadd.f32 0.0, %v8443
        %v8445 = vpop.f32.mrb[0].mxu0
        %8446 = vmatprep.mubr.bf16.mxu0 0
        %8447 = vmatmul.mubr.bf16.gmra.mrb[0].mxu0 %v1940
        %v8448 = vpop.f32.mrb[0].mxu0
        %v8449 = vadd.f32 0.0, %v8448
        %v8450 = vpop.f32.mrb[0].mxu0
        %v8451 = vpop.f32.mrb[0].mxu0
        %v8452 = vadd.f32 0.0, %v8451
        %v8453 = vpop.f32.mrb[0].mxu0
        %8454 = vmatprep.mubr.bf16.mxu0 0
        %8455 = vmatmul.mubr.bf16.gmra.mrb[0].mxu0 %v1941
        %v8456 = vpop.f32.mrb[0].mxu0
        %v8457 = vadd.f32 0.0, %v8456
        %v8458 = vpop.f32.mrb[0].mxu0
        %v8459 = vpop.f32.mrb[0].mxu0
        %v8460 = vadd.f32 0.0, %v8459
        %v8461 = vpop.f32.mrb[0].mxu0
        %8462 = vmatprep.mubr.bf16.mxu0 0
        %8463 = vmatmul.mubr.bf16.gmra.mrb[0].mxu0 %v1942
        %v8464 = vpop.f32.mrb[0].mxu0
        %v8465 = vadd.f32 0.0, %v8464
        %v8466 = vpop.f32.mrb[0].mxu0
        %v8467 = vpop.f32.mrb[0].mxu0
        %v8468 = vadd.f32 0.0, %v8467
        %v8469 = vpop.f32.mrb[0].mxu0
        %8470 = vmatprep.mubr.bf16.mxu0 0
        %8471 = vmatmul.mubr.bf16.gmra.mrb[0].mxu0 %v1943
        %v8472 = vpop.f32.mrb[0].mxu0
        %v8473 = vadd.f32 0.0, %v8472
        %v8474 = vpop.f32.mrb[0].mxu0
        %v8475 = vpop.f32.mrb[0].mxu0
        %v8476 = vadd.f32 0.0, %v8475
        %v8477 = vpop.f32.mrb[0].mxu0
        %8478 = vmatprep.mubr.bf16.mxu0 0
        %8479 = vmatmul.mubr.bf16.gmra.mrb[0].mxu0 %v1944
        %v8480 = vpop.f32.mrb[0].mxu0
        %v8481 = vadd.f32 0.0, %v8480
        %v8482 = vpop.f32.mrb[0].mxu0
        %v8483 = vpop.f32.mrb[0].mxu0
        %v8484 = vadd.f32 0.0, %v8483
        %v8485 = vpop.f32.mrb[0].mxu0
        %8486 = vmatprep.mubr.bf16.mxu0 0
        %8487 = vmatmul.mubr.bf16.gmra.mrb[0].mxu0 %v1945
        %v8488 = vpop.f32.mrb[0].mxu0
        %v8489 = vadd.f32 0.0, %v8488
        %v8490 = vpop.f32.mrb[0].mxu0
        %v8491 = vpop.f32.mrb[0].mxu0
        %v8492 = vadd.f32 0.0, %v8491
        %v8493 = vpop.f32.mrb[0].mxu0
        %8494 = vmatprep.mubr.bf16.mxu0 0
        %8495 = vmatmul.mubr.bf16.gmra.mrb[0].mxu0 %v1946
        %v8496 = vpop.f32.mrb[0].mxu0
        %v8497 = vadd.f32 0.0, %v8496
        %v8498 = vpop.f32.mrb[0].mxu0
        %v8499 = vpop.f32.mrb[0].mxu0
        %v8500 = vadd.f32 0.0, %v8499
        %v8501 = vpop.f32.mrb[0].mxu0
        %8502 = vmatprep.mubr.bf16.mxu0 0
        %8503 = vmatmul.mubr.bf16.gmra.mrb[0].mxu0 %v1947
        %v8504 = vpop.f32.mrb[0].mxu0
        %v8505 = vadd.f32 0.0, %v8504
        %v8506 = vpop.f32.mrb[0].mxu0
        %v8507 = vpop.f32.mrb[0].mxu0
        %v8508 = vadd.f32 0.0, %v8507
        %v8509 = vpop.f32.mrb[0].mxu0
        %8510 = vmatprep.mubr.bf16.mxu0 0
        %8511 = vmatmul.mubr.bf16.gmra.mrb[0].mxu0 %v1948
        %v8512 = vpop.f32.mrb[0].mxu0
        %v8513 = vadd.f32 0.0, %v8512
        %v8514 = vpop.f32.mrb[0].mxu0
        %v8515 = vpop.f32.mrb[0].mxu0
        %v8516 = vadd.f32 0.0, %v8515
        %v8517 = vpop.f32.mrb[0].mxu0
        %8518 = vmatprep.mubr.bf16.mxu0 0
        %8519 = vmatmul.mubr.bf16.gmra.mrb[0].mxu0 %v1949
        %v8520 = vpop.f32.mrb[0].mxu0
        %v8521 = vadd.f32 0.0, %v8520
        %v8522 = vpop.f32.mrb[0].mxu0
        %v8523 = vpop.f32.mrb[0].mxu0
        %v8524 = vadd.f32 0.0, %v8523
        %v8525 = vpop.f32.mrb[0].mxu0
        %8526 = vmatprep.mubr.bf16.mxu0 0
        %8527 = vmatmul.mubr.bf16.gmra.mrb[0].mxu0 %v1950
        %v8528 = vpop.f32.mrb[0].mxu0
        %v8529 = vadd.f32 0.0, %v8528
        %v8530 = vpop.f32.mrb[0].mxu0
        %v8531 = vpop.f32.mrb[0].mxu0
        %v8532 = vadd.f32 0.0, %v8531
        %v8533 = vpop.f32.mrb[0].mxu0
        %8534 = vmatprep.mubr.bf16.mxu0 0
        %8535 = vmatmul.mubr.bf16.gmra.mrb[0].mxu0 %v1951
        %v8536 = vpop.f32.mrb[0].mxu0
        %v8537 = vadd.f32 0.0, %v8536
        %v8538 = vpop.f32.mrb[0].mxu0
        %v8539 = vpop.f32.mrb[0].mxu0
        %v8540 = vadd.f32 0.0, %v8539
        %v8541 = vpop.f32.mrb[0].mxu0
        %8542 = vmatprep.mubr.bf16.mxu0 0
        %8543 = vmatmul.mubr.bf16.gmra.mrb[0].mxu0 %v1952
        %v8544 = vpop.f32.mrb[0].mxu0
        %v8545 = vadd.f32 0.0, %v8544
        %v8546 = vpop.f32.mrb[0].mxu0
        %v8547 = vpop.f32.mrb[0].mxu0
        %v8548 = vadd.f32 0.0, %v8547
        %v8549 = vpop.f32.mrb[0].mxu0
        %8550 = vmatprep.mubr.bf16.mxu0 0
        %8551 = vmatmul.mubr.bf16.gmra.mrb[0].mxu0 %v1953
        %v8552 = vpop.f32.mrb[0].mxu0
        %v8553 = vadd.f32 0.0, %v8552
        %v8554 = vpop.f32.mrb[0].mxu0
        %v8555 = vpop.f32.mrb[0].mxu0
        %v8556 = vadd.f32 0.0, %v8555
        %v8557 = vpop.f32.mrb[0].mxu0
        %8558 = vmatprep.mubr.bf16.mxu0 0
        %8559 = vmatmul.mubr.bf16.gmra.mrb[0].mxu0 %v1954
        %v8560 = vpop.f32.mrb[0].mxu0
        %v8561 = vadd.f32 0.0, %v8560
        %v8562 = vpop.f32.mrb[0].mxu0
        %v8563 = vpop.f32.mrb[0].mxu0
        %v8564 = vadd.f32 0.0, %v8563
        %v8565 = vpop.f32.mrb[0].mxu0
        %8566 = vmatprep.mubr.bf16.mxu0 0
        %8567 = vmatmul.mubr.bf16.gmra.mrb[0].mxu0 %v1955
        %v8568 = vpop.f32.mrb[0].mxu0
        %v8569 = vadd.f32 0.0, %v8568
        %v8570 = vpop.f32.mrb[0].mxu0
        %v8571 = vpop.f32.mrb[0].mxu0
        %v8572 = vadd.f32 0.0, %v8571
        %v8573 = vpop.f32.mrb[0].mxu0
        %8574 = vmatprep.mubr.bf16.mxu0 0
        %8575 = vmatmul.mubr.bf16.gmra.mrb[0].mxu0 %v1956
        %v8576 = vpop.f32.mrb[0].mxu0
        %v8577 = vadd.f32 0.0, %v8576
        %v8578 = vpop.f32.mrb[0].mxu0
        %v8579 = vpop.f32.mrb[0].mxu0
        %v8580 = vadd.f32 0.0, %v8579
        %v8581 = vpop.f32.mrb[0].mxu0
        %8582 = vmatprep.mubr.bf16.mxu0 0
        %8583 = vmatmul.mubr.bf16.gmra.mrb[0].mxu0 %v1957
        %v8584 = vpop.f32.mrb[0].mxu0
        %v8585 = vadd.f32 0.0, %v8584
        %v8586 = vpop.f32.mrb[0].mxu0
        %v8587 = vpop.f32.mrb[0].mxu0
        %v8588 = vadd.f32 0.0, %v8587
        %v8589 = vpop.f32.mrb[0].mxu0
        %8590 = vmatprep.mubr.bf16.mxu0 0
        %8591 = vmatmul.mubr.bf16.gmra.mrb[0].mxu0 %v1958
        %v8592 = vpop.f32.mrb[0].mxu0
        %v8593 = vadd.f32 0.0, %v8592
        %v8594 = vpop.f32.mrb[0].mxu0
        %v8595 = vpop.f32.mrb[0].mxu0
        %v8596 = vadd.f32 0.0, %v8595
        %v8597 = vpop.f32.mrb[0].mxu0
        %8598 = vmatprep.mubr.bf16.mxu0 0
        %8599 = vmatmul.mubr.bf16.gmra.mrb[0].mxu0 %v1959
        %v8600 = vpop.f32.mrb[0].mxu0
        %v8601 = vadd.f32 0.0, %v8600
        %v8602 = vpop.f32.mrb[0].mxu0
        %v8603 = vpop.f32.mrb[0].mxu0
        %v8604 = vadd.f32 0.0, %v8603
        %v8605 = vpop.f32.mrb[0].mxu0
        %8606 = vmatprep.mubr.bf16.mxu0 0
        %8607 = vmatmul.mubr.bf16.gmra.mrb[0].mxu0 %v1960
        %v8608 = vpop.f32.mrb[0].mxu0
        %v8609 = vadd.f32 0.0, %v8608
        %v8610 = vpop.f32.mrb[0].mxu0
        %v8611 = vpop.f32.mrb[0].mxu0
        %v8612 = vadd.f32 0.0, %v8611
        %v8613 = vpop.f32.mrb[0].mxu0
        %8614 = vmatprep.mubr.bf16.mxu0 0
        %8615 = vmatmul.mubr.bf16.gmra.mrb[0].mxu0 %v1961
        %v8616 = vpop.f32.mrb[0].mxu0
        %v8617 = vadd.f32 0.0, %v8616
        %v8618 = vpop.f32.mrb[0].mxu0
        %v8619 = vpop.f32.mrb[0].mxu0
        %v8620 = vadd.f32 0.0, %v8619
        %v8621 = vpop.f32.mrb[0].mxu0
        %8622 = vmatprep.mubr.bf16.mxu0 0
        %8623 = vmatmul.mubr.bf16.gmra.mrb[0].mxu0 %v1962
        %v8624 = vpop.f32.mrb[0].mxu0
        %v8625 = vadd.f32 0.0, %v8624
        %v8626 = vpop.f32.mrb[0].mxu0
        %v8627 = vpop.f32.mrb[0].mxu0
        %v8628 = vadd.f32 0.0, %v8627
        %v8629 = vpop.f32.mrb[0].mxu0
        %8630 = vmatprep.mubr.bf16.mxu0 0
        %8631 = vmatmul.mubr.bf16.gmra.mrb[0].mxu0 %v1963
        %v8632 = vpop.f32.mrb[0].mxu0
        %v8633 = vadd.f32 0.0, %v8632
        %v8634 = vpop.f32.mrb[0].mxu0
        %v8635 = vpop.f32.mrb[0].mxu0
        %v8636 = vadd.f32 0.0, %v8635
        %v8637 = vpop.f32.mrb[0].mxu0
        %8638 = vmatprep.mubr.bf16.mxu0 0
        %8639 = vmatmul.mubr.bf16.gmra.mrb[0].mxu0 %v1964
        %v8640 = vpop.f32.mrb[0].mxu0
        %v8641 = vadd.f32 0.0, %v8640
        %v8642 = vpop.f32.mrb[0].mxu0
        %v8643 = vpop.f32.mrb[0].mxu0
        %v8644 = vadd.f32 0.0, %v8643
        %v8645 = vpop.f32.mrb[0].mxu0
        %8646 = vmatprep.mubr.bf16.mxu0 0
        %8647 = vmatmul.mubr.bf16.gmra.mrb[0].mxu0 %v1965
        %v8648 = vpop.f32.mrb[0].mxu0
        %v8649 = vadd.f32 0.0, %v8648
        %v8650 = vpop.f32.mrb[0].mxu0
        %v8651 = vpop.f32.mrb[0].mxu0
        %v8652 = vadd.f32 0.0, %v8651
        %v8653 = vpop.f32.mrb[0].mxu0
        %8654 = vmatprep.mubr.bf16.mxu0 0
        %8655 = vmatmul.mubr.bf16.gmra.mrb[0].mxu0 %v1966
        %v8656 = vpop.f32.mrb[0].mxu0
        %v8657 = vadd.f32 0.0, %v8656
        %v8658 = vpop.f32.mrb[0].mxu0
        %v8659 = vpop.f32.mrb[0].mxu0
        %v8660 = vadd.f32 0.0, %v8659
        %v8661 = vpop.f32.mrb[0].mxu0
        %8662 = vmatprep.mubr.bf16.mxu0 0
        %8663 = vmatmul.mubr.bf16.gmra.mrb[0].mxu0 %v1967
        %v8664 = vpop.f32.mrb[0].mxu0
        %v8665 = vadd.f32 0.0, %v8664
        %v8666 = vpop.f32.mrb[0].mxu0
        %v8667 = vpop.f32.mrb[0].mxu0
        %v8668 = vadd.f32 0.0, %v8667
        %v8669 = vpop.f32.mrb[0].mxu0
        %8670 = vmatprep.mubr.bf16.mxu0 0
        %8671 = vmatmul.mubr.bf16.gmra.mrb[0].mxu0 %v1968
        %v8672 = vpop.f32.mrb[0].mxu0
        %v8673 = vadd.f32 0.0, %v8672
        %v8674 = vpop.f32.mrb[0].mxu0
        %v8675 = vpop.f32.mrb[0].mxu0
        %v8676 = vadd.f32 0.0, %v8675
        %v8677 = vpop.f32.mrb[0].mxu0
        %8678 = vmatprep.mubr.bf16.mxu0 0
        %8679 = vmatmul.mubr.bf16.gmra.mrb[0].mxu0 %v1969
        %v8680 = vpop.f32.mrb[0].mxu0
        %v8681 = vadd.f32 0.0, %v8680
        %v8682 = vpop.f32.mrb[0].mxu0
        %v8683 = vpop.f32.mrb[0].mxu0
        %v8684 = vadd.f32 0.0, %v8683
        %v8685 = vpop.f32.mrb[0].mxu0
        %8686 = vmatprep.mubr.bf16.mxu0 0
        %8687 = vmatmul.mubr.bf16.gmra.mrb[0].mxu0 %v1970
        %v8688 = vpop.f32.mrb[0].mxu0
        %v8689 = vadd.f32 0.0, %v8688
        %v8690 = vpop.f32.mrb[0].mxu0
        %v8691 = vpop.f32.mrb[0].mxu0
        %v8692 = vadd.f32 0.0, %v8691
        %v8693 = vpop.f32.mrb[0].mxu0
        %8694 = vmatprep.mubr.bf16.mxu0 0
        %8695 = vmatmul.mubr.bf16.gmra.mrb[0].mxu0 %v1971
        %v8696 = vpop.f32.mrb[0].mxu0
        %v8697 = vadd.f32 0.0, %v8696
        %v8698 = vpop.f32.mrb[0].mxu0
        %v8699 = vpop.f32.mrb[0].mxu0
        %v8700 = vadd.f32 0.0, %v8699
        %v8701 = vpop.f32.mrb[0].mxu0
        %8702 = vmatprep.mubr.bf16.mxu0 0
        %8703 = vmatmul.mubr.bf16.gmra.mrb[0].mxu0 %v1972
        %v8704 = vpop.f32.mrb[0].mxu0
        %v8705 = vadd.f32 0.0, %v8704
        %v8706 = vpop.f32.mrb[0].mxu0
        %v8707 = vpop.f32.mrb[0].mxu0
        %v8708 = vadd.f32 0.0, %v8707
        %v8709 = vpop.f32.mrb[0].mxu0
        %8710 = vmatprep.mubr.bf16.mxu0 0
        %8711 = vmatmul.mubr.bf16.gmra.mrb[0].mxu0 %v1973
        %v8712 = vpop.f32.mrb[0].mxu0
        %v8713 = vadd.f32 0.0, %v8712
        %v8714 = vpop.f32.mrb[0].mxu0
        %v8715 = vpop.f32.mrb[0].mxu0
        %v8716 = vadd.f32 0.0, %v8715
        %v8717 = vpop.f32.mrb[0].mxu0
        %8718 = vmatprep.mubr.bf16.mxu0 0
        %8719 = vmatmul.mubr.bf16.gmra.mrb[0].mxu0 %v1974
        %v8720 = vpop.f32.mrb[0].mxu0
        %v8721 = vadd.f32 0.0, %v8720
        %v8722 = vpop.f32.mrb[0].mxu0
        %v8723 = vpop.f32.mrb[0].mxu0
        %v8724 = vadd.f32 0.0, %v8723
        %v8725 = vpop.f32.mrb[0].mxu0
        %8726 = vmatprep.mubr.bf16.mxu0 0
        %8727 = vmatmul.mubr.bf16.gmra.mrb[0].mxu0 %v1975
        %v8728 = vpop.f32.mrb[0].mxu0
        %v8729 = vadd.f32 0.0, %v8728
        %v8730 = vpop.f32.mrb[0].mxu0
        %v8731 = vpop.f32.mrb[0].mxu0
        %v8732 = vadd.f32 0.0, %v8731
        %v8733 = vpop.f32.mrb[0].mxu0
        %8734 = vmatprep.mubr.bf16.mxu0 0
        %8735 = vmatmul.mubr.bf16.gmra.mrb[0].mxu0 %v5870
        %v8736 = vpop.f32.mrb[0].mxu0
        %v8737 = vadd.f32 0.0, %v8736
        %v8738 = vpop.f32.mrb[0].mxu0
        %v8739 = vpop.f32.mrb[0].mxu0
        %v8740 = vadd.f32 0.0, %v8739
        %v8741 = vpop.f32.mrb[0].mxu0
        %8742 = vmatprep.mubr.bf16.mxu0 0
        %8743 = vmatmul.mubr.bf16.gmra.mrb[0].mxu0 %v5871
        %v8744 = vpop.f32.mrb[0].mxu0
        %v8745 = vadd.f32 0.0, %v8744
        %v8746 = vpop.f32.mrb[0].mxu0
        %v8747 = vpop.f32.mrb[0].mxu0
        %v8748 = vadd.f32 0.0, %v8747
        %v8749 = vpop.f32.mrb[0].mxu0
        %8750 = vmatprep.mubr.bf16.mxu0 0
        %8751 = vmatmul.mubr.bf16.gmra.mrb[0].mxu0 %v8170
        %v8752 = vpop.f32.mrb[0].mxu0
        %v8753 = vadd.f32 0.0, %v8752
        %v8754 = vpop.f32.mrb[0].mxu0
        %v8755 = vpop.f32.mrb[0].mxu0
        %v8756 = vadd.f32 0.0, %v8755
        %v8757 = vpop.f32.mrb[0].mxu0
        %8758 = vmatprep.mubr.bf16.mxu0 0
        %8759 = vmatmul.mubr.bf16.gmra.mrb[0].mxu0 %v8171
        %v8760 = vpop.f32.mrb[0].mxu0
        %v8761 = vadd.f32 0.0, %v8760
        %v8762 = vpop.f32.mrb[0].mxu0
        %v8763 = vpop.f32.mrb[0].mxu0
        %v8764 = vadd.f32 0.0, %v8763
        %v8765 = vpop.f32.mrb[0].mxu0
        %8766 = vdwg.mxu0
        %v8767 = vadd.f32 %v7977, %v8257
        %v8768 = vadd.f32 %v7978, %v8260
        %v8769 = vadd.f32 %v7979, %v8265
        %v8770 = vadd.f32 %v7980, %v8268
        %v8771 = vadd.f32 %v7981, %v8273
        %v8772 = vadd.f32 %v7982, %v8276
        %v8773 = vadd.f32 %v7983, %v8281
        %v8774 = vadd.f32 %v7984, %v8284
        %v8775 = vadd.f32 %v7985, %v8289
        %v8776 = vadd.f32 %v7986, %v8292
        %v8777 = vadd.f32 %v7987, %v8297
        %v8778 = vadd.f32 %v7988, %v8300
        %v8779 = vadd.f32 %v7989, %v8305
        %v8780 = vadd.f32 %v7990, %v8308
        %v8781 = vadd.f32 %v7991, %v8313
        %v8782 = vadd.f32 %v7992, %v8316
        %v8783 = vadd.f32 %v7993, %v8321
        %v8784 = vadd.f32 %v7994, %v8324
        %v8785 = vadd.f32 %v7995, %v8329
        %v8786 = vadd.f32 %v7996, %v8332
        %v8787 = vadd.f32 %v7997, %v8337
        %v8788 = vadd.f32 %v7998, %v8340
        %v8789 = vadd.f32 %v7999, %v8345
        %v8790 = vadd.f32 %v8000, %v8348
        %v8791 = vadd.f32 %v8001, %v8353
        %v8792 = vadd.f32 %v8002, %v8356
        %v8793 = vadd.f32 %v8003, %v8361
        %v8794 = vadd.f32 %v8004, %v8364
        %v8795 = vadd.f32 %v8005, %v8369
        %v8796 = vadd.f32 %v8006, %v8372
        %v8797 = vadd.f32 %v8007, %v8377
        %v8798 = vadd.f32 %v8008, %v8380
        %v8799 = vadd.f32 %v8009, %v8385
        %v8800 = vadd.f32 %v8010, %v8388
        %v8801 = vadd.f32 %v8011, %v8393
        %v8802 = vadd.f32 %v8012, %v8396
        %v8803 = vadd.f32 %v8013, %v8401
        %v8804 = vadd.f32 %v8014, %v8404
        %v8805 = vadd.f32 %v8015, %v8409
        %v8806 = vadd.f32 %v8016, %v8412
        %v8807 = vadd.f32 %v8017, %v8417
        %v8808 = vadd.f32 %v8018, %v8420
        %v8809 = vadd.f32 %v8019, %v8425
        %v8810 = vadd.f32 %v8020, %v8428
        %v8811 = vadd.f32 %v8021, %v8433
        %v8812 = vadd.f32 %v8022, %v8436
        %v8813 = vadd.f32 %v8023, %v8441
        %v8814 = vadd.f32 %v8024, %v8444
        %v8815 = vadd.f32 %v8025, %v8449
        %v8816 = vadd.f32 %v8026, %v8452
        %v8817 = vadd.f32 %v8027, %v8457
        %v8818 = vadd.f32 %v8028, %v8460
        %v8819 = vadd.f32 %v8029, %v8465
        %v8820 = vadd.f32 %v8030, %v8468
        %v8821 = vadd.f32 %v8031, %v8473
        %v8822 = vadd.f32 %v8032, %v8476
        %v8823 = vadd.f32 %v8033, %v8481
        %v8824 = vadd.f32 %v8034, %v8484
        %v8825 = vadd.f32 %v8035, %v8489
        %v8826 = vadd.f32 %v8036, %v8492
        %v8827 = vadd.f32 %v8037, %v8497
        %v8828 = vadd.f32 %v8038, %v8500
        %v8829 = vadd.f32 %v8039, %v8505
        %v8830 = vadd.f32 %v8040, %v8508
        %v8831 = vadd.f32 %v8041, %v8513
        %v8832 = vadd.f32 %v8042, %v8516
        %v8833 = vadd.f32 %v8043, %v8521
        %v8834 = vadd.f32 %v8044, %v8524
        %v8835 = vadd.f32 %v8045, %v8529
        %v8836 = vadd.f32 %v8046, %v8532
        %v8837 = vadd.f32 %v8047, %v8537
        %v8838 = vadd.f32 %v8048, %v8540
        %v8839 = vadd.f32 %v8049, %v8545
        %v8840 = vadd.f32 %v8050, %v8548
        %v8841 = vadd.f32 %v8051, %v8553
        %v8842 = vadd.f32 %v8052, %v8556
        %v8843 = vadd.f32 %v8053, %v8561
        %v8844 = vadd.f32 %v8054, %v8564
        %v8845 = vadd.f32 %v8055, %v8569
        %v8846 = vadd.f32 %v8056, %v8572
        %v8847 = vadd.f32 %v8057, %v8577
        %v8848 = vadd.f32 %v8058, %v8580
        %v8849 = vadd.f32 %v8059, %v8585
        %v8850 = vadd.f32 %v8060, %v8588
        %v8851 = vadd.f32 %v8061, %v8593
        %v8852 = vadd.f32 %v8062, %v8596
        %v8853 = vadd.f32 %v8063, %v8601
        %v8854 = vadd.f32 %v8064, %v8604
        %v8855 = vadd.f32 %v8065, %v8609
        %v8856 = vadd.f32 %v8066, %v8612
        %v8857 = vadd.f32 %v8067, %v8617
        %v8858 = vadd.f32 %v8068, %v8620
        %v8859 = vadd.f32 %v8069, %v8625
        %v8860 = vadd.f32 %v8070, %v8628
        %v8861 = vadd.f32 %v8071, %v8633
        %v8862 = vadd.f32 %v8072, %v8636
        %v8863 = vadd.f32 %v8073, %v8641
        %v8864 = vadd.f32 %v8074, %v8644
        %v8865 = vadd.f32 %v8075, %v8649
        %v8866 = vadd.f32 %v8076, %v8652
        %v8867 = vadd.f32 %v8077, %v8657
        %v8868 = vadd.f32 %v8078, %v8660
        %v8869 = vadd.f32 %v8079, %v8665
        %v8870 = vadd.f32 %v8080, %v8668
        %v8871 = vadd.f32 %v8081, %v8673
        %v8872 = vadd.f32 %v8082, %v8676
        %v8873 = vadd.f32 %v8083, %v8681
        %v8874 = vadd.f32 %v8084, %v8684
        %v8875 = vadd.f32 %v8085, %v8689
        %v8876 = vadd.f32 %v8086, %v8692
        %v8877 = vadd.f32 %v8087, %v8697
        %v8878 = vadd.f32 %v8088, %v8700
        %v8879 = vadd.f32 %v8089, %v8705
        %v8880 = vadd.f32 %v8090, %v8708
        %v8881 = vadd.f32 %v8091, %v8713
        %v8882 = vadd.f32 %v8092, %v8716
        %v8883 = vadd.f32 %v8093, %v8721
        %v8884 = vadd.f32 %v8094, %v8724
        %v8885 = vadd.f32 %v8095, %v8729
        %v8886 = vadd.f32 %v8096, %v8732
        %v8887 = vadd.f32 %v8097, %v8737
        %v8888 = vadd.f32 %v8098, %v8740
        %v8889 = vadd.f32 %v8099, %v8745
        %v8890 = vadd.f32 %v8100, %v8748
        %v8891 = vadd.f32 %v8101, %v8753
        %v8892 = vadd.f32 %v8102, %v8756
        %v8893 = vadd.f32 %v8103, %v8761
        %v8894 = vadd.f32 %v8104, %v8764
        %v8896 = vrot.slane %v335, 5
        %v8897 = vrot.slane %v8896, 4
        %v8898 = vrot.slane %v336, 5
        %v8899 = vsel %vm3644, %v8897, %v8898
        %v8900 = vrot.slane %v8898, 4
        %v8901 = vrot.slane %v337, 5
        %v8902 = vsel %vm3644, %v8900, %v8901
        %v8903 = vrot.slane %v8901, 4
        %v8904 = vrot.slane %v338, 5
        %v8905 = vsel %vm3644, %v8903, %v8904
        %v8906 = vrot.slane %v8904, 4
        %v8907 = vrot.slane %v339, 5
        %v8908 = vsel %vm3644, %v8906, %v8907
        %s8909 = scalar_lea.vmem %s1, 512
        %v8910 = vld [vmem:[%s8909] sm:$0xf]
        %v8911 = vld [vmem:[%s8909 + $0x4] sm:$0xf]
        %v8912 = vld [vmem:[%s8909 + $0x8] sm:$0xf]
        %v8913 = vld [vmem:[%s8909 + $0xc] sm:$0xf]
        %v8914 = vld [vmem:[%s8909 + $0x10] sm:$0xf]
        %v8915 = vld [vmem:[%s8909 + $0x14] sm:$0xf]
        %v8916 = vld [vmem:[%s8909 + $0x18] sm:$0xf]
        %v8917 = vld [vmem:[%s8909 + $0x1c] sm:$0xf]
        %v8918 = vld [vmem:[%s8909 + $0x20] sm:$0xf]
        %v8919 = vld [vmem:[%s8909 + $0x24] sm:$0xf]
        %v8920 = vld [vmem:[%s8909 + $0x28] sm:$0xf]
        %v8921 = vld [vmem:[%s8909 + $0x2c] sm:$0xf]
        %v8922 = vld [vmem:[%s8909 + $0x30] sm:$0xf]
        %v8923 = vld [vmem:[%s8909 + $0x34] sm:$0xf]
        %v8924 = vld [vmem:[%s8909 + $0x38] sm:$0xf]
        %v8925 = vld [vmem:[%s8909 + $0x3c] sm:$0xf]
        %v8926 = vunpack.c.l.b16 %v8899
        %v8927 = vunpack.c.l.b16 %v8902
        %v8928 = vunpack.c.l.b16 %v8905
        %v8929 = vunpack.c.l.b16 %v8908
        %v8930 = vpack.c.b16 %v8927, %v8926
        %v8931 = vpack.c.b16 %v8929, %v8928
        %v8950 = vunpack.c.l.b16 %v8910
        %v8951 = vunpack.c.l.b16 %v8911
        %v8952 = vunpack.c.l.b16 %v8912
        %v8953 = vunpack.c.l.b16 %v8913
        %v8954 = vunpack.c.l.b16 %v8914
        %v8955 = vunpack.c.l.b16 %v8915
        %v8956 = vunpack.c.l.b16 %v8916
        %v8957 = vunpack.c.l.b16 %v8917
        %v8958 = vunpack.c.l.b16 %v8918
        %v8959 = vunpack.c.l.b16 %v8919
        %v8960 = vunpack.c.l.b16 %v8920
        %v8961 = vunpack.c.l.b16 %v8921
        %v8962 = vunpack.c.l.b16 %v8922
        %v8963 = vunpack.c.l.b16 %v8923
        %v8964 = vunpack.c.l.b16 %v8924
        %v8965 = vunpack.c.l.b16 %v8925
        %v8966 = vpack.c.b16 %v8951, %v8950
        %v8967 = vpack.c.b16 %v8953, %v8952
        %v8968 = vpack.c.b16 %v8955, %v8954
        %v8969 = vpack.c.b16 %v8957, %v8956
        %v8970 = vpack.c.b16 %v8959, %v8958
        %v8971 = vpack.c.b16 %v8961, %v8960
        %v8972 = vpack.c.b16 %v8963, %v8962
        %v8973 = vpack.c.b16 %v8965, %v8964
        %8982 = vmatprep.subr.bf16.mxu0 0
        %8983 = vmatpush1.bf16.msra.mxu0 %v8966
        %8984 = vmatprep.subr.bf16.mxu0 0
        %8985 = vmatpush1.bf16.msra.mxu0 %v8967
        %8986 = vmatprep.subr.bf16.mxu0 0
        %8987 = vmatpush1.bf16.msra.mxu0 %v8968
        %8988 = vmatprep.subr.bf16.mxu0 0
        %8989 = vmatpush1.bf16.msra.mxu0 %v8969
        %8990 = vmatprep.subr.bf16.mxu0 0
        %8991 = vmatpush1.bf16.msra.mxu0 %v8970
        %8992 = vmatprep.subr.bf16.mxu0 0
        %8993 = vmatpush1.bf16.msra.mxu0 %v8971
        %8994 = vmatprep.subr.bf16.mxu0 0
        %8995 = vmatpush1.bf16.msra.mxu0 %v8972
        %8996 = vmatprep.subr.bf16.mxu0 0
        %8997 = vmatpush1.bf16.msra.mxu0 %v8973
        %8998 = vmatprep.subr.bf16.mxu0 0
        %8999 = vmatpush1.bf16.msra.mxu0 0
        %9000 = vmatprep.subr.bf16.mxu0 0
        %9001 = vmatpush1.bf16.msra.mxu0 0
        %9002 = vmatprep.subr.bf16.mxu0 0
        %9003 = vmatpush1.bf16.msra.mxu0 0
        %9004 = vmatprep.subr.bf16.mxu0 0
        %9005 = vmatpush1.bf16.msra.mxu0 0
        %9006 = vmatprep.subr.bf16.mxu0 0
        %9007 = vmatpush1.bf16.msra.mxu0 0
        %9008 = vmatprep.subr.bf16.mxu0 0
        %9009 = vmatpush1.bf16.msra.mxu0 0
        %9010 = vmatprep.subr.bf16.mxu0 0
        %9011 = vmatpush1.bf16.msra.mxu0 0
        %9012 = vmatprep.subr.bf16.mxu0 0
        %9013 = vmatpush1.bf16.msra.mxu0 0
        %9014 = vmatprep.mubr.bf16.mxu0 0
        %9015 = vmatmul.mubr.bf16.gmra.mrb[0].mxu0 %v4210
        %v9016 = vpop.f32.mrb[0].mxu0
        %v9017 = vadd.f32 0.0, %v9016
        %v9018 = vpop.f32.mrb[0].mxu0
        %v9019 = vpop.f32.mrb[0].mxu0
        %v9020 = vadd.f32 0.0, %v9019
        %v9021 = vpop.f32.mrb[0].mxu0
        %9022 = vmatprep.mubr.bf16.mxu0 0
        %9023 = vmatmul.mubr.bf16.gmra.mrb[0].mxu0 %v4211
        %v9024 = vpop.f32.mrb[0].mxu0
        %v9025 = vadd.f32 0.0, %v9024
        %v9026 = vpop.f32.mrb[0].mxu0
        %v9027 = vpop.f32.mrb[0].mxu0
        %v9028 = vadd.f32 0.0, %v9027
        %v9029 = vpop.f32.mrb[0].mxu0
        %9030 = vmatprep.mubr.bf16.mxu0 0
        %9031 = vmatmul.mubr.bf16.gmra.mrb[0].mxu0 %v4212
        %v9032 = vpop.f32.mrb[0].mxu0
        %v9033 = vadd.f32 0.0, %v9032
        %v9034 = vpop.f32.mrb[0].mxu0
        %v9035 = vpop.f32.mrb[0].mxu0
        %v9036 = vadd.f32 0.0, %v9035
        %v9037 = vpop.f32.mrb[0].mxu0
        %9038 = vmatprep.mubr.bf16.mxu0 0
        %9039 = vmatmul.mubr.bf16.gmra.mrb[0].mxu0 %v4213
        %v9040 = vpop.f32.mrb[0].mxu0
        %v9041 = vadd.f32 0.0, %v9040
        %v9042 = vpop.f32.mrb[0].mxu0
        %v9043 = vpop.f32.mrb[0].mxu0
        %v9044 = vadd.f32 0.0, %v9043
        %v9045 = vpop.f32.mrb[0].mxu0
        %9046 = vmatprep.mubr.bf16.mxu0 0
        %9047 = vmatmul.mubr.bf16.gmra.mrb[0].mxu0 %v4214
        %v9048 = vpop.f32.mrb[0].mxu0
        %v9049 = vadd.f32 0.0, %v9048
        %v9050 = vpop.f32.mrb[0].mxu0
        %v9051 = vpop.f32.mrb[0].mxu0
        %v9052 = vadd.f32 0.0, %v9051
        %v9053 = vpop.f32.mrb[0].mxu0
        %9054 = vmatprep.mubr.bf16.mxu0 0
        %9055 = vmatmul.mubr.bf16.gmra.mrb[0].mxu0 %v4215
        %v9056 = vpop.f32.mrb[0].mxu0
        %v9057 = vadd.f32 0.0, %v9056
        %v9058 = vpop.f32.mrb[0].mxu0
        %v9059 = vpop.f32.mrb[0].mxu0
        %v9060 = vadd.f32 0.0, %v9059
        %v9061 = vpop.f32.mrb[0].mxu0
        %9062 = vmatprep.mubr.bf16.mxu0 0
        %9063 = vmatmul.mubr.bf16.gmra.mrb[0].mxu0 %v4216
        %v9064 = vpop.f32.mrb[0].mxu0
        %v9065 = vadd.f32 0.0, %v9064
        %v9066 = vpop.f32.mrb[0].mxu0
        %v9067 = vpop.f32.mrb[0].mxu0
        %v9068 = vadd.f32 0.0, %v9067
        %v9069 = vpop.f32.mrb[0].mxu0
        %9070 = vmatprep.mubr.bf16.mxu0 0
        %9071 = vmatmul.mubr.bf16.gmra.mrb[0].mxu0 %v4217
        %v9072 = vpop.f32.mrb[0].mxu0
        %v9073 = vadd.f32 0.0, %v9072
        %v9074 = vpop.f32.mrb[0].mxu0
        %v9075 = vpop.f32.mrb[0].mxu0
        %v9076 = vadd.f32 0.0, %v9075
        %v9077 = vpop.f32.mrb[0].mxu0
        %9078 = vmatprep.mubr.bf16.mxu0 0
        %9079 = vmatmul.mubr.bf16.gmra.mrb[0].mxu0 %v4218
        %v9080 = vpop.f32.mrb[0].mxu0
        %v9081 = vadd.f32 0.0, %v9080
        %v9082 = vpop.f32.mrb[0].mxu0
        %v9083 = vpop.f32.mrb[0].mxu0
        %v9084 = vadd.f32 0.0, %v9083
        %v9085 = vpop.f32.mrb[0].mxu0
        %9086 = vmatprep.mubr.bf16.mxu0 0
        %9087 = vmatmul.mubr.bf16.gmra.mrb[0].mxu0 %v4219
        %v9088 = vpop.f32.mrb[0].mxu0
        %v9089 = vadd.f32 0.0, %v9088
        %v9090 = vpop.f32.mrb[0].mxu0
        %v9091 = vpop.f32.mrb[0].mxu0
        %v9092 = vadd.f32 0.0, %v9091
        %v9093 = vpop.f32.mrb[0].mxu0
        %9094 = vmatprep.mubr.bf16.mxu0 0
        %9095 = vmatmul.mubr.bf16.gmra.mrb[0].mxu0 %v4220
        %v9096 = vpop.f32.mrb[0].mxu0
        %v9097 = vadd.f32 0.0, %v9096
        %v9098 = vpop.f32.mrb[0].mxu0
        %v9099 = vpop.f32.mrb[0].mxu0
        %v9100 = vadd.f32 0.0, %v9099
        %v9101 = vpop.f32.mrb[0].mxu0
        %9102 = vmatprep.mubr.bf16.mxu0 0
        %9103 = vmatmul.mubr.bf16.gmra.mrb[0].mxu0 %v4221
        %v9104 = vpop.f32.mrb[0].mxu0
        %v9105 = vadd.f32 0.0, %v9104
        %v9106 = vpop.f32.mrb[0].mxu0
        %v9107 = vpop.f32.mrb[0].mxu0
        %v9108 = vadd.f32 0.0, %v9107
        %v9109 = vpop.f32.mrb[0].mxu0
        %9110 = vmatprep.mubr.bf16.mxu0 0
        %9111 = vmatmul.mubr.bf16.gmra.mrb[0].mxu0 %v4222
        %v9112 = vpop.f32.mrb[0].mxu0
        %v9113 = vadd.f32 0.0, %v9112
        %v9114 = vpop.f32.mrb[0].mxu0
        %v9115 = vpop.f32.mrb[0].mxu0
        %v9116 = vadd.f32 0.0, %v9115
        %v9117 = vpop.f32.mrb[0].mxu0
        %9118 = vmatprep.mubr.bf16.mxu0 0
        %9119 = vmatmul.mubr.bf16.gmra.mrb[0].mxu0 %v4223
        %v9120 = vpop.f32.mrb[0].mxu0
        %v9121 = vadd.f32 0.0, %v9120
        %v9122 = vpop.f32.mrb[0].mxu0
        %v9123 = vpop.f32.mrb[0].mxu0
        %v9124 = vadd.f32 0.0, %v9123
        %v9125 = vpop.f32.mrb[0].mxu0
        %9126 = vmatprep.mubr.bf16.mxu0 0
        %9127 = vmatmul.mubr.bf16.gmra.mrb[0].mxu0 %v4224
        %v9128 = vpop.f32.mrb[0].mxu0
        %v9129 = vadd.f32 0.0, %v9128
        %v9130 = vpop.f32.mrb[0].mxu0
        %v9131 = vpop.f32.mrb[0].mxu0
        %v9132 = vadd.f32 0.0, %v9131
        %v9133 = vpop.f32.mrb[0].mxu0
        %9134 = vmatprep.mubr.bf16.mxu0 0
        %9135 = vmatmul.mubr.bf16.gmra.mrb[0].mxu0 %v4225
        %v9136 = vpop.f32.mrb[0].mxu0
        %v9137 = vadd.f32 0.0, %v9136
        %v9138 = vpop.f32.mrb[0].mxu0
        %v9139 = vpop.f32.mrb[0].mxu0
        %v9140 = vadd.f32 0.0, %v9139
        %v9141 = vpop.f32.mrb[0].mxu0
        %9142 = vmatprep.mubr.bf16.mxu0 0
        %9143 = vmatmul.mubr.bf16.gmra.mrb[0].mxu0 %v4226
        %v9144 = vpop.f32.mrb[0].mxu0
        %v9145 = vadd.f32 0.0, %v9144
        %v9146 = vpop.f32.mrb[0].mxu0
        %v9147 = vpop.f32.mrb[0].mxu0
        %v9148 = vadd.f32 0.0, %v9147
        %v9149 = vpop.f32.mrb[0].mxu0
        %9150 = vmatprep.mubr.bf16.mxu0 0
        %9151 = vmatmul.mubr.bf16.gmra.mrb[0].mxu0 %v4227
        %v9152 = vpop.f32.mrb[0].mxu0
        %v9153 = vadd.f32 0.0, %v9152
        %v9154 = vpop.f32.mrb[0].mxu0
        %v9155 = vpop.f32.mrb[0].mxu0
        %v9156 = vadd.f32 0.0, %v9155
        %v9157 = vpop.f32.mrb[0].mxu0
        %9158 = vmatprep.mubr.bf16.mxu0 0
        %9159 = vmatmul.mubr.bf16.gmra.mrb[0].mxu0 %v4228
        %v9160 = vpop.f32.mrb[0].mxu0
        %v9161 = vadd.f32 0.0, %v9160
        %v9162 = vpop.f32.mrb[0].mxu0
        %v9163 = vpop.f32.mrb[0].mxu0
        %v9164 = vadd.f32 0.0, %v9163
        %v9165 = vpop.f32.mrb[0].mxu0
        %9166 = vmatprep.mubr.bf16.mxu0 0
        %9167 = vmatmul.mubr.bf16.gmra.mrb[0].mxu0 %v4229
        %v9168 = vpop.f32.mrb[0].mxu0
        %v9169 = vadd.f32 0.0, %v9168
        %v9170 = vpop.f32.mrb[0].mxu0
        %v9171 = vpop.f32.mrb[0].mxu0
        %v9172 = vadd.f32 0.0, %v9171
        %v9173 = vpop.f32.mrb[0].mxu0
        %9174 = vmatprep.mubr.bf16.mxu0 0
        %9175 = vmatmul.mubr.bf16.gmra.mrb[0].mxu0 %v4230
        %v9176 = vpop.f32.mrb[0].mxu0
        %v9177 = vadd.f32 0.0, %v9176
        %v9178 = vpop.f32.mrb[0].mxu0
        %v9179 = vpop.f32.mrb[0].mxu0
        %v9180 = vadd.f32 0.0, %v9179
        %v9181 = vpop.f32.mrb[0].mxu0
        %9182 = vmatprep.mubr.bf16.mxu0 0
        %9183 = vmatmul.mubr.bf16.gmra.mrb[0].mxu0 %v4231
        %v9184 = vpop.f32.mrb[0].mxu0
        %v9185 = vadd.f32 0.0, %v9184
        %v9186 = vpop.f32.mrb[0].mxu0
        %v9187 = vpop.f32.mrb[0].mxu0
        %v9188 = vadd.f32 0.0, %v9187
        %v9189 = vpop.f32.mrb[0].mxu0
        %9190 = vmatprep.mubr.bf16.mxu0 0
        %9191 = vmatmul.mubr.bf16.gmra.mrb[0].mxu0 %v4232
        %v9192 = vpop.f32.mrb[0].mxu0
        %v9193 = vadd.f32 0.0, %v9192
        %v9194 = vpop.f32.mrb[0].mxu0
        %v9195 = vpop.f32.mrb[0].mxu0
        %v9196 = vadd.f32 0.0, %v9195
        %v9197 = vpop.f32.mrb[0].mxu0
        %9198 = vmatprep.mubr.bf16.mxu0 0
        %9199 = vmatmul.mubr.bf16.gmra.mrb[0].mxu0 %v4233
        %v9200 = vpop.f32.mrb[0].mxu0
        %v9201 = vadd.f32 0.0, %v9200
        %v9202 = vpop.f32.mrb[0].mxu0
        %v9203 = vpop.f32.mrb[0].mxu0
        %v9204 = vadd.f32 0.0, %v9203
        %v9205 = vpop.f32.mrb[0].mxu0
        %9206 = vmatprep.mubr.bf16.mxu0 0
        %9207 = vmatmul.mubr.bf16.gmra.mrb[0].mxu0 %v4234
        %v9208 = vpop.f32.mrb[0].mxu0
        %v9209 = vadd.f32 0.0, %v9208
        %v9210 = vpop.f32.mrb[0].mxu0
        %v9211 = vpop.f32.mrb[0].mxu0
        %v9212 = vadd.f32 0.0, %v9211
        %v9213 = vpop.f32.mrb[0].mxu0
        %9214 = vmatprep.mubr.bf16.mxu0 0
        %9215 = vmatmul.mubr.bf16.gmra.mrb[0].mxu0 %v4235
        %v9216 = vpop.f32.mrb[0].mxu0
        %v9217 = vadd.f32 0.0, %v9216
        %v9218 = vpop.f32.mrb[0].mxu0
        %v9219 = vpop.f32.mrb[0].mxu0
        %v9220 = vadd.f32 0.0, %v9219
        %v9221 = vpop.f32.mrb[0].mxu0
        %9222 = vmatprep.mubr.bf16.mxu0 0
        %9223 = vmatmul.mubr.bf16.gmra.mrb[0].mxu0 %v4236
        %v9224 = vpop.f32.mrb[0].mxu0
        %v9225 = vadd.f32 0.0, %v9224
        %v9226 = vpop.f32.mrb[0].mxu0
        %v9227 = vpop.f32.mrb[0].mxu0
        %v9228 = vadd.f32 0.0, %v9227
        %v9229 = vpop.f32.mrb[0].mxu0
        %9230 = vmatprep.mubr.bf16.mxu0 0
        %9231 = vmatmul.mubr.bf16.gmra.mrb[0].mxu0 %v4237
        %v9232 = vpop.f32.mrb[0].mxu0
        %v9233 = vadd.f32 0.0, %v9232
        %v9234 = vpop.f32.mrb[0].mxu0
        %v9235 = vpop.f32.mrb[0].mxu0
        %v9236 = vadd.f32 0.0, %v9235
        %v9237 = vpop.f32.mrb[0].mxu0
        %9238 = vmatprep.mubr.bf16.mxu0 0
        %9239 = vmatmul.mubr.bf16.gmra.mrb[0].mxu0 %v4238
        %v9240 = vpop.f32.mrb[0].mxu0
        %v9241 = vadd.f32 0.0, %v9240
        %v9242 = vpop.f32.mrb[0].mxu0
        %v9243 = vpop.f32.mrb[0].mxu0
        %v9244 = vadd.f32 0.0, %v9243
        %v9245 = vpop.f32.mrb[0].mxu0
        %9246 = vmatprep.mubr.bf16.mxu0 0
        %9247 = vmatmul.mubr.bf16.gmra.mrb[0].mxu0 %v4239
        %v9248 = vpop.f32.mrb[0].mxu0
        %v9249 = vadd.f32 0.0, %v9248
        %v9250 = vpop.f32.mrb[0].mxu0
        %v9251 = vpop.f32.mrb[0].mxu0
        %v9252 = vadd.f32 0.0, %v9251
        %v9253 = vpop.f32.mrb[0].mxu0
        %9254 = vmatprep.mubr.bf16.mxu0 0
        %9255 = vmatmul.mubr.bf16.gmra.mrb[0].mxu0 %v4240
        %v9256 = vpop.f32.mrb[0].mxu0
        %v9257 = vadd.f32 0.0, %v9256
        %v9258 = vpop.f32.mrb[0].mxu0
        %v9259 = vpop.f32.mrb[0].mxu0
        %v9260 = vadd.f32 0.0, %v9259
        %v9261 = vpop.f32.mrb[0].mxu0
        %9262 = vmatprep.mubr.bf16.mxu0 0
        %9263 = vmatmul.mubr.bf16.gmra.mrb[0].mxu0 %v4241
        %v9264 = vpop.f32.mrb[0].mxu0
        %v9265 = vadd.f32 0.0, %v9264
        %v9266 = vpop.f32.mrb[0].mxu0
        %v9267 = vpop.f32.mrb[0].mxu0
        %v9268 = vadd.f32 0.0, %v9267
        %v9269 = vpop.f32.mrb[0].mxu0
        %9270 = vmatprep.mubr.bf16.mxu0 0
        %9271 = vmatmul.mubr.bf16.gmra.mrb[0].mxu0 %v4242
        %v9272 = vpop.f32.mrb[0].mxu0
        %v9273 = vadd.f32 0.0, %v9272
        %v9274 = vpop.f32.mrb[0].mxu0
        %v9275 = vpop.f32.mrb[0].mxu0
        %v9276 = vadd.f32 0.0, %v9275
        %v9277 = vpop.f32.mrb[0].mxu0
        %9278 = vmatprep.mubr.bf16.mxu0 0
        %9279 = vmatmul.mubr.bf16.gmra.mrb[0].mxu0 %v4243
        %v9280 = vpop.f32.mrb[0].mxu0
        %v9281 = vadd.f32 0.0, %v9280
        %v9282 = vpop.f32.mrb[0].mxu0
        %v9283 = vpop.f32.mrb[0].mxu0
        %v9284 = vadd.f32 0.0, %v9283
        %v9285 = vpop.f32.mrb[0].mxu0
        %9286 = vmatprep.mubr.bf16.mxu0 0
        %9287 = vmatmul.mubr.bf16.gmra.mrb[0].mxu0 %v4244
        %v9288 = vpop.f32.mrb[0].mxu0
        %v9289 = vadd.f32 0.0, %v9288
        %v9290 = vpop.f32.mrb[0].mxu0
        %v9291 = vpop.f32.mrb[0].mxu0
        %v9292 = vadd.f32 0.0, %v9291
        %v9293 = vpop.f32.mrb[0].mxu0
        %9294 = vmatprep.mubr.bf16.mxu0 0
        %9295 = vmatmul.mubr.bf16.gmra.mrb[0].mxu0 %v4245
        %v9296 = vpop.f32.mrb[0].mxu0
        %v9297 = vadd.f32 0.0, %v9296
        %v9298 = vpop.f32.mrb[0].mxu0
        %v9299 = vpop.f32.mrb[0].mxu0
        %v9300 = vadd.f32 0.0, %v9299
        %v9301 = vpop.f32.mrb[0].mxu0
        %9302 = vmatprep.mubr.bf16.mxu0 0
        %9303 = vmatmul.mubr.bf16.gmra.mrb[0].mxu0 %v4246
        %v9304 = vpop.f32.mrb[0].mxu0
        %v9305 = vadd.f32 0.0, %v9304
        %v9306 = vpop.f32.mrb[0].mxu0
        %v9307 = vpop.f32.mrb[0].mxu0
        %v9308 = vadd.f32 0.0, %v9307
        %v9309 = vpop.f32.mrb[0].mxu0
        %9310 = vmatprep.mubr.bf16.mxu0 0
        %9311 = vmatmul.mubr.bf16.gmra.mrb[0].mxu0 %v4247
        %v9312 = vpop.f32.mrb[0].mxu0
        %v9313 = vadd.f32 0.0, %v9312
        %v9314 = vpop.f32.mrb[0].mxu0
        %v9315 = vpop.f32.mrb[0].mxu0
        %v9316 = vadd.f32 0.0, %v9315
        %v9317 = vpop.f32.mrb[0].mxu0
        %9318 = vmatprep.mubr.bf16.mxu0 0
        %9319 = vmatmul.mubr.bf16.gmra.mrb[0].mxu0 %v4248
        %v9320 = vpop.f32.mrb[0].mxu0
        %v9321 = vadd.f32 0.0, %v9320
        %v9322 = vpop.f32.mrb[0].mxu0
        %v9323 = vpop.f32.mrb[0].mxu0
        %v9324 = vadd.f32 0.0, %v9323
        %v9325 = vpop.f32.mrb[0].mxu0
        %9326 = vmatprep.mubr.bf16.mxu0 0
        %9327 = vmatmul.mubr.bf16.gmra.mrb[0].mxu0 %v4249
        %v9328 = vpop.f32.mrb[0].mxu0
        %v9329 = vadd.f32 0.0, %v9328
        %v9330 = vpop.f32.mrb[0].mxu0
        %v9331 = vpop.f32.mrb[0].mxu0
        %v9332 = vadd.f32 0.0, %v9331
        %v9333 = vpop.f32.mrb[0].mxu0
        %9334 = vmatprep.mubr.bf16.mxu0 0
        %9335 = vmatmul.mubr.bf16.gmra.mrb[0].mxu0 %v4250
        %v9336 = vpop.f32.mrb[0].mxu0
        %v9337 = vadd.f32 0.0, %v9336
        %v9338 = vpop.f32.mrb[0].mxu0
        %v9339 = vpop.f32.mrb[0].mxu0
        %v9340 = vadd.f32 0.0, %v9339
        %v9341 = vpop.f32.mrb[0].mxu0
        %9342 = vmatprep.mubr.bf16.mxu0 0
        %9343 = vmatmul.mubr.bf16.gmra.mrb[0].mxu0 %v4251
        %v9344 = vpop.f32.mrb[0].mxu0
        %v9345 = vadd.f32 0.0, %v9344
        %v9346 = vpop.f32.mrb[0].mxu0
        %v9347 = vpop.f32.mrb[0].mxu0
        %v9348 = vadd.f32 0.0, %v9347
        %v9349 = vpop.f32.mrb[0].mxu0
        %9350 = vmatprep.mubr.bf16.mxu0 0
        %9351 = vmatmul.mubr.bf16.gmra.mrb[0].mxu0 %v4252
        %v9352 = vpop.f32.mrb[0].mxu0
        %v9353 = vadd.f32 0.0, %v9352
        %v9354 = vpop.f32.mrb[0].mxu0
        %v9355 = vpop.f32.mrb[0].mxu0
        %v9356 = vadd.f32 0.0, %v9355
        %v9357 = vpop.f32.mrb[0].mxu0
        %9358 = vmatprep.mubr.bf16.mxu0 0
        %9359 = vmatmul.mubr.bf16.gmra.mrb[0].mxu0 %v4253
        %v9360 = vpop.f32.mrb[0].mxu0
        %v9361 = vadd.f32 0.0, %v9360
        %v9362 = vpop.f32.mrb[0].mxu0
        %v9363 = vpop.f32.mrb[0].mxu0
        %v9364 = vadd.f32 0.0, %v9363
        %v9365 = vpop.f32.mrb[0].mxu0
        %9366 = vmatprep.mubr.bf16.mxu0 0
        %9367 = vmatmul.mubr.bf16.gmra.mrb[0].mxu0 %v4254
        %v9368 = vpop.f32.mrb[0].mxu0
        %v9369 = vadd.f32 0.0, %v9368
        %v9370 = vpop.f32.mrb[0].mxu0
        %v9371 = vpop.f32.mrb[0].mxu0
        %v9372 = vadd.f32 0.0, %v9371
        %v9373 = vpop.f32.mrb[0].mxu0
        %9374 = vmatprep.mubr.bf16.mxu0 0
        %9375 = vmatmul.mubr.bf16.gmra.mrb[0].mxu0 %v4255
        %v9376 = vpop.f32.mrb[0].mxu0
        %v9377 = vadd.f32 0.0, %v9376
        %v9378 = vpop.f32.mrb[0].mxu0
        %v9379 = vpop.f32.mrb[0].mxu0
        %v9380 = vadd.f32 0.0, %v9379
        %v9381 = vpop.f32.mrb[0].mxu0
        %9382 = vmatprep.mubr.bf16.mxu0 0
        %9383 = vmatmul.mubr.bf16.gmra.mrb[0].mxu0 %v4256
        %v9384 = vpop.f32.mrb[0].mxu0
        %v9385 = vadd.f32 0.0, %v9384
        %v9386 = vpop.f32.mrb[0].mxu0
        %v9387 = vpop.f32.mrb[0].mxu0
        %v9388 = vadd.f32 0.0, %v9387
        %v9389 = vpop.f32.mrb[0].mxu0
        %9390 = vmatprep.mubr.bf16.mxu0 0
        %9391 = vmatmul.mubr.bf16.gmra.mrb[0].mxu0 %v4257
        %v9392 = vpop.f32.mrb[0].mxu0
        %v9393 = vadd.f32 0.0, %v9392
        %v9394 = vpop.f32.mrb[0].mxu0
        %v9395 = vpop.f32.mrb[0].mxu0
        %v9396 = vadd.f32 0.0, %v9395
        %v9397 = vpop.f32.mrb[0].mxu0
        %9398 = vmatprep.mubr.bf16.mxu0 0
        %9399 = vmatmul.mubr.bf16.gmra.mrb[0].mxu0 %v4258
        %v9400 = vpop.f32.mrb[0].mxu0
        %v9401 = vadd.f32 0.0, %v9400
        %v9402 = vpop.f32.mrb[0].mxu0
        %v9403 = vpop.f32.mrb[0].mxu0
        %v9404 = vadd.f32 0.0, %v9403
        %v9405 = vpop.f32.mrb[0].mxu0
        %9406 = vmatprep.mubr.bf16.mxu0 0
        %9407 = vmatmul.mubr.bf16.gmra.mrb[0].mxu0 %v4259
        %v9408 = vpop.f32.mrb[0].mxu0
        %v9409 = vadd.f32 0.0, %v9408
        %v9410 = vpop.f32.mrb[0].mxu0
        %v9411 = vpop.f32.mrb[0].mxu0
        %v9412 = vadd.f32 0.0, %v9411
        %v9413 = vpop.f32.mrb[0].mxu0
        %9414 = vmatprep.mubr.bf16.mxu0 0
        %9415 = vmatmul.mubr.bf16.gmra.mrb[0].mxu0 %v4260
        %v9416 = vpop.f32.mrb[0].mxu0
        %v9417 = vadd.f32 0.0, %v9416
        %v9418 = vpop.f32.mrb[0].mxu0
        %v9419 = vpop.f32.mrb[0].mxu0
        %v9420 = vadd.f32 0.0, %v9419
        %v9421 = vpop.f32.mrb[0].mxu0
        %9422 = vmatprep.mubr.bf16.mxu0 0
        %9423 = vmatmul.mubr.bf16.gmra.mrb[0].mxu0 %v4261
        %v9424 = vpop.f32.mrb[0].mxu0
        %v9425 = vadd.f32 0.0, %v9424
        %v9426 = vpop.f32.mrb[0].mxu0
        %v9427 = vpop.f32.mrb[0].mxu0
        %v9428 = vadd.f32 0.0, %v9427
        %v9429 = vpop.f32.mrb[0].mxu0
        %9430 = vmatprep.mubr.bf16.mxu0 0
        %9431 = vmatmul.mubr.bf16.gmra.mrb[0].mxu0 %v4262
        %v9432 = vpop.f32.mrb[0].mxu0
        %v9433 = vadd.f32 0.0, %v9432
        %v9434 = vpop.f32.mrb[0].mxu0
        %v9435 = vpop.f32.mrb[0].mxu0
        %v9436 = vadd.f32 0.0, %v9435
        %v9437 = vpop.f32.mrb[0].mxu0
        %9438 = vmatprep.mubr.bf16.mxu0 0
        %9439 = vmatmul.mubr.bf16.gmra.mrb[0].mxu0 %v4263
        %v9440 = vpop.f32.mrb[0].mxu0
        %v9441 = vadd.f32 0.0, %v9440
        %v9442 = vpop.f32.mrb[0].mxu0
        %v9443 = vpop.f32.mrb[0].mxu0
        %v9444 = vadd.f32 0.0, %v9443
        %v9445 = vpop.f32.mrb[0].mxu0
        %9446 = vmatprep.mubr.bf16.mxu0 0
        %9447 = vmatmul.mubr.bf16.gmra.mrb[0].mxu0 %v4264
        %v9448 = vpop.f32.mrb[0].mxu0
        %v9449 = vadd.f32 0.0, %v9448
        %v9450 = vpop.f32.mrb[0].mxu0
        %v9451 = vpop.f32.mrb[0].mxu0
        %v9452 = vadd.f32 0.0, %v9451
        %v9453 = vpop.f32.mrb[0].mxu0
        %9454 = vmatprep.mubr.bf16.mxu0 0
        %9455 = vmatmul.mubr.bf16.gmra.mrb[0].mxu0 %v4265
        %v9456 = vpop.f32.mrb[0].mxu0
        %v9457 = vadd.f32 0.0, %v9456
        %v9458 = vpop.f32.mrb[0].mxu0
        %v9459 = vpop.f32.mrb[0].mxu0
        %v9460 = vadd.f32 0.0, %v9459
        %v9461 = vpop.f32.mrb[0].mxu0
        %9462 = vmatprep.mubr.bf16.mxu0 0
        %9463 = vmatmul.mubr.bf16.gmra.mrb[0].mxu0 %v4266
        %v9464 = vpop.f32.mrb[0].mxu0
        %v9465 = vadd.f32 0.0, %v9464
        %v9466 = vpop.f32.mrb[0].mxu0
        %v9467 = vpop.f32.mrb[0].mxu0
        %v9468 = vadd.f32 0.0, %v9467
        %v9469 = vpop.f32.mrb[0].mxu0
        %9470 = vmatprep.mubr.bf16.mxu0 0
        %9471 = vmatmul.mubr.bf16.gmra.mrb[0].mxu0 %v4267
        %v9472 = vpop.f32.mrb[0].mxu0
        %v9473 = vadd.f32 0.0, %v9472
        %v9474 = vpop.f32.mrb[0].mxu0
        %v9475 = vpop.f32.mrb[0].mxu0
        %v9476 = vadd.f32 0.0, %v9475
        %v9477 = vpop.f32.mrb[0].mxu0
        %9478 = vmatprep.mubr.bf16.mxu0 0
        %9479 = vmatmul.mubr.bf16.gmra.mrb[0].mxu0 %v4268
        %v9480 = vpop.f32.mrb[0].mxu0
        %v9481 = vadd.f32 0.0, %v9480
        %v9482 = vpop.f32.mrb[0].mxu0
        %v9483 = vpop.f32.mrb[0].mxu0
        %v9484 = vadd.f32 0.0, %v9483
        %v9485 = vpop.f32.mrb[0].mxu0
        %9486 = vmatprep.mubr.bf16.mxu0 0
        %9487 = vmatmul.mubr.bf16.gmra.mrb[0].mxu0 %v4269
        %v9488 = vpop.f32.mrb[0].mxu0
        %v9489 = vadd.f32 0.0, %v9488
        %v9490 = vpop.f32.mrb[0].mxu0
        %v9491 = vpop.f32.mrb[0].mxu0
        %v9492 = vadd.f32 0.0, %v9491
        %v9493 = vpop.f32.mrb[0].mxu0
        %9494 = vmatprep.mubr.bf16.mxu0 0
        %9495 = vmatmul.mubr.bf16.gmra.mrb[0].mxu0 %v6630
        %v9496 = vpop.f32.mrb[0].mxu0
        %v9497 = vadd.f32 0.0, %v9496
        %v9498 = vpop.f32.mrb[0].mxu0
        %v9499 = vpop.f32.mrb[0].mxu0
        %v9500 = vadd.f32 0.0, %v9499
        %v9501 = vpop.f32.mrb[0].mxu0
        %9502 = vmatprep.mubr.bf16.mxu0 0
        %9503 = vmatmul.mubr.bf16.gmra.mrb[0].mxu0 %v6631
        %v9504 = vpop.f32.mrb[0].mxu0
        %v9505 = vadd.f32 0.0, %v9504
        %v9506 = vpop.f32.mrb[0].mxu0
        %v9507 = vpop.f32.mrb[0].mxu0
        %v9508 = vadd.f32 0.0, %v9507
        %v9509 = vpop.f32.mrb[0].mxu0
        %9510 = vmatprep.mubr.bf16.mxu0 0
        %9511 = vmatmul.mubr.bf16.gmra.mrb[0].mxu0 %v8930
        %v9512 = vpop.f32.mrb[0].mxu0
        %v9513 = vadd.f32 0.0, %v9512
        %v9514 = vpop.f32.mrb[0].mxu0
        %v9515 = vpop.f32.mrb[0].mxu0
        %v9516 = vadd.f32 0.0, %v9515
        %v9517 = vpop.f32.mrb[0].mxu0
        %9518 = vmatprep.mubr.bf16.mxu0 0
        %9519 = vmatmul.mubr.bf16.gmra.mrb[0].mxu0 %v8931
        %v9520 = vpop.f32.mrb[0].mxu0
        %v9521 = vadd.f32 0.0, %v9520
        %v9522 = vpop.f32.mrb[0].mxu0
        %v9523 = vpop.f32.mrb[0].mxu0
        %v9524 = vadd.f32 0.0, %v9523
        %v9525 = vpop.f32.mrb[0].mxu0
        %9526 = vdwg.mxu0
        %v9527 = vadd.f32 %v8767, %v9017
        %v9528 = vadd.f32 %v8768, %v9020
        %v9529 = vadd.f32 %v8769, %v9025
        %v9530 = vadd.f32 %v8770, %v9028
        %v9531 = vadd.f32 %v8771, %v9033
        %v9532 = vadd.f32 %v8772, %v9036
        %v9533 = vadd.f32 %v8773, %v9041
        %v9534 = vadd.f32 %v8774, %v9044
        %v9535 = vadd.f32 %v8775, %v9049
        %v9536 = vadd.f32 %v8776, %v9052
        %v9537 = vadd.f32 %v8777, %v9057
        %v9538 = vadd.f32 %v8778, %v9060
        %v9539 = vadd.f32 %v8779, %v9065
        %v9540 = vadd.f32 %v8780, %v9068
        %v9541 = vadd.f32 %v8781, %v9073
        %v9542 = vadd.f32 %v8782, %v9076
        %v9543 = vadd.f32 %v8783, %v9081
        %v9544 = vadd.f32 %v8784, %v9084
        %v9545 = vadd.f32 %v8785, %v9089
        %v9546 = vadd.f32 %v8786, %v9092
        %v9547 = vadd.f32 %v8787, %v9097
        %v9548 = vadd.f32 %v8788, %v9100
        %v9549 = vadd.f32 %v8789, %v9105
        %v9550 = vadd.f32 %v8790, %v9108
        %v9551 = vadd.f32 %v8791, %v9113
        %v9552 = vadd.f32 %v8792, %v9116
        %v9553 = vadd.f32 %v8793, %v9121
        %v9554 = vadd.f32 %v8794, %v9124
        %v9555 = vadd.f32 %v8795, %v9129
        %v9556 = vadd.f32 %v8796, %v9132
        %v9557 = vadd.f32 %v8797, %v9137
        %v9558 = vadd.f32 %v8798, %v9140
        %v9559 = vadd.f32 %v8799, %v9145
        %v9560 = vadd.f32 %v8800, %v9148
        %v9561 = vadd.f32 %v8801, %v9153
        %v9562 = vadd.f32 %v8802, %v9156
        %v9563 = vadd.f32 %v8803, %v9161
        %v9564 = vadd.f32 %v8804, %v9164
        %v9565 = vadd.f32 %v8805, %v9169
        %v9566 = vadd.f32 %v8806, %v9172
        %v9567 = vadd.f32 %v8807, %v9177
        %v9568 = vadd.f32 %v8808, %v9180
        %v9569 = vadd.f32 %v8809, %v9185
        %v9570 = vadd.f32 %v8810, %v9188
        %v9571 = vadd.f32 %v8811, %v9193
        %v9572 = vadd.f32 %v8812, %v9196
        %v9573 = vadd.f32 %v8813, %v9201
        %v9574 = vadd.f32 %v8814, %v9204
        %v9575 = vadd.f32 %v8815, %v9209
        %v9576 = vadd.f32 %v8816, %v9212
        %v9577 = vadd.f32 %v8817, %v9217
        %v9578 = vadd.f32 %v8818, %v9220
        %v9579 = vadd.f32 %v8819, %v9225
        %v9580 = vadd.f32 %v8820, %v9228
        %v9581 = vadd.f32 %v8821, %v9233
        %v9582 = vadd.f32 %v8822, %v9236
        %v9583 = vadd.f32 %v8823, %v9241
        %v9584 = vadd.f32 %v8824, %v9244
        %v9585 = vadd.f32 %v8825, %v9249
        %v9586 = vadd.f32 %v8826, %v9252
        %v9587 = vadd.f32 %v8827, %v9257
        %v9588 = vadd.f32 %v8828, %v9260
        %v9589 = vadd.f32 %v8829, %v9265
        %v9590 = vadd.f32 %v8830, %v9268
        %v9591 = vadd.f32 %v8831, %v9273
        %v9592 = vadd.f32 %v8832, %v9276
        %v9593 = vadd.f32 %v8833, %v9281
        %v9594 = vadd.f32 %v8834, %v9284
        %v9595 = vadd.f32 %v8835, %v9289
        %v9596 = vadd.f32 %v8836, %v9292
        %v9597 = vadd.f32 %v8837, %v9297
        %v9598 = vadd.f32 %v8838, %v9300
        %v9599 = vadd.f32 %v8839, %v9305
        %v9600 = vadd.f32 %v8840, %v9308
        %v9601 = vadd.f32 %v8841, %v9313
        %v9602 = vadd.f32 %v8842, %v9316
        %v9603 = vadd.f32 %v8843, %v9321
        %v9604 = vadd.f32 %v8844, %v9324
        %v9605 = vadd.f32 %v8845, %v9329
        %v9606 = vadd.f32 %v8846, %v9332
        %v9607 = vadd.f32 %v8847, %v9337
        %v9608 = vadd.f32 %v8848, %v9340
        %v9609 = vadd.f32 %v8849, %v9345
        %v9610 = vadd.f32 %v8850, %v9348
        %v9611 = vadd.f32 %v8851, %v9353
        %v9612 = vadd.f32 %v8852, %v9356
        %v9613 = vadd.f32 %v8853, %v9361
        %v9614 = vadd.f32 %v8854, %v9364
        %v9615 = vadd.f32 %v8855, %v9369
        %v9616 = vadd.f32 %v8856, %v9372
        %v9617 = vadd.f32 %v8857, %v9377
        %v9618 = vadd.f32 %v8858, %v9380
        %v9619 = vadd.f32 %v8859, %v9385
        %v9620 = vadd.f32 %v8860, %v9388
        %v9621 = vadd.f32 %v8861, %v9393
        %v9622 = vadd.f32 %v8862, %v9396
        %v9623 = vadd.f32 %v8863, %v9401
        %v9624 = vadd.f32 %v8864, %v9404
        %v9625 = vadd.f32 %v8865, %v9409
        %v9626 = vadd.f32 %v8866, %v9412
        %v9627 = vadd.f32 %v8867, %v9417
        %v9628 = vadd.f32 %v8868, %v9420
        %v9629 = vadd.f32 %v8869, %v9425
        %v9630 = vadd.f32 %v8870, %v9428
        %v9631 = vadd.f32 %v8871, %v9433
        %v9632 = vadd.f32 %v8872, %v9436
        %v9633 = vadd.f32 %v8873, %v9441
        %v9634 = vadd.f32 %v8874, %v9444
        %v9635 = vadd.f32 %v8875, %v9449
        %v9636 = vadd.f32 %v8876, %v9452
        %v9637 = vadd.f32 %v8877, %v9457
        %v9638 = vadd.f32 %v8878, %v9460
        %v9639 = vadd.f32 %v8879, %v9465
        %v9640 = vadd.f32 %v8880, %v9468
        %v9641 = vadd.f32 %v8881, %v9473
        %v9642 = vadd.f32 %v8882, %v9476
        %v9643 = vadd.f32 %v8883, %v9481
        %v9644 = vadd.f32 %v8884, %v9484
        %v9645 = vadd.f32 %v8885, %v9489
        %v9646 = vadd.f32 %v8886, %v9492
        %v9647 = vadd.f32 %v8887, %v9497
        %v9648 = vadd.f32 %v8888, %v9500
        %v9649 = vadd.f32 %v8889, %v9505
        %v9650 = vadd.f32 %v8890, %v9508
        %v9651 = vadd.f32 %v8891, %v9513
        %v9652 = vadd.f32 %v8892, %v9516
        %v9653 = vadd.f32 %v8893, %v9521
        %v9654 = vadd.f32 %v8894, %v9524
        %v9655 = vld [vmem:[%s2] sm:$0x1]
        %v9657 = vlaneseq
        %v9658 = vshrl.u32 %v9657, 7
        %v9659 = vsub.s32 0, %v9658
        %v9660 = vrot.slane %v9655, %v9659
        %v9662 = vadd.f32 %v9527, %v9660
        %v9663 = vadd.f32 %v9528, %v9660
        %v9664 = vadd.f32 %v9529, %v9660
        %v9665 = vadd.f32 %v9530, %v9660
        %v9666 = vadd.f32 %v9531, %v9660
        %v9667 = vadd.f32 %v9532, %v9660
        %v9668 = vadd.f32 %v9533, %v9660
        %v9669 = vadd.f32 %v9534, %v9660
        %v9670 = vadd.f32 %v9535, %v9660
        %v9671 = vadd.f32 %v9536, %v9660
        %v9672 = vadd.f32 %v9537, %v9660
        %v9673 = vadd.f32 %v9538, %v9660
        %v9674 = vadd.f32 %v9539, %v9660
        %v9675 = vadd.f32 %v9540, %v9660
        %v9676 = vadd.f32 %v9541, %v9660
        %v9677 = vadd.f32 %v9542, %v9660
        %v9678 = vadd.f32 %v9543, %v9660
        %v9679 = vadd.f32 %v9544, %v9660
        %v9680 = vadd.f32 %v9545, %v9660
        %v9681 = vadd.f32 %v9546, %v9660
        %v9682 = vadd.f32 %v9547, %v9660
        %v9683 = vadd.f32 %v9548, %v9660
        %v9684 = vadd.f32 %v9549, %v9660
        %v9685 = vadd.f32 %v9550, %v9660
        %v9686 = vadd.f32 %v9551, %v9660
        %v9687 = vadd.f32 %v9552, %v9660
        %v9688 = vadd.f32 %v9553, %v9660
        %v9689 = vadd.f32 %v9554, %v9660
        %v9690 = vadd.f32 %v9555, %v9660
        %v9691 = vadd.f32 %v9556, %v9660
        %v9692 = vadd.f32 %v9557, %v9660
        %v9693 = vadd.f32 %v9558, %v9660
        %v9694 = vadd.f32 %v9559, %v9660
        %v9695 = vadd.f32 %v9560, %v9660
        %v9696 = vadd.f32 %v9561, %v9660
        %v9697 = vadd.f32 %v9562, %v9660
        %v9698 = vadd.f32 %v9563, %v9660
        %v9699 = vadd.f32 %v9564, %v9660
        %v9700 = vadd.f32 %v9565, %v9660
        %v9701 = vadd.f32 %v9566, %v9660
        %v9702 = vadd.f32 %v9567, %v9660
        %v9703 = vadd.f32 %v9568, %v9660
        %v9704 = vadd.f32 %v9569, %v9660
        %v9705 = vadd.f32 %v9570, %v9660
        %v9706 = vadd.f32 %v9571, %v9660
        %v9707 = vadd.f32 %v9572, %v9660
        %v9708 = vadd.f32 %v9573, %v9660
        %v9709 = vadd.f32 %v9574, %v9660
        %v9710 = vadd.f32 %v9575, %v9660
        %v9711 = vadd.f32 %v9576, %v9660
        %v9712 = vadd.f32 %v9577, %v9660
        %v9713 = vadd.f32 %v9578, %v9660
        %v9714 = vadd.f32 %v9579, %v9660
        %v9715 = vadd.f32 %v9580, %v9660
        %v9716 = vadd.f32 %v9581, %v9660
        %v9717 = vadd.f32 %v9582, %v9660
        %v9718 = vadd.f32 %v9583, %v9660
        %v9719 = vadd.f32 %v9584, %v9660
        %v9720 = vadd.f32 %v9585, %v9660
        %v9721 = vadd.f32 %v9586, %v9660
        %v9722 = vadd.f32 %v9587, %v9660
        %v9723 = vadd.f32 %v9588, %v9660
        %v9724 = vadd.f32 %v9589, %v9660
        %v9725 = vadd.f32 %v9590, %v9660
        %v9726 = vadd.f32 %v9591, %v9660
        %v9727 = vadd.f32 %v9592, %v9660
        %v9728 = vadd.f32 %v9593, %v9660
        %v9729 = vadd.f32 %v9594, %v9660
        %v9730 = vadd.f32 %v9595, %v9660
        %v9731 = vadd.f32 %v9596, %v9660
        %v9732 = vadd.f32 %v9597, %v9660
        %v9733 = vadd.f32 %v9598, %v9660
        %v9734 = vadd.f32 %v9599, %v9660
        %v9735 = vadd.f32 %v9600, %v9660
        %v9736 = vadd.f32 %v9601, %v9660
        %v9737 = vadd.f32 %v9602, %v9660
        %v9738 = vadd.f32 %v9603, %v9660
        %v9739 = vadd.f32 %v9604, %v9660
        %v9740 = vadd.f32 %v9605, %v9660
        %v9741 = vadd.f32 %v9606, %v9660
        %v9742 = vadd.f32 %v9607, %v9660
        %v9743 = vadd.f32 %v9608, %v9660
        %v9744 = vadd.f32 %v9609, %v9660
        %v9745 = vadd.f32 %v9610, %v9660
        %v9746 = vadd.f32 %v9611, %v9660
        %v9747 = vadd.f32 %v9612, %v9660
        %v9748 = vadd.f32 %v9613, %v9660
        %v9749 = vadd.f32 %v9614, %v9660
        %v9750 = vadd.f32 %v9615, %v9660
        %v9751 = vadd.f32 %v9616, %v9660
        %v9752 = vadd.f32 %v9617, %v9660
        %v9753 = vadd.f32 %v9618, %v9660
        %v9754 = vadd.f32 %v9619, %v9660
        %v9755 = vadd.f32 %v9620, %v9660
        %v9756 = vadd.f32 %v9621, %v9660
        %v9757 = vadd.f32 %v9622, %v9660
        %v9758 = vadd.f32 %v9623, %v9660
        %v9759 = vadd.f32 %v9624, %v9660
        %v9760 = vadd.f32 %v9625, %v9660
        %v9761 = vadd.f32 %v9626, %v9660
        %v9762 = vadd.f32 %v9627, %v9660
        %v9763 = vadd.f32 %v9628, %v9660
        %v9764 = vadd.f32 %v9629, %v9660
        %v9765 = vadd.f32 %v9630, %v9660
        %v9766 = vadd.f32 %v9631, %v9660
        %v9767 = vadd.f32 %v9632, %v9660
        %v9768 = vadd.f32 %v9633, %v9660
        %v9769 = vadd.f32 %v9634, %v9660
        %v9770 = vadd.f32 %v9635, %v9660
        %v9771 = vadd.f32 %v9636, %v9660
        %v9772 = vadd.f32 %v9637, %v9660
        %v9773 = vadd.f32 %v9638, %v9660
        %v9774 = vadd.f32 %v9639, %v9660
        %v9775 = vadd.f32 %v9640, %v9660
        %v9776 = vadd.f32 %v9641, %v9660
        %v9777 = vadd.f32 %v9642, %v9660
        %v9778 = vadd.f32 %v9643, %v9660
        %v9779 = vadd.f32 %v9644, %v9660
        %v9780 = vadd.f32 %v9645, %v9660
        %v9781 = vadd.f32 %v9646, %v9660
        %v9782 = vadd.f32 %v9647, %v9660
        %v9783 = vadd.f32 %v9648, %v9660
        %v9784 = vadd.f32 %v9649, %v9660
        %v9785 = vadd.f32 %v9650, %v9660
        %v9786 = vadd.f32 %v9651, %v9660
        %v9787 = vadd.f32 %v9652, %v9660
        %v9788 = vadd.f32 %v9653, %v9660
        %v9789 = vadd.f32 %v9654, %v9660
        %v9790 = vmax.f32 %v9662, 0.0
        %v9791 = vmax.f32 %v9663, 0.0
        %v9792 = vmax.f32 %v9664, 0.0
        %v9793 = vmax.f32 %v9665, 0.0
        %v9794 = vmax.f32 %v9666, 0.0
        %v9795 = vmax.f32 %v9667, 0.0
        %v9796 = vmax.f32 %v9668, 0.0
        %v9797 = vmax.f32 %v9669, 0.0
        %v9798 = vmax.f32 %v9670, 0.0
        %v9799 = vmax.f32 %v9671, 0.0
        %v9800 = vmax.f32 %v9672, 0.0
        %v9801 = vmax.f32 %v9673, 0.0
        %v9802 = vmax.f32 %v9674, 0.0
        %v9803 = vmax.f32 %v9675, 0.0
        %v9804 = vmax.f32 %v9676, 0.0
        %v9805 = vmax.f32 %v9677, 0.0
        %v9806 = vmax.f32 %v9678, 0.0
        %v9807 = vmax.f32 %v9679, 0.0
        %v9808 = vmax.f32 %v9680, 0.0
        %v9809 = vmax.f32 %v9681, 0.0
        %v9810 = vmax.f32 %v9682, 0.0
        %v9811 = vmax.f32 %v9683, 0.0
        %v9812 = vmax.f32 %v9684, 0.0
        %v9813 = vmax.f32 %v9685, 0.0
        %v9814 = vmax.f32 %v9686, 0.0
        %v9815 = vmax.f32 %v9687, 0.0
        %v9816 = vmax.f32 %v9688, 0.0
        %v9817 = vmax.f32 %v9689, 0.0
        %v9818 = vmax.f32 %v9690, 0.0
        %v9819 = vmax.f32 %v9691, 0.0
        %v9820 = vmax.f32 %v9692, 0.0
        %v9821 = vmax.f32 %v9693, 0.0
        %v9822 = vmax.f32 %v9694, 0.0
        %v9823 = vmax.f32 %v9695, 0.0
        %v9824 = vmax.f32 %v9696, 0.0
        %v9825 = vmax.f32 %v9697, 0.0
        %v9826 = vmax.f32 %v9698, 0.0
        %v9827 = vmax.f32 %v9699, 0.0
        %v9828 = vmax.f32 %v9700, 0.0
        %v9829 = vmax.f32 %v9701, 0.0
        %v9830 = vmax.f32 %v9702, 0.0
        %v9831 = vmax.f32 %v9703, 0.0
        %v9832 = vmax.f32 %v9704, 0.0
        %v9833 = vmax.f32 %v9705, 0.0
        %v9834 = vmax.f32 %v9706, 0.0
        %v9835 = vmax.f32 %v9707, 0.0
        %v9836 = vmax.f32 %v9708, 0.0
        %v9837 = vmax.f32 %v9709, 0.0
        %v9838 = vmax.f32 %v9710, 0.0
        %v9839 = vmax.f32 %v9711, 0.0
        %v9840 = vmax.f32 %v9712, 0.0
        %v9841 = vmax.f32 %v9713, 0.0
        %v9842 = vmax.f32 %v9714, 0.0
        %v9843 = vmax.f32 %v9715, 0.0
        %v9844 = vmax.f32 %v9716, 0.0
        %v9845 = vmax.f32 %v9717, 0.0
        %v9846 = vmax.f32 %v9718, 0.0
        %v9847 = vmax.f32 %v9719, 0.0
        %v9848 = vmax.f32 %v9720, 0.0
        %v9849 = vmax.f32 %v9721, 0.0
        %v9850 = vmax.f32 %v9722, 0.0
        %v9851 = vmax.f32 %v9723, 0.0
        %v9852 = vmax.f32 %v9724, 0.0
        %v9853 = vmax.f32 %v9725, 0.0
        %v9854 = vmax.f32 %v9726, 0.0
        %v9855 = vmax.f32 %v9727, 0.0
        %v9856 = vmax.f32 %v9728, 0.0
        %v9857 = vmax.f32 %v9729, 0.0
        %v9858 = vmax.f32 %v9730, 0.0
        %v9859 = vmax.f32 %v9731, 0.0
        %v9860 = vmax.f32 %v9732, 0.0
        %v9861 = vmax.f32 %v9733, 0.0
        %v9862 = vmax.f32 %v9734, 0.0
        %v9863 = vmax.f32 %v9735, 0.0
        %v9864 = vmax.f32 %v9736, 0.0
        %v9865 = vmax.f32 %v9737, 0.0
        %v9866 = vmax.f32 %v9738, 0.0
        %v9867 = vmax.f32 %v9739, 0.0
        %v9868 = vmax.f32 %v9740, 0.0
        %v9869 = vmax.f32 %v9741, 0.0
        %v9870 = vmax.f32 %v9742, 0.0
        %v9871 = vmax.f32 %v9743, 0.0
        %v9872 = vmax.f32 %v9744, 0.0
        %v9873 = vmax.f32 %v9745, 0.0
        %v9874 = vmax.f32 %v9746, 0.0
        %v9875 = vmax.f32 %v9747, 0.0
        %v9876 = vmax.f32 %v9748, 0.0
        %v9877 = vmax.f32 %v9749, 0.0
        %v9878 = vmax.f32 %v9750, 0.0
        %v9879 = vmax.f32 %v9751, 0.0
        %v9880 = vmax.f32 %v9752, 0.0
        %v9881 = vmax.f32 %v9753, 0.0
        %v9882 = vmax.f32 %v9754, 0.0
        %v9883 = vmax.f32 %v9755, 0.0
        %v9884 = vmax.f32 %v9756, 0.0
        %v9885 = vmax.f32 %v9757, 0.0
        %v9886 = vmax.f32 %v9758, 0.0
        %v9887 = vmax.f32 %v9759, 0.0
        %v9888 = vmax.f32 %v9760, 0.0
        %v9889 = vmax.f32 %v9761, 0.0
        %v9890 = vmax.f32 %v9762, 0.0
        %v9891 = vmax.f32 %v9763, 0.0
        %v9892 = vmax.f32 %v9764, 0.0
        %v9893 = vmax.f32 %v9765, 0.0
        %v9894 = vmax.f32 %v9766, 0.0
        %v9895 = vmax.f32 %v9767, 0.0
        %v9896 = vmax.f32 %v9768, 0.0
        %v9897 = vmax.f32 %v9769, 0.0
        %v9898 = vmax.f32 %v9770, 0.0
        %v9899 = vmax.f32 %v9771, 0.0
        %v9900 = vmax.f32 %v9772, 0.0
        %v9901 = vmax.f32 %v9773, 0.0
        %v9902 = vmax.f32 %v9774, 0.0
        %v9903 = vmax.f32 %v9775, 0.0
        %v9904 = vmax.f32 %v9776, 0.0
        %v9905 = vmax.f32 %v9777, 0.0
        %v9906 = vmax.f32 %v9778, 0.0
        %v9907 = vmax.f32 %v9779, 0.0
        %v9908 = vmax.f32 %v9780, 0.0
        %v9909 = vmax.f32 %v9781, 0.0
        %v9910 = vmax.f32 %v9782, 0.0
        %v9911 = vmax.f32 %v9783, 0.0
        %v9912 = vmax.f32 %v9784, 0.0
        %v9913 = vmax.f32 %v9785, 0.0
        %v9914 = vmax.f32 %v9786, 0.0
        %v9915 = vmax.f32 %v9787, 0.0
        %v9916 = vmax.f32 %v9788, 0.0
        %v9917 = vmax.f32 %v9789, 0.0
        %v9918 = vpack.c.bf16 %v9791, %v9790
        %v9919 = vpack.c.bf16 %v9793, %v9792
        %v9920 = vpack.c.bf16 %v9795, %v9794
        %v9921 = vpack.c.bf16 %v9797, %v9796
        %v9922 = vpack.c.bf16 %v9799, %v9798
        %v9923 = vpack.c.bf16 %v9801, %v9800
        %v9924 = vpack.c.bf16 %v9803, %v9802
        %v9925 = vpack.c.bf16 %v9805, %v9804
        %v9926 = vpack.c.bf16 %v9807, %v9806
        %v9927 = vpack.c.bf16 %v9809, %v9808
        %v9928 = vpack.c.bf16 %v9811, %v9810
        %v9929 = vpack.c.bf16 %v9813, %v9812
        %v9930 = vpack.c.bf16 %v9815, %v9814
        %v9931 = vpack.c.bf16 %v9817, %v9816
        %v9932 = vpack.c.bf16 %v9819, %v9818
        %v9933 = vpack.c.bf16 %v9821, %v9820
        %v9934 = vpack.c.bf16 %v9823, %v9822
        %v9935 = vpack.c.bf16 %v9825, %v9824
        %v9936 = vpack.c.bf16 %v9827, %v9826
        %v9937 = vpack.c.bf16 %v9829, %v9828
        %v9938 = vpack.c.bf16 %v9831, %v9830
        %v9939 = vpack.c.bf16 %v9833, %v9832
        %v9940 = vpack.c.bf16 %v9835, %v9834
        %v9941 = vpack.c.bf16 %v9837, %v9836
        %v9942 = vpack.c.bf16 %v9839, %v9838
        %v9943 = vpack.c.bf16 %v9841, %v9840
        %v9944 = vpack.c.bf16 %v9843, %v9842
        %v9945 = vpack.c.bf16 %v9845, %v9844
        %v9946 = vpack.c.bf16 %v9847, %v9846
        %v9947 = vpack.c.bf16 %v9849, %v9848
        %v9948 = vpack.c.bf16 %v9851, %v9850
        %v9949 = vpack.c.bf16 %v9853, %v9852
        %v9950 = vpack.c.bf16 %v9855, %v9854
        %v9951 = vpack.c.bf16 %v9857, %v9856
        %v9952 = vpack.c.bf16 %v9859, %v9858
        %v9953 = vpack.c.bf16 %v9861, %v9860
        %v9954 = vpack.c.bf16 %v9863, %v9862
        %v9955 = vpack.c.bf16 %v9865, %v9864
        %v9956 = vpack.c.bf16 %v9867, %v9866
        %v9957 = vpack.c.bf16 %v9869, %v9868
        %v9958 = vpack.c.bf16 %v9871, %v9870
        %v9959 = vpack.c.bf16 %v9873, %v9872
        %v9960 = vpack.c.bf16 %v9875, %v9874
        %v9961 = vpack.c.bf16 %v9877, %v9876
        %v9962 = vpack.c.bf16 %v9879, %v9878
        %v9963 = vpack.c.bf16 %v9881, %v9880
        %v9964 = vpack.c.bf16 %v9883, %v9882
        %v9965 = vpack.c.bf16 %v9885, %v9884
        %v9966 = vpack.c.bf16 %v9887, %v9886
        %v9967 = vpack.c.bf16 %v9889, %v9888
        %v9968 = vpack.c.bf16 %v9891, %v9890
        %v9969 = vpack.c.bf16 %v9893, %v9892
        %v9970 = vpack.c.bf16 %v9895, %v9894
        %v9971 = vpack.c.bf16 %v9897, %v9896
        %v9972 = vpack.c.bf16 %v9899, %v9898
        %v9973 = vpack.c.bf16 %v9901, %v9900
        %v9974 = vpack.c.bf16 %v9903, %v9902
        %v9975 = vpack.c.bf16 %v9905, %v9904
        %v9976 = vpack.c.bf16 %v9907, %v9906
        %v9977 = vpack.c.bf16 %v9909, %v9908
        %v9978 = vpack.c.bf16 %v9911, %v9910
        %v9979 = vpack.c.bf16 %v9913, %v9912
        %v9980 = vpack.c.bf16 %v9915, %v9914
        %v9981 = vpack.c.bf16 %v9917, %v9916
        %v10046 = vunpack.c.l.b16 %v9918
        %v10047 = vunpack.c.h.b16 %v9918
        %v10048 = vunpack.c.l.b16 %v9919
        %v10049 = vunpack.c.h.b16 %v9919
        %v10050 = vunpack.c.l.b16 %v9920
        %v10051 = vunpack.c.h.b16 %v9920
        %v10052 = vunpack.c.l.b16 %v9921
        %v10053 = vunpack.c.h.b16 %v9921
        %v10054 = vunpack.c.l.b16 %v9922
        %v10055 = vunpack.c.h.b16 %v9922
        %v10056 = vunpack.c.l.b16 %v9923
        %v10057 = vunpack.c.h.b16 %v9923
        %v10058 = vunpack.c.l.b16 %v9924
        %v10059 = vunpack.c.h.b16 %v9924
        %v10060 = vunpack.c.l.b16 %v9925
        %v10061 = vunpack.c.h.b16 %v9925
        %v10062 = vunpack.c.l.b16 %v9926
        %v10063 = vunpack.c.h.b16 %v9926
        %v10064 = vunpack.c.l.b16 %v9927
        %v10065 = vunpack.c.h.b16 %v9927
        %v10066 = vunpack.c.l.b16 %v9928
        %v10067 = vunpack.c.h.b16 %v9928
        %v10068 = vunpack.c.l.b16 %v9929
        %v10069 = vunpack.c.h.b16 %v9929
        %v10070 = vunpack.c.l.b16 %v9930
        %v10071 = vunpack.c.h.b16 %v9930
        %v10072 = vunpack.c.l.b16 %v9931
        %v10073 = vunpack.c.h.b16 %v9931
        %v10074 = vunpack.c.l.b16 %v9932
        %v10075 = vunpack.c.h.b16 %v9932
        %v10076 = vunpack.c.l.b16 %v9933
        %v10077 = vunpack.c.h.b16 %v9933
        %v10078 = vunpack.c.l.b16 %v9934
        %v10079 = vunpack.c.h.b16 %v9934
        %v10080 = vunpack.c.l.b16 %v9935
        %v10081 = vunpack.c.h.b16 %v9935
        %v10082 = vunpack.c.l.b16 %v9936
        %v10083 = vunpack.c.h.b16 %v9936
        %v10084 = vunpack.c.l.b16 %v9937
        %v10085 = vunpack.c.h.b16 %v9937
        %v10086 = vunpack.c.l.b16 %v9938
        %v10087 = vunpack.c.h.b16 %v9938
        %v10088 = vunpack.c.l.b16 %v9939
        %v10089 = vunpack.c.h.b16 %v9939
        %v10090 = vunpack.c.l.b16 %v9940
        %v10091 = vunpack.c.h.b16 %v9940
        %v10092 = vunpack.c.l.b16 %v9941
        %v10093 = vunpack.c.h.b16 %v9941
        %v10094 = vunpack.c.l.b16 %v9942
        %v10095 = vunpack.c.h.b16 %v9942
        %v10096 = vunpack.c.l.b16 %v9943
        %v10097 = vunpack.c.h.b16 %v9943
        %v10098 = vunpack.c.l.b16 %v9944
        %v10099 = vunpack.c.h.b16 %v9944
        %v10100 = vunpack.c.l.b16 %v9945
        %v10101 = vunpack.c.h.b16 %v9945
        %v10102 = vunpack.c.l.b16 %v9946
        %v10103 = vunpack.c.h.b16 %v9946
        %v10104 = vunpack.c.l.b16 %v9947
        %v10105 = vunpack.c.h.b16 %v9947
        %v10106 = vunpack.c.l.b16 %v9948
        %v10107 = vunpack.c.h.b16 %v9948
        %v10108 = vunpack.c.l.b16 %v9949
        %v10109 = vunpack.c.h.b16 %v9949
        %v10110 = vunpack.c.l.b16 %v9950
        %v10111 = vunpack.c.h.b16 %v9950
        %v10112 = vunpack.c.l.b16 %v9951
        %v10113 = vunpack.c.h.b16 %v9951
        %v10114 = vunpack.c.l.b16 %v9952
        %v10115 = vunpack.c.h.b16 %v9952
        %v10116 = vunpack.c.l.b16 %v9953
        %v10117 = vunpack.c.h.b16 %v9953
        %v10118 = vunpack.c.l.b16 %v9954
        %v10119 = vunpack.c.h.b16 %v9954
        %v10120 = vunpack.c.l.b16 %v9955
        %v10121 = vunpack.c.h.b16 %v9955
        %v10122 = vunpack.c.l.b16 %v9956
        %v10123 = vunpack.c.h.b16 %v9956
        %v10124 = vunpack.c.l.b16 %v9957
        %v10125 = vunpack.c.h.b16 %v9957
        %v10126 = vunpack.c.l.b16 %v9958
        %v10127 = vunpack.c.h.b16 %v9958
        %v10128 = vunpack.c.l.b16 %v9959
        %v10129 = vunpack.c.h.b16 %v9959
        %v10130 = vunpack.c.l.b16 %v9960
        %v10131 = vunpack.c.h.b16 %v9960
        %v10132 = vunpack.c.l.b16 %v9961
        %v10133 = vunpack.c.h.b16 %v9961
        %v10134 = vunpack.c.l.b16 %v9962
        %v10135 = vunpack.c.h.b16 %v9962
        %v10136 = vunpack.c.l.b16 %v9963
        %v10137 = vunpack.c.h.b16 %v9963
        %v10138 = vunpack.c.l.b16 %v9964
        %v10139 = vunpack.c.h.b16 %v9964
        %v10140 = vunpack.c.l.b16 %v9965
        %v10141 = vunpack.c.h.b16 %v9965
        %v10142 = vunpack.c.l.b16 %v9966
        %v10143 = vunpack.c.h.b16 %v9966
        %v10144 = vunpack.c.l.b16 %v9967
        %v10145 = vunpack.c.h.b16 %v9967
        %v10146 = vunpack.c.l.b16 %v9968
        %v10147 = vunpack.c.h.b16 %v9968
        %v10148 = vunpack.c.l.b16 %v9969
        %v10149 = vunpack.c.h.b16 %v9969
        %v10150 = vunpack.c.l.b16 %v9970
        %v10151 = vunpack.c.h.b16 %v9970
        %v10152 = vunpack.c.l.b16 %v9971
        %v10153 = vunpack.c.h.b16 %v9971
        %v10154 = vunpack.c.l.b16 %v9972
        %v10155 = vunpack.c.h.b16 %v9972
        %v10156 = vunpack.c.l.b16 %v9973
        %v10157 = vunpack.c.h.b16 %v9973
        %v10158 = vunpack.c.l.b16 %v9974
        %v10159 = vunpack.c.h.b16 %v9974
        %v10160 = vunpack.c.l.b16 %v9975
        %v10161 = vunpack.c.h.b16 %v9975
        %v10162 = vunpack.c.l.b16 %v9976
        %v10163 = vunpack.c.h.b16 %v9976
        %v10164 = vunpack.c.l.b16 %v9977
        %v10165 = vunpack.c.h.b16 %v9977
        %v10166 = vunpack.c.l.b16 %v9978
        %v10167 = vunpack.c.h.b16 %v9978
        %v10168 = vunpack.c.l.b16 %v9979
        %v10169 = vunpack.c.h.b16 %v9979
        %v10170 = vunpack.c.l.b16 %v9980
        %v10171 = vunpack.c.h.b16 %v9980
        %v10172 = vunpack.c.l.b16 %v9981
        %v10173 = vunpack.c.h.b16 %v9981
        %v10174 = vpack.c.b16 %v10046, %v10046
        %v10175 = vpack.c.b16 %v10047, %v10047
        %v10176 = vpack.c.b16 %v10048, %v10048
        %v10177 = vpack.c.b16 %v10049, %v10049
        %v10178 = vpack.c.b16 %v10050, %v10050
        %v10179 = vpack.c.b16 %v10051, %v10051
        %v10180 = vpack.c.b16 %v10052, %v10052
        %v10181 = vpack.c.b16 %v10053, %v10053
        %v10182 = vpack.c.b16 %v10054, %v10054
        %v10183 = vpack.c.b16 %v10055, %v10055
        %v10184 = vpack.c.b16 %v10056, %v10056
        %v10185 = vpack.c.b16 %v10057, %v10057
        %v10186 = vpack.c.b16 %v10058, %v10058
        %v10187 = vpack.c.b16 %v10059, %v10059
        %v10188 = vpack.c.b16 %v10060, %v10060
        %v10189 = vpack.c.b16 %v10061, %v10061
        %v10190 = vpack.c.b16 %v10062, %v10062
        %v10191 = vpack.c.b16 %v10063, %v10063
        %v10192 = vpack.c.b16 %v10064, %v10064
        %v10193 = vpack.c.b16 %v10065, %v10065
        %v10194 = vpack.c.b16 %v10066, %v10066
        %v10195 = vpack.c.b16 %v10067, %v10067
        %v10196 = vpack.c.b16 %v10068, %v10068
        %v10197 = vpack.c.b16 %v10069, %v10069
        %v10198 = vpack.c.b16 %v10070, %v10070
        %v10199 = vpack.c.b16 %v10071, %v10071
        %v10200 = vpack.c.b16 %v10072, %v10072
        %v10201 = vpack.c.b16 %v10073, %v10073
        %v10202 = vpack.c.b16 %v10074, %v10074
        %v10203 = vpack.c.b16 %v10075, %v10075
        %v10204 = vpack.c.b16 %v10076, %v10076
        %v10205 = vpack.c.b16 %v10077, %v10077
        %v10206 = vpack.c.b16 %v10078, %v10078
        %v10207 = vpack.c.b16 %v10079, %v10079
        %v10208 = vpack.c.b16 %v10080, %v10080
        %v10209 = vpack.c.b16 %v10081, %v10081
        %v10210 = vpack.c.b16 %v10082, %v10082
        %v10211 = vpack.c.b16 %v10083, %v10083
        %v10212 = vpack.c.b16 %v10084, %v10084
        %v10213 = vpack.c.b16 %v10085, %v10085
        %v10214 = vpack.c.b16 %v10086, %v10086
        %v10215 = vpack.c.b16 %v10087, %v10087
        %v10216 = vpack.c.b16 %v10088, %v10088
        %v10217 = vpack.c.b16 %v10089, %v10089
        %v10218 = vpack.c.b16 %v10090, %v10090
        %v10219 = vpack.c.b16 %v10091, %v10091
        %v10220 = vpack.c.b16 %v10092, %v10092
        %v10221 = vpack.c.b16 %v10093, %v10093
        %v10222 = vpack.c.b16 %v10094, %v10094
        %v10223 = vpack.c.b16 %v10095, %v10095
        %v10224 = vpack.c.b16 %v10096, %v10096
        %v10225 = vpack.c.b16 %v10097, %v10097
        %v10226 = vpack.c.b16 %v10098, %v10098
        %v10227 = vpack.c.b16 %v10099, %v10099
        %v10228 = vpack.c.b16 %v10100, %v10100
        %v10229 = vpack.c.b16 %v10101, %v10101
        %v10230 = vpack.c.b16 %v10102, %v10102
        %v10231 = vpack.c.b16 %v10103, %v10103
        %v10232 = vpack.c.b16 %v10104, %v10104
        %v10233 = vpack.c.b16 %v10105, %v10105
        %v10234 = vpack.c.b16 %v10106, %v10106
        %v10235 = vpack.c.b16 %v10107, %v10107
        %v10236 = vpack.c.b16 %v10108, %v10108
        %v10237 = vpack.c.b16 %v10109, %v10109
        %v10238 = vpack.c.b16 %v10110, %v10110
        %v10239 = vpack.c.b16 %v10111, %v10111
        %v10240 = vpack.c.b16 %v10112, %v10112
        %v10241 = vpack.c.b16 %v10113, %v10113
        %v10242 = vpack.c.b16 %v10114, %v10114
        %v10243 = vpack.c.b16 %v10115, %v10115
        %v10244 = vpack.c.b16 %v10116, %v10116
        %v10245 = vpack.c.b16 %v10117, %v10117
        %v10246 = vpack.c.b16 %v10118, %v10118
        %v10247 = vpack.c.b16 %v10119, %v10119
        %v10248 = vpack.c.b16 %v10120, %v10120
        %v10249 = vpack.c.b16 %v10121, %v10121
        %v10250 = vpack.c.b16 %v10122, %v10122
        %v10251 = vpack.c.b16 %v10123, %v10123
        %v10252 = vpack.c.b16 %v10124, %v10124
        %v10253 = vpack.c.b16 %v10125, %v10125
        %v10254 = vpack.c.b16 %v10126, %v10126
        %v10255 = vpack.c.b16 %v10127, %v10127
        %v10256 = vpack.c.b16 %v10128, %v10128
        %v10257 = vpack.c.b16 %v10129, %v10129
        %v10258 = vpack.c.b16 %v10130, %v10130
        %v10259 = vpack.c.b16 %v10131, %v10131
        %v10260 = vpack.c.b16 %v10132, %v10132
        %v10261 = vpack.c.b16 %v10133, %v10133
        %v10262 = vpack.c.b16 %v10134, %v10134
        %v10263 = vpack.c.b16 %v10135, %v10135
        %v10264 = vpack.c.b16 %v10136, %v10136
        %v10265 = vpack.c.b16 %v10137, %v10137
        %v10266 = vpack.c.b16 %v10138, %v10138
        %v10267 = vpack.c.b16 %v10139, %v10139
        %v10268 = vpack.c.b16 %v10140, %v10140
        %v10269 = vpack.c.b16 %v10141, %v10141
        %v10270 = vpack.c.b16 %v10142, %v10142
        %v10271 = vpack.c.b16 %v10143, %v10143
        %v10272 = vpack.c.b16 %v10144, %v10144
        %v10273 = vpack.c.b16 %v10145, %v10145
        %v10274 = vpack.c.b16 %v10146, %v10146
        %v10275 = vpack.c.b16 %v10147, %v10147
        %v10276 = vpack.c.b16 %v10148, %v10148
        %v10277 = vpack.c.b16 %v10149, %v10149
        %v10278 = vpack.c.b16 %v10150, %v10150
        %v10279 = vpack.c.b16 %v10151, %v10151
        %v10280 = vpack.c.b16 %v10152, %v10152
        %v10281 = vpack.c.b16 %v10153, %v10153
        %v10282 = vpack.c.b16 %v10154, %v10154
        %v10283 = vpack.c.b16 %v10155, %v10155
        %v10284 = vpack.c.b16 %v10156, %v10156
        %v10285 = vpack.c.b16 %v10157, %v10157
        %v10286 = vpack.c.b16 %v10158, %v10158
        %v10287 = vpack.c.b16 %v10159, %v10159
        %v10288 = vpack.c.b16 %v10160, %v10160
        %v10289 = vpack.c.b16 %v10161, %v10161
        %v10290 = vpack.c.b16 %v10162, %v10162
        %v10291 = vpack.c.b16 %v10163, %v10163
        %v10292 = vpack.c.b16 %v10164, %v10164
        %v10293 = vpack.c.b16 %v10165, %v10165
        %v10294 = vpack.c.b16 %v10166, %v10166
        %v10295 = vpack.c.b16 %v10167, %v10167
        %v10296 = vpack.c.b16 %v10168, %v10168
        %v10297 = vpack.c.b16 %v10169, %v10169
        %v10298 = vpack.c.b16 %v10170, %v10170
        %v10299 = vpack.c.b16 %v10171, %v10171
        %v10300 = vpack.c.b16 %v10172, %v10172
        %v10301 = vpack.c.b16 %v10173, %v10173
        %10430 = vst [vmem:[%s163] sm:$0xf] %v10174
        %10431 = vst [vmem:[%s163 + $0x4] sm:$0xf] %v10175
        %10432 = vst [vmem:[%s163 + $0x8] sm:$0xf] %v10176
        %10433 = vst [vmem:[%s163 + $0xc] sm:$0xf] %v10177
        %10434 = vst [vmem:[%s163 + $0x10] sm:$0xf] %v10178
        %10435 = vst [vmem:[%s163 + $0x14] sm:$0xf] %v10179
        %10436 = vst [vmem:[%s163 + $0x18] sm:$0xf] %v10180
        %10437 = vst [vmem:[%s163 + $0x1c] sm:$0xf] %v10181
        %10438 = vst [vmem:[%s163 + $0x20] sm:$0xf] %v10182
        %10439 = vst [vmem:[%s163 + $0x24] sm:$0xf] %v10183
        %10440 = vst [vmem:[%s163 + $0x28] sm:$0xf] %v10184
        %10441 = vst [vmem:[%s163 + $0x2c] sm:$0xf] %v10185
        %10442 = vst [vmem:[%s163 + $0x30] sm:$0xf] %v10186
        %10443 = vst [vmem:[%s163 + $0x34] sm:$0xf] %v10187
        %10444 = vst [vmem:[%s163 + $0x38] sm:$0xf] %v10188
        %10445 = vst [vmem:[%s163 + $0x3c] sm:$0xf] %v10189
        %10446 = vst [vmem:[%s163 + $0x40] sm:$0xf] %v10190
        %10447 = vst [vmem:[%s163 + $0x44] sm:$0xf] %v10191
        %10448 = vst [vmem:[%s163 + $0x48] sm:$0xf] %v10192
        %10449 = vst [vmem:[%s163 + $0x4c] sm:$0xf] %v10193
        %10450 = vst [vmem:[%s163 + $0x50] sm:$0xf] %v10194
        %10451 = vst [vmem:[%s163 + $0x54] sm:$0xf] %v10195
        %10452 = vst [vmem:[%s163 + $0x58] sm:$0xf] %v10196
        %10453 = vst [vmem:[%s163 + $0x5c] sm:$0xf] %v10197
        %10454 = vst [vmem:[%s163 + $0x60] sm:$0xf] %v10198
        %10455 = vst [vmem:[%s163 + $0x64] sm:$0xf] %v10199
        %10456 = vst [vmem:[%s163 + $0x68] sm:$0xf] %v10200
        %10457 = vst [vmem:[%s163 + $0x6c] sm:$0xf] %v10201
        %10458 = vst [vmem:[%s163 + $0x70] sm:$0xf] %v10202
        %10459 = vst [vmem:[%s163 + $0x74] sm:$0xf] %v10203
        %10460 = vst [vmem:[%s163 + $0x78] sm:$0xf] %v10204
        %10461 = vst [vmem:[%s163 + $0x7c] sm:$0xf] %v10205
        %10462 = vst [vmem:[%s163 + $0x80] sm:$0xf] %v10206
        %10463 = vst [vmem:[%s163 + $0x84] sm:$0xf] %v10207
        %10464 = vst [vmem:[%s163 + $0x88] sm:$0xf] %v10208
        %10465 = vst [vmem:[%s163 + $0x8c] sm:$0xf] %v10209
        %10466 = vst [vmem:[%s163 + $0x90] sm:$0xf] %v10210
        %10467 = vst [vmem:[%s163 + $0x94] sm:$0xf] %v10211
        %10468 = vst [vmem:[%s163 + $0x98] sm:$0xf] %v10212
        %10469 = vst [vmem:[%s163 + $0x9c] sm:$0xf] %v10213
        %10470 = vst [vmem:[%s163 + $0xa0] sm:$0xf] %v10214
        %10471 = vst [vmem:[%s163 + $0xa4] sm:$0xf] %v10215
        %10472 = vst [vmem:[%s163 + $0xa8] sm:$0xf] %v10216
        %10473 = vst [vmem:[%s163 + $0xac] sm:$0xf] %v10217
        %10474 = vst [vmem:[%s163 + $0xb0] sm:$0xf] %v10218
        %10475 = vst [vmem:[%s163 + $0xb4] sm:$0xf] %v10219
        %10476 = vst [vmem:[%s163 + $0xb8] sm:$0xf] %v10220
        %10477 = vst [vmem:[%s163 + $0xbc] sm:$0xf] %v10221
        %10478 = vst [vmem:[%s163 + $0xc0] sm:$0xf] %v10222
        %10479 = vst [vmem:[%s163 + $0xc4] sm:$0xf] %v10223
        %10480 = vst [vmem:[%s163 + $0xc8] sm:$0xf] %v10224
        %10481 = vst [vmem:[%s163 + $0xcc] sm:$0xf] %v10225
        %10482 = vst [vmem:[%s163 + $0xd0] sm:$0xf] %v10226
        %10483 = vst [vmem:[%s163 + $0xd4] sm:$0xf] %v10227
        %10484 = vst [vmem:[%s163 + $0xd8] sm:$0xf] %v10228
        %10485 = vst [vmem:[%s163 + $0xdc] sm:$0xf] %v10229
        %10486 = vst [vmem:[%s163 + $0xe0] sm:$0xf] %v10230
        %10487 = vst [vmem:[%s163 + $0xe4] sm:$0xf] %v10231
        %10488 = vst [vmem:[%s163 + $0xe8] sm:$0xf] %v10232
        %10489 = vst [vmem:[%s163 + $0xec] sm:$0xf] %v10233
        %10490 = vst [vmem:[%s163 + $0xf0] sm:$0xf] %v10234
        %10491 = vst [vmem:[%s163 + $0xf4] sm:$0xf] %v10235
        %10492 = vst [vmem:[%s163 + $0xf8] sm:$0xf] %v10236
        %10493 = vst [vmem:[%s163 + $0xfc] sm:$0xf] %v10237
        %10494 = vst [vmem:[%s163 + $0x100] sm:$0xf] %v10238
        %10495 = vst [vmem:[%s163 + $0x104] sm:$0xf] %v10239
        %10496 = vst [vmem:[%s163 + $0x108] sm:$0xf] %v10240
        %10497 = vst [vmem:[%s163 + $0x10c] sm:$0xf] %v10241
        %10498 = vst [vmem:[%s163 + $0x110] sm:$0xf] %v10242
        %10499 = vst [vmem:[%s163 + $0x114] sm:$0xf] %v10243
        %10500 = vst [vmem:[%s163 + $0x118] sm:$0xf] %v10244
        %10501 = vst [vmem:[%s163 + $0x11c] sm:$0xf] %v10245
        %10502 = vst [vmem:[%s163 + $0x120] sm:$0xf] %v10246
        %10503 = vst [vmem:[%s163 + $0x124] sm:$0xf] %v10247
        %10504 = vst [vmem:[%s163 + $0x128] sm:$0xf] %v10248
        %10505 = vst [vmem:[%s163 + $0x12c] sm:$0xf] %v10249
        %10506 = vst [vmem:[%s163 + $0x130] sm:$0xf] %v10250
        %10507 = vst [vmem:[%s163 + $0x134] sm:$0xf] %v10251
        %10508 = vst [vmem:[%s163 + $0x138] sm:$0xf] %v10252
        %10509 = vst [vmem:[%s163 + $0x13c] sm:$0xf] %v10253
        %10510 = vst [vmem:[%s163 + $0x140] sm:$0xf] %v10254
        %10511 = vst [vmem:[%s163 + $0x144] sm:$0xf] %v10255
        %10512 = vst [vmem:[%s163 + $0x148] sm:$0xf] %v10256
        %10513 = vst [vmem:[%s163 + $0x14c] sm:$0xf] %v10257
        %10514 = vst [vmem:[%s163 + $0x150] sm:$0xf] %v10258
        %10515 = vst [vmem:[%s163 + $0x154] sm:$0xf] %v10259
        %10516 = vst [vmem:[%s163 + $0x158] sm:$0xf] %v10260
        %10517 = vst [vmem:[%s163 + $0x15c] sm:$0xf] %v10261
        %10518 = vst [vmem:[%s163 + $0x160] sm:$0xf] %v10262
        %10519 = vst [vmem:[%s163 + $0x164] sm:$0xf] %v10263
        %10520 = vst [vmem:[%s163 + $0x168] sm:$0xf] %v10264
        %10521 = vst [vmem:[%s163 + $0x16c] sm:$0xf] %v10265
        %10522 = vst [vmem:[%s163 + $0x170] sm:$0xf] %v10266
        %10523 = vst [vmem:[%s163 + $0x174] sm:$0xf] %v10267
        %10524 = vst [vmem:[%s163 + $0x178] sm:$0xf] %v10268
        %10525 = vst [vmem:[%s163 + $0x17c] sm:$0xf] %v10269
        %10526 = vst [vmem:[%s163 + $0x180] sm:$0xf] %v10270
        %10527 = vst [vmem:[%s163 + $0x184] sm:$0xf] %v10271
        %10528 = vst [vmem:[%s163 + $0x188] sm:$0xf] %v10272
        %10529 = vst [vmem:[%s163 + $0x18c] sm:$0xf] %v10273
        %10530 = vst [vmem:[%s163 + $0x190] sm:$0xf] %v10274
        %10531 = vst [vmem:[%s163 + $0x194] sm:$0xf] %v10275
        %10532 = vst [vmem:[%s163 + $0x198] sm:$0xf] %v10276
        %10533 = vst [vmem:[%s163 + $0x19c] sm:$0xf] %v10277
        %10534 = vst [vmem:[%s163 + $0x1a0] sm:$0xf] %v10278
        %10535 = vst [vmem:[%s163 + $0x1a4] sm:$0xf] %v10279
        %10536 = vst [vmem:[%s163 + $0x1a8] sm:$0xf] %v10280
        %10537 = vst [vmem:[%s163 + $0x1ac] sm:$0xf] %v10281
        %10538 = vst [vmem:[%s163 + $0x1b0] sm:$0xf] %v10282
        %10539 = vst [vmem:[%s163 + $0x1b4] sm:$0xf] %v10283
        %10540 = vst [vmem:[%s163 + $0x1b8] sm:$0xf] %v10284
        %10541 = vst [vmem:[%s163 + $0x1bc] sm:$0xf] %v10285
        %10542 = vst [vmem:[%s163 + $0x1c0] sm:$0xf] %v10286
        %10543 = vst [vmem:[%s163 + $0x1c4] sm:$0xf] %v10287
        %10544 = vst [vmem:[%s163 + $0x1c8] sm:$0xf] %v10288
        %10545 = vst [vmem:[%s163 + $0x1cc] sm:$0xf] %v10289
        %10546 = vst [vmem:[%s163 + $0x1d0] sm:$0xf] %v10290
        %10547 = vst [vmem:[%s163 + $0x1d4] sm:$0xf] %v10291
        %10548 = vst [vmem:[%s163 + $0x1d8] sm:$0xf] %v10292
        %10549 = vst [vmem:[%s163 + $0x1dc] sm:$0xf] %v10293
        %10550 = vst [vmem:[%s163 + $0x1e0] sm:$0xf] %v10294
        %10551 = vst [vmem:[%s163 + $0x1e4] sm:$0xf] %v10295
        %10552 = vst [vmem:[%s163 + $0x1e8] sm:$0xf] %v10296
        %10553 = vst [vmem:[%s163 + $0x1ec] sm:$0xf] %v10297
        %10554 = vst [vmem:[%s163 + $0x1f0] sm:$0xf] %v10298
        %10555 = vst [vmem:[%s163 + $0x1f4] sm:$0xf] %v10299
        %10556 = vst [vmem:[%s163 + $0x1f8] sm:$0xf] %v10300
        %10557 = vst [vmem:[%s163 + $0x1fc] sm:$0xf] %v10301
        %s10558 = sand.u32 %s93, 1
        %s10559 = scalar_lea.sflag [#allocation3], %s10558
        %s10560 = sand.u32 %s93, 1
        %s10561 = smul.addr %s10560, 512
        %s10562 = scalar_lea.vmem [#allocation2], %s10561
        // Predicated region
        $region33: #{tpu_custom_call.1} parent=31 // pred_check
          %p10563 = pneg %p103
        $region34: #{tpu_custom_call.1} parent=31 // pred_check_branch
          %10565 = sbr.rel (%p10563) target = $region36
        $region35: #{tpu_custom_call.1} parent=31 // pred_region
          %s10567 = ssub.s32 8192, 8192
          %10568 = vsyncadd %s10559, %s10567
          %s10569 = smul.addr %s17, 128
          %s10570 = smul.addr %s10569, 64
          %s10571 = scalar_lea.hbm %s3, %s10570
          %s10572 = sshll.u32 %s10562, 4
          %s10573 = int_to_ptr.vmem [resolvable:$true] %s10572
          %10578 = dma.vmem_to_hbm [thread:$0]  %s10573, 8192, %s10571, %s10559, 64, 64, 4
        $region36: #{tpu_custom_call.1} parent=31 // pred_fallthru
          _
      $region32: #{tpu_custom_call.1} parent=5 // pred_fallthru
        _
      %p10579 = scmp.le.s32.totalorder 2, %s12
      // Predicated region
      $region37: #{tpu_custom_call.1} parent=5 // pred_check
        %p10580 = pneg %p10579
      $region38: #{tpu_custom_call.1} parent=5 // pred_check_branch
        %10582 = sbr.rel (%p10580) target = $region40
      $region39: #{tpu_custom_call.1} parent=5 // pred_region
        %s10583 = ssub.s32 %s12, 2
        // Predicated region
        $region41: #{tpu_custom_call.1} parent=39 // pred_check
          %p10584 = pneg %p109
        $region42: #{tpu_custom_call.1} parent=39 // pred_check_branch
          %10586 = sbr.rel (%p10584) target = $region44
        $region43: #{tpu_custom_call.1} parent=39 // pred_region
          %s10587 = sand.u32 %s94, 1
          %s10588 = scalar_lea.sflag [#allocation3], %s10587
          %s10589 = sand.u32 %s94, 1
          %s10590 = smul.addr %s10589, 512
          %s10591 = scalar_lea.vmem [#allocation2], %s10590
          %10592 = dma.done %s10588, 8192
        $region44: #{tpu_custom_call.1} parent=39 // pred_fallthru
          _
      $region40: #{tpu_custom_call.1} parent=5 // pred_fallthru
        _
    $region6: #{tpu_custom_call.1} parent=1 // loop_footer
      %s16 = sadd.s32 1, %s12
    $region7: #{tpu_custom_call.1} parent=1 // loop_footer_branch
      %11 = sbr.rel target = $region3
    $region8: #{tpu_custom_call.1} parent=1 // loop_exit
      _
    %10593 = vsyncpa [#allocation3], 1
    %s10594 = scalar_lea.sflag [#allocation3], 1
    %10595 = vsyncpa %s10594, 1

</llo_original>
